<compile_context>
chip_gen: v7x
topology: tpu7x:2x2x1
jax: 0.10.0
libtpu: 0.0.40
codegen_flags: <defaults>
</compile_context>

<pallas_src>
import functools

import jax
import jax.numpy as jnp
from jax.experimental import pallas as pl
from jax.experimental.pallas import tpu as pltpu

# Worst-case double-buffered working set here is < 4 MiB; 32 MiB is safe on
# v5e/v6e (128 MiB VMEM) and on v7x (64 MiB per TensorCore).
_VMEM_LIMIT = 32 * 1024 * 1024


def _round_up(x, m):
    return (x + m - 1) // m * m


# ----------------------------------------------------------------------------
# Pallas matmul (MXU): bf16 inputs, f32 accumulation, adaptive tiles
# ----------------------------------------------------------------------------

def _matmul_kernel_single(a_ref, b_ref, o_ref):
    # Single K step: write the result directly, no accumulator scratch.
    o_ref[...] = jnp.dot(a_ref[...], b_ref[...],
                         preferred_element_type=jnp.float32).astype(o_ref.dtype)


def _matmul_kernel_multi(a_ref, b_ref, o_ref, acc_ref):
    @pl.when(pl.program_id(2) == 0)
    def _():
        acc_ref[...] = jnp.zeros_like(acc_ref)

    acc_ref[...] += jnp.dot(a_ref[...], b_ref[...],
                            preferred_element_type=jnp.float32)

    @pl.when(pl.program_id(2) == pl.num_programs(2) - 1)
    def _():
        o_ref[...] = acc_ref[...].astype(o_ref.dtype)


def _pick_tile(dim, pref):
    """Full-dim block when small (no padding); otherwise `pref` (pad if needed)."""
    if dim <= pref:
        return dim, dim
    if dim % pref == 0:
        return pref, dim
    return pref, _round_up(dim, pref)


def _pick_k_tile(K, pref=512, cap=1024):
    """Single full-K step when it fits; else the largest 128-multiple divisor."""
    if K <= cap:
        return K, K
    for t in range(pref, 127, -128):
        if K % t == 0:
            return t, K
    return pref, _round_up(K, pref)


def pallas_matmul(a, b):
    """(M, K) @ (K, N) -> f32.  Operands cast to bf16, f32 MXU accumulation."""
    M, K = a.shape
    K2, N = b.shape
    assert K == K2
    a = a.astype(jnp.bfloat16)
    b = b.astype(jnp.bfloat16)

    TM, Mp = _pick_tile(M, 256)
    TN, Np = _pick_tile(N, 256)
    TK, Kp = _pick_k_tile(K)

    if Mp != M or Kp != K:
        a = jnp.pad(a, ((0, Mp - M), (0, Kp - K)))
    if Kp != K or Np != N:
        b = jnp.pad(b, ((0, Kp - K), (0, Np - N)))

    k_steps = Kp // TK
    if k_steps == 1:
        out = pl.pallas_call(
            _matmul_kernel_single,
            out_shape=jax.ShapeDtypeStruct((Mp, Np), jnp.float32),
            grid_spec=pltpu.PrefetchScalarGridSpec(
                num_scalar_prefetch=0,
                grid=(Mp // TM, Np // TN),
                in_specs=[pl.BlockSpec((TM, TK), lambda i, j: (i, 0)),
                          pl.BlockSpec((TK, TN), lambda i, j: (0, j))],
                out_specs=pl.BlockSpec((TM, TN), lambda i, j: (i, j))),
            compiler_params=pltpu.CompilerParams(
                dimension_semantics=("parallel", "parallel"),
                vmem_limit_bytes=_VMEM_LIMIT),
        )(a, b)
    else:
        out = pl.pallas_call(
            _matmul_kernel_multi,
            out_shape=jax.ShapeDtypeStruct((Mp, Np), jnp.float32),
            grid_spec=pltpu.PrefetchScalarGridSpec(
                num_scalar_prefetch=0,
                grid=(Mp // TM, Np // TN, k_steps),
                in_specs=[pl.BlockSpec((TM, TK), lambda i, j, k: (i, k)),
                          pl.BlockSpec((TK, TN), lambda i, j, k: (k, j))],
                out_specs=pl.BlockSpec((TM, TN), lambda i, j, k: (i, j)),
                scratch_shapes=[pltpu.VMEM((TM, TN), jnp.float32)]),
            compiler_params=pltpu.CompilerParams(
                dimension_semantics=("parallel", "parallel", "arbitrary"),
                vmem_limit_bytes=_VMEM_LIMIT),
        )(a, b)

    if Mp != M or Np != N:
        out = out[:M, :N]
    return out


# ----------------------------------------------------------------------------
# Pallas BatchNorm: fused stats pass + fused normalize/residual/ReLU pass
# ----------------------------------------------------------------------------

def _pick_rows(M, max_rows=1024):
    if M <= max_rows:
        return M, M
    return max_rows, _round_up(M, max_rows)


def _bn_stats_kernel(x_ref, sum_ref, sq_ref):
    # Accumulate per-lane sum and sum-of-squares in one pass over the slab.
    @pl.when(pl.program_id(0) == 0)
    def _():
        sum_ref[...] = jnp.zeros_like(sum_ref)
        sq_ref[...] = jnp.zeros_like(sq_ref)

    x = x_ref[...]
    sum_ref[...] += jnp.sum(x, axis=0, keepdims=True)
    sq_ref[...] += jnp.sum(x * x, axis=0, keepdims=True)


def pallas_bn_stats(x2):
    """x2: (M2, C2) f32 -> (sum, sum_sq) per lane, each shape (C2,)."""
    M2, C2 = x2.shape
    BR, M2p = _pick_rows(M2)
    if M2p != M2:  # zero rows contribute 0 to both sums
        x2 = jnp.pad(x2, ((0, M2p - M2), (0, 0)))
    s, q = pl.pallas_call(
        _bn_stats_kernel,
        out_shape=(jax.ShapeDtypeStruct((1, C2), jnp.float32),
                   jax.ShapeDtypeStruct((1, C2), jnp.float32)),
        grid_spec=pltpu.PrefetchScalarGridSpec(
            num_scalar_prefetch=0,
            grid=(M2p // BR,),
            in_specs=[pl.BlockSpec((BR, C2), lambda r: (r, 0))],
            out_specs=(pl.BlockSpec((1, C2), lambda r: (0, 0)),
                       pl.BlockSpec((1, C2), lambda r: (0, 0)))),
        compiler_params=pltpu.CompilerParams(
            dimension_semantics=("arbitrary",),
            vmem_limit_bytes=_VMEM_LIMIT),
    )(x2)
    return s[0], q[0]


def _bn_norm_kernel(x_ref, scale_ref, shift_ref, o_ref, *, relu):
    y = x_ref[...] * scale_ref[...] + shift_ref[...]   # (BR,C)*(1,C) broadcast
    if relu:
        y = jnp.maximum(y, 0.0)
    o_ref[...] = y


def _bn_norm_res_kernel(x_ref, scale_ref, shift_ref, res_ref, o_ref, *, relu):
    y = x_ref[...] * scale_ref[...] + shift_ref[...] + res_ref[...]
    if relu:
        y = jnp.maximum(y, 0.0)
    o_ref[...] = y


def pallas_bn_norm(x2, scale2, shift2, res2, relu):
    """y = maybe_relu(x2 * scale + shift [+ res]) on a (M2, C2) slab."""
    M2, C2 = x2.shape
    BR, M2p = _pick_rows(M2)
    pad_r = M2p - M2

    def padr(a):
        return a if pad_r == 0 else jnp.pad(a, ((0, pad_r), (0, 0)))

    row_spec = pl.BlockSpec((BR, C2), lambda r: (r, 0))
    vec_spec = pl.BlockSpec((1, C2), lambda r: (0, 0))
    scale2 = scale2.reshape(1, C2)
    shift2 = shift2.reshape(1, C2)

    if res2 is None:
        kernel = functools.partial(_bn_norm_kernel, relu=relu)
        in_specs = [row_spec, vec_spec, vec_spec]
        args = (padr(x2), scale2, shift2)
    else:
        kernel = functools.partial(_bn_norm_res_kernel, relu=relu)
        in_specs = [row_spec, vec_spec, vec_spec, row_spec]
        args = (padr(x2), scale2, shift2, padr(res2))

    out = pl.pallas_call(
        kernel,
        out_shape=jax.ShapeDtypeStruct((M2p, C2), jnp.float32),
        grid_spec=pltpu.PrefetchScalarGridSpec(
            num_scalar_prefetch=0,
            grid=(M2p // BR,),
            in_specs=in_specs,
            out_specs=row_spec),
        compiler_params=pltpu.CompilerParams(
            dimension_semantics=("parallel",),
            vmem_limit_bytes=_VMEM_LIMIT),
    )(*args)
    return out[:M2] if pad_r else out


def bn_act(x, gamma, beta, res=None, relu=True, eps=1e-5):
    """BatchNorm2d (training-mode batch stats) + optional residual + ReLU."""
    N, H, W, C = x.shape
    M = N * H * W

    # Lane-dense fold for narrow-channel layers: (M, 64) -> (M/2, 128).
    f = 1
    if C < 128 and 128 % C == 0 and M % (128 // C) == 0:
        f = 128 // C
    M2, C2 = M // f, C * f

    x2 = x.reshape(M2, C2)
    res2 = None if res is None else res.astype(jnp.float32).reshape(M2, C2)

    # One fused Pallas pass for sum and sum-of-squares.
    s2, q2 = pallas_bn_stats(x2)
    s = s2.reshape(f, C).sum(axis=0)
    q = q2.reshape(f, C).sum(axis=0)
    mean = s / M
    var = jnp.maximum(q / M - mean * mean, 0.0)        # biased batch variance
    scale = gamma * jax.lax.rsqrt(var + eps)
    shift = beta - mean * scale

    out = pallas_bn_norm(x2, jnp.tile(scale, f), jnp.tile(shift, f), res2, relu)
    return out.reshape(N, H, W, C)


# ----------------------------------------------------------------------------
# Conv / pooling glue
# ----------------------------------------------------------------------------

def _im2col(x_nhwc, kh, kw, stride, pad):
    N, H, W, C = x_nhwc.shape
    x_p = x_nhwc if pad == 0 else jnp.pad(
        x_nhwc, ((0, 0), (pad, pad), (pad, pad), (0, 0)))
    Ho = (H + 2 * pad - kh) // stride + 1
    Wo = (W + 2 * pad - kw) // stride + 1
    cols = []
    for i in range(kh):
        for j in range(kw):
            cols.append(x_p[:, i:i + stride * Ho:stride,
                            j:j + stride * Wo:stride, :])
    cols = jnp.concatenate(cols, axis=-1)              # (N, Ho, Wo, kh*kw*C)
    return cols.reshape(N * Ho * Wo, kh * kw * C), (N, Ho, Wo)


def conv2d(x, w, stride, pad):
    """x: (N,H,W,Cin), w: PyTorch layout (Cout,Cin,kh,kw), bias=False."""
    Cout, Cin, kh, kw = w.shape
    xb = x.astype(jnp.bfloat16)                        # halve im2col HBM bytes
    if kh == 1 and kw == 1:
        # 1x1 conv needs no im2col: (strided) spatial subsample + matmul.
        if stride > 1:
            xb = xb[:, ::stride, ::stride, :]
        N, Ho, Wo, _ = xb.shape
        cols = xb.reshape(N * Ho * Wo, Cin)
    else:
        cols, (N, Ho, Wo) = _im2col(xb, kh, kw, stride, pad)
    w_mat = jnp.transpose(w, (2, 3, 1, 0)).reshape(
        kh * kw * Cin, Cout).astype(jnp.bfloat16)
    y = pallas_matmul(cols, w_mat)                     # f32 output
    return y.reshape(N, Ho, Wo, Cout)


def maxpool_3x3_s2_p1(x):
    # TODO(synk): max-pool uses lax.reduce_window (XLA) rather than a Pallas kernel.
    return jax.lax.reduce_window(
        x, -jnp.inf, jax.lax.max,
        window_dimensions=(1, 3, 3, 1),
        window_strides=(1, 2, 2, 1),
        padding=((0, 0), (1, 1), (1, 1), (0, 0)))


def basic_block(x, blk, stride):
    out = conv2d(x, blk["conv1"], stride=stride, pad=1)
    out = bn_act(out, *blk["bn1"], relu=True)
    out = conv2d(out, blk["conv2"], stride=1, pad=1)
    if "down_conv" in blk:
        identity = conv2d(x, blk["down_conv"], stride=stride, pad=0)
        identity = bn_act(identity, *blk["down_bn"], relu=False)
    else:
        identity = x
    # bn2(out) + identity, then ReLU -- fused in one Pallas elementwise kernel.
    return bn_act(out, *blk["bn2"], res=identity, relu=True)


# ----------------------------------------------------------------------------
# EmbeddingNet (resnet18 with fc = Linear(512, 256))
# ----------------------------------------------------------------------------

def init_params(key):
    keys = iter(jax.random.split(key, 64))

    def conv_w(cout, cin, k):
        fan_in = cin * k * k
        return jax.random.normal(next(keys), (cout, cin, k, k),
                                 jnp.float32) * (2.0 / fan_in) ** 0.5

    def bn(c):
        return (jnp.ones((c,), jnp.float32), jnp.zeros((c,), jnp.float32))

    p = {"conv1": conv_w(64, 3, 7), "bn1": bn(64)}
    cins = [64, 64, 128, 256]
    couts = [64, 128, 256, 512]
    for li in range(4):
        blocks = []
        for bi in range(2):
            cin = cins[li] if bi == 0 else couts[li]
            cout = couts[li]
            blk = {"conv1": conv_w(cout, cin, 3), "bn1": bn(cout),
                   "conv2": conv_w(cout, cout, 3), "bn2": bn(cout)}
            if bi == 0 and li > 0:
                blk["down_conv"] = conv_w(cout, cin, 1)
                blk["down_bn"] = bn(cout)
            blocks.append(blk)
        p[f"layer{li + 1}"] = blocks
    p["fc_w"] = jax.random.normal(next(keys), (256, 512),
                                  jnp.float32) * (1.0 / 512) ** 0.5
    p["fc_b"] = jax.random.normal(next(keys), (256,), jnp.float32) * 0.01
    return p


def embedding_net_forward(params, x_nchw):
    x = jnp.transpose(x_nchw, (0, 2, 3, 1)).astype(jnp.float32)  # NCHW -> NHWC

    # stem
    x = conv2d(x, params["conv1"], stride=2, pad=3)
    x = bn_act(x, *params["bn1"], relu=True)
    x = maxpool_3x3_s2_p1(x)

    # residual stages
    for li in range(4):
        for bi, blk in enumerate(params[f"layer{li + 1}"]):
            stride = 2 if (li > 0 and bi == 0) else 1
            x = basic_block(x, blk, stride)

    # adaptive avg pool (1,1) + flatten
    feat = jnp.mean(x, axis=(1, 2))                    # (N, 512)

    # fc: Linear(512, 256).  ~0.5 MFLOP at batch 2 -> pad + pallas launch
    # overhead would dominate, so use a plain XLA dot (per perf review).
    out = jnp.dot(feat, params["fc_w"].T,
                  preferred_element_type=jnp.float32) + params["fc_b"]
    return out                                         # (N, 256)


# ----------------------------------------------------------------------------

if __name__ == "__main__":
    key = jax.random.PRNGKey(0)
    pkey, xkey = jax.random.split(key)
    params = init_params(pkey)
    # ResNet-18 downsamples 32x; 32x32 inputs keep everything small but valid.
    x = jax.random.normal(xkey, (2, 3, 32, 32), jnp.float32)

    fwd = jax.jit(embedding_net_forward)
    out = fwd(params, x)
    out = jax.block_until_ready(out)

    assert out.shape == (2, 256), out.shape
    assert out.dtype == jnp.float32
    assert bool(jnp.all(jnp.isfinite(out)))
    print("KERNEL_OK")
</pallas_src>

<mosaic_0001>
module attributes {stable_mosaic.version = 11 : i64} {
  func.func @_bn_stats_kernel(%arg0: i32, %arg1: memref<256x128xf32, #tpu.memory_space<vmem>>, %arg2: memref<1x128xf32, #tpu.memory_space<vmem>>, %arg3: memref<1x128xf32, #tpu.memory_space<vmem>>) attributes {dimension_semantics = [#tpu.dimension_semantics<arbitrary>], iteration_bounds = array<i64: 1>, scalar_prefetch = 0 : i64, scratch_operands = 0 : i64, tpu.core_type = #tpu.core_type<tc>, window_params = [{transform_indices = @transform_0, window_bounds = array<i64: 256, 128>}, {pipeline_mode = #tpu.pipeline_mode<synchronous>, transform_indices = @transform_1, window_bounds = array<i64: 1, 128>}, {pipeline_mode = #tpu.pipeline_mode<synchronous>, transform_indices = @transform_2, window_bounds = array<i64: 1, 128>}]} {
    %c0_i32 = arith.constant 0 : i32
    %0 = arith.cmpi eq, %arg0, %c0_i32 : i32
    %1 = arith.extui %0 : i1 to i32
    %c0_i32_0 = arith.constant 0 : i32
    %2 = arith.cmpi ne, %1, %c0_i32_0 : i32
    scf.if %2 {
      %cst_11 = arith.constant 0.000000e+00 : f32
      %15 = vector.broadcast %cst_11 : f32 to vector<1x128xf32>
      %c0_12 = arith.constant 0 : index
      %c0_13 = arith.constant 0 : index
      %16 = vector.load %arg2[%c0_12, %c0_13] : memref<1x128xf32, #tpu.memory_space<vmem>>, vector<1x128xf32>
      tpu.vector_store %arg2[%c0_12, %c0_13], %15 {strides = array<i32>} : memref<1x128xf32, #tpu.memory_space<vmem>>, vector<1x128xf32>,
      %cst_14 = arith.constant 0.000000e+00 : f32
      %17 = vector.broadcast %cst_14 : f32 to vector<1x128xf32>
      %c0_15 = arith.constant 0 : index
      %c0_16 = arith.constant 0 : index
      %18 = vector.load %arg3[%c0_15, %c0_16] : memref<1x128xf32, #tpu.memory_space<vmem>>, vector<1x128xf32>
      tpu.vector_store %arg3[%c0_15, %c0_16], %17 {strides = array<i32>} : memref<1x128xf32, #tpu.memory_space<vmem>>, vector<1x128xf32>,
    } else {
    }
    %c0 = arith.constant 0 : index
    %c0_1 = arith.constant 0 : index
    %3 = vector.load %arg1[%c0, %c0_1] : memref<256x128xf32, #tpu.memory_space<vmem>>, vector<256x128xf32>
    %c0_2 = arith.constant 0 : index
    %c0_3 = arith.constant 0 : index
    %4 = vector.load %arg2[%c0_2, %c0_3] : memref<1x128xf32, #tpu.memory_space<vmem>>, vector<1x128xf32>
    %cst = arith.constant dense<0.000000e+00> : vector<128xf32>
    %5 = vector.multi_reduction <add>, %3, %cst [0] : vector<256x128xf32> to vector<128xf32>
    %6 = vector.shape_cast %5 : vector<128xf32> to vector<1x128xf32>
    %7 = arith.addf %4, %6 : vector<1x128xf32>
    %c0_4 = arith.constant 0 : index
    %c0_5 = arith.constant 0 : index
    %8 = vector.load %arg2[%c0_4, %c0_5] : memref<1x128xf32, #tpu.memory_space<vmem>>, vector<1x128xf32>
    tpu.vector_store %arg2[%c0_4, %c0_5], %7 {strides = array<i32>} : memref<1x128xf32, #tpu.memory_space<vmem>>, vector<1x128xf32>,
    %c0_6 = arith.constant 0 : index
    %c0_7 = arith.constant 0 : index
    %9 = vector.load %arg3[%c0_6, %c0_7] : memref<1x128xf32, #tpu.memory_space<vmem>>, vector<1x128xf32>
    %10 = arith.mulf %3, %3 : vector<256x128xf32>
    %cst_8 = arith.constant dense<0.000000e+00> : vector<128xf32>
    %11 = vector.multi_reduction <add>, %10, %cst_8 [0] : vector<256x128xf32> to vector<128xf32>
    %12 = vector.shape_cast %11 : vector<128xf32> to vector<1x128xf32>
    %13 = arith.addf %9, %12 : vector<1x128xf32>
    %c0_9 = arith.constant 0 : index
    %c0_10 = arith.constant 0 : index
    %14 = vector.load %arg3[%c0_9, %c0_10] : memref<1x128xf32, #tpu.memory_space<vmem>>, vector<1x128xf32>
    tpu.vector_store %arg3[%c0_9, %c0_10], %13 {strides = array<i32>} : memref<1x128xf32, #tpu.memory_space<vmem>>, vector<1x128xf32>,
    return
  }
  func.func @transform_0(%arg0: i32) -> (i32, i32) {
    %c0_i32 = arith.constant 0 : i32
    %c0_i32_0 = arith.constant 0 : i32
    return %arg0, %c0_i32 : i32, i32
  }
  func.func @transform_1(%arg0: i32) -> (i32, i32) {
    %c0_i32 = arith.constant 0 : i32
    %c0_i32_0 = arith.constant 0 : i32
    %c0_i32_1 = arith.constant 0 : i32
    return %c0_i32, %c0_i32_0 : i32, i32
  }
  func.func @transform_2(%arg0: i32) -> (i32, i32) {
    %c0_i32 = arith.constant 0 : i32
    %c0_i32_0 = arith.constant 0 : i32
    %c0_i32_1 = arith.constant 0 : i32
    return %c0_i32, %c0_i32_0 : i32, i32
  }
}

module attributes {stable_mosaic.version = 11 : i64} {
  func.func @_matmul_kernel_single(%arg0: i32, %arg1: i32, %arg2: memref<256x147xbf16, #tpu.memory_space<vmem>>, %arg3: memref<147x64xbf16, #tpu.memory_space<vmem>>, %arg4: memref<256x64xf32, #tpu.memory_space<vmem>>) attributes {dimension_semantics = [#tpu.dimension_semantics<parallel>, #tpu.dimension_semantics<parallel>], iteration_bounds = array<i64: 2, 1>, scalar_prefetch = 0 : i64, scratch_operands = 0 : i64, tpu.core_type = #tpu.core_type<tc>, window_params = [{transform_indices = @transform_0, window_bounds = array<i64: 256, 147>}, {transform_indices = @transform_1, window_bounds = array<i64: 147, 64>}, {transform_indices = @transform_2, window_bounds = array<i64: 256, 64>}]} {
    %c0 = arith.constant 0 : index
    %c0_0 = arith.constant 0 : index
    %0 = vector.load %arg2[%c0, %c0_0] : memref<256x147xbf16, #tpu.memory_space<vmem>>, vector<256x147xbf16>
    %c0_1 = arith.constant 0 : index
    %c0_2 = arith.constant 0 : index
    %1 = vector.load %arg3[%c0_1, %c0_2] : memref<147x64xbf16, #tpu.memory_space<vmem>>, vector<147x64xbf16>
    %cst = arith.constant dense<0.000000e+00> : vector<256x64xf32>
    %2 = tpu.matmul %0, %1, %cst {dimension_numbers = #tpu.dot_dimension_numbers<[1], [0], [0], [1], [0, 0, 1, 1], [], []>} : vector<256x147xbf16>, vector<147x64xbf16>, vector<256x64xf32> -> vector<256x64xf32>
    %c0_3 = arith.constant 0 : index
    %c0_4 = arith.constant 0 : index
    %3 = vector.load %arg4[%c0_3, %c0_4] : memref<256x64xf32, #tpu.memory_space<vmem>>, vector<256x64xf32>
    tpu.vector_store %arg4[%c0_3, %c0_4], %2 {strides = array<i32>} : memref<256x64xf32, #tpu.memory_space<vmem>>, vector<256x64xf32>,
    return
  }
  func.func @transform_0(%arg0: i32, %arg1: i32) -> (i32, i32) {
    %c0_i32 = arith.constant 0 : i32
    %c0_i32_0 = arith.constant 0 : i32
    return %arg0, %c0_i32 : i32, i32
  }
  func.func @transform_1(%arg0: i32, %arg1: i32) -> (i32, i32) {
    %c0_i32 = arith.constant 0 : i32
    %c0_i32_0 = arith.constant 0 : i32
    return %c0_i32, %arg1 : i32, i32
  }
  func.func @transform_2(%arg0: i32, %arg1: i32) -> (i32, i32) {
    %c0_i32 = arith.constant 0 : i32
    return %arg0, %arg1 : i32, i32
  }
}

module attributes {stable_mosaic.version = 11 : i64} {
  func.func @_bn_norm_kernel(%arg0: i32, %arg1: memref<256x128xf32, #tpu.memory_space<vmem>>, %arg2: memref<1x128xf32, #tpu.memory_space<vmem>>, %arg3: memref<1x128xf32, #tpu.memory_space<vmem>>, %arg4: memref<256x128xf32, #tpu.memory_space<vmem>>) attributes {dimension_semantics = [#tpu.dimension_semantics<parallel>], iteration_bounds = array<i64: 1>, scalar_prefetch = 0 : i64, scratch_operands = 0 : i64, tpu.core_type = #tpu.core_type<tc>, window_params = [{transform_indices = @transform_0, window_bounds = array<i64: 256, 128>}, {pipeline_mode = #tpu.pipeline_mode<synchronous>, transform_indices = @transform_1, window_bounds = array<i64: 1, 128>}, {pipeline_mode = #tpu.pipeline_mode<synchronous>, transform_indices = @transform_2, window_bounds = array<i64: 1, 128>}, {transform_indices = @transform_3, window_bounds = array<i64: 256, 128>}]} {
    %c0 = arith.constant 0 : index
    %c0_0 = arith.constant 0 : index
    %0 = vector.load %arg1[%c0, %c0_0] : memref<256x128xf32, #tpu.memory_space<vmem>>, vector<256x128xf32>
    %c0_1 = arith.constant 0 : index
    %c0_2 = arith.constant 0 : index
    %1 = vector.load %arg2[%c0_1, %c0_2] : memref<1x128xf32, #tpu.memory_space<vmem>>, vector<1x128xf32>
    %2 = vector.broadcast %1 : vector<1x128xf32> to vector<256x128xf32>
    %3 = arith.mulf %0, %2 : vector<256x128xf32>
    %c0_3 = arith.constant 0 : index
    %c0_4 = arith.constant 0 : index
    %4 = vector.load %arg3[%c0_3, %c0_4] : memref<1x128xf32, #tpu.memory_space<vmem>>, vector<1x128xf32>
    %5 = vector.broadcast %4 : vector<1x128xf32> to vector<256x128xf32>
    %6 = arith.addf %3, %5 : vector<256x128xf32>
    %cst = arith.constant 0.000000e+00 : f32
    %7 = vector.broadcast %cst : f32 to vector<256x128xf32>
    %8 = arith.maximumf %6, %7 : vector<256x128xf32>
    %c0_5 = arith.constant 0 : index
    %c0_6 = arith.constant 0 : index
    %9 = vector.load %arg4[%c0_5, %c0_6] : memref<256x128xf32, #tpu.memory_space<vmem>>, vector<256x128xf32>
    tpu.vector_store %arg4[%c0_5, %c0_6], %8 {strides = array<i32>} : memref<256x128xf32, #tpu.memory_space<vmem>>, vector<256x128xf32>,
    return
  }
  func.func @transform_0(%arg0: i32) -> (i32, i32) {
    %c0_i32 = arith.constant 0 : i32
    %c0_i32_0 = arith.constant 0 : i32
    return %arg0, %c0_i32 : i32, i32
  }
  func.func @transform_1(%arg0: i32) -> (i32, i32) {
    %c0_i32 = arith.constant 0 : i32
    %c0_i32_0 = arith.constant 0 : i32
    %c0_i32_1 = arith.constant 0 : i32
    return %c0_i32, %c0_i32_0 : i32, i32
  }
  func.func @transform_2(%arg0: i32) -> (i32, i32) {
    %c0_i32 = arith.constant 0 : i32
    %c0_i32_0 = arith.constant 0 : i32
    %c0_i32_1 = arith.constant 0 : i32
    return %c0_i32, %c0_i32_0 : i32, i32
  }
  func.func @transform_3(%arg0: i32) -> (i32, i32) {
    %c0_i32 = arith.constant 0 : i32
    %c0_i32_0 = arith.constant 0 : i32
    return %arg0, %c0_i32 : i32, i32
  }
}

module attributes {stable_mosaic.version = 11 : i64} {
  func.func @_matmul_kernel_single(%arg0: i32, %arg1: i32, %arg2: memref<128x576xbf16, #tpu.memory_space<vmem>>, %arg3: memref<576x64xbf16, #tpu.memory_space<vmem>>, %arg4: memref<128x64xf32, #tpu.memory_space<vmem>>) attributes {dimension_semantics = [#tpu.dimension_semantics<parallel>, #tpu.dimension_semantics<parallel>], iteration_bounds = array<i64: 1, 1>, scalar_prefetch = 0 : i64, scratch_operands = 0 : i64, tpu.core_type = #tpu.core_type<tc>, window_params = [{transform_indices = @transform_0, window_bounds = array<i64: 128, 576>}, {transform_indices = @transform_1, window_bounds = array<i64: 576, 64>}, {transform_indices = @transform_2, window_bounds = array<i64: 128, 64>}]} {
    %c0 = arith.constant 0 : index
    %c0_0 = arith.constant 0 : index
    %0 = vector.load %arg2[%c0, %c0_0] : memref<128x576xbf16, #tpu.memory_space<vmem>>, vector<128x576xbf16>
    %c0_1 = arith.constant 0 : index
    %c0_2 = arith.constant 0 : index
    %1 = vector.load %arg3[%c0_1, %c0_2] : memref<576x64xbf16, #tpu.memory_space<vmem>>, vector<576x64xbf16>
    %cst = arith.constant dense<0.000000e+00> : vector<128x64xf32>
    %2 = tpu.matmul %0, %1, %cst {dimension_numbers = #tpu.dot_dimension_numbers<[1], [0], [0], [1], [0, 0, 1, 1], [], []>} : vector<128x576xbf16>, vector<576x64xbf16>, vector<128x64xf32> -> vector<128x64xf32>
    %c0_3 = arith.constant 0 : index
    %c0_4 = arith.constant 0 : index
    %3 = vector.load %arg4[%c0_3, %c0_4] : memref<128x64xf32, #tpu.memory_space<vmem>>, vector<128x64xf32>
    tpu.vector_store %arg4[%c0_3, %c0_4], %2 {strides = array<i32>} : memref<128x64xf32, #tpu.memory_space<vmem>>, vector<128x64xf32>,
    return
  }
  func.func @transform_0(%arg0: i32, %arg1: i32) -> (i32, i32) {
    %c0_i32 = arith.constant 0 : i32
    %c0_i32_0 = arith.constant 0 : i32
    return %arg0, %c0_i32 : i32, i32
  }
  func.func @transform_1(%arg0: i32, %arg1: i32) -> (i32, i32) {
    %c0_i32 = arith.constant 0 : i32
    %c0_i32_0 = arith.constant 0 : i32
    return %c0_i32, %arg1 : i32, i32
  }
  func.func @transform_2(%arg0: i32, %arg1: i32) -> (i32, i32) {
    %c0_i32 = arith.constant 0 : i32
    return %arg0, %arg1 : i32, i32
  }
}

module attributes {stable_mosaic.version = 11 : i64} {
  func.func @_bn_norm_kernel(%arg0: i32, %arg1: memref<64x128xf32, #tpu.memory_space<vmem>>, %arg2: memref<1x128xf32, #tpu.memory_space<vmem>>, %arg3: memref<1x128xf32, #tpu.memory_space<vmem>>, %arg4: memref<64x128xf32, #tpu.memory_space<vmem>>) attributes {dimension_semantics = [#tpu.dimension_semantics<parallel>], iteration_bounds = array<i64: 1>, scalar_prefetch = 0 : i64, scratch_operands = 0 : i64, tpu.core_type = #tpu.core_type<tc>, window_params = [{transform_indices = @transform_0, window_bounds = array<i64: 64, 128>}, {pipeline_mode = #tpu.pipeline_mode<synchronous>, transform_indices = @transform_1, window_bounds = array<i64: 1, 128>}, {pipeline_mode = #tpu.pipeline_mode<synchronous>, transform_indices = @transform_2, window_bounds = array<i64: 1, 128>}, {transform_indices = @transform_3, window_bounds = array<i64: 64, 128>}]} {
    %c0 = arith.constant 0 : index
    %c0_0 = arith.constant 0 : index
    %0 = vector.load %arg1[%c0, %c0_0] : memref<64x128xf32, #tpu.memory_space<vmem>>, vector<64x128xf32>
    %c0_1 = arith.constant 0 : index
    %c0_2 = arith.constant 0 : index
    %1 = vector.load %arg2[%c0_1, %c0_2] : memref<1x128xf32, #tpu.memory_space<vmem>>, vector<1x128xf32>
    %2 = vector.broadcast %1 : vector<1x128xf32> to vector<64x128xf32>
    %3 = arith.mulf %0, %2 : vector<64x128xf32>
    %c0_3 = arith.constant 0 : index
    %c0_4 = arith.constant 0 : index
    %4 = vector.load %arg3[%c0_3, %c0_4] : memref<1x128xf32, #tpu.memory_space<vmem>>, vector<1x128xf32>
    %5 = vector.broadcast %4 : vector<1x128xf32> to vector<64x128xf32>
    %6 = arith.addf %3, %5 : vector<64x128xf32>
    %cst = arith.constant 0.000000e+00 : f32
    %7 = vector.broadcast %cst : f32 to vector<64x128xf32>
    %8 = arith.maximumf %6, %7 : vector<64x128xf32>
    %c0_5 = arith.constant 0 : index
    %c0_6 = arith.constant 0 : index
    %9 = vector.load %arg4[%c0_5, %c0_6] : memref<64x128xf32, #tpu.memory_space<vmem>>, vector<64x128xf32>
    tpu.vector_store %arg4[%c0_5, %c0_6], %8 {strides = array<i32>} : memref<64x128xf32, #tpu.memory_space<vmem>>, vector<64x128xf32>,
    return
  }
  func.func @transform_0(%arg0: i32) -> (i32, i32) {
    %c0_i32 = arith.constant 0 : i32
    %c0_i32_0 = arith.constant 0 : i32
    return %arg0, %c0_i32 : i32, i32
  }
  func.func @transform_1(%arg0: i32) -> (i32, i32) {
    %c0_i32 = arith.constant 0 : i32
    %c0_i32_0 = arith.constant 0 : i32
    %c0_i32_1 = arith.constant 0 : i32
    return %c0_i32, %c0_i32_0 : i32, i32
  }
  func.func @transform_2(%arg0: i32) -> (i32, i32) {
    %c0_i32 = arith.constant 0 : i32
    %c0_i32_0 = arith.constant 0 : i32
    %c0_i32_1 = arith.constant 0 : i32
    return %c0_i32, %c0_i32_0 : i32, i32
  }
  func.func @transform_3(%arg0: i32) -> (i32, i32) {
    %c0_i32 = arith.constant 0 : i32
    %c0_i32_0 = arith.constant 0 : i32
    return %arg0, %c0_i32 : i32, i32
  }
}

module attributes {stable_mosaic.version = 11 : i64} {
  func.func @_bn_stats_kernel(%arg0: i32, %arg1: memref<64x128xf32, #tpu.memory_space<vmem>>, %arg2: memref<1x128xf32, #tpu.memory_space<vmem>>, %arg3: memref<1x128xf32, #tpu.memory_space<vmem>>) attributes {dimension_semantics = [#tpu.dimension_semantics<arbitrary>], iteration_bounds = array<i64: 1>, scalar_prefetch = 0 : i64, scratch_operands = 0 : i64, tpu.core_type = #tpu.core_type<tc>, window_params = [{transform_indices = @transform_0, window_bounds = array<i64: 64, 128>}, {pipeline_mode = #tpu.pipeline_mode<synchronous>, transform_indices = @transform_1, window_bounds = array<i64: 1, 128>}, {pipeline_mode = #tpu.pipeline_mode<synchronous>, transform_indices = @transform_2, window_bounds = array<i64: 1, 128>}]} {
    %c0_i32 = arith.constant 0 : i32
    %0 = arith.cmpi eq, %arg0, %c0_i32 : i32
    %1 = arith.extui %0 : i1 to i32
    %c0_i32_0 = arith.constant 0 : i32
    %2 = arith.cmpi ne, %1, %c0_i32_0 : i32
    scf.if %2 {
      %cst_11 = arith.constant 0.000000e+00 : f32
      %15 = vector.broadcast %cst_11 : f32 to vector<1x128xf32>
      %c0_12 = arith.constant 0 : index
      %c0_13 = arith.constant 0 : index
      %16 = vector.load %arg2[%c0_12, %c0_13] : memref<1x128xf32, #tpu.memory_space<vmem>>, vector<1x128xf32>
      tpu.vector_store %arg2[%c0_12, %c0_13], %15 {strides = array<i32>} : memref<1x128xf32, #tpu.memory_space<vmem>>, vector<1x128xf32>,
      %cst_14 = arith.constant 0.000000e+00 : f32
      %17 = vector.broadcast %cst_14 : f32 to vector<1x128xf32>
      %c0_15 = arith.constant 0 : index
      %c0_16 = arith.constant 0 : index
      %18 = vector.load %arg3[%c0_15, %c0_16] : memref<1x128xf32, #tpu.memory_space<vmem>>, vector<1x128xf32>
      tpu.vector_store %arg3[%c0_15, %c0_16], %17 {strides = array<i32>} : memref<1x128xf32, #tpu.memory_space<vmem>>, vector<1x128xf32>,
    } else {
    }
    %c0 = arith.constant 0 : index
    %c0_1 = arith.constant 0 : index
    %3 = vector.load %arg1[%c0, %c0_1] : memref<64x128xf32, #tpu.memory_space<vmem>>, vector<64x128xf32>
    %c0_2 = arith.constant 0 : index
    %c0_3 = arith.constant 0 : index
    %4 = vector.load %arg2[%c0_2, %c0_3] : memref<1x128xf32, #tpu.memory_space<vmem>>, vector<1x128xf32>
    %cst = arith.constant dense<0.000000e+00> : vector<128xf32>
    %5 = vector.multi_reduction <add>, %3, %cst [0] : vector<64x128xf32> to vector<128xf32>
    %6 = vector.shape_cast %5 : vector<128xf32> to vector<1x128xf32>
    %7 = arith.addf %4, %6 : vector<1x128xf32>
    %c0_4 = arith.constant 0 : index
    %c0_5 = arith.constant 0 : index
    %8 = vector.load %arg2[%c0_4, %c0_5] : memref<1x128xf32, #tpu.memory_space<vmem>>, vector<1x128xf32>
    tpu.vector_store %arg2[%c0_4, %c0_5], %7 {strides = array<i32>} : memref<1x128xf32, #tpu.memory_space<vmem>>, vector<1x128xf32>,
    %c0_6 = arith.constant 0 : index
    %c0_7 = arith.constant 0 : index
    %9 = vector.load %arg3[%c0_6, %c0_7] : memref<1x128xf32, #tpu.memory_space<vmem>>, vector<1x128xf32>
    %10 = arith.mulf %3, %3 : vector<64x128xf32>
    %cst_8 = arith.constant dense<0.000000e+00> : vector<128xf32>
    %11 = vector.multi_reduction <add>, %10, %cst_8 [0] : vector<64x128xf32> to vector<128xf32>
    %12 = vector.shape_cast %11 : vector<128xf32> to vector<1x128xf32>
    %13 = arith.addf %9, %12 : vector<1x128xf32>
    %c0_9 = arith.constant 0 : index
    %c0_10 = arith.constant 0 : index
    %14 = vector.load %arg3[%c0_9, %c0_10] : memref<1x128xf32, #tpu.memory_space<vmem>>, vector<1x128xf32>
    tpu.vector_store %arg3[%c0_9, %c0_10], %13 {strides = array<i32>} : memref<1x128xf32, #tpu.memory_space<vmem>>, vector<1x128xf32>,
    return
  }
  func.func @transform_0(%arg0: i32) -> (i32, i32) {
    %c0_i32 = arith.constant 0 : i32
    %c0_i32_0 = arith.constant 0 : i32
    return %arg0, %c0_i32 : i32, i32
  }
  func.func @transform_1(%arg0: i32) -> (i32, i32) {
    %c0_i32 = arith.constant 0 : i32
    %c0_i32_0 = arith.constant 0 : i32
    %c0_i32_1 = arith.constant 0 : i32
    return %c0_i32, %c0_i32_0 : i32, i32
  }
  func.func @transform_2(%arg0: i32) -> (i32, i32) {
    %c0_i32 = arith.constant 0 : i32
    %c0_i32_0 = arith.constant 0 : i32
    %c0_i32_1 = arith.constant 0 : i32
    return %c0_i32, %c0_i32_0 : i32, i32
  }
}

module attributes {stable_mosaic.version = 11 : i64} {
  func.func @_bn_norm_res_kernel(%arg0: i32, %arg1: memref<64x128xf32, #tpu.memory_space<vmem>>, %arg2: memref<1x128xf32, #tpu.memory_space<vmem>>, %arg3: memref<1x128xf32, #tpu.memory_space<vmem>>, %arg4: memref<64x128xf32, #tpu.memory_space<vmem>>, %arg5: memref<64x128xf32, #tpu.memory_space<vmem>>) attributes {dimension_semantics = [#tpu.dimension_semantics<parallel>], iteration_bounds = array<i64: 1>, scalar_prefetch = 0 : i64, scratch_operands = 0 : i64, tpu.core_type = #tpu.core_type<tc>, window_params = [{transform_indices = @transform_0, window_bounds = array<i64: 64, 128>}, {pipeline_mode = #tpu.pipeline_mode<synchronous>, transform_indices = @transform_1, window_bounds = array<i64: 1, 128>}, {pipeline_mode = #tpu.pipeline_mode<synchronous>, transform_indices = @transform_2, window_bounds = array<i64: 1, 128>}, {transform_indices = @transform_3, window_bounds = array<i64: 64, 128>}, {transform_indices = @transform_4, window_bounds = array<i64: 64, 128>}]} {
    %c0 = arith.constant 0 : index
    %c0_0 = arith.constant 0 : index
    %0 = vector.load %arg1[%c0, %c0_0] : memref<64x128xf32, #tpu.memory_space<vmem>>, vector<64x128xf32>
    %c0_1 = arith.constant 0 : index
    %c0_2 = arith.constant 0 : index
    %1 = vector.load %arg2[%c0_1, %c0_2] : memref<1x128xf32, #tpu.memory_space<vmem>>, vector<1x128xf32>
    %2 = vector.broadcast %1 : vector<1x128xf32> to vector<64x128xf32>
    %3 = arith.mulf %0, %2 : vector<64x128xf32>
    %c0_3 = arith.constant 0 : index
    %c0_4 = arith.constant 0 : index
    %4 = vector.load %arg3[%c0_3, %c0_4] : memref<1x128xf32, #tpu.memory_space<vmem>>, vector<1x128xf32>
    %5 = vector.broadcast %4 : vector<1x128xf32> to vector<64x128xf32>
    %6 = arith.addf %3, %5 : vector<64x128xf32>
    %c0_5 = arith.constant 0 : index
    %c0_6 = arith.constant 0 : index
    %7 = vector.load %arg4[%c0_5, %c0_6] : memref<64x128xf32, #tpu.memory_space<vmem>>, vector<64x128xf32>
    %8 = arith.addf %6, %7 : vector<64x128xf32>
    %cst = arith.constant 0.000000e+00 : f32
    %9 = vector.broadcast %cst : f32 to vector<64x128xf32>
    %10 = arith.maximumf %8, %9 : vector<64x128xf32>
    %c0_7 = arith.constant 0 : index
    %c0_8 = arith.constant 0 : index
    %11 = vector.load %arg5[%c0_7, %c0_8] : memref<64x128xf32, #tpu.memory_space<vmem>>, vector<64x128xf32>
    tpu.vector_store %arg5[%c0_7, %c0_8], %10 {strides = array<i32>} : memref<64x128xf32, #tpu.memory_space<vmem>>, vector<64x128xf32>,
    return
  }
  func.func @transform_0(%arg0: i32) -> (i32, i32) {
    %c0_i32 = arith.constant 0 : i32
    %c0_i32_0 = arith.constant 0 : i32
    return %arg0, %c0_i32 : i32, i32
  }
  func.func @transform_1(%arg0: i32) -> (i32, i32) {
    %c0_i32 = arith.constant 0 : i32
    %c0_i32_0 = arith.constant 0 : i32
    %c0_i32_1 = arith.constant 0 : i32
    return %c0_i32, %c0_i32_0 : i32, i32
  }
  func.func @transform_2(%arg0: i32) -> (i32, i32) {
    %c0_i32 = arith.constant 0 : i32
    %c0_i32_0 = arith.constant 0 : i32
    %c0_i32_1 = arith.constant 0 : i32
    return %c0_i32, %c0_i32_0 : i32, i32
  }
  func.func @transform_3(%arg0: i32) -> (i32, i32) {
    %c0_i32 = arith.constant 0 : i32
    %c0_i32_0 = arith.constant 0 : i32
    return %arg0, %c0_i32 : i32, i32
  }
  func.func @transform_4(%arg0: i32) -> (i32, i32) {
    %c0_i32 = arith.constant 0 : i32
    %c0_i32_0 = arith.constant 0 : i32
    return %arg0, %c0_i32 : i32, i32
  }
}

module attributes {stable_mosaic.version = 11 : i64} {
  func.func @_matmul_kernel_single(%arg0: i32, %arg1: i32, %arg2: memref<32x64xbf16, #tpu.memory_space<vmem>>, %arg3: memref<64x128xbf16, #tpu.memory_space<vmem>>, %arg4: memref<32x128xf32, #tpu.memory_space<vmem>>) attributes {dimension_semantics = [#tpu.dimension_semantics<parallel>, #tpu.dimension_semantics<parallel>], iteration_bounds = array<i64: 1, 1>, scalar_prefetch = 0 : i64, scratch_operands = 0 : i64, tpu.core_type = #tpu.core_type<tc>, window_params = [{transform_indices = @transform_0, window_bounds = array<i64: 32, 64>}, {transform_indices = @transform_1, window_bounds = array<i64: 64, 128>}, {transform_indices = @transform_2, window_bounds = array<i64: 32, 128>}]} {
    %c0 = arith.constant 0 : index
    %c0_0 = arith.constant 0 : index
    %0 = vector.load %arg2[%c0, %c0_0] : memref<32x64xbf16, #tpu.memory_space<vmem>>, vector<32x64xbf16>
    %c0_1 = arith.constant 0 : index
    %c0_2 = arith.constant 0 : index
    %1 = vector.load %arg3[%c0_1, %c0_2] : memref<64x128xbf16, #tpu.memory_space<vmem>>, vector<64x128xbf16>
    %cst = arith.constant dense<0.000000e+00> : vector<32x128xf32>
    %2 = tpu.matmul %0, %1, %cst {dimension_numbers = #tpu.dot_dimension_numbers<[1], [0], [0], [1], [0, 0, 1, 1], [], []>} : vector<32x64xbf16>, vector<64x128xbf16>, vector<32x128xf32> -> vector<32x128xf32>
    %c0_3 = arith.constant 0 : index
    %c0_4 = arith.constant 0 : index
    %3 = vector.load %arg4[%c0_3, %c0_4] : memref<32x128xf32, #tpu.memory_space<vmem>>, vector<32x128xf32>
    tpu.vector_store %arg4[%c0_3, %c0_4], %2 {strides = array<i32>} : memref<32x128xf32, #tpu.memory_space<vmem>>, vector<32x128xf32>,
    return
  }
  func.func @transform_0(%arg0: i32, %arg1: i32) -> (i32, i32) {
    %c0_i32 = arith.constant 0 : i32
    %c0_i32_0 = arith.constant 0 : i32
    return %arg0, %c0_i32 : i32, i32
  }
  func.func @transform_1(%arg0: i32, %arg1: i32) -> (i32, i32) {
    %c0_i32 = arith.constant 0 : i32
    %c0_i32_0 = arith.constant 0 : i32
    return %c0_i32, %arg1 : i32, i32
  }
  func.func @transform_2(%arg0: i32, %arg1: i32) -> (i32, i32) {
    %c0_i32 = arith.constant 0 : i32
    return %arg0, %arg1 : i32, i32
  }
}

module attributes {stable_mosaic.version = 11 : i64} {
  func.func @_bn_stats_kernel(%arg0: i32, %arg1: memref<32x128xf32, #tpu.memory_space<vmem>>, %arg2: memref<1x128xf32, #tpu.memory_space<vmem>>, %arg3: memref<1x128xf32, #tpu.memory_space<vmem>>) attributes {dimension_semantics = [#tpu.dimension_semantics<arbitrary>], iteration_bounds = array<i64: 1>, scalar_prefetch = 0 : i64, scratch_operands = 0 : i64, tpu.core_type = #tpu.core_type<tc>, window_params = [{transform_indices = @transform_0, window_bounds = array<i64: 32, 128>}, {pipeline_mode = #tpu.pipeline_mode<synchronous>, transform_indices = @transform_1, window_bounds = array<i64: 1, 128>}, {pipeline_mode = #tpu.pipeline_mode<synchronous>, transform_indices = @transform_2, window_bounds = array<i64: 1, 128>}]} {
    %c0_i32 = arith.constant 0 : i32
    %0 = arith.cmpi eq, %arg0, %c0_i32 : i32
    %1 = arith.extui %0 : i1 to i32
    %c0_i32_0 = arith.constant 0 : i32
    %2 = arith.cmpi ne, %1, %c0_i32_0 : i32
    scf.if %2 {
      %cst_11 = arith.constant 0.000000e+00 : f32
      %15 = vector.broadcast %cst_11 : f32 to vector<1x128xf32>
      %c0_12 = arith.constant 0 : index
      %c0_13 = arith.constant 0 : index
      %16 = vector.load %arg2[%c0_12, %c0_13] : memref<1x128xf32, #tpu.memory_space<vmem>>, vector<1x128xf32>
      tpu.vector_store %arg2[%c0_12, %c0_13], %15 {strides = array<i32>} : memref<1x128xf32, #tpu.memory_space<vmem>>, vector<1x128xf32>,
      %cst_14 = arith.constant 0.000000e+00 : f32
      %17 = vector.broadcast %cst_14 : f32 to vector<1x128xf32>
      %c0_15 = arith.constant 0 : index
      %c0_16 = arith.constant 0 : index
      %18 = vector.load %arg3[%c0_15, %c0_16] : memref<1x128xf32, #tpu.memory_space<vmem>>, vector<1x128xf32>
      tpu.vector_store %arg3[%c0_15, %c0_16], %17 {strides = array<i32>} : memref<1x128xf32, #tpu.memory_space<vmem>>, vector<1x128xf32>,
    } else {
    }
    %c0 = arith.constant 0 : index
    %c0_1 = arith.constant 0 : index
    %3 = vector.load %arg1[%c0, %c0_1] : memref<32x128xf32, #tpu.memory_space<vmem>>, vector<32x128xf32>
    %c0_2 = arith.constant 0 : index
    %c0_3 = arith.constant 0 : index
    %4 = vector.load %arg2[%c0_2, %c0_3] : memref<1x128xf32, #tpu.memory_space<vmem>>, vector<1x128xf32>
    %cst = arith.constant dense<0.000000e+00> : vector<128xf32>
    %5 = vector.multi_reduction <add>, %3, %cst [0] : vector<32x128xf32> to vector<128xf32>
    %6 = vector.shape_cast %5 : vector<128xf32> to vector<1x128xf32>
    %7 = arith.addf %4, %6 : vector<1x128xf32>
    %c0_4 = arith.constant 0 : index
    %c0_5 = arith.constant 0 : index
    %8 = vector.load %arg2[%c0_4, %c0_5] : memref<1x128xf32, #tpu.memory_space<vmem>>, vector<1x128xf32>
    tpu.vector_store %arg2[%c0_4, %c0_5], %7 {strides = array<i32>} : memref<1x128xf32, #tpu.memory_space<vmem>>, vector<1x128xf32>,
    %c0_6 = arith.constant 0 : index
    %c0_7 = arith.constant 0 : index
    %9 = vector.load %arg3[%c0_6, %c0_7] : memref<1x128xf32, #tpu.memory_space<vmem>>, vector<1x128xf32>
    %10 = arith.mulf %3, %3 : vector<32x128xf32>
    %cst_8 = arith.constant dense<0.000000e+00> : vector<128xf32>
    %11 = vector.multi_reduction <add>, %10, %cst_8 [0] : vector<32x128xf32> to vector<128xf32>
    %12 = vector.shape_cast %11 : vector<128xf32> to vector<1x128xf32>
    %13 = arith.addf %9, %12 : vector<1x128xf32>
    %c0_9 = arith.constant 0 : index
    %c0_10 = arith.constant 0 : index
    %14 = vector.load %arg3[%c0_9, %c0_10] : memref<1x128xf32, #tpu.memory_space<vmem>>, vector<1x128xf32>
    tpu.vector_store %arg3[%c0_9, %c0_10], %13 {strides = array<i32>} : memref<1x128xf32, #tpu.memory_space<vmem>>, vector<1x128xf32>,
    return
  }
  func.func @transform_0(%arg0: i32) -> (i32, i32) {
    %c0_i32 = arith.constant 0 : i32
    %c0_i32_0 = arith.constant 0 : i32
    return %arg0, %c0_i32 : i32, i32
  }
  func.func @transform_1(%arg0: i32) -> (i32, i32) {
    %c0_i32 = arith.constant 0 : i32
    %c0_i32_0 = arith.constant 0 : i32
    %c0_i32_1 = arith.constant 0 : i32
    return %c0_i32, %c0_i32_0 : i32, i32
  }
  func.func @transform_2(%arg0: i32) -> (i32, i32) {
    %c0_i32 = arith.constant 0 : i32
    %c0_i32_0 = arith.constant 0 : i32
    %c0_i32_1 = arith.constant 0 : i32
    return %c0_i32, %c0_i32_0 : i32, i32
  }
}

module attributes {stable_mosaic.version = 11 : i64} {
  func.func @_bn_norm_kernel(%arg0: i32, %arg1: memref<32x128xf32, #tpu.memory_space<vmem>>, %arg2: memref<1x128xf32, #tpu.memory_space<vmem>>, %arg3: memref<1x128xf32, #tpu.memory_space<vmem>>, %arg4: memref<32x128xf32, #tpu.memory_space<vmem>>) attributes {dimension_semantics = [#tpu.dimension_semantics<parallel>], iteration_bounds = array<i64: 1>, scalar_prefetch = 0 : i64, scratch_operands = 0 : i64, tpu.core_type = #tpu.core_type<tc>, window_params = [{transform_indices = @transform_0, window_bounds = array<i64: 32, 128>}, {pipeline_mode = #tpu.pipeline_mode<synchronous>, transform_indices = @transform_1, window_bounds = array<i64: 1, 128>}, {pipeline_mode = #tpu.pipeline_mode<synchronous>, transform_indices = @transform_2, window_bounds = array<i64: 1, 128>}, {transform_indices = @transform_3, window_bounds = array<i64: 32, 128>}]} {
    %c0 = arith.constant 0 : index
    %c0_0 = arith.constant 0 : index
    %0 = vector.load %arg1[%c0, %c0_0] : memref<32x128xf32, #tpu.memory_space<vmem>>, vector<32x128xf32>
    %c0_1 = arith.constant 0 : index
    %c0_2 = arith.constant 0 : index
    %1 = vector.load %arg2[%c0_1, %c0_2] : memref<1x128xf32, #tpu.memory_space<vmem>>, vector<1x128xf32>
    %2 = vector.broadcast %1 : vector<1x128xf32> to vector<32x128xf32>
    %3 = arith.mulf %0, %2 : vector<32x128xf32>
    %c0_3 = arith.constant 0 : index
    %c0_4 = arith.constant 0 : index
    %4 = vector.load %arg3[%c0_3, %c0_4] : memref<1x128xf32, #tpu.memory_space<vmem>>, vector<1x128xf32>
    %5 = vector.broadcast %4 : vector<1x128xf32> to vector<32x128xf32>
    %6 = arith.addf %3, %5 : vector<32x128xf32>
    %c0_5 = arith.constant 0 : index
    %c0_6 = arith.constant 0 : index
    %7 = vector.load %arg4[%c0_5, %c0_6] : memref<32x128xf32, #tpu.memory_space<vmem>>, vector<32x128xf32>
    tpu.vector_store %arg4[%c0_5, %c0_6], %6 {strides = array<i32>} : memref<32x128xf32, #tpu.memory_space<vmem>>, vector<32x128xf32>,
    return
  }
  func.func @transform_0(%arg0: i32) -> (i32, i32) {
    %c0_i32 = arith.constant 0 : i32
    %c0_i32_0 = arith.constant 0 : i32
    return %arg0, %c0_i32 : i32, i32
  }
  func.func @transform_1(%arg0: i32) -> (i32, i32) {
    %c0_i32 = arith.constant 0 : i32
    %c0_i32_0 = arith.constant 0 : i32
    %c0_i32_1 = arith.constant 0 : i32
    return %c0_i32, %c0_i32_0 : i32, i32
  }
  func.func @transform_2(%arg0: i32) -> (i32, i32) {
    %c0_i32 = arith.constant 0 : i32
    %c0_i32_0 = arith.constant 0 : i32
    %c0_i32_1 = arith.constant 0 : i32
    return %c0_i32, %c0_i32_0 : i32, i32
  }
  func.func @transform_3(%arg0: i32) -> (i32, i32) {
    %c0_i32 = arith.constant 0 : i32
    %c0_i32_0 = arith.constant 0 : i32
    return %arg0, %c0_i32 : i32, i32
  }
}

module attributes {stable_mosaic.version = 11 : i64} {
  func.func @_matmul_kernel_single(%arg0: i32, %arg1: i32, %arg2: memref<32x576xbf16, #tpu.memory_space<vmem>>, %arg3: memref<576x128xbf16, #tpu.memory_space<vmem>>, %arg4: memref<32x128xf32, #tpu.memory_space<vmem>>) attributes {dimension_semantics = [#tpu.dimension_semantics<parallel>, #tpu.dimension_semantics<parallel>], iteration_bounds = array<i64: 1, 1>, scalar_prefetch = 0 : i64, scratch_operands = 0 : i64, tpu.core_type = #tpu.core_type<tc>, window_params = [{transform_indices = @transform_0, window_bounds = array<i64: 32, 576>}, {transform_indices = @transform_1, window_bounds = array<i64: 576, 128>}, {transform_indices = @transform_2, window_bounds = array<i64: 32, 128>}]} {
    %c0 = arith.constant 0 : index
    %c0_0 = arith.constant 0 : index
    %0 = vector.load %arg2[%c0, %c0_0] : memref<32x576xbf16, #tpu.memory_space<vmem>>, vector<32x576xbf16>
    %c0_1 = arith.constant 0 : index
    %c0_2 = arith.constant 0 : index
    %1 = vector.load %arg3[%c0_1, %c0_2] : memref<576x128xbf16, #tpu.memory_space<vmem>>, vector<576x128xbf16>
    %cst = arith.constant dense<0.000000e+00> : vector<32x128xf32>
    %2 = tpu.matmul %0, %1, %cst {dimension_numbers = #tpu.dot_dimension_numbers<[1], [0], [0], [1], [0, 0, 1, 1], [], []>} : vector<32x576xbf16>, vector<576x128xbf16>, vector<32x128xf32> -> vector<32x128xf32>
    %c0_3 = arith.constant 0 : index
    %c0_4 = arith.constant 0 : index
    %3 = vector.load %arg4[%c0_3, %c0_4] : memref<32x128xf32, #tpu.memory_space<vmem>>, vector<32x128xf32>
    tpu.vector_store %arg4[%c0_3, %c0_4], %2 {strides = array<i32>} : memref<32x128xf32, #tpu.memory_space<vmem>>, vector<32x128xf32>,
    return
  }
  func.func @transform_0(%arg0: i32, %arg1: i32) -> (i32, i32) {
    %c0_i32 = arith.constant 0 : i32
    %c0_i32_0 = arith.constant 0 : i32
    return %arg0, %c0_i32 : i32, i32
  }
  func.func @transform_1(%arg0: i32, %arg1: i32) -> (i32, i32) {
    %c0_i32 = arith.constant 0 : i32
    %c0_i32_0 = arith.constant 0 : i32
    return %c0_i32, %arg1 : i32, i32
  }
  func.func @transform_2(%arg0: i32, %arg1: i32) -> (i32, i32) {
    %c0_i32 = arith.constant 0 : i32
    return %arg0, %arg1 : i32, i32
  }
}

module attributes {stable_mosaic.version = 11 : i64} {
  func.func @_bn_norm_kernel(%arg0: i32, %arg1: memref<32x128xf32, #tpu.memory_space<vmem>>, %arg2: memref<1x128xf32, #tpu.memory_space<vmem>>, %arg3: memref<1x128xf32, #tpu.memory_space<vmem>>, %arg4: memref<32x128xf32, #tpu.memory_space<vmem>>) attributes {dimension_semantics = [#tpu.dimension_semantics<parallel>], iteration_bounds = array<i64: 1>, scalar_prefetch = 0 : i64, scratch_operands = 0 : i64, tpu.core_type = #tpu.core_type<tc>, window_params = [{transform_indices = @transform_0, window_bounds = array<i64: 32, 128>}, {pipeline_mode = #tpu.pipeline_mode<synchronous>, transform_indices = @transform_1, window_bounds = array<i64: 1, 128>}, {pipeline_mode = #tpu.pipeline_mode<synchronous>, transform_indices = @transform_2, window_bounds = array<i64: 1, 128>}, {transform_indices = @transform_3, window_bounds = array<i64: 32, 128>}]} {
    %c0 = arith.constant 0 : index
    %c0_0 = arith.constant 0 : index
    %0 = vector.load %arg1[%c0, %c0_0] : memref<32x128xf32, #tpu.memory_space<vmem>>, vector<32x128xf32>
    %c0_1 = arith.constant 0 : index
    %c0_2 = arith.constant 0 : index
    %1 = vector.load %arg2[%c0_1, %c0_2] : memref<1x128xf32, #tpu.memory_space<vmem>>, vector<1x128xf32>
    %2 = vector.broadcast %1 : vector<1x128xf32> to vector<32x128xf32>
    %3 = arith.mulf %0, %2 : vector<32x128xf32>
    %c0_3 = arith.constant 0 : index
    %c0_4 = arith.constant 0 : index
    %4 = vector.load %arg3[%c0_3, %c0_4] : memref<1x128xf32, #tpu.memory_space<vmem>>, vector<1x128xf32>
    %5 = vector.broadcast %4 : vector<1x128xf32> to vector<32x128xf32>
    %6 = arith.addf %3, %5 : vector<32x128xf32>
    %cst = arith.constant 0.000000e+00 : f32
    %7 = vector.broadcast %cst : f32 to vector<32x128xf32>
    %8 = arith.maximumf %6, %7 : vector<32x128xf32>
    %c0_5 = arith.constant 0 : index
    %c0_6 = arith.constant 0 : index
    %9 = vector.load %arg4[%c0_5, %c0_6] : memref<32x128xf32, #tpu.memory_space<vmem>>, vector<32x128xf32>
    tpu.vector_store %arg4[%c0_5, %c0_6], %8 {strides = array<i32>} : memref<32x128xf32, #tpu.memory_space<vmem>>, vector<32x128xf32>,
    return
  }
  func.func @transform_0(%arg0: i32) -> (i32, i32) {
    %c0_i32 = arith.constant 0 : i32
    %c0_i32_0 = arith.constant 0 : i32
    return %arg0, %c0_i32 : i32, i32
  }
  func.func @transform_1(%arg0: i32) -> (i32, i32) {
    %c0_i32 = arith.constant 0 : i32
    %c0_i32_0 = arith.constant 0 : i32
    %c0_i32_1 = arith.constant 0 : i32
    return %c0_i32, %c0_i32_0 : i32, i32
  }
  func.func @transform_2(%arg0: i32) -> (i32, i32) {
    %c0_i32 = arith.constant 0 : i32
    %c0_i32_0 = arith.constant 0 : i32
    %c0_i32_1 = arith.constant 0 : i32
    return %c0_i32, %c0_i32_0 : i32, i32
  }
  func.func @transform_3(%arg0: i32) -> (i32, i32) {
    %c0_i32 = arith.constant 0 : i32
    %c0_i32_0 = arith.constant 0 : i32
    return %arg0, %c0_i32 : i32, i32
  }
}

module attributes {stable_mosaic.version = 11 : i64} {
  func.func @_matmul_kernel_multi(%arg0: i32, %arg1: i32, %arg2: i32, %arg3: memref<32x384xbf16, #tpu.memory_space<vmem>>, %arg4: memref<384x128xbf16, #tpu.memory_space<vmem>>, %arg5: memref<32x128xf32, #tpu.memory_space<vmem>>, %arg6: memref<32x128xf32, #tpu.memory_space<vmem>>) attributes {dimension_semantics = [#tpu.dimension_semantics<parallel>, #tpu.dimension_semantics<parallel>, #tpu.dimension_semantics<arbitrary>], iteration_bounds = array<i64: 1, 1, 3>, scalar_prefetch = 0 : i64, scratch_operands = 1 : i64, tpu.core_type = #tpu.core_type<tc>, window_params = [{transform_indices = @transform_0, window_bounds = array<i64: 32, 384>}, {transform_indices = @transform_1, window_bounds = array<i64: 384, 128>}, {transform_indices = @transform_2, window_bounds = array<i64: 32, 128>}]} {
    %c0_i32 = arith.constant 0 : i32
    %0 = arith.cmpi eq, %arg2, %c0_i32 : i32
    %1 = arith.extui %0 : i1 to i32
    %c0_i32_0 = arith.constant 0 : i32
    %2 = arith.cmpi ne, %1, %c0_i32_0 : i32
    scf.if %2 {
      %cst_9 = arith.constant 0.000000e+00 : f32
      %12 = vector.broadcast %cst_9 : f32 to vector<32x128xf32>
      %c0_10 = arith.constant 0 : index
      %c0_11 = arith.constant 0 : index
      %13 = vector.load %arg6[%c0_10, %c0_11] : memref<32x128xf32, #tpu.memory_space<vmem>>, vector<32x128xf32>
      tpu.vector_store %arg6[%c0_10, %c0_11], %12 {strides = array<i32>} : memref<32x128xf32, #tpu.memory_space<vmem>>, vector<32x128xf32>,
    } else {
    }
    %c0 = arith.constant 0 : index
    %c0_1 = arith.constant 0 : index
    %3 = vector.load %arg6[%c0, %c0_1] : memref<32x128xf32, #tpu.memory_space<vmem>>, vector<32x128xf32>
    %c0_2 = arith.constant 0 : index
    %c0_3 = arith.constant 0 : index
    %4 = vector.load %arg3[%c0_2, %c0_3] : memref<32x384xbf16, #tpu.memory_space<vmem>>, vector<32x384xbf16>
    %c0_4 = arith.constant 0 : index
    %c0_5 = arith.constant 0 : index
    %5 = vector.load %arg4[%c0_4, %c0_5] : memref<384x128xbf16, #tpu.memory_space<vmem>>, vector<384x128xbf16>
    %cst = arith.constant dense<0.000000e+00> : vector<32x128xf32>
    %6 = tpu.matmul %4, %5, %cst {dimension_numbers = #tpu.dot_dimension_numbers<[1], [0], [0], [1], [0, 0, 1, 1], [], []>} : vector<32x384xbf16>, vector<384x128xbf16>, vector<32x128xf32> -> vector<32x128xf32>
    %7 = arith.addf %3, %6 : vector<32x128xf32>
    %c0_6 = arith.constant 0 : index
    %c0_7 = arith.constant 0 : index
    %8 = vector.load %arg6[%c0_6, %c0_7] : memref<32x128xf32, #tpu.memory_space<vmem>>, vector<32x128xf32>
    tpu.vector_store %arg6[%c0_6, %c0_7], %7 {strides = array<i32>} : memref<32x128xf32, #tpu.memory_space<vmem>>, vector<32x128xf32>,
    %c2_i32 = arith.constant 2 : i32
    %9 = arith.cmpi eq, %arg2, %c2_i32 : i32
    %10 = arith.extui %9 : i1 to i32
    %c0_i32_8 = arith.constant 0 : i32
    %11 = arith.cmpi ne, %10, %c0_i32_8 : i32
    scf.if %11 {
      %c0_9 = arith.constant 0 : index
      %c0_10 = arith.constant 0 : index
      %12 = vector.load %arg6[%c0_9, %c0_10] : memref<32x128xf32, #tpu.memory_space<vmem>>, vector<32x128xf32>
      %c0_11 = arith.constant 0 : index
      %c0_12 = arith.constant 0 : index
      %13 = vector.load %arg5[%c0_11, %c0_12] : memref<32x128xf32, #tpu.memory_space<vmem>>, vector<32x128xf32>
      tpu.vector_store %arg5[%c0_11, %c0_12], %12 {strides = array<i32>} : memref<32x128xf32, #tpu.memory_space<vmem>>, vector<32x128xf32>,
    } else {
    }
    return
  }
  func.func @transform_0(%arg0: i32, %arg1: i32, %arg2: i32) -> (i32, i32) {
    %c0_i32 = arith.constant 0 : i32
    return %arg0, %arg2 : i32, i32
  }
  func.func @transform_1(%arg0: i32, %arg1: i32, %arg2: i32) -> (i32, i32) {
    %c0_i32 = arith.constant 0 : i32
    return %arg2, %arg1 : i32, i32
  }
  func.func @transform_2(%arg0: i32, %arg1: i32, %arg2: i32) -> (i32, i32) {
    %c0_i32 = arith.constant 0 : i32
    return %arg0, %arg1 : i32, i32
  }
}

module attributes {stable_mosaic.version = 11 : i64} {
  func.func @_bn_norm_res_kernel(%arg0: i32, %arg1: memref<32x128xf32, #tpu.memory_space<vmem>>, %arg2: memref<1x128xf32, #tpu.memory_space<vmem>>, %arg3: memref<1x128xf32, #tpu.memory_space<vmem>>, %arg4: memref<32x128xf32, #tpu.memory_space<vmem>>, %arg5: memref<32x128xf32, #tpu.memory_space<vmem>>) attributes {dimension_semantics = [#tpu.dimension_semantics<parallel>], iteration_bounds = array<i64: 1>, scalar_prefetch = 0 : i64, scratch_operands = 0 : i64, tpu.core_type = #tpu.core_type<tc>, window_params = [{transform_indices = @transform_0, window_bounds = array<i64: 32, 128>}, {pipeline_mode = #tpu.pipeline_mode<synchronous>, transform_indices = @transform_1, window_bounds = array<i64: 1, 128>}, {pipeline_mode = #tpu.pipeline_mode<synchronous>, transform_indices = @transform_2, window_bounds = array<i64: 1, 128>}, {transform_indices = @transform_3, window_bounds = array<i64: 32, 128>}, {transform_indices = @transform_4, window_bounds = array<i64: 32, 128>}]} {
    %c0 = arith.constant 0 : index
    %c0_0 = arith.constant 0 : index
    %0 = vector.load %arg1[%c0, %c0_0] : memref<32x128xf32, #tpu.memory_space<vmem>>, vector<32x128xf32>
    %c0_1 = arith.constant 0 : index
    %c0_2 = arith.constant 0 : index
    %1 = vector.load %arg2[%c0_1, %c0_2] : memref<1x128xf32, #tpu.memory_space<vmem>>, vector<1x128xf32>
    %2 = vector.broadcast %1 : vector<1x128xf32> to vector<32x128xf32>
    %3 = arith.mulf %0, %2 : vector<32x128xf32>
    %c0_3 = arith.constant 0 : index
    %c0_4 = arith.constant 0 : index
    %4 = vector.load %arg3[%c0_3, %c0_4] : memref<1x128xf32, #tpu.memory_space<vmem>>, vector<1x128xf32>
    %5 = vector.broadcast %4 : vector<1x128xf32> to vector<32x128xf32>
    %6 = arith.addf %3, %5 : vector<32x128xf32>
    %c0_5 = arith.constant 0 : index
    %c0_6 = arith.constant 0 : index
    %7 = vector.load %arg4[%c0_5, %c0_6] : memref<32x128xf32, #tpu.memory_space<vmem>>, vector<32x128xf32>
    %8 = arith.addf %6, %7 : vector<32x128xf32>
    %cst = arith.constant 0.000000e+00 : f32
    %9 = vector.broadcast %cst : f32 to vector<32x128xf32>
    %10 = arith.maximumf %8, %9 : vector<32x128xf32>
    %c0_7 = arith.constant 0 : index
    %c0_8 = arith.constant 0 : index
    %11 = vector.load %arg5[%c0_7, %c0_8] : memref<32x128xf32, #tpu.memory_space<vmem>>, vector<32x128xf32>
    tpu.vector_store %arg5[%c0_7, %c0_8], %10 {strides = array<i32>} : memref<32x128xf32, #tpu.memory_space<vmem>>, vector<32x128xf32>,
    return
  }
  func.func @transform_0(%arg0: i32) -> (i32, i32) {
    %c0_i32 = arith.constant 0 : i32
    %c0_i32_0 = arith.constant 0 : i32
    return %arg0, %c0_i32 : i32, i32
  }
  func.func @transform_1(%arg0: i32) -> (i32, i32) {
    %c0_i32 = arith.constant 0 : i32
    %c0_i32_0 = arith.constant 0 : i32
    %c0_i32_1 = arith.constant 0 : i32
    return %c0_i32, %c0_i32_0 : i32, i32
  }
  func.func @transform_2(%arg0: i32) -> (i32, i32) {
    %c0_i32 = arith.constant 0 : i32
    %c0_i32_0 = arith.constant 0 : i32
    %c0_i32_1 = arith.constant 0 : i32
    return %c0_i32, %c0_i32_0 : i32, i32
  }
  func.func @transform_3(%arg0: i32) -> (i32, i32) {
    %c0_i32 = arith.constant 0 : i32
    %c0_i32_0 = arith.constant 0 : i32
    return %arg0, %c0_i32 : i32, i32
  }
  func.func @transform_4(%arg0: i32) -> (i32, i32) {
    %c0_i32 = arith.constant 0 : i32
    %c0_i32_0 = arith.constant 0 : i32
    return %arg0, %c0_i32 : i32, i32
  }
}

module attributes {stable_mosaic.version = 11 : i64} {
  func.func @_matmul_kernel_single(%arg0: i32, %arg1: i32, %arg2: memref<8x128xbf16, #tpu.memory_space<vmem>>, %arg3: memref<128x256xbf16, #tpu.memory_space<vmem>>, %arg4: memref<8x256xf32, #tpu.memory_space<vmem>>) attributes {dimension_semantics = [#tpu.dimension_semantics<parallel>, #tpu.dimension_semantics<parallel>], iteration_bounds = array<i64: 1, 1>, scalar_prefetch = 0 : i64, scratch_operands = 0 : i64, tpu.core_type = #tpu.core_type<tc>, window_params = [{transform_indices = @transform_0, window_bounds = array<i64: 8, 128>}, {transform_indices = @transform_1, window_bounds = array<i64: 128, 256>}, {transform_indices = @transform_2, window_bounds = array<i64: 8, 256>}]} {
    %c0 = arith.constant 0 : index
    %c0_0 = arith.constant 0 : index
    %0 = vector.load %arg2[%c0, %c0_0] : memref<8x128xbf16, #tpu.memory_space<vmem>>, vector<8x128xbf16>
    %c0_1 = arith.constant 0 : index
    %c0_2 = arith.constant 0 : index
    %1 = vector.load %arg3[%c0_1, %c0_2] : memref<128x256xbf16, #tpu.memory_space<vmem>>, vector<128x256xbf16>
    %cst = arith.constant dense<0.000000e+00> : vector<8x256xf32>
    %2 = tpu.matmul %0, %1, %cst {dimension_numbers = #tpu.dot_dimension_numbers<[1], [0], [0], [1], [0, 0, 1, 1], [], []>} : vector<8x128xbf16>, vector<128x256xbf16>, vector<8x256xf32> -> vector<8x256xf32>
    %c0_3 = arith.constant 0 : index
    %c0_4 = arith.constant 0 : index
    %3 = vector.load %arg4[%c0_3, %c0_4] : memref<8x256xf32, #tpu.memory_space<vmem>>, vector<8x256xf32>
    tpu.vector_store %arg4[%c0_3, %c0_4], %2 {strides = array<i32>} : memref<8x256xf32, #tpu.memory_space<vmem>>, vector<8x256xf32>,
    return
  }
  func.func @transform_0(%arg0: i32, %arg1: i32) -> (i32, i32) {
    %c0_i32 = arith.constant 0 : i32
    %c0_i32_0 = arith.constant 0 : i32
    return %arg0, %c0_i32 : i32, i32
  }
  func.func @transform_1(%arg0: i32, %arg1: i32) -> (i32, i32) {
    %c0_i32 = arith.constant 0 : i32
    %c0_i32_0 = arith.constant 0 : i32
    return %c0_i32, %arg1 : i32, i32
  }
  func.func @transform_2(%arg0: i32, %arg1: i32) -> (i32, i32) {
    %c0_i32 = arith.constant 0 : i32
    return %arg0, %arg1 : i32, i32
  }
}

module attributes {stable_mosaic.version = 11 : i64} {
  func.func @_bn_stats_kernel(%arg0: i32, %arg1: memref<8x256xf32, #tpu.memory_space<vmem>>, %arg2: memref<1x256xf32, #tpu.memory_space<vmem>>, %arg3: memref<1x256xf32, #tpu.memory_space<vmem>>) attributes {dimension_semantics = [#tpu.dimension_semantics<arbitrary>], iteration_bounds = array<i64: 1>, scalar_prefetch = 0 : i64, scratch_operands = 0 : i64, tpu.core_type = #tpu.core_type<tc>, window_params = [{transform_indices = @transform_0, window_bounds = array<i64: 8, 256>}, {pipeline_mode = #tpu.pipeline_mode<synchronous>, transform_indices = @transform_1, window_bounds = array<i64: 1, 256>}, {pipeline_mode = #tpu.pipeline_mode<synchronous>, transform_indices = @transform_2, window_bounds = array<i64: 1, 256>}]} {
    %c0_i32 = arith.constant 0 : i32
    %0 = arith.cmpi eq, %arg0, %c0_i32 : i32
    %1 = arith.extui %0 : i1 to i32
    %c0_i32_0 = arith.constant 0 : i32
    %2 = arith.cmpi ne, %1, %c0_i32_0 : i32
    scf.if %2 {
      %cst_11 = arith.constant 0.000000e+00 : f32
      %15 = vector.broadcast %cst_11 : f32 to vector<1x256xf32>
      %c0_12 = arith.constant 0 : index
      %c0_13 = arith.constant 0 : index
      %16 = vector.load %arg2[%c0_12, %c0_13] : memref<1x256xf32, #tpu.memory_space<vmem>>, vector<1x256xf32>
      tpu.vector_store %arg2[%c0_12, %c0_13], %15 {strides = array<i32>} : memref<1x256xf32, #tpu.memory_space<vmem>>, vector<1x256xf32>,
      %cst_14 = arith.constant 0.000000e+00 : f32
      %17 = vector.broadcast %cst_14 : f32 to vector<1x256xf32>
      %c0_15 = arith.constant 0 : index
      %c0_16 = arith.constant 0 : index
      %18 = vector.load %arg3[%c0_15, %c0_16] : memref<1x256xf32, #tpu.memory_space<vmem>>, vector<1x256xf32>
      tpu.vector_store %arg3[%c0_15, %c0_16], %17 {strides = array<i32>} : memref<1x256xf32, #tpu.memory_space<vmem>>, vector<1x256xf32>,
    } else {
    }
    %c0 = arith.constant 0 : index
    %c0_1 = arith.constant 0 : index
    %3 = vector.load %arg1[%c0, %c0_1] : memref<8x256xf32, #tpu.memory_space<vmem>>, vector<8x256xf32>
    %c0_2 = arith.constant 0 : index
    %c0_3 = arith.constant 0 : index
    %4 = vector.load %arg2[%c0_2, %c0_3] : memref<1x256xf32, #tpu.memory_space<vmem>>, vector<1x256xf32>
    %cst = arith.constant dense<0.000000e+00> : vector<256xf32>
    %5 = vector.multi_reduction <add>, %3, %cst [0] : vector<8x256xf32> to vector<256xf32>
    %6 = vector.shape_cast %5 : vector<256xf32> to vector<1x256xf32>
    %7 = arith.addf %4, %6 : vector<1x256xf32>
    %c0_4 = arith.constant 0 : index
    %c0_5 = arith.constant 0 : index
    %8 = vector.load %arg2[%c0_4, %c0_5] : memref<1x256xf32, #tpu.memory_space<vmem>>, vector<1x256xf32>
    tpu.vector_store %arg2[%c0_4, %c0_5], %7 {strides = array<i32>} : memref<1x256xf32, #tpu.memory_space<vmem>>, vector<1x256xf32>,
    %c0_6 = arith.constant 0 : index
    %c0_7 = arith.constant 0 : index
    %9 = vector.load %arg3[%c0_6, %c0_7] : memref<1x256xf32, #tpu.memory_space<vmem>>, vector<1x256xf32>
    %10 = arith.mulf %3, %3 : vector<8x256xf32>
    %cst_8 = arith.constant dense<0.000000e+00> : vector<256xf32>
    %11 = vector.multi_reduction <add>, %10, %cst_8 [0] : vector<8x256xf32> to vector<256xf32>
    %12 = vector.shape_cast %11 : vector<256xf32> to vector<1x256xf32>
    %13 = arith.addf %9, %12 : vector<1x256xf32>
    %c0_9 = arith.constant 0 : index
    %c0_10 = arith.constant 0 : index
    %14 = vector.load %arg3[%c0_9, %c0_10] : memref<1x256xf32, #tpu.memory_space<vmem>>, vector<1x256xf32>
    tpu.vector_store %arg3[%c0_9, %c0_10], %13 {strides = array<i32>} : memref<1x256xf32, #tpu.memory_space<vmem>>, vector<1x256xf32>,
    return
  }
  func.func @transform_0(%arg0: i32) -> (i32, i32) {
    %c0_i32 = arith.constant 0 : i32
    %c0_i32_0 = arith.constant 0 : i32
    return %arg0, %c0_i32 : i32, i32
  }
  func.func @transform_1(%arg0: i32) -> (i32, i32) {
    %c0_i32 = arith.constant 0 : i32
    %c0_i32_0 = arith.constant 0 : i32
    %c0_i32_1 = arith.constant 0 : i32
    return %c0_i32, %c0_i32_0 : i32, i32
  }
  func.func @transform_2(%arg0: i32) -> (i32, i32) {
    %c0_i32 = arith.constant 0 : i32
    %c0_i32_0 = arith.constant 0 : i32
    %c0_i32_1 = arith.constant 0 : i32
    return %c0_i32, %c0_i32_0 : i32, i32
  }
}

module attributes {stable_mosaic.version = 11 : i64} {
  func.func @_bn_norm_kernel(%arg0: i32, %arg1: memref<8x256xf32, #tpu.memory_space<vmem>>, %arg2: memref<1x256xf32, #tpu.memory_space<vmem>>, %arg3: memref<1x256xf32, #tpu.memory_space<vmem>>, %arg4: memref<8x256xf32, #tpu.memory_space<vmem>>) attributes {dimension_semantics = [#tpu.dimension_semantics<parallel>], iteration_bounds = array<i64: 1>, scalar_prefetch = 0 : i64, scratch_operands = 0 : i64, tpu.core_type = #tpu.core_type<tc>, window_params = [{transform_indices = @transform_0, window_bounds = array<i64: 8, 256>}, {pipeline_mode = #tpu.pipeline_mode<synchronous>, transform_indices = @transform_1, window_bounds = array<i64: 1, 256>}, {pipeline_mode = #tpu.pipeline_mode<synchronous>, transform_indices = @transform_2, window_bounds = array<i64: 1, 256>}, {transform_indices = @transform_3, window_bounds = array<i64: 8, 256>}]} {
    %c0 = arith.constant 0 : index
    %c0_0 = arith.constant 0 : index
    %0 = vector.load %arg1[%c0, %c0_0] : memref<8x256xf32, #tpu.memory_space<vmem>>, vector<8x256xf32>
    %c0_1 = arith.constant 0 : index
    %c0_2 = arith.constant 0 : index
    %1 = vector.load %arg2[%c0_1, %c0_2] : memref<1x256xf32, #tpu.memory_space<vmem>>, vector<1x256xf32>
    %2 = vector.broadcast %1 : vector<1x256xf32> to vector<8x256xf32>
    %3 = arith.mulf %0, %2 : vector<8x256xf32>
    %c0_3 = arith.constant 0 : index
    %c0_4 = arith.constant 0 : index
    %4 = vector.load %arg3[%c0_3, %c0_4] : memref<1x256xf32, #tpu.memory_space<vmem>>, vector<1x256xf32>
    %5 = vector.broadcast %4 : vector<1x256xf32> to vector<8x256xf32>
    %6 = arith.addf %3, %5 : vector<8x256xf32>
    %c0_5 = arith.constant 0 : index
    %c0_6 = arith.constant 0 : index
    %7 = vector.load %arg4[%c0_5, %c0_6] : memref<8x256xf32, #tpu.memory_space<vmem>>, vector<8x256xf32>
    tpu.vector_store %arg4[%c0_5, %c0_6], %6 {strides = array<i32>} : memref<8x256xf32, #tpu.memory_space<vmem>>, vector<8x256xf32>,
    return
  }
  func.func @transform_0(%arg0: i32) -> (i32, i32) {
    %c0_i32 = arith.constant 0 : i32
    %c0_i32_0 = arith.constant 0 : i32
    return %arg0, %c0_i32 : i32, i32
  }
  func.func @transform_1(%arg0: i32) -> (i32, i32) {
    %c0_i32 = arith.constant 0 : i32
    %c0_i32_0 = arith.constant 0 : i32
    %c0_i32_1 = arith.constant 0 : i32
    return %c0_i32, %c0_i32_0 : i32, i32
  }
  func.func @transform_2(%arg0: i32) -> (i32, i32) {
    %c0_i32 = arith.constant 0 : i32
    %c0_i32_0 = arith.constant 0 : i32
    %c0_i32_1 = arith.constant 0 : i32
    return %c0_i32, %c0_i32_0 : i32, i32
  }
  func.func @transform_3(%arg0: i32) -> (i32, i32) {
    %c0_i32 = arith.constant 0 : i32
    %c0_i32_0 = arith.constant 0 : i32
    return %arg0, %c0_i32 : i32, i32
  }
}

module attributes {stable_mosaic.version = 11 : i64} {
  func.func @_bn_norm_kernel(%arg0: i32, %arg1: memref<8x256xf32, #tpu.memory_space<vmem>>, %arg2: memref<1x256xf32, #tpu.memory_space<vmem>>, %arg3: memref<1x256xf32, #tpu.memory_space<vmem>>, %arg4: memref<8x256xf32, #tpu.memory_space<vmem>>) attributes {dimension_semantics = [#tpu.dimension_semantics<parallel>], iteration_bounds = array<i64: 1>, scalar_prefetch = 0 : i64, scratch_operands = 0 : i64, tpu.core_type = #tpu.core_type<tc>, window_params = [{transform_indices = @transform_0, window_bounds = array<i64: 8, 256>}, {pipeline_mode = #tpu.pipeline_mode<synchronous>, transform_indices = @transform_1, window_bounds = array<i64: 1, 256>}, {pipeline_mode = #tpu.pipeline_mode<synchronous>, transform_indices = @transform_2, window_bounds = array<i64: 1, 256>}, {transform_indices = @transform_3, window_bounds = array<i64: 8, 256>}]} {
    %c0 = arith.constant 0 : index
    %c0_0 = arith.constant 0 : index
    %0 = vector.load %arg1[%c0, %c0_0] : memref<8x256xf32, #tpu.memory_space<vmem>>, vector<8x256xf32>
    %c0_1 = arith.constant 0 : index
    %c0_2 = arith.constant 0 : index
    %1 = vector.load %arg2[%c0_1, %c0_2] : memref<1x256xf32, #tpu.memory_space<vmem>>, vector<1x256xf32>
    %2 = vector.broadcast %1 : vector<1x256xf32> to vector<8x256xf32>
    %3 = arith.mulf %0, %2 : vector<8x256xf32>
    %c0_3 = arith.constant 0 : index
    %c0_4 = arith.constant 0 : index
    %4 = vector.load %arg3[%c0_3, %c0_4] : memref<1x256xf32, #tpu.memory_space<vmem>>, vector<1x256xf32>
    %5 = vector.broadcast %4 : vector<1x256xf32> to vector<8x256xf32>
    %6 = arith.addf %3, %5 : vector<8x256xf32>
    %cst = arith.constant 0.000000e+00 : f32
    %7 = vector.broadcast %cst : f32 to vector<8x256xf32>
    %8 = arith.maximumf %6, %7 : vector<8x256xf32>
    %c0_5 = arith.constant 0 : index
    %c0_6 = arith.constant 0 : index
    %9 = vector.load %arg4[%c0_5, %c0_6] : memref<8x256xf32, #tpu.memory_space<vmem>>, vector<8x256xf32>
    tpu.vector_store %arg4[%c0_5, %c0_6], %8 {strides = array<i32>} : memref<8x256xf32, #tpu.memory_space<vmem>>, vector<8x256xf32>,
    return
  }
  func.func @transform_0(%arg0: i32) -> (i32, i32) {
    %c0_i32 = arith.constant 0 : i32
    %c0_i32_0 = arith.constant 0 : i32
    return %arg0, %c0_i32 : i32, i32
  }
  func.func @transform_1(%arg0: i32) -> (i32, i32) {
    %c0_i32 = arith.constant 0 : i32
    %c0_i32_0 = arith.constant 0 : i32
    %c0_i32_1 = arith.constant 0 : i32
    return %c0_i32, %c0_i32_0 : i32, i32
  }
  func.func @transform_2(%arg0: i32) -> (i32, i32) {
    %c0_i32 = arith.constant 0 : i32
    %c0_i32_0 = arith.constant 0 : i32
    %c0_i32_1 = arith.constant 0 : i32
    return %c0_i32, %c0_i32_0 : i32, i32
  }
  func.func @transform_3(%arg0: i32) -> (i32, i32) {
    %c0_i32 = arith.constant 0 : i32
    %c0_i32_0 = arith.constant 0 : i32
    return %arg0, %c0_i32 : i32, i32
  }
}

module attributes {stable_mosaic.version = 11 : i64} {
  func.func @_matmul_kernel_multi(%arg0: i32, %arg1: i32, %arg2: i32, %arg3: memref<8x384xbf16, #tpu.memory_space<vmem>>, %arg4: memref<384x256xbf16, #tpu.memory_space<vmem>>, %arg5: memref<8x256xf32, #tpu.memory_space<vmem>>, %arg6: memref<8x256xf32, #tpu.memory_space<vmem>>) attributes {dimension_semantics = [#tpu.dimension_semantics<parallel>, #tpu.dimension_semantics<parallel>, #tpu.dimension_semantics<arbitrary>], iteration_bounds = array<i64: 1, 1, 3>, scalar_prefetch = 0 : i64, scratch_operands = 1 : i64, tpu.core_type = #tpu.core_type<tc>, window_params = [{transform_indices = @transform_0, window_bounds = array<i64: 8, 384>}, {transform_indices = @transform_1, window_bounds = array<i64: 384, 256>}, {transform_indices = @transform_2, window_bounds = array<i64: 8, 256>}]} {
    %c0_i32 = arith.constant 0 : i32
    %0 = arith.cmpi eq, %arg2, %c0_i32 : i32
    %1 = arith.extui %0 : i1 to i32
    %c0_i32_0 = arith.constant 0 : i32
    %2 = arith.cmpi ne, %1, %c0_i32_0 : i32
    scf.if %2 {
      %cst_9 = arith.constant 0.000000e+00 : f32
      %12 = vector.broadcast %cst_9 : f32 to vector<8x256xf32>
      %c0_10 = arith.constant 0 : index
      %c0_11 = arith.constant 0 : index
      %13 = vector.load %arg6[%c0_10, %c0_11] : memref<8x256xf32, #tpu.memory_space<vmem>>, vector<8x256xf32>
      tpu.vector_store %arg6[%c0_10, %c0_11], %12 {strides = array<i32>} : memref<8x256xf32, #tpu.memory_space<vmem>>, vector<8x256xf32>,
    } else {
    }
    %c0 = arith.constant 0 : index
    %c0_1 = arith.constant 0 : index
    %3 = vector.load %arg6[%c0, %c0_1] : memref<8x256xf32, #tpu.memory_space<vmem>>, vector<8x256xf32>
    %c0_2 = arith.constant 0 : index
    %c0_3 = arith.constant 0 : index
    %4 = vector.load %arg3[%c0_2, %c0_3] : memref<8x384xbf16, #tpu.memory_space<vmem>>, vector<8x384xbf16>
    %c0_4 = arith.constant 0 : index
    %c0_5 = arith.constant 0 : index
    %5 = vector.load %arg4[%c0_4, %c0_5] : memref<384x256xbf16, #tpu.memory_space<vmem>>, vector<384x256xbf16>
    %cst = arith.constant dense<0.000000e+00> : vector<8x256xf32>
    %6 = tpu.matmul %4, %5, %cst {dimension_numbers = #tpu.dot_dimension_numbers<[1], [0], [0], [1], [0, 0, 1, 1], [], []>} : vector<8x384xbf16>, vector<384x256xbf16>, vector<8x256xf32> -> vector<8x256xf32>
    %7 = arith.addf %3, %6 : vector<8x256xf32>
    %c0_6 = arith.constant 0 : index
    %c0_7 = arith.constant 0 : index
    %8 = vector.load %arg6[%c0_6, %c0_7] : memref<8x256xf32, #tpu.memory_space<vmem>>, vector<8x256xf32>
    tpu.vector_store %arg6[%c0_6, %c0_7], %7 {strides = array<i32>} : memref<8x256xf32, #tpu.memory_space<vmem>>, vector<8x256xf32>,
    %c2_i32 = arith.constant 2 : i32
    %9 = arith.cmpi eq, %arg2, %c2_i32 : i32
    %10 = arith.extui %9 : i1 to i32
    %c0_i32_8 = arith.constant 0 : i32
    %11 = arith.cmpi ne, %10, %c0_i32_8 : i32
    scf.if %11 {
      %c0_9 = arith.constant 0 : index
      %c0_10 = arith.constant 0 : index
      %12 = vector.load %arg6[%c0_9, %c0_10] : memref<8x256xf32, #tpu.memory_space<vmem>>, vector<8x256xf32>
      %c0_11 = arith.constant 0 : index
      %c0_12 = arith.constant 0 : index
      %13 = vector.load %arg5[%c0_11, %c0_12] : memref<8x256xf32, #tpu.memory_space<vmem>>, vector<8x256xf32>
      tpu.vector_store %arg5[%c0_11, %c0_12], %12 {strides = array<i32>} : memref<8x256xf32, #tpu.memory_space<vmem>>, vector<8x256xf32>,
    } else {
    }
    return
  }
  func.func @transform_0(%arg0: i32, %arg1: i32, %arg2: i32) -> (i32, i32) {
    %c0_i32 = arith.constant 0 : i32
    return %arg0, %arg2 : i32, i32
  }
  func.func @transform_1(%arg0: i32, %arg1: i32, %arg2: i32) -> (i32, i32) {
    %c0_i32 = arith.constant 0 : i32
    return %arg2, %arg1 : i32, i32
  }
  func.func @transform_2(%arg0: i32, %arg1: i32, %arg2: i32) -> (i32, i32) {
    %c0_i32 = arith.constant 0 : i32
    return %arg0, %arg1 : i32, i32
  }
}

module attributes {stable_mosaic.version = 11 : i64} {
  func.func @_matmul_kernel_multi(%arg0: i32, %arg1: i32, %arg2: i32, %arg3: memref<8x384xbf16, #tpu.memory_space<vmem>>, %arg4: memref<384x256xbf16, #tpu.memory_space<vmem>>, %arg5: memref<8x256xf32, #tpu.memory_space<vmem>>, %arg6: memref<8x256xf32, #tpu.memory_space<vmem>>) attributes {dimension_semantics = [#tpu.dimension_semantics<parallel>, #tpu.dimension_semantics<parallel>, #tpu.dimension_semantics<arbitrary>], iteration_bounds = array<i64: 1, 1, 6>, scalar_prefetch = 0 : i64, scratch_operands = 1 : i64, tpu.core_type = #tpu.core_type<tc>, window_params = [{transform_indices = @transform_0, window_bounds = array<i64: 8, 384>}, {transform_indices = @transform_1, window_bounds = array<i64: 384, 256>}, {transform_indices = @transform_2, window_bounds = array<i64: 8, 256>}]} {
    %c0_i32 = arith.constant 0 : i32
    %0 = arith.cmpi eq, %arg2, %c0_i32 : i32
    %1 = arith.extui %0 : i1 to i32
    %c0_i32_0 = arith.constant 0 : i32
    %2 = arith.cmpi ne, %1, %c0_i32_0 : i32
    scf.if %2 {
      %cst_9 = arith.constant 0.000000e+00 : f32
      %12 = vector.broadcast %cst_9 : f32 to vector<8x256xf32>
      %c0_10 = arith.constant 0 : index
      %c0_11 = arith.constant 0 : index
      %13 = vector.load %arg6[%c0_10, %c0_11] : memref<8x256xf32, #tpu.memory_space<vmem>>, vector<8x256xf32>
      tpu.vector_store %arg6[%c0_10, %c0_11], %12 {strides = array<i32>} : memref<8x256xf32, #tpu.memory_space<vmem>>, vector<8x256xf32>,
    } else {
    }
    %c0 = arith.constant 0 : index
    %c0_1 = arith.constant 0 : index
    %3 = vector.load %arg6[%c0, %c0_1] : memref<8x256xf32, #tpu.memory_space<vmem>>, vector<8x256xf32>
    %c0_2 = arith.constant 0 : index
    %c0_3 = arith.constant 0 : index
    %4 = vector.load %arg3[%c0_2, %c0_3] : memref<8x384xbf16, #tpu.memory_space<vmem>>, vector<8x384xbf16>
    %c0_4 = arith.constant 0 : index
    %c0_5 = arith.constant 0 : index
    %5 = vector.load %arg4[%c0_4, %c0_5] : memref<384x256xbf16, #tpu.memory_space<vmem>>, vector<384x256xbf16>
    %cst = arith.constant dense<0.000000e+00> : vector<8x256xf32>
    %6 = tpu.matmul %4, %5, %cst {dimension_numbers = #tpu.dot_dimension_numbers<[1], [0], [0], [1], [0, 0, 1, 1], [], []>} : vector<8x384xbf16>, vector<384x256xbf16>, vector<8x256xf32> -> vector<8x256xf32>
    %7 = arith.addf %3, %6 : vector<8x256xf32>
    %c0_6 = arith.constant 0 : index
    %c0_7 = arith.constant 0 : index
    %8 = vector.load %arg6[%c0_6, %c0_7] : memref<8x256xf32, #tpu.memory_space<vmem>>, vector<8x256xf32>
    tpu.vector_store %arg6[%c0_6, %c0_7], %7 {strides = array<i32>} : memref<8x256xf32, #tpu.memory_space<vmem>>, vector<8x256xf32>,
    %c5_i32 = arith.constant 5 : i32
    %9 = arith.cmpi eq, %arg2, %c5_i32 : i32
    %10 = arith.extui %9 : i1 to i32
    %c0_i32_8 = arith.constant 0 : i32
    %11 = arith.cmpi ne, %10, %c0_i32_8 : i32
    scf.if %11 {
      %c0_9 = arith.constant 0 : index
      %c0_10 = arith.constant 0 : index
      %12 = vector.load %arg6[%c0_9, %c0_10] : memref<8x256xf32, #tpu.memory_space<vmem>>, vector<8x256xf32>
      %c0_11 = arith.constant 0 : index
      %c0_12 = arith.constant 0 : index
      %13 = vector.load %arg5[%c0_11, %c0_12] : memref<8x256xf32, #tpu.memory_space<vmem>>, vector<8x256xf32>
      tpu.vector_store %arg5[%c0_11, %c0_12], %12 {strides = array<i32>} : memref<8x256xf32, #tpu.memory_space<vmem>>, vector<8x256xf32>,
    } else {
    }
    return
  }
  func.func @transform_0(%arg0: i32, %arg1: i32, %arg2: i32) -> (i32, i32) {
    %c0_i32 = arith.constant 0 : i32
    return %arg0, %arg2 : i32, i32
  }
  func.func @transform_1(%arg0: i32, %arg1: i32, %arg2: i32) -> (i32, i32) {
    %c0_i32 = arith.constant 0 : i32
    return %arg2, %arg1 : i32, i32
  }
  func.func @transform_2(%arg0: i32, %arg1: i32, %arg2: i32) -> (i32, i32) {
    %c0_i32 = arith.constant 0 : i32
    return %arg0, %arg1 : i32, i32
  }
}

module attributes {stable_mosaic.version = 11 : i64} {
  func.func @_bn_norm_res_kernel(%arg0: i32, %arg1: memref<8x256xf32, #tpu.memory_space<vmem>>, %arg2: memref<1x256xf32, #tpu.memory_space<vmem>>, %arg3: memref<1x256xf32, #tpu.memory_space<vmem>>, %arg4: memref<8x256xf32, #tpu.memory_space<vmem>>, %arg5: memref<8x256xf32, #tpu.memory_space<vmem>>) attributes {dimension_semantics = [#tpu.dimension_semantics<parallel>], iteration_bounds = array<i64: 1>, scalar_prefetch = 0 : i64, scratch_operands = 0 : i64, tpu.core_type = #tpu.core_type<tc>, window_params = [{transform_indices = @transform_0, window_bounds = array<i64: 8, 256>}, {pipeline_mode = #tpu.pipeline_mode<synchronous>, transform_indices = @transform_1, window_bounds = array<i64: 1, 256>}, {pipeline_mode = #tpu.pipeline_mode<synchronous>, transform_indices = @transform_2, window_bounds = array<i64: 1, 256>}, {transform_indices = @transform_3, window_bounds = array<i64: 8, 256>}, {transform_indices = @transform_4, window_bounds = array<i64: 8, 256>}]} {
    %c0 = arith.constant 0 : index
    %c0_0 = arith.constant 0 : index
    %0 = vector.load %arg1[%c0, %c0_0] : memref<8x256xf32, #tpu.memory_space<vmem>>, vector<8x256xf32>
    %c0_1 = arith.constant 0 : index
    %c0_2 = arith.constant 0 : index
    %1 = vector.load %arg2[%c0_1, %c0_2] : memref<1x256xf32, #tpu.memory_space<vmem>>, vector<1x256xf32>
    %2 = vector.broadcast %1 : vector<1x256xf32> to vector<8x256xf32>
    %3 = arith.mulf %0, %2 : vector<8x256xf32>
    %c0_3 = arith.constant 0 : index
    %c0_4 = arith.constant 0 : index
    %4 = vector.load %arg3[%c0_3, %c0_4] : memref<1x256xf32, #tpu.memory_space<vmem>>, vector<1x256xf32>
    %5 = vector.broadcast %4 : vector<1x256xf32> to vector<8x256xf32>
    %6 = arith.addf %3, %5 : vector<8x256xf32>
    %c0_5 = arith.constant 0 : index
    %c0_6 = arith.constant 0 : index
    %7 = vector.load %arg4[%c0_5, %c0_6] : memref<8x256xf32, #tpu.memory_space<vmem>>, vector<8x256xf32>
    %8 = arith.addf %6, %7 : vector<8x256xf32>
    %cst = arith.constant 0.000000e+00 : f32
    %9 = vector.broadcast %cst : f32 to vector<8x256xf32>
    %10 = arith.maximumf %8, %9 : vector<8x256xf32>
    %c0_7 = arith.constant 0 : index
    %c0_8 = arith.constant 0 : index
    %11 = vector.load %arg5[%c0_7, %c0_8] : memref<8x256xf32, #tpu.memory_space<vmem>>, vector<8x256xf32>
    tpu.vector_store %arg5[%c0_7, %c0_8], %10 {strides = array<i32>} : memref<8x256xf32, #tpu.memory_space<vmem>>, vector<8x256xf32>,
    return
  }
  func.func @transform_0(%arg0: i32) -> (i32, i32) {
    %c0_i32 = arith.constant 0 : i32
    %c0_i32_0 = arith.constant 0 : i32
    return %arg0, %c0_i32 : i32, i32
  }
  func.func @transform_1(%arg0: i32) -> (i32, i32) {
    %c0_i32 = arith.constant 0 : i32
    %c0_i32_0 = arith.constant 0 : i32
    %c0_i32_1 = arith.constant 0 : i32
    return %c0_i32, %c0_i32_0 : i32, i32
  }
  func.func @transform_2(%arg0: i32) -> (i32, i32) {
    %c0_i32 = arith.constant 0 : i32
    %c0_i32_0 = arith.constant 0 : i32
    %c0_i32_1 = arith.constant 0 : i32
    return %c0_i32, %c0_i32_0 : i32, i32
  }
  func.func @transform_3(%arg0: i32) -> (i32, i32) {
    %c0_i32 = arith.constant 0 : i32
    %c0_i32_0 = arith.constant 0 : i32
    return %arg0, %c0_i32 : i32, i32
  }
  func.func @transform_4(%arg0: i32) -> (i32, i32) {
    %c0_i32 = arith.constant 0 : i32
    %c0_i32_0 = arith.constant 0 : i32
    return %arg0, %c0_i32 : i32, i32
  }
}

module attributes {stable_mosaic.version = 11 : i64} {
  func.func @_matmul_kernel_single(%arg0: i32, %arg1: i32, %arg2: memref<2x256xbf16, #tpu.memory_space<vmem>>, %arg3: memref<256x256xbf16, #tpu.memory_space<vmem>>, %arg4: memref<2x256xf32, #tpu.memory_space<vmem>>) attributes {dimension_semantics = [#tpu.dimension_semantics<parallel>, #tpu.dimension_semantics<parallel>], iteration_bounds = array<i64: 1, 2>, scalar_prefetch = 0 : i64, scratch_operands = 0 : i64, tpu.core_type = #tpu.core_type<tc>, window_params = [{transform_indices = @transform_0, window_bounds = array<i64: 2, 256>}, {transform_indices = @transform_1, window_bounds = array<i64: 256, 256>}, {transform_indices = @transform_2, window_bounds = array<i64: 2, 256>}]} {
    %c0 = arith.constant 0 : index
    %c0_0 = arith.constant 0 : index
    %0 = vector.load %arg2[%c0, %c0_0] : memref<2x256xbf16, #tpu.memory_space<vmem>>, vector<2x256xbf16>
    %c0_1 = arith.constant 0 : index
    %c0_2 = arith.constant 0 : index
    %1 = vector.load %arg3[%c0_1, %c0_2] : memref<256x256xbf16, #tpu.memory_space<vmem>>, vector<256x256xbf16>
    %cst = arith.constant dense<0.000000e+00> : vector<2x256xf32>
    %2 = tpu.matmul %0, %1, %cst {dimension_numbers = #tpu.dot_dimension_numbers<[1], [0], [0], [1], [0, 0, 1, 1], [], []>} : vector<2x256xbf16>, vector<256x256xbf16>, vector<2x256xf32> -> vector<2x256xf32>
    %c0_3 = arith.constant 0 : index
    %c0_4 = arith.constant 0 : index
    %3 = vector.load %arg4[%c0_3, %c0_4] : memref<2x256xf32, #tpu.memory_space<vmem>>, vector<2x256xf32>
    tpu.vector_store %arg4[%c0_3, %c0_4], %2 {strides = array<i32>} : memref<2x256xf32, #tpu.memory_space<vmem>>, vector<2x256xf32>,
    return
  }
  func.func @transform_0(%arg0: i32, %arg1: i32) -> (i32, i32) {
    %c0_i32 = arith.constant 0 : i32
    %c0_i32_0 = arith.constant 0 : i32
    return %arg0, %c0_i32 : i32, i32
  }
  func.func @transform_1(%arg0: i32, %arg1: i32) -> (i32, i32) {
    %c0_i32 = arith.constant 0 : i32
    %c0_i32_0 = arith.constant 0 : i32
    return %c0_i32, %arg1 : i32, i32
  }
  func.func @transform_2(%arg0: i32, %arg1: i32) -> (i32, i32) {
    %c0_i32 = arith.constant 0 : i32
    return %arg0, %arg1 : i32, i32
  }
}

module attributes {stable_mosaic.version = 11 : i64} {
  func.func @_bn_stats_kernel(%arg0: i32, %arg1: memref<2x512xf32, #tpu.memory_space<vmem>>, %arg2: memref<1x512xf32, #tpu.memory_space<vmem>>, %arg3: memref<1x512xf32, #tpu.memory_space<vmem>>) attributes {dimension_semantics = [#tpu.dimension_semantics<arbitrary>], iteration_bounds = array<i64: 1>, scalar_prefetch = 0 : i64, scratch_operands = 0 : i64, tpu.core_type = #tpu.core_type<tc>, window_params = [{transform_indices = @transform_0, window_bounds = array<i64: 2, 512>}, {pipeline_mode = #tpu.pipeline_mode<synchronous>, transform_indices = @transform_1, window_bounds = array<i64: 1, 512>}, {pipeline_mode = #tpu.pipeline_mode<synchronous>, transform_indices = @transform_2, window_bounds = array<i64: 1, 512>}]} {
    %c0_i32 = arith.constant 0 : i32
    %0 = arith.cmpi eq, %arg0, %c0_i32 : i32
    %1 = arith.extui %0 : i1 to i32
    %c0_i32_0 = arith.constant 0 : i32
    %2 = arith.cmpi ne, %1, %c0_i32_0 : i32
    scf.if %2 {
      %cst_11 = arith.constant 0.000000e+00 : f32
      %15 = vector.broadcast %cst_11 : f32 to vector<1x512xf32>
      %c0_12 = arith.constant 0 : index
      %c0_13 = arith.constant 0 : index
      %16 = vector.load %arg2[%c0_12, %c0_13] : memref<1x512xf32, #tpu.memory_space<vmem>>, vector<1x512xf32>
      tpu.vector_store %arg2[%c0_12, %c0_13], %15 {strides = array<i32>} : memref<1x512xf32, #tpu.memory_space<vmem>>, vector<1x512xf32>,
      %cst_14 = arith.constant 0.000000e+00 : f32
      %17 = vector.broadcast %cst_14 : f32 to vector<1x512xf32>
      %c0_15 = arith.constant 0 : index
      %c0_16 = arith.constant 0 : index
      %18 = vector.load %arg3[%c0_15, %c0_16] : memref<1x512xf32, #tpu.memory_space<vmem>>, vector<1x512xf32>
      tpu.vector_store %arg3[%c0_15, %c0_16], %17 {strides = array<i32>} : memref<1x512xf32, #tpu.memory_space<vmem>>, vector<1x512xf32>,
    } else {
    }
    %c0 = arith.constant 0 : index
    %c0_1 = arith.constant 0 : index
    %3 = vector.load %arg1[%c0, %c0_1] : memref<2x512xf32, #tpu.memory_space<vmem>>, vector<2x512xf32>
    %c0_2 = arith.constant 0 : index
    %c0_3 = arith.constant 0 : index
    %4 = vector.load %arg2[%c0_2, %c0_3] : memref<1x512xf32, #tpu.memory_space<vmem>>, vector<1x512xf32>
    %cst = arith.constant dense<0.000000e+00> : vector<512xf32>
    %5 = vector.multi_reduction <add>, %3, %cst [0] : vector<2x512xf32> to vector<512xf32>
    %6 = vector.shape_cast %5 : vector<512xf32> to vector<1x512xf32>
    %7 = arith.addf %4, %6 : vector<1x512xf32>
    %c0_4 = arith.constant 0 : index
    %c0_5 = arith.constant 0 : index
    %8 = vector.load %arg2[%c0_4, %c0_5] : memref<1x512xf32, #tpu.memory_space<vmem>>, vector<1x512xf32>
    tpu.vector_store %arg2[%c0_4, %c0_5], %7 {strides = array<i32>} : memref<1x512xf32, #tpu.memory_space<vmem>>, vector<1x512xf32>,
    %c0_6 = arith.constant 0 : index
    %c0_7 = arith.constant 0 : index
    %9 = vector.load %arg3[%c0_6, %c0_7] : memref<1x512xf32, #tpu.memory_space<vmem>>, vector<1x512xf32>
    %10 = arith.mulf %3, %3 : vector<2x512xf32>
    %cst_8 = arith.constant dense<0.000000e+00> : vector<512xf32>
    %11 = vector.multi_reduction <add>, %10, %cst_8 [0] : vector<2x512xf32> to vector<512xf32>
    %12 = vector.shape_cast %11 : vector<512xf32> to vector<1x512xf32>
    %13 = arith.addf %9, %12 : vector<1x512xf32>
    %c0_9 = arith.constant 0 : index
    %c0_10 = arith.constant 0 : index
    %14 = vector.load %arg3[%c0_9, %c0_10] : memref<1x512xf32, #tpu.memory_space<vmem>>, vector<1x512xf32>
    tpu.vector_store %arg3[%c0_9, %c0_10], %13 {strides = array<i32>} : memref<1x512xf32, #tpu.memory_space<vmem>>, vector<1x512xf32>,
    return
  }
  func.func @transform_0(%arg0: i32) -> (i32, i32) {
    %c0_i32 = arith.constant 0 : i32
    %c0_i32_0 = arith.constant 0 : i32
    return %arg0, %c0_i32 : i32, i32
  }
  func.func @transform_1(%arg0: i32) -> (i32, i32) {
    %c0_i32 = arith.constant 0 : i32
    %c0_i32_0 = arith.constant 0 : i32
    %c0_i32_1 = arith.constant 0 : i32
    return %c0_i32, %c0_i32_0 : i32, i32
  }
  func.func @transform_2(%arg0: i32) -> (i32, i32) {
    %c0_i32 = arith.constant 0 : i32
    %c0_i32_0 = arith.constant 0 : i32
    %c0_i32_1 = arith.constant 0 : i32
    return %c0_i32, %c0_i32_0 : i32, i32
  }
}

module attributes {stable_mosaic.version = 11 : i64} {
  func.func @_matmul_kernel_multi(%arg0: i32, %arg1: i32, %arg2: i32, %arg3: memref<2x384xbf16, #tpu.memory_space<vmem>>, %arg4: memref<384x256xbf16, #tpu.memory_space<vmem>>, %arg5: memref<2x256xf32, #tpu.memory_space<vmem>>, %arg6: memref<2x256xf32, #tpu.memory_space<vmem>>) attributes {dimension_semantics = [#tpu.dimension_semantics<parallel>, #tpu.dimension_semantics<parallel>, #tpu.dimension_semantics<arbitrary>], iteration_bounds = array<i64: 1, 2, 6>, scalar_prefetch = 0 : i64, scratch_operands = 1 : i64, tpu.core_type = #tpu.core_type<tc>, window_params = [{transform_indices = @transform_0, window_bounds = array<i64: 2, 384>}, {transform_indices = @transform_1, window_bounds = array<i64: 384, 256>}, {transform_indices = @transform_2, window_bounds = array<i64: 2, 256>}]} {
    %c0_i32 = arith.constant 0 : i32
    %0 = arith.cmpi eq, %arg2, %c0_i32 : i32
    %1 = arith.extui %0 : i1 to i32
    %c0_i32_0 = arith.constant 0 : i32
    %2 = arith.cmpi ne, %1, %c0_i32_0 : i32
    scf.if %2 {
      %cst_9 = arith.constant 0.000000e+00 : f32
      %12 = vector.broadcast %cst_9 : f32 to vector<2x256xf32>
      %c0_10 = arith.constant 0 : index
      %c0_11 = arith.constant 0 : index
      %13 = vector.load %arg6[%c0_10, %c0_11] : memref<2x256xf32, #tpu.memory_space<vmem>>, vector<2x256xf32>
      tpu.vector_store %arg6[%c0_10, %c0_11], %12 {strides = array<i32>} : memref<2x256xf32, #tpu.memory_space<vmem>>, vector<2x256xf32>,
    } else {
    }
    %c0 = arith.constant 0 : index
    %c0_1 = arith.constant 0 : index
    %3 = vector.load %arg6[%c0, %c0_1] : memref<2x256xf32, #tpu.memory_space<vmem>>, vector<2x256xf32>
    %c0_2 = arith.constant 0 : index
    %c0_3 = arith.constant 0 : index
    %4 = vector.load %arg3[%c0_2, %c0_3] : memref<2x384xbf16, #tpu.memory_space<vmem>>, vector<2x384xbf16>
    %c0_4 = arith.constant 0 : index
    %c0_5 = arith.constant 0 : index
    %5 = vector.load %arg4[%c0_4, %c0_5] : memref<384x256xbf16, #tpu.memory_space<vmem>>, vector<384x256xbf16>
    %cst = arith.constant dense<0.000000e+00> : vector<2x256xf32>
    %6 = tpu.matmul %4, %5, %cst {dimension_numbers = #tpu.dot_dimension_numbers<[1], [0], [0], [1], [0, 0, 1, 1], [], []>} : vector<2x384xbf16>, vector<384x256xbf16>, vector<2x256xf32> -> vector<2x256xf32>
    %7 = arith.addf %3, %6 : vector<2x256xf32>
    %c0_6 = arith.constant 0 : index
    %c0_7 = arith.constant 0 : index
    %8 = vector.load %arg6[%c0_6, %c0_7] : memref<2x256xf32, #tpu.memory_space<vmem>>, vector<2x256xf32>
    tpu.vector_store %arg6[%c0_6, %c0_7], %7 {strides = array<i32>} : memref<2x256xf32, #tpu.memory_space<vmem>>, vector<2x256xf32>,
    %c5_i32 = arith.constant 5 : i32
    %9 = arith.cmpi eq, %arg2, %c5_i32 : i32
    %10 = arith.extui %9 : i1 to i32
    %c0_i32_8 = arith.constant 0 : i32
    %11 = arith.cmpi ne, %10, %c0_i32_8 : i32
    scf.if %11 {
      %c0_9 = arith.constant 0 : index
      %c0_10 = arith.constant 0 : index
      %12 = vector.load %arg6[%c0_9, %c0_10] : memref<2x256xf32, #tpu.memory_space<vmem>>, vector<2x256xf32>
      %c0_11 = arith.constant 0 : index
      %c0_12 = arith.constant 0 : index
      %13 = vector.load %arg5[%c0_11, %c0_12] : memref<2x256xf32, #tpu.memory_space<vmem>>, vector<2x256xf32>
      tpu.vector_store %arg5[%c0_11, %c0_12], %12 {strides = array<i32>} : memref<2x256xf32, #tpu.memory_space<vmem>>, vector<2x256xf32>,
    } else {
    }
    return
  }
  func.func @transform_0(%arg0: i32, %arg1: i32, %arg2: i32) -> (i32, i32) {
    %c0_i32 = arith.constant 0 : i32
    return %arg0, %arg2 : i32, i32
  }
  func.func @transform_1(%arg0: i32, %arg1: i32, %arg2: i32) -> (i32, i32) {
    %c0_i32 = arith.constant 0 : i32
    return %arg2, %arg1 : i32, i32
  }
  func.func @transform_2(%arg0: i32, %arg1: i32, %arg2: i32) -> (i32, i32) {
    %c0_i32 = arith.constant 0 : i32
    return %arg0, %arg1 : i32, i32
  }
}

module attributes {stable_mosaic.version = 11 : i64} {
  func.func @_bn_norm_kernel(%arg0: i32, %arg1: memref<2x512xf32, #tpu.memory_space<vmem>>, %arg2: memref<1x512xf32, #tpu.memory_space<vmem>>, %arg3: memref<1x512xf32, #tpu.memory_space<vmem>>, %arg4: memref<2x512xf32, #tpu.memory_space<vmem>>) attributes {dimension_semantics = [#tpu.dimension_semantics<parallel>], iteration_bounds = array<i64: 1>, scalar_prefetch = 0 : i64, scratch_operands = 0 : i64, tpu.core_type = #tpu.core_type<tc>, window_params = [{transform_indices = @transform_0, window_bounds = array<i64: 2, 512>}, {pipeline_mode = #tpu.pipeline_mode<synchronous>, transform_indices = @transform_1, window_bounds = array<i64: 1, 512>}, {pipeline_mode = #tpu.pipeline_mode<synchronous>, transform_indices = @transform_2, window_bounds = array<i64: 1, 512>}, {transform_indices = @transform_3, window_bounds = array<i64: 2, 512>}]} {
    %c0 = arith.constant 0 : index
    %c0_0 = arith.constant 0 : index
    %0 = vector.load %arg1[%c0, %c0_0] : memref<2x512xf32, #tpu.memory_space<vmem>>, vector<2x512xf32>
    %c0_1 = arith.constant 0 : index
    %c0_2 = arith.constant 0 : index
    %1 = vector.load %arg2[%c0_1, %c0_2] : memref<1x512xf32, #tpu.memory_space<vmem>>, vector<1x512xf32>
    %2 = vector.broadcast %1 : vector<1x512xf32> to vector<2x512xf32>
    %3 = arith.mulf %0, %2 : vector<2x512xf32>
    %c0_3 = arith.constant 0 : index
    %c0_4 = arith.constant 0 : index
    %4 = vector.load %arg3[%c0_3, %c0_4] : memref<1x512xf32, #tpu.memory_space<vmem>>, vector<1x512xf32>
    %5 = vector.broadcast %4 : vector<1x512xf32> to vector<2x512xf32>
    %6 = arith.addf %3, %5 : vector<2x512xf32>
    %c0_5 = arith.constant 0 : index
    %c0_6 = arith.constant 0 : index
    %7 = vector.load %arg4[%c0_5, %c0_6] : memref<2x512xf32, #tpu.memory_space<vmem>>, vector<2x512xf32>
    tpu.vector_store %arg4[%c0_5, %c0_6], %6 {strides = array<i32>} : memref<2x512xf32, #tpu.memory_space<vmem>>, vector<2x512xf32>,
    return
  }
  func.func @transform_0(%arg0: i32) -> (i32, i32) {
    %c0_i32 = arith.constant 0 : i32
    %c0_i32_0 = arith.constant 0 : i32
    return %arg0, %c0_i32 : i32, i32
  }
  func.func @transform_1(%arg0: i32) -> (i32, i32) {
    %c0_i32 = arith.constant 0 : i32
    %c0_i32_0 = arith.constant 0 : i32
    %c0_i32_1 = arith.constant 0 : i32
    return %c0_i32, %c0_i32_0 : i32, i32
  }
  func.func @transform_2(%arg0: i32) -> (i32, i32) {
    %c0_i32 = arith.constant 0 : i32
    %c0_i32_0 = arith.constant 0 : i32
    %c0_i32_1 = arith.constant 0 : i32
    return %c0_i32, %c0_i32_0 : i32, i32
  }
  func.func @transform_3(%arg0: i32) -> (i32, i32) {
    %c0_i32 = arith.constant 0 : i32
    %c0_i32_0 = arith.constant 0 : i32
    return %arg0, %c0_i32 : i32, i32
  }
}

module attributes {stable_mosaic.version = 11 : i64} {
  func.func @_bn_norm_kernel(%arg0: i32, %arg1: memref<2x512xf32, #tpu.memory_space<vmem>>, %arg2: memref<1x512xf32, #tpu.memory_space<vmem>>, %arg3: memref<1x512xf32, #tpu.memory_space<vmem>>, %arg4: memref<2x512xf32, #tpu.memory_space<vmem>>) attributes {dimension_semantics = [#tpu.dimension_semantics<parallel>], iteration_bounds = array<i64: 1>, scalar_prefetch = 0 : i64, scratch_operands = 0 : i64, tpu.core_type = #tpu.core_type<tc>, window_params = [{transform_indices = @transform_0, window_bounds = array<i64: 2, 512>}, {pipeline_mode = #tpu.pipeline_mode<synchronous>, transform_indices = @transform_1, window_bounds = array<i64: 1, 512>}, {pipeline_mode = #tpu.pipeline_mode<synchronous>, transform_indices = @transform_2, window_bounds = array<i64: 1, 512>}, {transform_indices = @transform_3, window_bounds = array<i64: 2, 512>}]} {
    %c0 = arith.constant 0 : index
    %c0_0 = arith.constant 0 : index
    %0 = vector.load %arg1[%c0, %c0_0] : memref<2x512xf32, #tpu.memory_space<vmem>>, vector<2x512xf32>
    %c0_1 = arith.constant 0 : index
    %c0_2 = arith.constant 0 : index
    %1 = vector.load %arg2[%c0_1, %c0_2] : memref<1x512xf32, #tpu.memory_space<vmem>>, vector<1x512xf32>
    %2 = vector.broadcast %1 : vector<1x512xf32> to vector<2x512xf32>
    %3 = arith.mulf %0, %2 : vector<2x512xf32>
    %c0_3 = arith.constant 0 : index
    %c0_4 = arith.constant 0 : index
    %4 = vector.load %arg3[%c0_3, %c0_4] : memref<1x512xf32, #tpu.memory_space<vmem>>, vector<1x512xf32>
    %5 = vector.broadcast %4 : vector<1x512xf32> to vector<2x512xf32>
    %6 = arith.addf %3, %5 : vector<2x512xf32>
    %cst = arith.constant 0.000000e+00 : f32
    %7 = vector.broadcast %cst : f32 to vector<2x512xf32>
    %8 = arith.maximumf %6, %7 : vector<2x512xf32>
    %c0_5 = arith.constant 0 : index
    %c0_6 = arith.constant 0 : index
    %9 = vector.load %arg4[%c0_5, %c0_6] : memref<2x512xf32, #tpu.memory_space<vmem>>, vector<2x512xf32>
    tpu.vector_store %arg4[%c0_5, %c0_6], %8 {strides = array<i32>} : memref<2x512xf32, #tpu.memory_space<vmem>>, vector<2x512xf32>,
    return
  }
  func.func @transform_0(%arg0: i32) -> (i32, i32) {
    %c0_i32 = arith.constant 0 : i32
    %c0_i32_0 = arith.constant 0 : i32
    return %arg0, %c0_i32 : i32, i32
  }
  func.func @transform_1(%arg0: i32) -> (i32, i32) {
    %c0_i32 = arith.constant 0 : i32
    %c0_i32_0 = arith.constant 0 : i32
    %c0_i32_1 = arith.constant 0 : i32
    return %c0_i32, %c0_i32_0 : i32, i32
  }
  func.func @transform_2(%arg0: i32) -> (i32, i32) {
    %c0_i32 = arith.constant 0 : i32
    %c0_i32_0 = arith.constant 0 : i32
    %c0_i32_1 = arith.constant 0 : i32
    return %c0_i32, %c0_i32_0 : i32, i32
  }
  func.func @transform_3(%arg0: i32) -> (i32, i32) {
    %c0_i32 = arith.constant 0 : i32
    %c0_i32_0 = arith.constant 0 : i32
    return %arg0, %c0_i32 : i32, i32
  }
}

module attributes {stable_mosaic.version = 11 : i64} {
  func.func @_matmul_kernel_multi(%arg0: i32, %arg1: i32, %arg2: i32, %arg3: memref<2x512xbf16, #tpu.memory_space<vmem>>, %arg4: memref<512x256xbf16, #tpu.memory_space<vmem>>, %arg5: memref<2x256xf32, #tpu.memory_space<vmem>>, %arg6: memref<2x256xf32, #tpu.memory_space<vmem>>) attributes {dimension_semantics = [#tpu.dimension_semantics<parallel>, #tpu.dimension_semantics<parallel>, #tpu.dimension_semantics<arbitrary>], iteration_bounds = array<i64: 1, 2, 9>, scalar_prefetch = 0 : i64, scratch_operands = 1 : i64, tpu.core_type = #tpu.core_type<tc>, window_params = [{transform_indices = @transform_0, window_bounds = array<i64: 2, 512>}, {transform_indices = @transform_1, window_bounds = array<i64: 512, 256>}, {transform_indices = @transform_2, window_bounds = array<i64: 2, 256>}]} {
    %c0_i32 = arith.constant 0 : i32
    %0 = arith.cmpi eq, %arg2, %c0_i32 : i32
    %1 = arith.extui %0 : i1 to i32
    %c0_i32_0 = arith.constant 0 : i32
    %2 = arith.cmpi ne, %1, %c0_i32_0 : i32
    scf.if %2 {
      %cst_9 = arith.constant 0.000000e+00 : f32
      %12 = vector.broadcast %cst_9 : f32 to vector<2x256xf32>
      %c0_10 = arith.constant 0 : index
      %c0_11 = arith.constant 0 : index
      %13 = vector.load %arg6[%c0_10, %c0_11] : memref<2x256xf32, #tpu.memory_space<vmem>>, vector<2x256xf32>
      tpu.vector_store %arg6[%c0_10, %c0_11], %12 {strides = array<i32>} : memref<2x256xf32, #tpu.memory_space<vmem>>, vector<2x256xf32>,
    } else {
    }
    %c0 = arith.constant 0 : index
    %c0_1 = arith.constant 0 : index
    %3 = vector.load %arg6[%c0, %c0_1] : memref<2x256xf32, #tpu.memory_space<vmem>>, vector<2x256xf32>
    %c0_2 = arith.constant 0 : index
    %c0_3 = arith.constant 0 : index
    %4 = vector.load %arg3[%c0_2, %c0_3] : memref<2x512xbf16, #tpu.memory_space<vmem>>, vector<2x512xbf16>
    %c0_4 = arith.constant 0 : index
    %c0_5 = arith.constant 0 : index
    %5 = vector.load %arg4[%c0_4, %c0_5] : memref<512x256xbf16, #tpu.memory_space<vmem>>, vector<512x256xbf16>
    %cst = arith.constant dense<0.000000e+00> : vector<2x256xf32>
    %6 = tpu.matmul %4, %5, %cst {dimension_numbers = #tpu.dot_dimension_numbers<[1], [0], [0], [1], [0, 0, 1, 1], [], []>} : vector<2x512xbf16>, vector<512x256xbf16>, vector<2x256xf32> -> vector<2x256xf32>
    %7 = arith.addf %3, %6 : vector<2x256xf32>
    %c0_6 = arith.constant 0 : index
    %c0_7 = arith.constant 0 : index
    %8 = vector.load %arg6[%c0_6, %c0_7] : memref<2x256xf32, #tpu.memory_space<vmem>>, vector<2x256xf32>
    tpu.vector_store %arg6[%c0_6, %c0_7], %7 {strides = array<i32>} : memref<2x256xf32, #tpu.memory_space<vmem>>, vector<2x256xf32>,
    %c8_i32 = arith.constant 8 : i32
    %9 = arith.cmpi eq, %arg2, %c8_i32 : i32
    %10 = arith.extui %9 : i1 to i32
    %c0_i32_8 = arith.constant 0 : i32
    %11 = arith.cmpi ne, %10, %c0_i32_8 : i32
    scf.if %11 {
      %c0_9 = arith.constant 0 : index
      %c0_10 = arith.constant 0 : index
      %12 = vector.load %arg6[%c0_9, %c0_10] : memref<2x256xf32, #tpu.memory_space<vmem>>, vector<2x256xf32>
      %c0_11 = arith.constant 0 : index
      %c0_12 = arith.constant 0 : index
      %13 = vector.load %arg5[%c0_11, %c0_12] : memref<2x256xf32, #tpu.memory_space<vmem>>, vector<2x256xf32>
      tpu.vector_store %arg5[%c0_11, %c0_12], %12 {strides = array<i32>} : memref<2x256xf32, #tpu.memory_space<vmem>>, vector<2x256xf32>,
    } else {
    }
    return
  }
  func.func @transform_0(%arg0: i32, %arg1: i32, %arg2: i32) -> (i32, i32) {
    %c0_i32 = arith.constant 0 : i32
    return %arg0, %arg2 : i32, i32
  }
  func.func @transform_1(%arg0: i32, %arg1: i32, %arg2: i32) -> (i32, i32) {
    %c0_i32 = arith.constant 0 : i32
    return %arg2, %arg1 : i32, i32
  }
  func.func @transform_2(%arg0: i32, %arg1: i32, %arg2: i32) -> (i32, i32) {
    %c0_i32 = arith.constant 0 : i32
    return %arg0, %arg1 : i32, i32
  }
}

module attributes {stable_mosaic.version = 11 : i64} {
  func.func @_bn_norm_res_kernel(%arg0: i32, %arg1: memref<2x512xf32, #tpu.memory_space<vmem>>, %arg2: memref<1x512xf32, #tpu.memory_space<vmem>>, %arg3: memref<1x512xf32, #tpu.memory_space<vmem>>, %arg4: memref<2x512xf32, #tpu.memory_space<vmem>>, %arg5: memref<2x512xf32, #tpu.memory_space<vmem>>) attributes {dimension_semantics = [#tpu.dimension_semantics<parallel>], iteration_bounds = array<i64: 1>, scalar_prefetch = 0 : i64, scratch_operands = 0 : i64, tpu.core_type = #tpu.core_type<tc>, window_params = [{transform_indices = @transform_0, window_bounds = array<i64: 2, 512>}, {pipeline_mode = #tpu.pipeline_mode<synchronous>, transform_indices = @transform_1, window_bounds = array<i64: 1, 512>}, {pipeline_mode = #tpu.pipeline_mode<synchronous>, transform_indices = @transform_2, window_bounds = array<i64: 1, 512>}, {transform_indices = @transform_3, window_bounds = array<i64: 2, 512>}, {transform_indices = @transform_4, window_bounds = array<i64: 2, 512>}]} {
    %c0 = arith.constant 0 : index
    %c0_0 = arith.constant 0 : index
    %0 = vector.load %arg1[%c0, %c0_0] : memref<2x512xf32, #tpu.memory_space<vmem>>, vector<2x512xf32>
    %c0_1 = arith.constant 0 : index
    %c0_2 = arith.constant 0 : index
    %1 = vector.load %arg2[%c0_1, %c0_2] : memref<1x512xf32, #tpu.memory_space<vmem>>, vector<1x512xf32>
    %2 = vector.broadcast %1 : vector<1x512xf32> to vector<2x512xf32>
    %3 = arith.mulf %0, %2 : vector<2x512xf32>
    %c0_3 = arith.constant 0 : index
    %c0_4 = arith.constant 0 : index
    %4 = vector.load %arg3[%c0_3, %c0_4] : memref<1x512xf32, #tpu.memory_space<vmem>>, vector<1x512xf32>
    %5 = vector.broadcast %4 : vector<1x512xf32> to vector<2x512xf32>
    %6 = arith.addf %3, %5 : vector<2x512xf32>
    %c0_5 = arith.constant 0 : index
    %c0_6 = arith.constant 0 : index
    %7 = vector.load %arg4[%c0_5, %c0_6] : memref<2x512xf32, #tpu.memory_space<vmem>>, vector<2x512xf32>
    %8 = arith.addf %6, %7 : vector<2x512xf32>
    %cst = arith.constant 0.000000e+00 : f32
    %9 = vector.broadcast %cst : f32 to vector<2x512xf32>
    %10 = arith.maximumf %8, %9 : vector<2x512xf32>
    %c0_7 = arith.constant 0 : index
    %c0_8 = arith.constant 0 : index
    %11 = vector.load %arg5[%c0_7, %c0_8] : memref<2x512xf32, #tpu.memory_space<vmem>>, vector<2x512xf32>
    tpu.vector_store %arg5[%c0_7, %c0_8], %10 {strides = array<i32>} : memref<2x512xf32, #tpu.memory_space<vmem>>, vector<2x512xf32>,
    return
  }
  func.func @transform_0(%arg0: i32) -> (i32, i32) {
    %c0_i32 = arith.constant 0 : i32
    %c0_i32_0 = arith.constant 0 : i32
    return %arg0, %c0_i32 : i32, i32
  }
  func.func @transform_1(%arg0: i32) -> (i32, i32) {
    %c0_i32 = arith.constant 0 : i32
    %c0_i32_0 = arith.constant 0 : i32
    %c0_i32_1 = arith.constant 0 : i32
    return %c0_i32, %c0_i32_0 : i32, i32
  }
  func.func @transform_2(%arg0: i32) -> (i32, i32) {
    %c0_i32 = arith.constant 0 : i32
    %c0_i32_0 = arith.constant 0 : i32
    %c0_i32_1 = arith.constant 0 : i32
    return %c0_i32, %c0_i32_0 : i32, i32
  }
  func.func @transform_3(%arg0: i32) -> (i32, i32) {
    %c0_i32 = arith.constant 0 : i32
    %c0_i32_0 = arith.constant 0 : i32
    return %arg0, %c0_i32 : i32, i32
  }
  func.func @transform_4(%arg0: i32) -> (i32, i32) {
    %c0_i32 = arith.constant 0 : i32
    %c0_i32_0 = arith.constant 0 : i32
    return %arg0, %c0_i32 : i32, i32
  }
}

</mosaic_0001>

<llo_original>
// kernel: squeeze.10
$region0: #{squeeze.10}
  %s0 = inlined_call_operand.vmem [shape: f32[128], index: 0, kind: input, shape index: {}]
  %s1 = inlined_call_operand.vmem [shape: f32[2,64], index: 1, kind: output, shape index: {}]
  $region1: #{squeeze.10} parent=0
    #allocation0 [shape = 'u8[4096]{0}', space=vmem, size = 0x1000, scoped, tag = 'scoped mem for output reshape']
    #allocation1 [shape = 'u8[4096]{0}', space=vmem, size = 0x1000, scoped, tag = 'scoped mem for input reshape']
    %s3 = sshllo.u32 0, 1
    %v4 = vld [vmem:[%s0] sm:%s3]
    %5 = vst [vmem:[#allocation1] sm:%s3] %v4
    %v6 = vld [vmem:[#allocation1] sm:$0x1]
    %vm7 = vcmask 523264
    %8 = vst.msk [vmem:[#allocation0] sm:$0x1] %vm7, %v6
    %v9 = vld [vmem:[#allocation1] sm:$0x1]
    %10 = vrot.lane.b32.xlu0 %v9, 64
    %v11 = vpop.permute.xlu0 %10
    %vm12 = vcmask 523264
    %s13 = scalar_lea.vmem [#allocation0], 1
    %14 = vst.msk [vmem:[%s13] sm:$0x1] %vm12, %v11
    %s16 = sshllo.u32 0, 2
    %v18 = vld [vmem:[#allocation0] sm:%s16]
    %s19 = sshllo.u32 0, 2
    %20 = vst [vmem:[%s1] sm:%s19] %v18

// kernel: tile.83
$region0: #{tile.83}
  #allocation0 [shape = 's32[1]{0}', space=sflag, size = 0x4, scoped, tag = 'scoped memory for tile.83']
  %s0 = inlined_call_operand.vmem [shape: f32[64], index: 0, kind: input, shape index: {}]
  %s1 = inlined_call_operand.vmem [shape: f32[2,64], index: 1, kind: output, shape index: {}]
  // Predicated region
  $region2: #{tile.83} parent=0 // pred_check
    _
  $region3: #{tile.83} parent=0 // pred_check_branch
    %3 = sbr.rel (0) target = $region5
  $region4: #{tile.83} parent=0 // pred_region
    _
  $region5: #{tile.83} parent=0 // pred_fallthru
    _
  %v4 = vld [vmem:[%s0] ss:$0 sm:$0xff]
  %5 = vst [vmem:[%s1] sm:$0x3] %v4

// kernel: tile.88
$region0: #{tile.88}
  %s0 = inlined_call_operand.vmem [shape: f32[2,64], index: 0, kind: input, shape index: {}]
  %s1 = inlined_call_operand.vmem [shape: f32[1,128], index: 1, kind: output, shape index: {}]
  $region1: #{tile.88} parent=0
    #allocation0 [shape = 'u8[4096]{0}', space=vmem, size = 0x1000, scoped, tag = 'scoped mem for output reshape']
    #allocation1 [shape = 'u8[4096]{0}', space=vmem, size = 0x1000, scoped, tag = 'scoped mem for input reshape']
    %s3 = sshllo.u32 0, 2
    %v4 = vld [vmem:[%s0] sm:%s3]
    %5 = vst [vmem:[#allocation1] sm:%s3] %v4
    %v6 = vld [vmem:[#allocation1] sm:$0x1]
    %vm7 = vcmask 523264
    %8 = vst.msk [vmem:[#allocation0] sm:$0x1] %vm7, %v6
    %s9 = scalar_lea.vmem [#allocation1], 1
    %v10 = vld [vmem:[%s9] sm:$0x1]
    %11 = vrot.lane.b32.xlu0 %v10, 64
    %v12 = vpop.permute.xlu0 %11
    %vm13 = vcmask 1048064
    %14 = vst.msk [vmem:[#allocation0] sm:$0x1] %vm13, %v12
    %s16 = sshllo.u32 0, 1
    %v18 = vld [vmem:[#allocation0] sm:%s16]
    %s19 = sshllo.u32 0, 1
    %20 = vst [vmem:[%s1] sm:%s19] %v18

// kernel: embedding_net_forward.61
$region0: #{embedding_net_forward.61}
  #allocation0 [shape = 'u32[]', space=smem, size = 0x4, offset = 0x4, fixed_abs, tag = 'smem constant byte address 0x4 - core index']
  #allocation1 [shape = 'u32[144,128]{1,0:T(1,128)}', space=vmem, size = 0x12000, scoped, tag = 'internal scratch']
  %s0 = inlined_call_operand.vmem [shape: f32[256,128], index: 0, kind: input, shape index: {}]
  %s1 = inlined_call_operand.vmem [shape: f32[1,128], index: 1, kind: output, shape index: {0}]
  %s2 = inlined_call_operand.vmem [shape: f32[1,128], index: 2, kind: output, shape index: {1}]
  %3 = xla_tuple %s1, %s2
  %s4 = sld [smem:[#allocation0]]
  $region26: #{embedding_net_forward.61} parent=0
    _
  %s6 = ssub.s32 1, %s4
  %s7 = scalar_select 0, %s6, %s4
  // Predicated region
  $region2: #{embedding_net_forward.61} parent=0 // pred_check
    _
  $region3: #{embedding_net_forward.61} parent=0 // pred_check_branch
    %9 = sbr.rel (0) target = $region5
  $region4: #{embedding_net_forward.61} parent=0 // pred_region
    _
  $region5: #{embedding_net_forward.61} parent=0 // pred_fallthru
    _
  %p10 = scmp.eq.s32.totalorder 0, 0
  // Predicated region
  $region6: #{embedding_net_forward.61} parent=0 // pred_check
    %p11 = pneg %p10
  $region7: #{embedding_net_forward.61} parent=0 // pred_check_branch
    %13 = sbr.rel (%p11) target = $region9
  $region8: #{embedding_net_forward.61} parent=0 // pred_region
    %14 = vst [vmem:[%s1] sm:$0x1] 0.0
    %15 = vst [vmem:[%s2] sm:$0x1] 0.0
  $region9: #{embedding_net_forward.61} parent=0 // pred_fallthru
    _
  %v16 = vld [vmem:[%s0] sm:$0xff]
  %v17 = vld [vmem:[%s0 + $0x8] sm:$0xff]
  %v18 = vld [vmem:[%s0 + $0x10] sm:$0xff]
  %v19 = vld [vmem:[%s0 + $0x18] sm:$0xff]
  %v20 = vld [vmem:[%s0 + $0x20] sm:$0xff]
  %v21 = vld [vmem:[%s0 + $0x28] sm:$0xff]
  %v22 = vld [vmem:[%s0 + $0x30] sm:$0xff]
  %v23 = vld [vmem:[%s0 + $0x38] sm:$0xff]
  %v24 = vld [vmem:[%s0 + $0x40] sm:$0xff]
  %v25 = vld [vmem:[%s0 + $0x48] sm:$0xff]
  %v26 = vld [vmem:[%s0 + $0x50] sm:$0xff]
  %v27 = vld [vmem:[%s0 + $0x58] sm:$0xff]
  %v28 = vld [vmem:[%s0 + $0x60] sm:$0xff]
  %v29 = vld [vmem:[%s0 + $0x68] sm:$0xff]
  %v30 = vld [vmem:[%s0 + $0x70] sm:$0xff]
  %v31 = vld [vmem:[%s0 + $0x78] sm:$0xff]
  %v32 = vld [vmem:[%s0 + $0x80] sm:$0xff]
  %v33 = vld [vmem:[%s0 + $0x88] sm:$0xff]
  %v34 = vld [vmem:[%s0 + $0x90] sm:$0xff]
  %v35 = vld [vmem:[%s0 + $0x98] sm:$0xff]
  %v36 = vld [vmem:[%s0 + $0xa0] sm:$0xff]
  %v37 = vld [vmem:[%s0 + $0xa8] sm:$0xff]
  %v38 = vld [vmem:[%s0 + $0xb0] sm:$0xff]
  %v39 = vld [vmem:[%s0 + $0xb8] sm:$0xff]
  %v40 = vld [vmem:[%s0 + $0xc0] sm:$0xff]
  %v41 = vld [vmem:[%s0 + $0xc8] sm:$0xff]
  %v42 = vld [vmem:[%s0 + $0xd0] sm:$0xff]
  %v43 = vld [vmem:[%s0 + $0xd8] sm:$0xff]
  %v44 = vld [vmem:[%s0 + $0xe0] sm:$0xff]
  %v45 = vld [vmem:[%s0 + $0xe8] sm:$0xff]
  %v46 = vld [vmem:[%s0 + $0xf0] sm:$0xff]
  %v47 = vld [vmem:[%s0 + $0xf8] sm:$0xff]
  %v48 = vld [vmem:[%s1] sm:$0x1]
  %v49 = vadd.f32 %v16, %v17
  %v50 = vadd.f32 %v49, %v18
  %v51 = vadd.f32 %v50, %v19
  %v52 = vadd.f32 %v51, %v20
  %v53 = vadd.f32 %v52, %v21
  %v54 = vadd.f32 %v53, %v22
  %v55 = vadd.f32 %v54, %v23
  %v56 = vadd.f32 %v55, %v24
  %v57 = vadd.f32 %v56, %v25
  %v58 = vadd.f32 %v57, %v26
  %v59 = vadd.f32 %v58, %v27
  %v60 = vadd.f32 %v59, %v28
  %v61 = vadd.f32 %v60, %v29
  %v62 = vadd.f32 %v61, %v30
  %v63 = vadd.f32 %v62, %v31
  %v64 = vadd.f32 %v63, %v32
  %v65 = vadd.f32 %v64, %v33
  %v66 = vadd.f32 %v65, %v34
  %v67 = vadd.f32 %v66, %v35
  %v68 = vadd.f32 %v67, %v36
  %v69 = vadd.f32 %v68, %v37
  %v70 = vadd.f32 %v69, %v38
  %v71 = vadd.f32 %v70, %v39
  %v72 = vadd.f32 %v71, %v40
  %v73 = vadd.f32 %v72, %v41
  %v74 = vadd.f32 %v73, %v42
  %v75 = vadd.f32 %v74, %v43
  %v76 = vadd.f32 %v75, %v44
  %v77 = vadd.f32 %v76, %v45
  %v78 = vadd.f32 %v77, %v46
  %v79 = vadd.f32 %v78, %v47
  %v80 = vrot.slane %v79, 4
  %v81 = vadd.f32 %v79, %v80
  %v82 = vrot.slane %v81, 2
  %v83 = vadd.f32 %v81, %v82
  %v84 = vrot.slane %v83, 1
  %v85 = vadd.f32 %v83, %v84
  %v86 = vadd.f32 %v48, %v85
  %87 = vst [vmem:[%s1] sm:$0x1] %v86
  %v88 = vld [vmem:[%s2] sm:$0x1]
  %v89 = vmul.f32 %v16, %v16
  %v90 = vmul.f32 %v17, %v17
  %v91 = vmul.f32 %v18, %v18
  %v92 = vmul.f32 %v19, %v19
  %v93 = vmul.f32 %v20, %v20
  %v94 = vmul.f32 %v21, %v21
  %v95 = vmul.f32 %v22, %v22
  %v96 = vmul.f32 %v23, %v23
  %v97 = vmul.f32 %v24, %v24
  %v98 = vmul.f32 %v25, %v25
  %v99 = vmul.f32 %v26, %v26
  %v100 = vmul.f32 %v27, %v27
  %v101 = vmul.f32 %v28, %v28
  %v102 = vmul.f32 %v29, %v29
  %v103 = vmul.f32 %v30, %v30
  %v104 = vmul.f32 %v31, %v31
  %v105 = vmul.f32 %v32, %v32
  %v106 = vmul.f32 %v33, %v33
  %v107 = vmul.f32 %v34, %v34
  %v108 = vmul.f32 %v35, %v35
  %v109 = vmul.f32 %v36, %v36
  %v110 = vmul.f32 %v37, %v37
  %v111 = vmul.f32 %v38, %v38
  %v112 = vmul.f32 %v39, %v39
  %v113 = vmul.f32 %v40, %v40
  %v114 = vmul.f32 %v41, %v41
  %v115 = vmul.f32 %v42, %v42
  %v116 = vmul.f32 %v43, %v43
  %v117 = vmul.f32 %v44, %v44
  %v118 = vmul.f32 %v45, %v45
  %v119 = vmul.f32 %v46, %v46
  %v120 = vmul.f32 %v47, %v47
  %v121 = vadd.f32 %v89, %v90
  %v122 = vadd.f32 %v121, %v91
  %v123 = vadd.f32 %v122, %v92
  %v124 = vadd.f32 %v123, %v93
  %v125 = vadd.f32 %v124, %v94
  %v126 = vadd.f32 %v125, %v95
  %v127 = vadd.f32 %v126, %v96
  %v128 = vadd.f32 %v127, %v97
  %v129 = vadd.f32 %v128, %v98
  %v130 = vadd.f32 %v129, %v99
  %v131 = vadd.f32 %v130, %v100
  %v132 = vadd.f32 %v131, %v101
  %v133 = vadd.f32 %v132, %v102
  %v134 = vadd.f32 %v133, %v103
  %v135 = vadd.f32 %v134, %v104
  %v136 = vadd.f32 %v135, %v105
  %v137 = vadd.f32 %v136, %v106
  %v138 = vadd.f32 %v137, %v107
  %v139 = vadd.f32 %v138, %v108
  %v140 = vadd.f32 %v139, %v109
  %v141 = vadd.f32 %v140, %v110
  %v142 = vadd.f32 %v141, %v111
  %v143 = vadd.f32 %v142, %v112
  %v144 = vadd.f32 %v143, %v113
  %v145 = vadd.f32 %v144, %v114
  %v146 = vadd.f32 %v145, %v115
  %v147 = vadd.f32 %v146, %v116
  %v148 = vadd.f32 %v147, %v117
  %v149 = vadd.f32 %v148, %v118
  %v150 = vadd.f32 %v149, %v119
  %v151 = vadd.f32 %v150, %v120
  %v152 = vrot.slane %v151, 4
  %v153 = vadd.f32 %v151, %v152
  %v154 = vrot.slane %v153, 2
  %v155 = vadd.f32 %v153, %v154
  %v156 = vrot.slane %v155, 1
  %v157 = vadd.f32 %v155, %v156
  %v158 = vadd.f32 %v88, %v157
  %159 = vst [vmem:[%s2] sm:$0x1] %v158
  // Predicated region
  $region10: #{embedding_net_forward.61} parent=0 // pred_check
    _
  $region11: #{embedding_net_forward.61} parent=0 // pred_check_branch
    %161 = sbr.rel (0) target = $region13
  $region12: #{embedding_net_forward.61} parent=0 // pred_region
    _
  $region13: #{embedding_net_forward.61} parent=0 // pred_fallthru
    _
  // Predicated region
  $region14: #{embedding_net_forward.61} parent=0 // pred_check
    _
  $region15: #{embedding_net_forward.61} parent=0 // pred_check_branch
    %163 = sbr.rel (0) target = $region17
  $region16: #{embedding_net_forward.61} parent=0 // pred_region
    _
  $region17: #{embedding_net_forward.61} parent=0 // pred_fallthru
    _
  // Predicated region
  $region18: #{embedding_net_forward.61} parent=0 // pred_check
    _
  $region19: #{embedding_net_forward.61} parent=0 // pred_check_branch
    %165 = sbr.rel (0) target = $region21
  $region20: #{embedding_net_forward.61} parent=0 // pred_region
    _
  $region21: #{embedding_net_forward.61} parent=0 // pred_fallthru
    _
  // Predicated region
  $region22: #{embedding_net_forward.61} parent=0 // pred_check
    _
  $region23: #{embedding_net_forward.61} parent=0 // pred_check_branch
    %167 = sbr.rel (0) target = $region25
  $region24: #{embedding_net_forward.61} parent=0 // pred_region
    _
  $region25: #{embedding_net_forward.61} parent=0 // pred_fallthru
    _

// kernel: embedding_net_forward.62
$region0: #{embedding_net_forward.62}
  #allocation0 [shape = 'u32[]', space=smem, size = 0x4, offset = 0x4, fixed_abs, tag = 'smem constant byte address 0x4 - core index']
  #allocation1 [shape = 'u32[144,128]{1,0:T(1,128)}', space=vmem, size = 0x12000, scoped, tag = 'internal scratch']
  %s0 = inlined_call_operand.vmem [shape: f32[256,128], index: 0, kind: input, shape index: {}]
  %s1 = inlined_call_operand.vmem [shape: f32[1,128], index: 1, kind: input, shape index: {}]
  %s2 = inlined_call_operand.vmem [shape: f32[1,128], index: 2, kind: input, shape index: {}]
  %s3 = inlined_call_operand.vmem [shape: f32[256,128], index: 3, kind: output, shape index: {}]
  %s4 = sld [smem:[#allocation0]]
  $region22: #{embedding_net_forward.62} parent=0
    _
  %s6 = ssub.s32 1, %s4
  %s7 = scalar_select 0, %s6, %s4
  // Predicated region
  $region2: #{embedding_net_forward.62} parent=0 // pred_check
    _
  $region3: #{embedding_net_forward.62} parent=0 // pred_check_branch
    %9 = sbr.rel (0) target = $region5
  $region4: #{embedding_net_forward.62} parent=0 // pred_region
    _
  $region5: #{embedding_net_forward.62} parent=0 // pred_fallthru
    _
  // Predicated region
  $region6: #{embedding_net_forward.62} parent=0 // pred_check
    _
  $region7: #{embedding_net_forward.62} parent=0 // pred_check_branch
    %11 = sbr.rel (0) target = $region9
  $region8: #{embedding_net_forward.62} parent=0 // pred_region
    _
  $region9: #{embedding_net_forward.62} parent=0 // pred_fallthru
    _
  // Predicated region
  $region10: #{embedding_net_forward.62} parent=0 // pred_check
    _
  $region11: #{embedding_net_forward.62} parent=0 // pred_check_branch
    %13 = sbr.rel (0) target = $region13
  $region12: #{embedding_net_forward.62} parent=0 // pred_region
    _
  $region13: #{embedding_net_forward.62} parent=0 // pred_fallthru
    _
  %v14 = vld [vmem:[%s0] sm:$0xff]
  %v15 = vld [vmem:[%s0 + $0x8] sm:$0xff]
  %v16 = vld [vmem:[%s0 + $0x10] sm:$0xff]
  %v17 = vld [vmem:[%s0 + $0x18] sm:$0xff]
  %v18 = vld [vmem:[%s0 + $0x20] sm:$0xff]
  %v19 = vld [vmem:[%s0 + $0x28] sm:$0xff]
  %v20 = vld [vmem:[%s0 + $0x30] sm:$0xff]
  %v21 = vld [vmem:[%s0 + $0x38] sm:$0xff]
  %v22 = vld [vmem:[%s0 + $0x40] sm:$0xff]
  %v23 = vld [vmem:[%s0 + $0x48] sm:$0xff]
  %v24 = vld [vmem:[%s0 + $0x50] sm:$0xff]
  %v25 = vld [vmem:[%s0 + $0x58] sm:$0xff]
  %v26 = vld [vmem:[%s0 + $0x60] sm:$0xff]
  %v27 = vld [vmem:[%s0 + $0x68] sm:$0xff]
  %v28 = vld [vmem:[%s0 + $0x70] sm:$0xff]
  %v29 = vld [vmem:[%s0 + $0x78] sm:$0xff]
  %v30 = vld [vmem:[%s0 + $0x80] sm:$0xff]
  %v31 = vld [vmem:[%s0 + $0x88] sm:$0xff]
  %v32 = vld [vmem:[%s0 + $0x90] sm:$0xff]
  %v33 = vld [vmem:[%s0 + $0x98] sm:$0xff]
  %v34 = vld [vmem:[%s0 + $0xa0] sm:$0xff]
  %v35 = vld [vmem:[%s0 + $0xa8] sm:$0xff]
  %v36 = vld [vmem:[%s0 + $0xb0] sm:$0xff]
  %v37 = vld [vmem:[%s0 + $0xb8] sm:$0xff]
  %v38 = vld [vmem:[%s0 + $0xc0] sm:$0xff]
  %v39 = vld [vmem:[%s0 + $0xc8] sm:$0xff]
  %v40 = vld [vmem:[%s0 + $0xd0] sm:$0xff]
  %v41 = vld [vmem:[%s0 + $0xd8] sm:$0xff]
  %v42 = vld [vmem:[%s0 + $0xe0] sm:$0xff]
  %v43 = vld [vmem:[%s0 + $0xe8] sm:$0xff]
  %v44 = vld [vmem:[%s0 + $0xf0] sm:$0xff]
  %v45 = vld [vmem:[%s0 + $0xf8] sm:$0xff]
  %v46 = vld [vmem:[%s1] sm:$0x1]
  %v48 = vlaneseq
  %v49 = vshrl.u32 %v48, 7
  %v50 = vsub.s32 0, %v49
  %v51 = vrot.slane %v46, %v50
  %v53 = vmul.f32 %v14, %v51
  %v54 = vmul.f32 %v15, %v51
  %v55 = vmul.f32 %v16, %v51
  %v56 = vmul.f32 %v17, %v51
  %v57 = vmul.f32 %v18, %v51
  %v58 = vmul.f32 %v19, %v51
  %v59 = vmul.f32 %v20, %v51
  %v60 = vmul.f32 %v21, %v51
  %v61 = vmul.f32 %v22, %v51
  %v62 = vmul.f32 %v23, %v51
  %v63 = vmul.f32 %v24, %v51
  %v64 = vmul.f32 %v25, %v51
  %v65 = vmul.f32 %v26, %v51
  %v66 = vmul.f32 %v27, %v51
  %v67 = vmul.f32 %v28, %v51
  %v68 = vmul.f32 %v29, %v51
  %v69 = vmul.f32 %v30, %v51
  %v70 = vmul.f32 %v31, %v51
  %v71 = vmul.f32 %v32, %v51
  %v72 = vmul.f32 %v33, %v51
  %v73 = vmul.f32 %v34, %v51
  %v74 = vmul.f32 %v35, %v51
  %v75 = vmul.f32 %v36, %v51
  %v76 = vmul.f32 %v37, %v51
  %v77 = vmul.f32 %v38, %v51
  %v78 = vmul.f32 %v39, %v51
  %v79 = vmul.f32 %v40, %v51
  %v80 = vmul.f32 %v41, %v51
  %v81 = vmul.f32 %v42, %v51
  %v82 = vmul.f32 %v43, %v51
  %v83 = vmul.f32 %v44, %v51
  %v84 = vmul.f32 %v45, %v51
  %v85 = vld [vmem:[%s2] sm:$0x1]
  %v87 = vlaneseq
  %v88 = vshrl.u32 %v87, 7
  %v89 = vsub.s32 0, %v88
  %v90 = vrot.slane %v85, %v89
  %v92 = vadd.f32 %v53, %v90
  %v93 = vadd.f32 %v54, %v90
  %v94 = vadd.f32 %v55, %v90
  %v95 = vadd.f32 %v56, %v90
  %v96 = vadd.f32 %v57, %v90
  %v97 = vadd.f32 %v58, %v90
  %v98 = vadd.f32 %v59, %v90
  %v99 = vadd.f32 %v60, %v90
  %v100 = vadd.f32 %v61, %v90
  %v101 = vadd.f32 %v62, %v90
  %v102 = vadd.f32 %v63, %v90
  %v103 = vadd.f32 %v64, %v90
  %v104 = vadd.f32 %v65, %v90
  %v105 = vadd.f32 %v66, %v90
  %v106 = vadd.f32 %v67, %v90
  %v107 = vadd.f32 %v68, %v90
  %v108 = vadd.f32 %v69, %v90
  %v109 = vadd.f32 %v70, %v90
  %v110 = vadd.f32 %v71, %v90
  %v111 = vadd.f32 %v72, %v90
  %v112 = vadd.f32 %v73, %v90
  %v113 = vadd.f32 %v74, %v90
  %v114 = vadd.f32 %v75, %v90
  %v115 = vadd.f32 %v76, %v90
  %v116 = vadd.f32 %v77, %v90
  %v117 = vadd.f32 %v78, %v90
  %v118 = vadd.f32 %v79, %v90
  %v119 = vadd.f32 %v80, %v90
  %v120 = vadd.f32 %v81, %v90
  %v121 = vadd.f32 %v82, %v90
  %v122 = vadd.f32 %v83, %v90
  %v123 = vadd.f32 %v84, %v90
  %v124 = vmax.f32 %v92, 0.0
  %v125 = vmax.f32 %v93, 0.0
  %v126 = vmax.f32 %v94, 0.0
  %v127 = vmax.f32 %v95, 0.0
  %v128 = vmax.f32 %v96, 0.0
  %v129 = vmax.f32 %v97, 0.0
  %v130 = vmax.f32 %v98, 0.0
  %v131 = vmax.f32 %v99, 0.0
  %v132 = vmax.f32 %v100, 0.0
  %v133 = vmax.f32 %v101, 0.0
  %v134 = vmax.f32 %v102, 0.0
  %v135 = vmax.f32 %v103, 0.0
  %v136 = vmax.f32 %v104, 0.0
  %v137 = vmax.f32 %v105, 0.0
  %v138 = vmax.f32 %v106, 0.0
  %v139 = vmax.f32 %v107, 0.0
  %v140 = vmax.f32 %v108, 0.0
  %v141 = vmax.f32 %v109, 0.0
  %v142 = vmax.f32 %v110, 0.0
  %v143 = vmax.f32 %v111, 0.0
  %v144 = vmax.f32 %v112, 0.0
  %v145 = vmax.f32 %v113, 0.0
  %v146 = vmax.f32 %v114, 0.0
  %v147 = vmax.f32 %v115, 0.0
  %v148 = vmax.f32 %v116, 0.0
  %v149 = vmax.f32 %v117, 0.0
  %v150 = vmax.f32 %v118, 0.0
  %v151 = vmax.f32 %v119, 0.0
  %v152 = vmax.f32 %v120, 0.0
  %v153 = vmax.f32 %v121, 0.0
  %v154 = vmax.f32 %v122, 0.0
  %v155 = vmax.f32 %v123, 0.0
  %156 = vst [vmem:[%s3] sm:$0xff] %v124
  %157 = vst [vmem:[%s3 + $0x8] sm:$0xff] %v125
  %158 = vst [vmem:[%s3 + $0x10] sm:$0xff] %v126
  %159 = vst [vmem:[%s3 + $0x18] sm:$0xff] %v127
  %160 = vst [vmem:[%s3 + $0x20] sm:$0xff] %v128
  %161 = vst [vmem:[%s3 + $0x28] sm:$0xff] %v129
  %162 = vst [vmem:[%s3 + $0x30] sm:$0xff] %v130
  %163 = vst [vmem:[%s3 + $0x38] sm:$0xff] %v131
  %164 = vst [vmem:[%s3 + $0x40] sm:$0xff] %v132
  %165 = vst [vmem:[%s3 + $0x48] sm:$0xff] %v133
  %166 = vst [vmem:[%s3 + $0x50] sm:$0xff] %v134
  %167 = vst [vmem:[%s3 + $0x58] sm:$0xff] %v135
  %168 = vst [vmem:[%s3 + $0x60] sm:$0xff] %v136
  %169 = vst [vmem:[%s3 + $0x68] sm:$0xff] %v137
  %170 = vst [vmem:[%s3 + $0x70] sm:$0xff] %v138
  %171 = vst [vmem:[%s3 + $0x78] sm:$0xff] %v139
  %172 = vst [vmem:[%s3 + $0x80] sm:$0xff] %v140
  %173 = vst [vmem:[%s3 + $0x88] sm:$0xff] %v141
  %174 = vst [vmem:[%s3 + $0x90] sm:$0xff] %v142
  %175 = vst [vmem:[%s3 + $0x98] sm:$0xff] %v143
  %176 = vst [vmem:[%s3 + $0xa0] sm:$0xff] %v144
  %177 = vst [vmem:[%s3 + $0xa8] sm:$0xff] %v145
  %178 = vst [vmem:[%s3 + $0xb0] sm:$0xff] %v146
  %179 = vst [vmem:[%s3 + $0xb8] sm:$0xff] %v147
  %180 = vst [vmem:[%s3 + $0xc0] sm:$0xff] %v148
  %181 = vst [vmem:[%s3 + $0xc8] sm:$0xff] %v149
  %182 = vst [vmem:[%s3 + $0xd0] sm:$0xff] %v150
  %183 = vst [vmem:[%s3 + $0xd8] sm:$0xff] %v151
  %184 = vst [vmem:[%s3 + $0xe0] sm:$0xff] %v152
  %185 = vst [vmem:[%s3 + $0xe8] sm:$0xff] %v153
  %186 = vst [vmem:[%s3 + $0xf0] sm:$0xff] %v154
  %187 = vst [vmem:[%s3 + $0xf8] sm:$0xff] %v155
  // Predicated region
  $region14: #{embedding_net_forward.62} parent=0 // pred_check
    _
  $region15: #{embedding_net_forward.62} parent=0 // pred_check_branch
    %189 = sbr.rel (0) target = $region17
  $region16: #{embedding_net_forward.62} parent=0 // pred_region
    _
  $region17: #{embedding_net_forward.62} parent=0 // pred_fallthru
    _
  // Predicated region
  $region18: #{embedding_net_forward.62} parent=0 // pred_check
    _
  $region19: #{embedding_net_forward.62} parent=0 // pred_check_branch
    %191 = sbr.rel (0) target = $region21
  $region20: #{embedding_net_forward.62} parent=0 // pred_region
    _
  $region21: #{embedding_net_forward.62} parent=0 // pred_fallthru
    _

// kernel: embedding_net_forward.60
$region0: #{embedding_net_forward.60}
  #allocation0 [shape = 'u32[]', space=smem, size = 0x4, offset = 0x4, fixed_abs, tag = 'smem constant byte address 0x4 - core index']
  #allocation1 [shape = 'u32[144,128]{1,0:T(1,128)}', space=vmem, size = 0x12000, scoped, tag = 'internal scratch']
  %s0 = inlined_call_operand.vmem [shape: bf16[512,147], index: 0, kind: input, shape index: {}]
  %s1 = inlined_call_operand.vmem [shape: bf16[147,64], index: 1, kind: input, shape index: {}]
  %s2 = inlined_call_operand.vmem [shape: f32[512,64], index: 2, kind: output, shape index: {}]
  %s3 = sld [smem:[#allocation0]]
  $region41: #{embedding_net_forward.60} parent=0
    _
  %s5 = ssub.s32 1, %s3
  %s6 = scalar_select 0, %s5, %s3
  loop: start=0, step=1, limit=4
  $region2: #{embedding_net_forward.60} parent=0 // loop_pre_header
    _
  $region3: #{embedding_net_forward.60} parent=0 // loop_header
    %s8 = sphi 0, %s12
    %p9 = scmp.ge.s32.totalorder %s8, 4
    %s15 = sphi 0, %s27
    %s16 = sphi 0, %s23
    %s17 = sphi 0, %s15
    %s18 = sphi 0, %s16
    %s19 = sphi 0, %s17
    %s20 = sphi 0, %s18
    %s30 = sphi 0, %s32
    %s33 = sphi 0, %s30
    %s34 = sphi 0, %s33
    %s50 = sphi 0, %s34
    %s56 = sphi 0, %s58
    %s59 = sphi 0, %s56
    %s60 = sphi 0, %s59
    %s76 = sphi 0, %s60
    %s84 = sphi 0, %s86
    %s87 = sphi 0, %s84
    %s88 = sphi 0, %s87
    %s104 = sphi 0, %s88
  $region4: #{embedding_net_forward.60} parent=0 // loop_header_branch
    %11 = sbr.rel (%p9) target = $region8
  $region5: #{embedding_net_forward.60} parent=0 // loop_body
    %s13 = ssub.s32 %s8, 1
    %s14 = ssub.s32 %s8, 2
    %s21 = sadd.s32 1, %s16
    %p22 = scmp.ge.s32.totalorder %s21, 1
    %s23 = scalar_select %p22, 0, %s21
    %s24 = sadd.s32 1, %s15
    %s25 = scalar_select %p22, %s24, %s15
    %p26 = scmp.ge.s32.totalorder %s25, 2
    %s27 = scalar_select %p26, 0, %s25
    %s28 = ssub.s32 %s15, %s27
    %p29 = scmp.eq.s32.totalorder %s28, 0
    %s31 = sadd.s32 %s30, 1
    %s32 = scalar_select %p29, %s30, %s31
    %p35 = pneg %p29
    %p36 = scmp.eq.s32.totalorder %s8, 1
    %p37 = por %p35, %p36
    %p38 = scmp.ne.s32.totalorder %s30, %s33
    %p39 = scmp.eq.s32.totalorder %s8, 0
    %p40 = por %p38, %p39
    %p41 = scmp.ne.s32.totalorder %s30, %s33
    %p42 = scmp.eq.s32.totalorder %s13, 1
    %p43 = por %p41, %p42
    %p44 = scmp.ne.s32.totalorder %s33, %s34
    %p45 = scmp.eq.s32.totalorder %s13, 0
    %p46 = por %p44, %p45
    %p47 = scmp.ne.s32.totalorder %s33, %s34
    %p48 = scmp.eq.s32.totalorder %s14, 1
    %p49 = por %p47, %p48
    %p51 = scmp.ne.s32.totalorder %s34, %s50
    %p52 = scmp.eq.s32.totalorder %s14, 0
    %p53 = por %p51, %p52
    %s54 = ssub.s32 %s16, %s23
    %p55 = scmp.eq.s32.totalorder %s54, 0
    %s57 = sadd.s32 %s56, 1
    %s58 = scalar_select %p55, %s56, %s57
    %p61 = pneg %p55
    %p62 = scmp.eq.s32.totalorder %s8, 1
    %p63 = por %p61, %p62
    %p64 = scmp.ne.s32.totalorder %s56, %s59
    %p65 = scmp.eq.s32.totalorder %s8, 0
    %p66 = por %p64, %p65
    %p67 = scmp.ne.s32.totalorder %s56, %s59
    %p68 = scmp.eq.s32.totalorder %s13, 1
    %p69 = por %p67, %p68
    %p70 = scmp.ne.s32.totalorder %s59, %s60
    %p71 = scmp.eq.s32.totalorder %s13, 0
    %p72 = por %p70, %p71
    %p73 = scmp.ne.s32.totalorder %s59, %s60
    %p74 = scmp.eq.s32.totalorder %s14, 1
    %p75 = por %p73, %p74
    %p77 = scmp.ne.s32.totalorder %s60, %s76
    %p78 = scmp.eq.s32.totalorder %s14, 0
    %p79 = por %p77, %p78
    %s80 = ssub.s32 %s15, %s27
    %s81 = ssub.s32 %s16, %s23
    %s82 = sor.u32 %s80, %s81
    %p83 = scmp.eq.s32.totalorder %s82, 0
    %s85 = sadd.s32 %s84, 1
    %s86 = scalar_select %p83, %s84, %s85
    %p89 = pneg %p83
    %p90 = scmp.eq.s32.totalorder %s8, 1
    %p91 = por %p89, %p90
    %p92 = scmp.ne.s32.totalorder %s84, %s87
    %p93 = scmp.eq.s32.totalorder %s8, 0
    %p94 = por %p92, %p93
    %p95 = scmp.ne.s32.totalorder %s84, %s87
    %p96 = scmp.eq.s32.totalorder %s13, 1
    %p97 = por %p95, %p96
    %p98 = scmp.ne.s32.totalorder %s87, %s88
    %p99 = scmp.eq.s32.totalorder %s13, 0
    %p100 = por %p98, %p99
    %p101 = scmp.ne.s32.totalorder %s87, %s88
    %p102 = scmp.eq.s32.totalorder %s14, 1
    %p103 = por %p101, %p102
    %p105 = scmp.ne.s32.totalorder %s88, %s104
    %p106 = scmp.eq.s32.totalorder %s14, 0
    %p107 = por %p105, %p106
    %p108 = scmp.le.s32.totalorder 1, %s8
    %p109 = scmp.lt.s32.totalorder %s8, 3
    %p110 = pnand %p108, %p109
    %p111 = pneg %p110
    // Predicated region
    $region9: #{embedding_net_forward.60} parent=5 // pred_check
      _
    $region10: #{embedding_net_forward.60} parent=5 // pred_check_branch
      %113 = sbr.rel (%p110) target = $region12
    $region11: #{embedding_net_forward.60} parent=5 // pred_region
      %s114 = ssub.s32 %s8, 1
      // Predicated region
      $region13: #{embedding_net_forward.60} parent=11 // pred_check
        %p115 = pneg %p72
      $region14: #{embedding_net_forward.60} parent=11 // pred_check_branch
        %117 = sbr.rel (%p115) target = $region16
      $region15: #{embedding_net_forward.60} parent=11 // pred_region
        %p118 = scmp.lt.s32.totalorder %s18, 0
        %s119 = scalar_select %p118, %s18, 0
        %s120 = smul.addr %s119, 4
        %s121 = scalar_lea.vmem %s1, %s120
      $region16: #{embedding_net_forward.60} parent=11 // pred_fallthru
        _
    $region12: #{embedding_net_forward.60} parent=5 // pred_fallthru
      _
    %p122 = scmp.lt.s32.totalorder %s8, 2
    // Predicated region
    $region17: #{embedding_net_forward.60} parent=5 // pred_check
      %p123 = pneg %p122
    $region18: #{embedding_net_forward.60} parent=5 // pred_check_branch
      %125 = sbr.rel (%p123) target = $region20
    $region19: #{embedding_net_forward.60} parent=5 // pred_region
      // Predicated region
      $region21: #{embedding_net_forward.60} parent=19 // pred_check
        %p126 = pneg %p40
      $region22: #{embedding_net_forward.60} parent=19 // pred_check_branch
        %128 = sbr.rel (%p126) target = $region24
      $region23: #{embedding_net_forward.60} parent=19 // pred_region
        %s129 = smul.u32 32, %s15
        %p130 = scmp.lt.s32.totalorder %s129, 63
        %s131 = scalar_select %p130, %s129, 63
        %s132 = smul.addr %s131, 2
        %s133 = smul.addr %s132, 4
        %s134 = scalar_lea.vmem %s0, %s133
        %s135 = smul.u32 32, %s15
      $region24: #{embedding_net_forward.60} parent=19 // pred_fallthru
        _
    $region20: #{embedding_net_forward.60} parent=5 // pred_fallthru
      _
    %p136 = scmp.le.s32.totalorder 1, %s8
    %p137 = scmp.lt.s32.totalorder %s8, 3
    %p138 = pnand %p136, %p137
    %p139 = pneg %p138
    // Predicated region
    $region25: #{embedding_net_forward.60} parent=5 // pred_check
      _
    $region26: #{embedding_net_forward.60} parent=5 // pred_check_branch
      %141 = sbr.rel (%p138) target = $region28
    $region27: #{embedding_net_forward.60} parent=5 // pred_region
      %s142 = ssub.s32 %s8, 1
      %s143 = smul.u32 32, %s17
      %p144 = scmp.lt.s32.totalorder %s143, 63
      %s145 = scalar_select %p144, %s143, 63
      %s146 = smul.addr %s145, 2
      %s147 = smul.addr %s146, 4
      %s148 = scalar_lea.vmem %s0, %s147
      %p149 = pneg %p46
      %p150 = pneg %p43
      %p151 = scmp.lt.s32.totalorder %s18, 0
      %s152 = scalar_select %p151, %s18, 0
      %s153 = smul.addr %s152, 4
      %s154 = scalar_lea.vmem %s1, %s153
      %p155 = pneg %p72
      %p156 = pneg %p69
      %p157 = pneg %p100
      %p158 = pneg %p97
      %s159 = smul.u32 32, %s17
      %p160 = scmp.lt.s32.totalorder %s159, 63
      %s161 = scalar_select %p160, %s159, 63
      %p162 = scmp.lt.s32.totalorder %s18, 0
      %s163 = scalar_select %p162, %s18, 0
      %s164 = sadd.s32 %s163, %s161
      %s165 = smul.addr %s164, 8
      %s166 = scalar_lea.vmem %s2, %s165
      %s167 = smul.u32 32, %s17
      %p168 = scmp.lt.s32.totalorder %s167, 63
      %s169 = scalar_select %p168, %s167, 63
      %s170 = smul.addr %s169, 2
      %s171 = smul.addr %s170, 4
      %s172 = scalar_lea.vmem %s0, %s171
      %s173 = smul.u32 32, %s17
      %p174 = scmp.lt.s32.totalorder %s18, 0
      %s175 = scalar_select %p174, %s18, 0
      %s176 = smul.addr %s175, 4
      %s177 = scalar_lea.vmem %s1, %s176
      %s178 = smul.u32 32, %s17
      %p179 = scmp.lt.s32.totalorder %s178, 63
      %s180 = scalar_select %p179, %s178, 63
      %p181 = scmp.lt.s32.totalorder %s18, 0
      %s182 = scalar_select %p181, %s18, 0
      %s183 = sadd.s32 %s182, %s180
      %s184 = smul.addr %s183, 8
      %s185 = scalar_lea.vmem %s2, %s184
      %s186 = smul.u32 32, %s17
      %v188 = vld [vmem:[%s172] sm:$0xff]
      %v189 = vld [vmem:[%s172 + $0x8] sm:$0xff]
      %v190 = vld [vmem:[%s172 + $0x10] sm:$0xff]
      %v191 = vld [vmem:[%s172 + $0x18] sm:$0xff]
      %v192 = vld [vmem:[%s172 + $0x20] sm:$0xff]
      %v193 = vld [vmem:[%s172 + $0x28] sm:$0xff]
      %v194 = vld [vmem:[%s172 + $0x30] sm:$0xff]
      %v195 = vld [vmem:[%s172 + $0x38] sm:$0xff]
      %v196 = vld [vmem:[%s172 + $0x40] sm:$0xff]
      %v197 = vld [vmem:[%s172 + $0x48] sm:$0xff]
      %v198 = vld [vmem:[%s172 + $0x50] sm:$0xff]
      %v199 = vld [vmem:[%s172 + $0x58] sm:$0xff]
      %v200 = vld [vmem:[%s172 + $0x60] sm:$0xff]
      %v201 = vld [vmem:[%s172 + $0x68] sm:$0xff]
      %v202 = vld [vmem:[%s172 + $0x70] sm:$0xff]
      %v203 = vld [vmem:[%s172 + $0x78] sm:$0xff]
      %v204 = vld [vmem:[%s172 + $0x80] sm:$0xff]
      %v205 = vld [vmem:[%s172 + $0x88] sm:$0xff]
      %v206 = vld [vmem:[%s172 + $0x90] sm:$0xff]
      %v207 = vld [vmem:[%s172 + $0x98] sm:$0xff]
      %v208 = vld [vmem:[%s172 + $0xa0] sm:$0xff]
      %v209 = vld [vmem:[%s172 + $0xa8] sm:$0xff]
      %v210 = vld [vmem:[%s172 + $0xb0] sm:$0xff]
      %v211 = vld [vmem:[%s172 + $0xb8] sm:$0xff]
      %v212 = vld [vmem:[%s172 + $0xc0] sm:$0xff]
      %v213 = vld [vmem:[%s172 + $0xc8] sm:$0xff]
      %v214 = vld [vmem:[%s172 + $0xd0] sm:$0xff]
      %v215 = vld [vmem:[%s172 + $0xd8] sm:$0xff]
      %v216 = vld [vmem:[%s172 + $0xe0] sm:$0xff]
      %v217 = vld [vmem:[%s172 + $0xe8] sm:$0xff]
      %v218 = vld [vmem:[%s172 + $0xf0] sm:$0xff]
      %v219 = vld [vmem:[%s172 + $0xf8] sm:$0xff]
      %v220 = vld [vmem:[%s177] sm:$0xf]
      %v221 = vld [vmem:[%s177 + $0x4] sm:$0xf]
      %v222 = vld [vmem:[%s177 + $0x8] sm:$0xf]
      %v223 = vld [vmem:[%s177 + $0xc] sm:$0xf]
      %v224 = vld [vmem:[%s177 + $0x10] sm:$0xf]
      %v225 = vld [vmem:[%s177 + $0x14] sm:$0xf]
      %v226 = vld [vmem:[%s177 + $0x18] sm:$0xf]
      %v227 = vld [vmem:[%s177 + $0x1c] sm:$0xf]
      %v228 = vld [vmem:[%s177 + $0x20] sm:$0xf]
      %v229 = vld [vmem:[%s177 + $0x24] sm:$0xf]
      %v230 = vld [vmem:[%s177 + $0x28] sm:$0xf]
      %v231 = vld [vmem:[%s177 + $0x2c] sm:$0xf]
      %v232 = vld [vmem:[%s177 + $0x30] sm:$0xf]
      %v233 = vld [vmem:[%s177 + $0x34] sm:$0xf]
      %v234 = vld [vmem:[%s177 + $0x38] sm:$0xf]
      %v235 = vld [vmem:[%s177 + $0x3c] sm:$0xf]
      %v236 = vld [vmem:[%s177 + $0x40] sm:$0xf]
      %v237 = vld [vmem:[%s177 + $0x44] sm:$0xf]
      %v238 = vld [vmem:[%s177 + $0x48] sm:$0x3]
      %v271 = vunpack.c.l.b16 %v188
      %v272 = vunpack.c.h.b16 %v188
      %v273 = vunpack.c.l.b16 %v189
      %v274 = vunpack.c.h.b16 %v189
      %v275 = vunpack.c.l.b16 %v190
      %v276 = vunpack.c.h.b16 %v190
      %v277 = vunpack.c.l.b16 %v191
      %v278 = vunpack.c.h.b16 %v191
      %v279 = vunpack.c.l.b16 %v192
      %v280 = vunpack.c.h.b16 %v192
      %v281 = vunpack.c.l.b16 %v193
      %v282 = vunpack.c.h.b16 %v193
      %v283 = vunpack.c.l.b16 %v194
      %v284 = vunpack.c.h.b16 %v194
      %v285 = vunpack.c.l.b16 %v195
      %v286 = vunpack.c.h.b16 %v195
      %v287 = vunpack.c.l.b16 %v196
      %v288 = vunpack.c.h.b16 %v196
      %v289 = vunpack.c.l.b16 %v197
      %v290 = vunpack.c.h.b16 %v197
      %v291 = vunpack.c.l.b16 %v198
      %v292 = vunpack.c.h.b16 %v198
      %v293 = vunpack.c.l.b16 %v199
      %v294 = vunpack.c.h.b16 %v199
      %v295 = vunpack.c.l.b16 %v200
      %v296 = vunpack.c.h.b16 %v200
      %v297 = vunpack.c.l.b16 %v201
      %v298 = vunpack.c.h.b16 %v201
      %v299 = vunpack.c.l.b16 %v202
      %v300 = vunpack.c.h.b16 %v202
      %v301 = vunpack.c.l.b16 %v203
      %v302 = vunpack.c.h.b16 %v203
      %v303 = vunpack.c.l.b16 %v204
      %v304 = vunpack.c.h.b16 %v204
      %v305 = vunpack.c.l.b16 %v205
      %v306 = vunpack.c.h.b16 %v205
      %v307 = vunpack.c.l.b16 %v206
      %v308 = vunpack.c.h.b16 %v206
      %v309 = vunpack.c.l.b16 %v207
      %v310 = vunpack.c.h.b16 %v207
      %v311 = vunpack.c.l.b16 %v208
      %v312 = vunpack.c.h.b16 %v208
      %v313 = vunpack.c.l.b16 %v209
      %v314 = vunpack.c.h.b16 %v209
      %v315 = vunpack.c.l.b16 %v210
      %v316 = vunpack.c.h.b16 %v210
      %v317 = vunpack.c.l.b16 %v211
      %v318 = vunpack.c.h.b16 %v211
      %v319 = vunpack.c.l.b16 %v212
      %v320 = vunpack.c.h.b16 %v212
      %v321 = vunpack.c.l.b16 %v213
      %v322 = vunpack.c.h.b16 %v213
      %v323 = vunpack.c.l.b16 %v214
      %v324 = vunpack.c.h.b16 %v214
      %v325 = vunpack.c.l.b16 %v215
      %v326 = vunpack.c.h.b16 %v215
      %v327 = vunpack.c.l.b16 %v216
      %v328 = vunpack.c.h.b16 %v216
      %v329 = vunpack.c.l.b16 %v217
      %v330 = vunpack.c.h.b16 %v217
      %v331 = vunpack.c.l.b16 %v218
      %v332 = vunpack.c.h.b16 %v218
      %v333 = vunpack.c.l.b16 %v219
      %v334 = vunpack.c.h.b16 %v219
      %v335 = vpack.c.b16 %v273, %v271
      %v336 = vpack.c.b16 %v274, %v272
      %v337 = vpack.c.b16 %v277, %v275
      %v338 = vpack.c.b16 %v278, %v276
      %v339 = vpack.c.b16 %v281, %v279
      %v340 = vpack.c.b16 %v282, %v280
      %v341 = vpack.c.b16 %v285, %v283
      %v342 = vpack.c.b16 %v286, %v284
      %v343 = vpack.c.b16 %v289, %v287
      %v344 = vpack.c.b16 %v290, %v288
      %v345 = vpack.c.b16 %v293, %v291
      %v346 = vpack.c.b16 %v294, %v292
      %v347 = vpack.c.b16 %v297, %v295
      %v348 = vpack.c.b16 %v298, %v296
      %v349 = vpack.c.b16 %v301, %v299
      %v350 = vpack.c.b16 %v302, %v300
      %v351 = vpack.c.b16 %v305, %v303
      %v352 = vpack.c.b16 %v306, %v304
      %v353 = vpack.c.b16 %v309, %v307
      %v354 = vpack.c.b16 %v310, %v308
      %v355 = vpack.c.b16 %v313, %v311
      %v356 = vpack.c.b16 %v314, %v312
      %v357 = vpack.c.b16 %v317, %v315
      %v358 = vpack.c.b16 %v318, %v316
      %v359 = vpack.c.b16 %v321, %v319
      %v360 = vpack.c.b16 %v322, %v320
      %v361 = vpack.c.b16 %v325, %v323
      %v362 = vpack.c.b16 %v326, %v324
      %v363 = vpack.c.b16 %v329, %v327
      %v364 = vpack.c.b16 %v330, %v328
      %v365 = vpack.c.b16 %v333, %v331
      %v366 = vpack.c.b16 %v334, %v332
      %v402 = vunpack.c.l.b16 %v220
      %v403 = vunpack.c.l.b16 %v221
      %v404 = vunpack.c.l.b16 %v222
      %v405 = vunpack.c.l.b16 %v223
      %v406 = vunpack.c.l.b16 %v224
      %v407 = vunpack.c.l.b16 %v225
      %v408 = vunpack.c.l.b16 %v226
      %v409 = vunpack.c.l.b16 %v227
      %v410 = vunpack.c.l.b16 %v228
      %v411 = vunpack.c.l.b16 %v229
      %v412 = vunpack.c.l.b16 %v230
      %v413 = vunpack.c.l.b16 %v231
      %v414 = vunpack.c.l.b16 %v232
      %v415 = vunpack.c.l.b16 %v233
      %v416 = vunpack.c.l.b16 %v234
      %v417 = vunpack.c.l.b16 %v235
      %v418 = vunpack.c.l.b16 %v236
      %v419 = vunpack.c.l.b16 %v237
      %v420 = vunpack.c.l.b16 %v238
      %v421 = vpack.c.b16 %v403, %v402
      %v422 = vpack.c.b16 %v405, %v404
      %v423 = vpack.c.b16 %v407, %v406
      %v424 = vpack.c.b16 %v409, %v408
      %v425 = vpack.c.b16 %v411, %v410
      %v426 = vpack.c.b16 %v413, %v412
      %v427 = vpack.c.b16 %v415, %v414
      %v428 = vpack.c.b16 %v417, %v416
      %v429 = vpack.c.b16 %v419, %v418
      %v430 = vpack.c.b16 %v420, %v420
      %vm440 = vcmask 154624
      %v442 = vsel %vm440, %v336, 0
      %v445 = vsel %vm440, %v338, 0
      %v448 = vsel %vm440, %v340, 0
      %v451 = vsel %vm440, %v342, 0
      %v454 = vsel %vm440, %v344, 0
      %v457 = vsel %vm440, %v346, 0
      %v460 = vsel %vm440, %v348, 0
      %v463 = vsel %vm440, %v350, 0
      %v466 = vsel %vm440, %v352, 0
      %v469 = vsel %vm440, %v354, 0
      %v472 = vsel %vm440, %v356, 0
      %v475 = vsel %vm440, %v358, 0
      %v478 = vsel %vm440, %v360, 0
      %v481 = vsel %vm440, %v362, 0
      %v484 = vsel %vm440, %v364, 0
      %v487 = vsel %vm440, %v366, 0
      %vm489 = vcmask 1040384
      %vm490 = vcmask 1041408
      %v491 = vsel %vm489, 4294967295, 65535
      %v492 = vsel %vm490, %v491, 0
      %v494 = vand.u32 %v430, %v492
      %496 = vmatprep.subr.bf16.mxu0 0
      %497 = vmatpush1.bf16.msra.mxu0 %v421
      %498 = vmatprep.subr.bf16.mxu0 0
      %499 = vmatpush1.bf16.msra.mxu0 %v422
      %500 = vmatprep.subr.bf16.mxu0 0
      %501 = vmatpush1.bf16.msra.mxu0 %v423
      %502 = vmatprep.subr.bf16.mxu0 0
      %503 = vmatpush1.bf16.msra.mxu0 %v424
      %504 = vmatprep.subr.bf16.mxu0 0
      %505 = vmatpush1.bf16.msra.mxu0 %v425
      %506 = vmatprep.subr.bf16.mxu0 0
      %507 = vmatpush1.bf16.msra.mxu0 %v426
      %508 = vmatprep.subr.bf16.mxu0 0
      %509 = vmatpush1.bf16.msra.mxu0 %v427
      %510 = vmatprep.subr.bf16.mxu0 0
      %511 = vmatpush1.bf16.msra.mxu0 %v428
      %512 = vmatprep.subr.bf16.mxu0 0
      %513 = vmatpush1.bf16.msra.mxu0 %v429
      %514 = vmatprep.subr.bf16.mxu0 0
      %515 = vmatpush1.bf16.msra.mxu0 %v494
      %516 = vmatprep.subr.bf16.mxu0 0
      %517 = vmatpush1.bf16.msra.mxu0 0
      %518 = vmatprep.subr.bf16.mxu0 0
      %519 = vmatpush1.bf16.msra.mxu0 0
      %520 = vmatprep.subr.bf16.mxu0 0
      %521 = vmatpush1.bf16.msra.mxu0 0
      %522 = vmatprep.subr.bf16.mxu0 0
      %523 = vmatpush1.bf16.msra.mxu0 0
      %524 = vmatprep.subr.bf16.mxu0 0
      %525 = vmatpush1.bf16.msra.mxu0 0
      %526 = vmatprep.subr.bf16.mxu0 0
      %527 = vmatpush1.bf16.msra.mxu0 0
      %528 = vmatprep.mubr.bf16.mxu0 %v442
      %529 = vmatmul.mubr.bf16.gmra.mrb[0].mxu0 %v335
      %v530 = vpop.f32.mrb[0].mxu0
      %v531 = vadd.f32 0.0, %v530
      %v532 = vpop.f32.mrb[0].mxu0
      %v533 = vpop.f32.mrb[0].mxu0
      %v534 = vadd.f32 0.0, %v533
      %v535 = vpop.f32.mrb[0].mxu0
      %536 = vmatprep.mubr.bf16.mxu0 %v445
      %537 = vmatmul.mubr.bf16.gmra.mrb[0].mxu0 %v337
      %v538 = vpop.f32.mrb[0].mxu0
      %v539 = vadd.f32 0.0, %v538
      %v540 = vpop.f32.mrb[0].mxu0
      %v541 = vpop.f32.mrb[0].mxu0
      %v542 = vadd.f32 0.0, %v541
      %v543 = vpop.f32.mrb[0].mxu0
      %544 = vmatprep.mubr.bf16.mxu0 %v448
      %545 = vmatmul.mubr.bf16.gmra.mrb[0].mxu0 %v339
      %v546 = vpop.f32.mrb[0].mxu0
      %v547 = vadd.f32 0.0, %v546
      %v548 = vpop.f32.mrb[0].mxu0
      %v549 = vpop.f32.mrb[0].mxu0
      %v550 = vadd.f32 0.0, %v549
      %v551 = vpop.f32.mrb[0].mxu0
      %552 = vmatprep.mubr.bf16.mxu0 %v451
      %553 = vmatmul.mubr.bf16.gmra.mrb[0].mxu0 %v341
      %v554 = vpop.f32.mrb[0].mxu0
      %v555 = vadd.f32 0.0, %v554
      %v556 = vpop.f32.mrb[0].mxu0
      %v557 = vpop.f32.mrb[0].mxu0
      %v558 = vadd.f32 0.0, %v557
      %v559 = vpop.f32.mrb[0].mxu0
      %560 = vmatprep.mubr.bf16.mxu0 %v454
      %561 = vmatmul.mubr.bf16.gmra.mrb[0].mxu0 %v343
      %v562 = vpop.f32.mrb[0].mxu0
      %v563 = vadd.f32 0.0, %v562
      %v564 = vpop.f32.mrb[0].mxu0
      %v565 = vpop.f32.mrb[0].mxu0
      %v566 = vadd.f32 0.0, %v565
      %v567 = vpop.f32.mrb[0].mxu0
      %568 = vmatprep.mubr.bf16.mxu0 %v457
      %569 = vmatmul.mubr.bf16.gmra.mrb[0].mxu0 %v345
      %v570 = vpop.f32.mrb[0].mxu0
      %v571 = vadd.f32 0.0, %v570
      %v572 = vpop.f32.mrb[0].mxu0
      %v573 = vpop.f32.mrb[0].mxu0
      %v574 = vadd.f32 0.0, %v573
      %v575 = vpop.f32.mrb[0].mxu0
      %576 = vmatprep.mubr.bf16.mxu0 %v460
      %577 = vmatmul.mubr.bf16.gmra.mrb[0].mxu0 %v347
      %v578 = vpop.f32.mrb[0].mxu0
      %v579 = vadd.f32 0.0, %v578
      %v580 = vpop.f32.mrb[0].mxu0
      %v581 = vpop.f32.mrb[0].mxu0
      %v582 = vadd.f32 0.0, %v581
      %v583 = vpop.f32.mrb[0].mxu0
      %584 = vmatprep.mubr.bf16.mxu0 %v463
      %585 = vmatmul.mubr.bf16.gmra.mrb[0].mxu0 %v349
      %v586 = vpop.f32.mrb[0].mxu0
      %v587 = vadd.f32 0.0, %v586
      %v588 = vpop.f32.mrb[0].mxu0
      %v589 = vpop.f32.mrb[0].mxu0
      %v590 = vadd.f32 0.0, %v589
      %v591 = vpop.f32.mrb[0].mxu0
      %592 = vmatprep.mubr.bf16.mxu0 %v466
      %593 = vmatmul.mubr.bf16.gmra.mrb[0].mxu0 %v351
      %v594 = vpop.f32.mrb[0].mxu0
      %v595 = vadd.f32 0.0, %v594
      %v596 = vpop.f32.mrb[0].mxu0
      %v597 = vpop.f32.mrb[0].mxu0
      %v598 = vadd.f32 0.0, %v597
      %v599 = vpop.f32.mrb[0].mxu0
      %600 = vmatprep.mubr.bf16.mxu0 %v469
      %601 = vmatmul.mubr.bf16.gmra.mrb[0].mxu0 %v353
      %v602 = vpop.f32.mrb[0].mxu0
      %v603 = vadd.f32 0.0, %v602
      %v604 = vpop.f32.mrb[0].mxu0
      %v605 = vpop.f32.mrb[0].mxu0
      %v606 = vadd.f32 0.0, %v605
      %v607 = vpop.f32.mrb[0].mxu0
      %608 = vmatprep.mubr.bf16.mxu0 %v472
      %609 = vmatmul.mubr.bf16.gmra.mrb[0].mxu0 %v355
      %v610 = vpop.f32.mrb[0].mxu0
      %v611 = vadd.f32 0.0, %v610
      %v612 = vpop.f32.mrb[0].mxu0
      %v613 = vpop.f32.mrb[0].mxu0
      %v614 = vadd.f32 0.0, %v613
      %v615 = vpop.f32.mrb[0].mxu0
      %616 = vmatprep.mubr.bf16.mxu0 %v475
      %617 = vmatmul.mubr.bf16.gmra.mrb[0].mxu0 %v357
      %v618 = vpop.f32.mrb[0].mxu0
      %v619 = vadd.f32 0.0, %v618
      %v620 = vpop.f32.mrb[0].mxu0
      %v621 = vpop.f32.mrb[0].mxu0
      %v622 = vadd.f32 0.0, %v621
      %v623 = vpop.f32.mrb[0].mxu0
      %624 = vmatprep.mubr.bf16.mxu0 %v478
      %625 = vmatmul.mubr.bf16.gmra.mrb[0].mxu0 %v359
      %v626 = vpop.f32.mrb[0].mxu0
      %v627 = vadd.f32 0.0, %v626
      %v628 = vpop.f32.mrb[0].mxu0
      %v629 = vpop.f32.mrb[0].mxu0
      %v630 = vadd.f32 0.0, %v629
      %v631 = vpop.f32.mrb[0].mxu0
      %632 = vmatprep.mubr.bf16.mxu0 %v481
      %633 = vmatmul.mubr.bf16.gmra.mrb[0].mxu0 %v361
      %v634 = vpop.f32.mrb[0].mxu0
      %v635 = vadd.f32 0.0, %v634
      %v636 = vpop.f32.mrb[0].mxu0
      %v637 = vpop.f32.mrb[0].mxu0
      %v638 = vadd.f32 0.0, %v637
      %v639 = vpop.f32.mrb[0].mxu0
      %640 = vmatprep.mubr.bf16.mxu0 %v484
      %641 = vmatmul.mubr.bf16.gmra.mrb[0].mxu0 %v363
      %v642 = vpop.f32.mrb[0].mxu0
      %v643 = vadd.f32 0.0, %v642
      %v644 = vpop.f32.mrb[0].mxu0
      %v645 = vpop.f32.mrb[0].mxu0
      %v646 = vadd.f32 0.0, %v645
      %v647 = vpop.f32.mrb[0].mxu0
      %648 = vmatprep.mubr.bf16.mxu0 %v487
      %649 = vmatmul.mubr.bf16.gmra.mrb[0].mxu0 %v365
      %v650 = vpop.f32.mrb[0].mxu0
      %v651 = vadd.f32 0.0, %v650
      %v652 = vpop.f32.mrb[0].mxu0
      %v653 = vpop.f32.mrb[0].mxu0
      %v654 = vadd.f32 0.0, %v653
      %v655 = vpop.f32.mrb[0].mxu0
      %656 = vdwg.mxu0
      %vm657 = vcmask 523264
      %658 = vst.msk [vmem:[%s185] sm:$0xff] %vm657, %v531
      %659 = vst.msk [vmem:[%s185 + $0x8] sm:$0xff] %vm657, %v534
      %660 = vst.msk [vmem:[%s185 + $0x10] sm:$0xff] %vm657, %v539
      %661 = vst.msk [vmem:[%s185 + $0x18] sm:$0xff] %vm657, %v542
      %662 = vst.msk [vmem:[%s185 + $0x20] sm:$0xff] %vm657, %v547
      %663 = vst.msk [vmem:[%s185 + $0x28] sm:$0xff] %vm657, %v550
      %664 = vst.msk [vmem:[%s185 + $0x30] sm:$0xff] %vm657, %v555
      %665 = vst.msk [vmem:[%s185 + $0x38] sm:$0xff] %vm657, %v558
      %666 = vst.msk [vmem:[%s185 + $0x40] sm:$0xff] %vm657, %v563
      %667 = vst.msk [vmem:[%s185 + $0x48] sm:$0xff] %vm657, %v566
      %668 = vst.msk [vmem:[%s185 + $0x50] sm:$0xff] %vm657, %v571
      %669 = vst.msk [vmem:[%s185 + $0x58] sm:$0xff] %vm657, %v574
      %670 = vst.msk [vmem:[%s185 + $0x60] sm:$0xff] %vm657, %v579
      %671 = vst.msk [vmem:[%s185 + $0x68] sm:$0xff] %vm657, %v582
      %672 = vst.msk [vmem:[%s185 + $0x70] sm:$0xff] %vm657, %v587
      %673 = vst.msk [vmem:[%s185 + $0x78] sm:$0xff] %vm657, %v590
      %674 = vst.msk [vmem:[%s185 + $0x80] sm:$0xff] %vm657, %v595
      %675 = vst.msk [vmem:[%s185 + $0x88] sm:$0xff] %vm657, %v598
      %676 = vst.msk [vmem:[%s185 + $0x90] sm:$0xff] %vm657, %v603
      %677 = vst.msk [vmem:[%s185 + $0x98] sm:$0xff] %vm657, %v606
      %678 = vst.msk [vmem:[%s185 + $0xa0] sm:$0xff] %vm657, %v611
      %679 = vst.msk [vmem:[%s185 + $0xa8] sm:$0xff] %vm657, %v614
      %680 = vst.msk [vmem:[%s185 + $0xb0] sm:$0xff] %vm657, %v619
      %681 = vst.msk [vmem:[%s185 + $0xb8] sm:$0xff] %vm657, %v622
      %682 = vst.msk [vmem:[%s185 + $0xc0] sm:$0xff] %vm657, %v627
      %683 = vst.msk [vmem:[%s185 + $0xc8] sm:$0xff] %vm657, %v630
      %684 = vst.msk [vmem:[%s185 + $0xd0] sm:$0xff] %vm657, %v635
      %685 = vst.msk [vmem:[%s185 + $0xd8] sm:$0xff] %vm657, %v638
      %686 = vst.msk [vmem:[%s185 + $0xe0] sm:$0xff] %vm657, %v643
      %687 = vst.msk [vmem:[%s185 + $0xe8] sm:$0xff] %vm657, %v646
      %688 = vst.msk [vmem:[%s185 + $0xf0] sm:$0xff] %vm657, %v651
      %689 = vst.msk [vmem:[%s185 + $0xf8] sm:$0xff] %vm657, %v654
      %s690 = smul.u32 32, %s17
      %p691 = scmp.lt.s32.totalorder %s690, 63
      %s692 = scalar_select %p691, %s690, 63
      %p693 = scmp.lt.s32.totalorder %s18, 0
      %s694 = scalar_select %p693, %s18, 0
      %s695 = sadd.s32 %s694, %s692
      %s696 = smul.addr %s695, 8
      %s697 = scalar_lea.vmem %s2, %s696
      // Predicated region
      $region29: #{embedding_net_forward.60} parent=27 // pred_check
        %p698 = pneg %p97
      $region30: #{embedding_net_forward.60} parent=27 // pred_check_branch
        %700 = sbr.rel (%p698) target = $region32
      $region31: #{embedding_net_forward.60} parent=27 // pred_region
        %s701 = smul.u32 32, %s17
      $region32: #{embedding_net_forward.60} parent=27 // pred_fallthru
        _
    $region28: #{embedding_net_forward.60} parent=5 // pred_fallthru
      _
    %p702 = scmp.le.s32.totalorder 2, %s8
    // Predicated region
    $region33: #{embedding_net_forward.60} parent=5 // pred_check
      %p703 = pneg %p702
    $region34: #{embedding_net_forward.60} parent=5 // pred_check_branch
      %705 = sbr.rel (%p703) target = $region36
    $region35: #{embedding_net_forward.60} parent=5 // pred_region
      %s706 = ssub.s32 %s8, 2
      // Predicated region
      $region37: #{embedding_net_forward.60} parent=35 // pred_check
        %p707 = pneg %p103
      $region38: #{embedding_net_forward.60} parent=35 // pred_check_branch
        %709 = sbr.rel (%p707) target = $region40
      $region39: #{embedding_net_forward.60} parent=35 // pred_region
        %s710 = smul.u32 32, %s19
        %p711 = scmp.lt.s32.totalorder %s710, 63
        %s712 = scalar_select %p711, %s710, 63
        %p713 = scmp.lt.s32.totalorder %s20, 0
        %s714 = scalar_select %p713, %s20, 0
        %s715 = sadd.s32 %s714, %s712
        %s716 = smul.addr %s715, 8
        %s717 = scalar_lea.vmem %s2, %s716
      $region40: #{embedding_net_forward.60} parent=35 // pred_fallthru
        _
    $region36: #{embedding_net_forward.60} parent=5 // pred_fallthru
      _
  $region6: #{embedding_net_forward.60} parent=0 // loop_footer
    %s12 = sadd.s32 1, %s8
  $region7: #{embedding_net_forward.60} parent=0 // loop_footer_branch
    %7 = sbr.rel target = $region3
  $region8: #{embedding_net_forward.60} parent=0 // loop_exit
    _

// kernel: embedding_net_forward.65
$region0: #{embedding_net_forward.65}
  #allocation0 [shape = 'u32[]', space=smem, size = 0x4, offset = 0x4, fixed_abs, tag = 'smem constant byte address 0x4 - core index']
  #allocation1 [shape = 'u32[144,128]{1,0:T(1,128)}', space=vmem, size = 0x12000, scoped, tag = 'internal scratch']
  %s0 = inlined_call_operand.vmem [shape: f32[64,128], index: 0, kind: input, shape index: {}]
  %s1 = inlined_call_operand.vmem [shape: f32[1,128], index: 1, kind: input, shape index: {}]
  %s2 = inlined_call_operand.vmem [shape: f32[1,128], index: 2, kind: input, shape index: {}]
  %s3 = inlined_call_operand.vmem [shape: f32[64,128], index: 3, kind: output, shape index: {}]
  %s4 = sld [smem:[#allocation0]]
  $region22: #{embedding_net_forward.65} parent=0
    _
  %s6 = ssub.s32 1, %s4
  %s7 = scalar_select 0, %s6, %s4
  // Predicated region
  $region2: #{embedding_net_forward.65} parent=0 // pred_check
    _
  $region3: #{embedding_net_forward.65} parent=0 // pred_check_branch
    %9 = sbr.rel (0) target = $region5
  $region4: #{embedding_net_forward.65} parent=0 // pred_region
    _
  $region5: #{embedding_net_forward.65} parent=0 // pred_fallthru
    _
  // Predicated region
  $region6: #{embedding_net_forward.65} parent=0 // pred_check
    _
  $region7: #{embedding_net_forward.65} parent=0 // pred_check_branch
    %11 = sbr.rel (0) target = $region9
  $region8: #{embedding_net_forward.65} parent=0 // pred_region
    _
  $region9: #{embedding_net_forward.65} parent=0 // pred_fallthru
    _
  // Predicated region
  $region10: #{embedding_net_forward.65} parent=0 // pred_check
    _
  $region11: #{embedding_net_forward.65} parent=0 // pred_check_branch
    %13 = sbr.rel (0) target = $region13
  $region12: #{embedding_net_forward.65} parent=0 // pred_region
    _
  $region13: #{embedding_net_forward.65} parent=0 // pred_fallthru
    _
  %v14 = vld [vmem:[%s0] sm:$0xff]
  %v15 = vld [vmem:[%s0 + $0x8] sm:$0xff]
  %v16 = vld [vmem:[%s0 + $0x10] sm:$0xff]
  %v17 = vld [vmem:[%s0 + $0x18] sm:$0xff]
  %v18 = vld [vmem:[%s0 + $0x20] sm:$0xff]
  %v19 = vld [vmem:[%s0 + $0x28] sm:$0xff]
  %v20 = vld [vmem:[%s0 + $0x30] sm:$0xff]
  %v21 = vld [vmem:[%s0 + $0x38] sm:$0xff]
  %v22 = vld [vmem:[%s1] sm:$0x1]
  %v24 = vlaneseq
  %v25 = vshrl.u32 %v24, 7
  %v26 = vsub.s32 0, %v25
  %v27 = vrot.slane %v22, %v26
  %v29 = vmul.f32 %v14, %v27
  %v30 = vmul.f32 %v15, %v27
  %v31 = vmul.f32 %v16, %v27
  %v32 = vmul.f32 %v17, %v27
  %v33 = vmul.f32 %v18, %v27
  %v34 = vmul.f32 %v19, %v27
  %v35 = vmul.f32 %v20, %v27
  %v36 = vmul.f32 %v21, %v27
  %v37 = vld [vmem:[%s2] sm:$0x1]
  %v39 = vlaneseq
  %v40 = vshrl.u32 %v39, 7
  %v41 = vsub.s32 0, %v40
  %v42 = vrot.slane %v37, %v41
  %v44 = vadd.f32 %v29, %v42
  %v45 = vadd.f32 %v30, %v42
  %v46 = vadd.f32 %v31, %v42
  %v47 = vadd.f32 %v32, %v42
  %v48 = vadd.f32 %v33, %v42
  %v49 = vadd.f32 %v34, %v42
  %v50 = vadd.f32 %v35, %v42
  %v51 = vadd.f32 %v36, %v42
  %v52 = vmax.f32 %v44, 0.0
  %v53 = vmax.f32 %v45, 0.0
  %v54 = vmax.f32 %v46, 0.0
  %v55 = vmax.f32 %v47, 0.0
  %v56 = vmax.f32 %v48, 0.0
  %v57 = vmax.f32 %v49, 0.0
  %v58 = vmax.f32 %v50, 0.0
  %v59 = vmax.f32 %v51, 0.0
  %60 = vst [vmem:[%s3] sm:$0xff] %v52
  %61 = vst [vmem:[%s3 + $0x8] sm:$0xff] %v53
  %62 = vst [vmem:[%s3 + $0x10] sm:$0xff] %v54
  %63 = vst [vmem:[%s3 + $0x18] sm:$0xff] %v55
  %64 = vst [vmem:[%s3 + $0x20] sm:$0xff] %v56
  %65 = vst [vmem:[%s3 + $0x28] sm:$0xff] %v57
  %66 = vst [vmem:[%s3 + $0x30] sm:$0xff] %v58
  %67 = vst [vmem:[%s3 + $0x38] sm:$0xff] %v59
  // Predicated region
  $region14: #{embedding_net_forward.65} parent=0 // pred_check
    _
  $region15: #{embedding_net_forward.65} parent=0 // pred_check_branch
    %69 = sbr.rel (0) target = $region17
  $region16: #{embedding_net_forward.65} parent=0 // pred_region
    _
  $region17: #{embedding_net_forward.65} parent=0 // pred_fallthru
    _
  // Predicated region
  $region18: #{embedding_net_forward.65} parent=0 // pred_check
    _
  $region19: #{embedding_net_forward.65} parent=0 // pred_check_branch
    %71 = sbr.rel (0) target = $region21
  $region20: #{embedding_net_forward.65} parent=0 // pred_region
    _
  $region21: #{embedding_net_forward.65} parent=0 // pred_fallthru
    _

// kernel: embedding_net_forward.64
$region0: #{embedding_net_forward.64}
  #allocation0 [shape = 'u32[]', space=smem, size = 0x4, offset = 0x4, fixed_abs, tag = 'smem constant byte address 0x4 - core index']
  #allocation1 [shape = 'u32[144,128]{1,0:T(1,128)}', space=vmem, size = 0x12000, scoped, tag = 'internal scratch']
  %s0 = inlined_call_operand.vmem [shape: f32[64,128], index: 0, kind: input, shape index: {}]
  %s1 = inlined_call_operand.vmem [shape: f32[1,128], index: 1, kind: output, shape index: {0}]
  %s2 = inlined_call_operand.vmem [shape: f32[1,128], index: 2, kind: output, shape index: {1}]
  %3 = xla_tuple %s1, %s2
  %s4 = sld [smem:[#allocation0]]
  $region26: #{embedding_net_forward.64} parent=0
    _
  %s6 = ssub.s32 1, %s4
  %s7 = scalar_select 0, %s6, %s4
  // Predicated region
  $region2: #{embedding_net_forward.64} parent=0 // pred_check
    _
  $region3: #{embedding_net_forward.64} parent=0 // pred_check_branch
    %9 = sbr.rel (0) target = $region5
  $region4: #{embedding_net_forward.64} parent=0 // pred_region
    _
  $region5: #{embedding_net_forward.64} parent=0 // pred_fallthru
    _
  %p10 = scmp.eq.s32.totalorder 0, 0
  // Predicated region
  $region6: #{embedding_net_forward.64} parent=0 // pred_check
    %p11 = pneg %p10
  $region7: #{embedding_net_forward.64} parent=0 // pred_check_branch
    %13 = sbr.rel (%p11) target = $region9
  $region8: #{embedding_net_forward.64} parent=0 // pred_region
    %14 = vst [vmem:[%s1] sm:$0x1] 0.0
    %15 = vst [vmem:[%s2] sm:$0x1] 0.0
  $region9: #{embedding_net_forward.64} parent=0 // pred_fallthru
    _
  %v16 = vld [vmem:[%s0] sm:$0xff]
  %v17 = vld [vmem:[%s0 + $0x8] sm:$0xff]
  %v18 = vld [vmem:[%s0 + $0x10] sm:$0xff]
  %v19 = vld [vmem:[%s0 + $0x18] sm:$0xff]
  %v20 = vld [vmem:[%s0 + $0x20] sm:$0xff]
  %v21 = vld [vmem:[%s0 + $0x28] sm:$0xff]
  %v22 = vld [vmem:[%s0 + $0x30] sm:$0xff]
  %v23 = vld [vmem:[%s0 + $0x38] sm:$0xff]
  %v24 = vld [vmem:[%s1] sm:$0x1]
  %v25 = vadd.f32 %v16, %v17
  %v26 = vadd.f32 %v25, %v18
  %v27 = vadd.f32 %v26, %v19
  %v28 = vadd.f32 %v27, %v20
  %v29 = vadd.f32 %v28, %v21
  %v30 = vadd.f32 %v29, %v22
  %v31 = vadd.f32 %v30, %v23
  %v32 = vrot.slane %v31, 4
  %v33 = vadd.f32 %v31, %v32
  %v34 = vrot.slane %v33, 2
  %v35 = vadd.f32 %v33, %v34
  %v36 = vrot.slane %v35, 1
  %v37 = vadd.f32 %v35, %v36
  %v38 = vadd.f32 %v24, %v37
  %39 = vst [vmem:[%s1] sm:$0x1] %v38
  %v40 = vld [vmem:[%s2] sm:$0x1]
  %v41 = vmul.f32 %v16, %v16
  %v42 = vmul.f32 %v17, %v17
  %v43 = vmul.f32 %v18, %v18
  %v44 = vmul.f32 %v19, %v19
  %v45 = vmul.f32 %v20, %v20
  %v46 = vmul.f32 %v21, %v21
  %v47 = vmul.f32 %v22, %v22
  %v48 = vmul.f32 %v23, %v23
  %v49 = vadd.f32 %v41, %v42
  %v50 = vadd.f32 %v49, %v43
  %v51 = vadd.f32 %v50, %v44
  %v52 = vadd.f32 %v51, %v45
  %v53 = vadd.f32 %v52, %v46
  %v54 = vadd.f32 %v53, %v47
  %v55 = vadd.f32 %v54, %v48
  %v56 = vrot.slane %v55, 4
  %v57 = vadd.f32 %v55, %v56
  %v58 = vrot.slane %v57, 2
  %v59 = vadd.f32 %v57, %v58
  %v60 = vrot.slane %v59, 1
  %v61 = vadd.f32 %v59, %v60
  %v62 = vadd.f32 %v40, %v61
  %63 = vst [vmem:[%s2] sm:$0x1] %v62
  // Predicated region
  $region10: #{embedding_net_forward.64} parent=0 // pred_check
    _
  $region11: #{embedding_net_forward.64} parent=0 // pred_check_branch
    %65 = sbr.rel (0) target = $region13
  $region12: #{embedding_net_forward.64} parent=0 // pred_region
    _
  $region13: #{embedding_net_forward.64} parent=0 // pred_fallthru
    _
  // Predicated region
  $region14: #{embedding_net_forward.64} parent=0 // pred_check
    _
  $region15: #{embedding_net_forward.64} parent=0 // pred_check_branch
    %67 = sbr.rel (0) target = $region17
  $region16: #{embedding_net_forward.64} parent=0 // pred_region
    _
  $region17: #{embedding_net_forward.64} parent=0 // pred_fallthru
    _
  // Predicated region
  $region18: #{embedding_net_forward.64} parent=0 // pred_check
    _
  $region19: #{embedding_net_forward.64} parent=0 // pred_check_branch
    %69 = sbr.rel (0) target = $region21
  $region20: #{embedding_net_forward.64} parent=0 // pred_region
    _
  $region21: #{embedding_net_forward.64} parent=0 // pred_fallthru
    _
  // Predicated region
  $region22: #{embedding_net_forward.64} parent=0 // pred_check
    _
  $region23: #{embedding_net_forward.64} parent=0 // pred_check_branch
    %71 = sbr.rel (0) target = $region25
  $region24: #{embedding_net_forward.64} parent=0 // pred_region
    _
  $region25: #{embedding_net_forward.64} parent=0 // pred_fallthru
    _

// kernel: embedding_net_forward.63
$region0: #{embedding_net_forward.63}
  #allocation0 [shape = 'u32[]', space=smem, size = 0x4, offset = 0x4, fixed_abs, tag = 'smem constant byte address 0x4 - core index']
  #allocation1 [shape = 'u32[144,128]{1,0:T(1,128)}', space=vmem, size = 0x12000, scoped, tag = 'internal scratch']
  %s0 = inlined_call_operand.vmem [shape: bf16[128,576], index: 0, kind: input, shape index: {}]
  %s1 = inlined_call_operand.vmem [shape: bf16[576,64], index: 1, kind: input, shape index: {}]
  %s2 = inlined_call_operand.vmem [shape: f32[128,64], index: 2, kind: output, shape index: {}]
  %s3 = sld [smem:[#allocation0]]
  $region18: #{embedding_net_forward.63} parent=0
    _
  %s5 = ssub.s32 1, %s3
  %s6 = scalar_select 0, %s5, %s3
  // Predicated region
  $region2: #{embedding_net_forward.63} parent=0 // pred_check
    _
  $region3: #{embedding_net_forward.63} parent=0 // pred_check_branch
    %8 = sbr.rel (0) target = $region5
  $region4: #{embedding_net_forward.63} parent=0 // pred_region
    _
  $region5: #{embedding_net_forward.63} parent=0 // pred_fallthru
    _
  // Predicated region
  $region6: #{embedding_net_forward.63} parent=0 // pred_check
    _
  $region7: #{embedding_net_forward.63} parent=0 // pred_check_branch
    %10 = sbr.rel (0) target = $region9
  $region8: #{embedding_net_forward.63} parent=0 // pred_region
    _
  $region9: #{embedding_net_forward.63} parent=0 // pred_fallthru
    _
  %v12 = vld [vmem:[%s0] sm:$0xff]
  %v13 = vld [vmem:[%s0 + $0x8] sm:$0xff]
  %v14 = vld [vmem:[%s0 + $0x10] sm:$0xf]
  %v15 = vld [vmem:[%s0 + $0x14] sm:$0xff]
  %v16 = vld [vmem:[%s0 + $0x1c] sm:$0xff]
  %v17 = vld [vmem:[%s0 + $0x24] sm:$0xf]
  %v18 = vld [vmem:[%s0 + $0x28] sm:$0xff]
  %v19 = vld [vmem:[%s0 + $0x30] sm:$0xff]
  %v20 = vld [vmem:[%s0 + $0x38] sm:$0xf]
  %v21 = vld [vmem:[%s0 + $0x3c] sm:$0xff]
  %v22 = vld [vmem:[%s0 + $0x44] sm:$0xff]
  %v23 = vld [vmem:[%s0 + $0x4c] sm:$0xf]
  %v24 = vld [vmem:[%s0 + $0x50] sm:$0xff]
  %v25 = vld [vmem:[%s0 + $0x58] sm:$0xff]
  %v26 = vld [vmem:[%s0 + $0x60] sm:$0xf]
  %v27 = vld [vmem:[%s0 + $0x64] sm:$0xff]
  %v28 = vld [vmem:[%s0 + $0x6c] sm:$0xff]
  %v29 = vld [vmem:[%s0 + $0x74] sm:$0xf]
  %v30 = vld [vmem:[%s0 + $0x78] sm:$0xff]
  %v31 = vld [vmem:[%s0 + $0x80] sm:$0xff]
  %v32 = vld [vmem:[%s0 + $0x88] sm:$0xf]
  %v33 = vld [vmem:[%s0 + $0x8c] sm:$0xff]
  %v34 = vld [vmem:[%s0 + $0x94] sm:$0xff]
  %v35 = vld [vmem:[%s0 + $0x9c] sm:$0xf]
  %v36 = vld [vmem:[%s0 + $0xa0] sm:$0xff]
  %v37 = vld [vmem:[%s0 + $0xa8] sm:$0xff]
  %v38 = vld [vmem:[%s0 + $0xb0] sm:$0xf]
  %v39 = vld [vmem:[%s0 + $0xb4] sm:$0xff]
  %v40 = vld [vmem:[%s0 + $0xbc] sm:$0xff]
  %v41 = vld [vmem:[%s0 + $0xc4] sm:$0xf]
  %v42 = vld [vmem:[%s0 + $0xc8] sm:$0xff]
  %v43 = vld [vmem:[%s0 + $0xd0] sm:$0xff]
  %v44 = vld [vmem:[%s0 + $0xd8] sm:$0xf]
  %v45 = vld [vmem:[%s0 + $0xdc] sm:$0xff]
  %v46 = vld [vmem:[%s0 + $0xe4] sm:$0xff]
  %v47 = vld [vmem:[%s0 + $0xec] sm:$0xf]
  %v48 = vld [vmem:[%s0 + $0xf0] sm:$0xff]
  %v49 = vld [vmem:[%s0 + $0xf8] sm:$0xff]
  %v50 = vld [vmem:[%s0 + $0x100] sm:$0xf]
  %v51 = vld [vmem:[%s0 + $0x104] sm:$0xff]
  %v52 = vld [vmem:[%s0 + $0x10c] sm:$0xff]
  %v53 = vld [vmem:[%s0 + $0x114] sm:$0xf]
  %v54 = vld [vmem:[%s0 + $0x118] sm:$0xff]
  %v55 = vld [vmem:[%s0 + $0x120] sm:$0xff]
  %v56 = vld [vmem:[%s0 + $0x128] sm:$0xf]
  %v57 = vld [vmem:[%s0 + $0x12c] sm:$0xff]
  %v58 = vld [vmem:[%s0 + $0x134] sm:$0xff]
  %v59 = vld [vmem:[%s0 + $0x13c] sm:$0xf]
  %v60 = vld [vmem:[%s1] sm:$0xf]
  %v61 = vld [vmem:[%s1 + $0x4] sm:$0xf]
  %v62 = vld [vmem:[%s1 + $0x8] sm:$0xf]
  %v63 = vld [vmem:[%s1 + $0xc] sm:$0xf]
  %v64 = vld [vmem:[%s1 + $0x10] sm:$0xf]
  %v65 = vld [vmem:[%s1 + $0x14] sm:$0xf]
  %v66 = vld [vmem:[%s1 + $0x18] sm:$0xf]
  %v67 = vld [vmem:[%s1 + $0x1c] sm:$0xf]
  %v68 = vld [vmem:[%s1 + $0x20] sm:$0xf]
  %v69 = vld [vmem:[%s1 + $0x24] sm:$0xf]
  %v70 = vld [vmem:[%s1 + $0x28] sm:$0xf]
  %v71 = vld [vmem:[%s1 + $0x2c] sm:$0xf]
  %v72 = vld [vmem:[%s1 + $0x30] sm:$0xf]
  %v73 = vld [vmem:[%s1 + $0x34] sm:$0xf]
  %v74 = vld [vmem:[%s1 + $0x38] sm:$0xf]
  %v75 = vld [vmem:[%s1 + $0x3c] sm:$0xf]
  %v76 = vld [vmem:[%s1 + $0x40] sm:$0xf]
  %v77 = vld [vmem:[%s1 + $0x44] sm:$0xf]
  %v78 = vld [vmem:[%s1 + $0x48] sm:$0xf]
  %v79 = vld [vmem:[%s1 + $0x4c] sm:$0xf]
  %v80 = vld [vmem:[%s1 + $0x50] sm:$0xf]
  %v81 = vld [vmem:[%s1 + $0x54] sm:$0xf]
  %v82 = vld [vmem:[%s1 + $0x58] sm:$0xf]
  %v83 = vld [vmem:[%s1 + $0x5c] sm:$0xf]
  %v84 = vld [vmem:[%s1 + $0x60] sm:$0xf]
  %v85 = vld [vmem:[%s1 + $0x64] sm:$0xf]
  %v86 = vld [vmem:[%s1 + $0x68] sm:$0xf]
  %v87 = vld [vmem:[%s1 + $0x6c] sm:$0xf]
  %v88 = vld [vmem:[%s1 + $0x70] sm:$0xf]
  %v89 = vld [vmem:[%s1 + $0x74] sm:$0xf]
  %v90 = vld [vmem:[%s1 + $0x78] sm:$0xf]
  %v91 = vld [vmem:[%s1 + $0x7c] sm:$0xf]
  %v92 = vld [vmem:[%s1 + $0x80] sm:$0xf]
  %v93 = vld [vmem:[%s1 + $0x84] sm:$0xf]
  %v94 = vld [vmem:[%s1 + $0x88] sm:$0xf]
  %v95 = vld [vmem:[%s1 + $0x8c] sm:$0xf]
  %v96 = vld [vmem:[%s1 + $0x90] sm:$0xf]
  %v97 = vld [vmem:[%s1 + $0x94] sm:$0xf]
  %v98 = vld [vmem:[%s1 + $0x98] sm:$0xf]
  %v99 = vld [vmem:[%s1 + $0x9c] sm:$0xf]
  %v100 = vld [vmem:[%s1 + $0xa0] sm:$0xf]
  %v101 = vld [vmem:[%s1 + $0xa4] sm:$0xf]
  %v102 = vld [vmem:[%s1 + $0xa8] sm:$0xf]
  %v103 = vld [vmem:[%s1 + $0xac] sm:$0xf]
  %v104 = vld [vmem:[%s1 + $0xb0] sm:$0xf]
  %v105 = vld [vmem:[%s1 + $0xb4] sm:$0xf]
  %v106 = vld [vmem:[%s1 + $0xb8] sm:$0xf]
  %v107 = vld [vmem:[%s1 + $0xbc] sm:$0xf]
  %v108 = vld [vmem:[%s1 + $0xc0] sm:$0xf]
  %v109 = vld [vmem:[%s1 + $0xc4] sm:$0xf]
  %v110 = vld [vmem:[%s1 + $0xc8] sm:$0xf]
  %v111 = vld [vmem:[%s1 + $0xcc] sm:$0xf]
  %v112 = vld [vmem:[%s1 + $0xd0] sm:$0xf]
  %v113 = vld [vmem:[%s1 + $0xd4] sm:$0xf]
  %v114 = vld [vmem:[%s1 + $0xd8] sm:$0xf]
  %v115 = vld [vmem:[%s1 + $0xdc] sm:$0xf]
  %v116 = vld [vmem:[%s1 + $0xe0] sm:$0xf]
  %v117 = vld [vmem:[%s1 + $0xe4] sm:$0xf]
  %v118 = vld [vmem:[%s1 + $0xe8] sm:$0xf]
  %v119 = vld [vmem:[%s1 + $0xec] sm:$0xf]
  %v120 = vld [vmem:[%s1 + $0xf0] sm:$0xf]
  %v121 = vld [vmem:[%s1 + $0xf4] sm:$0xf]
  %v122 = vld [vmem:[%s1 + $0xf8] sm:$0xf]
  %v123 = vld [vmem:[%s1 + $0xfc] sm:$0xf]
  %v124 = vld [vmem:[%s1 + $0x100] sm:$0xf]
  %v125 = vld [vmem:[%s1 + $0x104] sm:$0xf]
  %v126 = vld [vmem:[%s1 + $0x108] sm:$0xf]
  %v127 = vld [vmem:[%s1 + $0x10c] sm:$0xf]
  %v128 = vld [vmem:[%s1 + $0x110] sm:$0xf]
  %v129 = vld [vmem:[%s1 + $0x114] sm:$0xf]
  %v130 = vld [vmem:[%s1 + $0x118] sm:$0xf]
  %v131 = vld [vmem:[%s1 + $0x11c] sm:$0xf]
  %v180 = vunpack.c.l.b16 %v12
  %v181 = vunpack.c.h.b16 %v12
  %v182 = vunpack.c.l.b16 %v13
  %v183 = vunpack.c.h.b16 %v13
  %v184 = vunpack.c.l.b16 %v14
  %v185 = vunpack.c.l.b16 %v15
  %v186 = vunpack.c.h.b16 %v15
  %v187 = vunpack.c.l.b16 %v16
  %v188 = vunpack.c.h.b16 %v16
  %v189 = vunpack.c.l.b16 %v17
  %v190 = vunpack.c.l.b16 %v18
  %v191 = vunpack.c.h.b16 %v18
  %v192 = vunpack.c.l.b16 %v19
  %v193 = vunpack.c.h.b16 %v19
  %v194 = vunpack.c.l.b16 %v20
  %v195 = vunpack.c.l.b16 %v21
  %v196 = vunpack.c.h.b16 %v21
  %v197 = vunpack.c.l.b16 %v22
  %v198 = vunpack.c.h.b16 %v22
  %v199 = vunpack.c.l.b16 %v23
  %v200 = vunpack.c.l.b16 %v24
  %v201 = vunpack.c.h.b16 %v24
  %v202 = vunpack.c.l.b16 %v25
  %v203 = vunpack.c.h.b16 %v25
  %v204 = vunpack.c.l.b16 %v26
  %v205 = vunpack.c.l.b16 %v27
  %v206 = vunpack.c.h.b16 %v27
  %v207 = vunpack.c.l.b16 %v28
  %v208 = vunpack.c.h.b16 %v28
  %v209 = vunpack.c.l.b16 %v29
  %v210 = vunpack.c.l.b16 %v30
  %v211 = vunpack.c.h.b16 %v30
  %v212 = vunpack.c.l.b16 %v31
  %v213 = vunpack.c.h.b16 %v31
  %v214 = vunpack.c.l.b16 %v32
  %v215 = vunpack.c.l.b16 %v33
  %v216 = vunpack.c.h.b16 %v33
  %v217 = vunpack.c.l.b16 %v34
  %v218 = vunpack.c.h.b16 %v34
  %v219 = vunpack.c.l.b16 %v35
  %v220 = vunpack.c.l.b16 %v36
  %v221 = vunpack.c.h.b16 %v36
  %v222 = vunpack.c.l.b16 %v37
  %v223 = vunpack.c.h.b16 %v37
  %v224 = vunpack.c.l.b16 %v38
  %v225 = vunpack.c.l.b16 %v39
  %v226 = vunpack.c.h.b16 %v39
  %v227 = vunpack.c.l.b16 %v40
  %v228 = vunpack.c.h.b16 %v40
  %v229 = vunpack.c.l.b16 %v41
  %v230 = vunpack.c.l.b16 %v42
  %v231 = vunpack.c.h.b16 %v42
  %v232 = vunpack.c.l.b16 %v43
  %v233 = vunpack.c.h.b16 %v43
  %v234 = vunpack.c.l.b16 %v44
  %v235 = vunpack.c.l.b16 %v45
  %v236 = vunpack.c.h.b16 %v45
  %v237 = vunpack.c.l.b16 %v46
  %v238 = vunpack.c.h.b16 %v46
  %v239 = vunpack.c.l.b16 %v47
  %v240 = vunpack.c.l.b16 %v48
  %v241 = vunpack.c.h.b16 %v48
  %v242 = vunpack.c.l.b16 %v49
  %v243 = vunpack.c.h.b16 %v49
  %v244 = vunpack.c.l.b16 %v50
  %v245 = vunpack.c.l.b16 %v51
  %v246 = vunpack.c.h.b16 %v51
  %v247 = vunpack.c.l.b16 %v52
  %v248 = vunpack.c.h.b16 %v52
  %v249 = vunpack.c.l.b16 %v53
  %v250 = vunpack.c.l.b16 %v54
  %v251 = vunpack.c.h.b16 %v54
  %v252 = vunpack.c.l.b16 %v55
  %v253 = vunpack.c.h.b16 %v55
  %v254 = vunpack.c.l.b16 %v56
  %v255 = vunpack.c.l.b16 %v57
  %v256 = vunpack.c.h.b16 %v57
  %v257 = vunpack.c.l.b16 %v58
  %v258 = vunpack.c.h.b16 %v58
  %v259 = vunpack.c.l.b16 %v59
  %v260 = vpack.c.b16 %v185, %v180
  %v261 = vpack.c.b16 %v186, %v181
  %v262 = vpack.c.b16 %v187, %v182
  %v263 = vpack.c.b16 %v188, %v183
  %v264 = vpack.c.b16 %v189, %v184
  %v265 = vpack.c.b16 %v195, %v190
  %v266 = vpack.c.b16 %v196, %v191
  %v267 = vpack.c.b16 %v197, %v192
  %v268 = vpack.c.b16 %v198, %v193
  %v269 = vpack.c.b16 %v199, %v194
  %v270 = vpack.c.b16 %v205, %v200
  %v271 = vpack.c.b16 %v206, %v201
  %v272 = vpack.c.b16 %v207, %v202
  %v273 = vpack.c.b16 %v208, %v203
  %v274 = vpack.c.b16 %v209, %v204
  %v275 = vpack.c.b16 %v215, %v210
  %v276 = vpack.c.b16 %v216, %v211
  %v277 = vpack.c.b16 %v217, %v212
  %v278 = vpack.c.b16 %v218, %v213
  %v279 = vpack.c.b16 %v219, %v214
  %v280 = vpack.c.b16 %v225, %v220
  %v281 = vpack.c.b16 %v226, %v221
  %v282 = vpack.c.b16 %v227, %v222
  %v283 = vpack.c.b16 %v228, %v223
  %v284 = vpack.c.b16 %v229, %v224
  %v285 = vpack.c.b16 %v235, %v230
  %v286 = vpack.c.b16 %v236, %v231
  %v287 = vpack.c.b16 %v237, %v232
  %v288 = vpack.c.b16 %v238, %v233
  %v289 = vpack.c.b16 %v239, %v234
  %v290 = vpack.c.b16 %v245, %v240
  %v291 = vpack.c.b16 %v246, %v241
  %v292 = vpack.c.b16 %v247, %v242
  %v293 = vpack.c.b16 %v248, %v243
  %v294 = vpack.c.b16 %v249, %v244
  %v295 = vpack.c.b16 %v255, %v250
  %v296 = vpack.c.b16 %v256, %v251
  %v297 = vpack.c.b16 %v257, %v252
  %v298 = vpack.c.b16 %v258, %v253
  %v299 = vpack.c.b16 %v259, %v254
  %v404 = vunpack.c.l.b16 %v60
  %v405 = vunpack.c.l.b16 %v61
  %v406 = vunpack.c.l.b16 %v62
  %v407 = vunpack.c.l.b16 %v63
  %v408 = vunpack.c.l.b16 %v64
  %v409 = vunpack.c.l.b16 %v65
  %v410 = vunpack.c.l.b16 %v66
  %v411 = vunpack.c.l.b16 %v67
  %v412 = vunpack.c.l.b16 %v68
  %v413 = vunpack.c.l.b16 %v69
  %v414 = vunpack.c.l.b16 %v70
  %v415 = vunpack.c.l.b16 %v71
  %v416 = vunpack.c.l.b16 %v72
  %v417 = vunpack.c.l.b16 %v73
  %v418 = vunpack.c.l.b16 %v74
  %v419 = vunpack.c.l.b16 %v75
  %v420 = vunpack.c.l.b16 %v76
  %v421 = vunpack.c.l.b16 %v77
  %v422 = vunpack.c.l.b16 %v78
  %v423 = vunpack.c.l.b16 %v79
  %v424 = vunpack.c.l.b16 %v80
  %v425 = vunpack.c.l.b16 %v81
  %v426 = vunpack.c.l.b16 %v82
  %v427 = vunpack.c.l.b16 %v83
  %v428 = vunpack.c.l.b16 %v84
  %v429 = vunpack.c.l.b16 %v85
  %v430 = vunpack.c.l.b16 %v86
  %v431 = vunpack.c.l.b16 %v87
  %v432 = vunpack.c.l.b16 %v88
  %v433 = vunpack.c.l.b16 %v89
  %v434 = vunpack.c.l.b16 %v90
  %v435 = vunpack.c.l.b16 %v91
  %v436 = vunpack.c.l.b16 %v92
  %v437 = vunpack.c.l.b16 %v93
  %v438 = vunpack.c.l.b16 %v94
  %v439 = vunpack.c.l.b16 %v95
  %v440 = vunpack.c.l.b16 %v96
  %v441 = vunpack.c.l.b16 %v97
  %v442 = vunpack.c.l.b16 %v98
  %v443 = vunpack.c.l.b16 %v99
  %v444 = vunpack.c.l.b16 %v100
  %v445 = vunpack.c.l.b16 %v101
  %v446 = vunpack.c.l.b16 %v102
  %v447 = vunpack.c.l.b16 %v103
  %v448 = vunpack.c.l.b16 %v104
  %v449 = vunpack.c.l.b16 %v105
  %v450 = vunpack.c.l.b16 %v106
  %v451 = vunpack.c.l.b16 %v107
  %v452 = vunpack.c.l.b16 %v108
  %v453 = vunpack.c.l.b16 %v109
  %v454 = vunpack.c.l.b16 %v110
  %v455 = vunpack.c.l.b16 %v111
  %v456 = vunpack.c.l.b16 %v112
  %v457 = vunpack.c.l.b16 %v113
  %v458 = vunpack.c.l.b16 %v114
  %v459 = vunpack.c.l.b16 %v115
  %v460 = vunpack.c.l.b16 %v116
  %v461 = vunpack.c.l.b16 %v117
  %v462 = vunpack.c.l.b16 %v118
  %v463 = vunpack.c.l.b16 %v119
  %v464 = vunpack.c.l.b16 %v120
  %v465 = vunpack.c.l.b16 %v121
  %v466 = vunpack.c.l.b16 %v122
  %v467 = vunpack.c.l.b16 %v123
  %v468 = vunpack.c.l.b16 %v124
  %v469 = vunpack.c.l.b16 %v125
  %v470 = vunpack.c.l.b16 %v126
  %v471 = vunpack.c.l.b16 %v127
  %v472 = vunpack.c.l.b16 %v128
  %v473 = vunpack.c.l.b16 %v129
  %v474 = vunpack.c.l.b16 %v130
  %v475 = vunpack.c.l.b16 %v131
  %v476 = vpack.c.b16 %v405, %v404
  %v477 = vpack.c.b16 %v407, %v406
  %v478 = vpack.c.b16 %v409, %v408
  %v479 = vpack.c.b16 %v411, %v410
  %v480 = vpack.c.b16 %v413, %v412
  %v481 = vpack.c.b16 %v415, %v414
  %v482 = vpack.c.b16 %v417, %v416
  %v483 = vpack.c.b16 %v419, %v418
  %v484 = vpack.c.b16 %v421, %v420
  %v485 = vpack.c.b16 %v423, %v422
  %v486 = vpack.c.b16 %v425, %v424
  %v487 = vpack.c.b16 %v427, %v426
  %v488 = vpack.c.b16 %v429, %v428
  %v489 = vpack.c.b16 %v431, %v430
  %v490 = vpack.c.b16 %v433, %v432
  %v491 = vpack.c.b16 %v435, %v434
  %v492 = vpack.c.b16 %v437, %v436
  %v493 = vpack.c.b16 %v439, %v438
  %v494 = vpack.c.b16 %v441, %v440
  %v495 = vpack.c.b16 %v443, %v442
  %v496 = vpack.c.b16 %v445, %v444
  %v497 = vpack.c.b16 %v447, %v446
  %v498 = vpack.c.b16 %v449, %v448
  %v499 = vpack.c.b16 %v451, %v450
  %v500 = vpack.c.b16 %v453, %v452
  %v501 = vpack.c.b16 %v455, %v454
  %v502 = vpack.c.b16 %v457, %v456
  %v503 = vpack.c.b16 %v459, %v458
  %v504 = vpack.c.b16 %v461, %v460
  %v505 = vpack.c.b16 %v463, %v462
  %v506 = vpack.c.b16 %v465, %v464
  %v507 = vpack.c.b16 %v467, %v466
  %v508 = vpack.c.b16 %v469, %v468
  %v509 = vpack.c.b16 %v471, %v470
  %v510 = vpack.c.b16 %v473, %v472
  %v511 = vpack.c.b16 %v475, %v474
  %vm548 = vcmask 523264
  %v550 = vsel %vm548, %v264, 0
  %v553 = vsel %vm548, %v269, 0
  %v556 = vsel %vm548, %v274, 0
  %v559 = vsel %vm548, %v279, 0
  %v562 = vsel %vm548, %v284, 0
  %v565 = vsel %vm548, %v289, 0
  %v568 = vsel %vm548, %v294, 0
  %v571 = vsel %vm548, %v299, 0
  %573 = vmatprep.subr.bf16.mxu0 0
  %574 = vmatpush1.bf16.msra.mxu0 %v476
  %575 = vmatprep.subr.bf16.mxu0 0
  %576 = vmatpush1.bf16.msra.mxu0 %v477
  %577 = vmatprep.subr.bf16.mxu0 0
  %578 = vmatpush1.bf16.msra.mxu0 %v478
  %579 = vmatprep.subr.bf16.mxu0 0
  %580 = vmatpush1.bf16.msra.mxu0 %v479
  %581 = vmatprep.subr.bf16.mxu0 0
  %582 = vmatpush1.bf16.msra.mxu0 %v480
  %583 = vmatprep.subr.bf16.mxu0 0
  %584 = vmatpush1.bf16.msra.mxu0 %v481
  %585 = vmatprep.subr.bf16.mxu0 0
  %586 = vmatpush1.bf16.msra.mxu0 %v482
  %587 = vmatprep.subr.bf16.mxu0 0
  %588 = vmatpush1.bf16.msra.mxu0 %v483
  %589 = vmatprep.subr.bf16.mxu0 0
  %590 = vmatpush1.bf16.msra.mxu0 %v484
  %591 = vmatprep.subr.bf16.mxu0 0
  %592 = vmatpush1.bf16.msra.mxu0 %v485
  %593 = vmatprep.subr.bf16.mxu0 0
  %594 = vmatpush1.bf16.msra.mxu0 %v486
  %595 = vmatprep.subr.bf16.mxu0 0
  %596 = vmatpush1.bf16.msra.mxu0 %v487
  %597 = vmatprep.subr.bf16.mxu0 0
  %598 = vmatpush1.bf16.msra.mxu0 %v488
  %599 = vmatprep.subr.bf16.mxu0 0
  %600 = vmatpush1.bf16.msra.mxu0 %v489
  %601 = vmatprep.subr.bf16.mxu0 0
  %602 = vmatpush1.bf16.msra.mxu0 %v490
  %603 = vmatprep.subr.bf16.mxu0 0
  %604 = vmatpush1.bf16.msra.mxu0 %v491
  %605 = vmatprep.mubr.bf16.mxu0 %v261
  %606 = vmatmul.mubr.bf16.gmra.mrb[0].mxu0 %v260
  %v607 = vpop.f32.mrb[0].mxu0
  %v608 = vadd.f32 0.0, %v607
  %v609 = vpop.f32.mrb[0].mxu0
  %v610 = vpop.f32.mrb[0].mxu0
  %v611 = vadd.f32 0.0, %v610
  %v612 = vpop.f32.mrb[0].mxu0
  %613 = vmatprep.mubr.bf16.mxu0 %v266
  %614 = vmatmul.mubr.bf16.gmra.mrb[0].mxu0 %v265
  %v615 = vpop.f32.mrb[0].mxu0
  %v616 = vadd.f32 0.0, %v615
  %v617 = vpop.f32.mrb[0].mxu0
  %v618 = vpop.f32.mrb[0].mxu0
  %v619 = vadd.f32 0.0, %v618
  %v620 = vpop.f32.mrb[0].mxu0
  %621 = vmatprep.mubr.bf16.mxu0 %v271
  %622 = vmatmul.mubr.bf16.gmra.mrb[0].mxu0 %v270
  %v623 = vpop.f32.mrb[0].mxu0
  %v624 = vadd.f32 0.0, %v623
  %v625 = vpop.f32.mrb[0].mxu0
  %v626 = vpop.f32.mrb[0].mxu0
  %v627 = vadd.f32 0.0, %v626
  %v628 = vpop.f32.mrb[0].mxu0
  %629 = vmatprep.mubr.bf16.mxu0 %v276
  %630 = vmatmul.mubr.bf16.gmra.mrb[0].mxu0 %v275
  %v631 = vpop.f32.mrb[0].mxu0
  %v632 = vadd.f32 0.0, %v631
  %v633 = vpop.f32.mrb[0].mxu0
  %v634 = vpop.f32.mrb[0].mxu0
  %v635 = vadd.f32 0.0, %v634
  %v636 = vpop.f32.mrb[0].mxu0
  %637 = vmatprep.mubr.bf16.mxu0 %v281
  %638 = vmatmul.mubr.bf16.gmra.mrb[0].mxu0 %v280
  %v639 = vpop.f32.mrb[0].mxu0
  %v640 = vadd.f32 0.0, %v639
  %v641 = vpop.f32.mrb[0].mxu0
  %v642 = vpop.f32.mrb[0].mxu0
  %v643 = vadd.f32 0.0, %v642
  %v644 = vpop.f32.mrb[0].mxu0
  %645 = vmatprep.mubr.bf16.mxu0 %v286
  %646 = vmatmul.mubr.bf16.gmra.mrb[0].mxu0 %v285
  %v647 = vpop.f32.mrb[0].mxu0
  %v648 = vadd.f32 0.0, %v647
  %v649 = vpop.f32.mrb[0].mxu0
  %v650 = vpop.f32.mrb[0].mxu0
  %v651 = vadd.f32 0.0, %v650
  %v652 = vpop.f32.mrb[0].mxu0
  %653 = vmatprep.mubr.bf16.mxu0 %v291
  %654 = vmatmul.mubr.bf16.gmra.mrb[0].mxu0 %v290
  %v655 = vpop.f32.mrb[0].mxu0
  %v656 = vadd.f32 0.0, %v655
  %v657 = vpop.f32.mrb[0].mxu0
  %v658 = vpop.f32.mrb[0].mxu0
  %v659 = vadd.f32 0.0, %v658
  %v660 = vpop.f32.mrb[0].mxu0
  %661 = vmatprep.mubr.bf16.mxu0 %v296
  %662 = vmatmul.mubr.bf16.gmra.mrb[0].mxu0 %v295
  %v663 = vpop.f32.mrb[0].mxu0
  %v664 = vadd.f32 0.0, %v663
  %v665 = vpop.f32.mrb[0].mxu0
  %v666 = vpop.f32.mrb[0].mxu0
  %v667 = vadd.f32 0.0, %v666
  %v668 = vpop.f32.mrb[0].mxu0
  %669 = vdwg.mxu0
  %670 = vmatprep.subr.bf16.mxu0 0
  %671 = vmatpush1.bf16.msra.mxu0 %v492
  %672 = vmatprep.subr.bf16.mxu0 0
  %673 = vmatpush1.bf16.msra.mxu0 %v493
  %674 = vmatprep.subr.bf16.mxu0 0
  %675 = vmatpush1.bf16.msra.mxu0 %v494
  %676 = vmatprep.subr.bf16.mxu0 0
  %677 = vmatpush1.bf16.msra.mxu0 %v495
  %678 = vmatprep.subr.bf16.mxu0 0
  %679 = vmatpush1.bf16.msra.mxu0 %v496
  %680 = vmatprep.subr.bf16.mxu0 0
  %681 = vmatpush1.bf16.msra.mxu0 %v497
  %682 = vmatprep.subr.bf16.mxu0 0
  %683 = vmatpush1.bf16.msra.mxu0 %v498
  %684 = vmatprep.subr.bf16.mxu0 0
  %685 = vmatpush1.bf16.msra.mxu0 %v499
  %686 = vmatprep.subr.bf16.mxu0 0
  %687 = vmatpush1.bf16.msra.mxu0 %v500
  %688 = vmatprep.subr.bf16.mxu0 0
  %689 = vmatpush1.bf16.msra.mxu0 %v501
  %690 = vmatprep.subr.bf16.mxu0 0
  %691 = vmatpush1.bf16.msra.mxu0 %v502
  %692 = vmatprep.subr.bf16.mxu0 0
  %693 = vmatpush1.bf16.msra.mxu0 %v503
  %694 = vmatprep.subr.bf16.mxu0 0
  %695 = vmatpush1.bf16.msra.mxu0 %v504
  %696 = vmatprep.subr.bf16.mxu0 0
  %697 = vmatpush1.bf16.msra.mxu0 %v505
  %698 = vmatprep.subr.bf16.mxu0 0
  %699 = vmatpush1.bf16.msra.mxu0 %v506
  %700 = vmatprep.subr.bf16.mxu0 0
  %701 = vmatpush1.bf16.msra.mxu0 %v507
  %702 = vmatprep.mubr.bf16.mxu0 %v263
  %703 = vmatmul.mubr.bf16.gmra.mrb[0].mxu0 %v262
  %v704 = vpop.f32.mrb[0].mxu0
  %v705 = vadd.f32 %v608, %v704
  %v706 = vpop.f32.mrb[0].mxu0
  %v707 = vpop.f32.mrb[0].mxu0
  %v708 = vadd.f32 %v611, %v707
  %v709 = vpop.f32.mrb[0].mxu0
  %710 = vmatprep.mubr.bf16.mxu0 %v268
  %711 = vmatmul.mubr.bf16.gmra.mrb[0].mxu0 %v267
  %v712 = vpop.f32.mrb[0].mxu0
  %v713 = vadd.f32 %v616, %v712
  %v714 = vpop.f32.mrb[0].mxu0
  %v715 = vpop.f32.mrb[0].mxu0
  %v716 = vadd.f32 %v619, %v715
  %v717 = vpop.f32.mrb[0].mxu0
  %718 = vmatprep.mubr.bf16.mxu0 %v273
  %719 = vmatmul.mubr.bf16.gmra.mrb[0].mxu0 %v272
  %v720 = vpop.f32.mrb[0].mxu0
  %v721 = vadd.f32 %v624, %v720
  %v722 = vpop.f32.mrb[0].mxu0
  %v723 = vpop.f32.mrb[0].mxu0
  %v724 = vadd.f32 %v627, %v723
  %v725 = vpop.f32.mrb[0].mxu0
  %726 = vmatprep.mubr.bf16.mxu0 %v278
  %727 = vmatmul.mubr.bf16.gmra.mrb[0].mxu0 %v277
  %v728 = vpop.f32.mrb[0].mxu0
  %v729 = vadd.f32 %v632, %v728
  %v730 = vpop.f32.mrb[0].mxu0
  %v731 = vpop.f32.mrb[0].mxu0
  %v732 = vadd.f32 %v635, %v731
  %v733 = vpop.f32.mrb[0].mxu0
  %734 = vmatprep.mubr.bf16.mxu0 %v283
  %735 = vmatmul.mubr.bf16.gmra.mrb[0].mxu0 %v282
  %v736 = vpop.f32.mrb[0].mxu0
  %v737 = vadd.f32 %v640, %v736
  %v738 = vpop.f32.mrb[0].mxu0
  %v739 = vpop.f32.mrb[0].mxu0
  %v740 = vadd.f32 %v643, %v739
  %v741 = vpop.f32.mrb[0].mxu0
  %742 = vmatprep.mubr.bf16.mxu0 %v288
  %743 = vmatmul.mubr.bf16.gmra.mrb[0].mxu0 %v287
  %v744 = vpop.f32.mrb[0].mxu0
  %v745 = vadd.f32 %v648, %v744
  %v746 = vpop.f32.mrb[0].mxu0
  %v747 = vpop.f32.mrb[0].mxu0
  %v748 = vadd.f32 %v651, %v747
  %v749 = vpop.f32.mrb[0].mxu0
  %750 = vmatprep.mubr.bf16.mxu0 %v293
  %751 = vmatmul.mubr.bf16.gmra.mrb[0].mxu0 %v292
  %v752 = vpop.f32.mrb[0].mxu0
  %v753 = vadd.f32 %v656, %v752
  %v754 = vpop.f32.mrb[0].mxu0
  %v755 = vpop.f32.mrb[0].mxu0
  %v756 = vadd.f32 %v659, %v755
  %v757 = vpop.f32.mrb[0].mxu0
  %758 = vmatprep.mubr.bf16.mxu0 %v298
  %759 = vmatmul.mubr.bf16.gmra.mrb[0].mxu0 %v297
  %v760 = vpop.f32.mrb[0].mxu0
  %v761 = vadd.f32 %v664, %v760
  %v762 = vpop.f32.mrb[0].mxu0
  %v763 = vpop.f32.mrb[0].mxu0
  %v764 = vadd.f32 %v667, %v763
  %v765 = vpop.f32.mrb[0].mxu0
  %766 = vdwg.mxu0
  %767 = vmatprep.subr.bf16.mxu0 0
  %768 = vmatpush1.bf16.msra.mxu0 %v508
  %769 = vmatprep.subr.bf16.mxu0 0
  %770 = vmatpush1.bf16.msra.mxu0 %v509
  %771 = vmatprep.subr.bf16.mxu0 0
  %772 = vmatpush1.bf16.msra.mxu0 %v510
  %773 = vmatprep.subr.bf16.mxu0 0
  %774 = vmatpush1.bf16.msra.mxu0 %v511
  %775 = vmatprep.subr.bf16.mxu0 0
  %776 = vmatpush1.bf16.msra.mxu0 0
  %777 = vmatprep.subr.bf16.mxu0 0
  %778 = vmatpush1.bf16.msra.mxu0 0
  %779 = vmatprep.subr.bf16.mxu0 0
  %780 = vmatpush1.bf16.msra.mxu0 0
  %781 = vmatprep.subr.bf16.mxu0 0
  %782 = vmatpush1.bf16.msra.mxu0 0
  %783 = vmatprep.subr.bf16.mxu0 0
  %784 = vmatpush1.bf16.msra.mxu0 0
  %785 = vmatprep.subr.bf16.mxu0 0
  %786 = vmatpush1.bf16.msra.mxu0 0
  %787 = vmatprep.subr.bf16.mxu0 0
  %788 = vmatpush1.bf16.msra.mxu0 0
  %789 = vmatprep.subr.bf16.mxu0 0
  %790 = vmatpush1.bf16.msra.mxu0 0
  %791 = vmatprep.subr.bf16.mxu0 0
  %792 = vmatpush1.bf16.msra.mxu0 0
  %793 = vmatprep.subr.bf16.mxu0 0
  %794 = vmatpush1.bf16.msra.mxu0 0
  %795 = vmatprep.subr.bf16.mxu0 0
  %796 = vmatpush1.bf16.msra.mxu0 0
  %797 = vmatprep.subr.bf16.mxu0 0
  %798 = vmatpush1.bf16.msra.mxu0 0
  %799 = vmatprep.mubr.bf16.mxu0 0
  %800 = vmatmul.mubr.bf16.gmra.mrb[0].mxu0 %v550
  %v801 = vpop.f32.mrb[0].mxu0
  %v802 = vadd.f32 %v705, %v801
  %v803 = vpop.f32.mrb[0].mxu0
  %v804 = vpop.f32.mrb[0].mxu0
  %v805 = vadd.f32 %v708, %v804
  %v806 = vpop.f32.mrb[0].mxu0
  %807 = vmatprep.mubr.bf16.mxu0 0
  %808 = vmatmul.mubr.bf16.gmra.mrb[0].mxu0 %v553
  %v809 = vpop.f32.mrb[0].mxu0
  %v810 = vadd.f32 %v713, %v809
  %v811 = vpop.f32.mrb[0].mxu0
  %v812 = vpop.f32.mrb[0].mxu0
  %v813 = vadd.f32 %v716, %v812
  %v814 = vpop.f32.mrb[0].mxu0
  %815 = vmatprep.mubr.bf16.mxu0 0
  %816 = vmatmul.mubr.bf16.gmra.mrb[0].mxu0 %v556
  %v817 = vpop.f32.mrb[0].mxu0
  %v818 = vadd.f32 %v721, %v817
  %v819 = vpop.f32.mrb[0].mxu0
  %v820 = vpop.f32.mrb[0].mxu0
  %v821 = vadd.f32 %v724, %v820
  %v822 = vpop.f32.mrb[0].mxu0
  %823 = vmatprep.mubr.bf16.mxu0 0
  %824 = vmatmul.mubr.bf16.gmra.mrb[0].mxu0 %v559
  %v825 = vpop.f32.mrb[0].mxu0
  %v826 = vadd.f32 %v729, %v825
  %v827 = vpop.f32.mrb[0].mxu0
  %v828 = vpop.f32.mrb[0].mxu0
  %v829 = vadd.f32 %v732, %v828
  %v830 = vpop.f32.mrb[0].mxu0
  %831 = vmatprep.mubr.bf16.mxu0 0
  %832 = vmatmul.mubr.bf16.gmra.mrb[0].mxu0 %v562
  %v833 = vpop.f32.mrb[0].mxu0
  %v834 = vadd.f32 %v737, %v833
  %v835 = vpop.f32.mrb[0].mxu0
  %v836 = vpop.f32.mrb[0].mxu0
  %v837 = vadd.f32 %v740, %v836
  %v838 = vpop.f32.mrb[0].mxu0
  %839 = vmatprep.mubr.bf16.mxu0 0
  %840 = vmatmul.mubr.bf16.gmra.mrb[0].mxu0 %v565
  %v841 = vpop.f32.mrb[0].mxu0
  %v842 = vadd.f32 %v745, %v841
  %v843 = vpop.f32.mrb[0].mxu0
  %v844 = vpop.f32.mrb[0].mxu0
  %v845 = vadd.f32 %v748, %v844
  %v846 = vpop.f32.mrb[0].mxu0
  %847 = vmatprep.mubr.bf16.mxu0 0
  %848 = vmatmul.mubr.bf16.gmra.mrb[0].mxu0 %v568
  %v849 = vpop.f32.mrb[0].mxu0
  %v850 = vadd.f32 %v753, %v849
  %v851 = vpop.f32.mrb[0].mxu0
  %v852 = vpop.f32.mrb[0].mxu0
  %v853 = vadd.f32 %v756, %v852
  %v854 = vpop.f32.mrb[0].mxu0
  %855 = vmatprep.mubr.bf16.mxu0 0
  %856 = vmatmul.mubr.bf16.gmra.mrb[0].mxu0 %v571
  %v857 = vpop.f32.mrb[0].mxu0
  %v858 = vadd.f32 %v761, %v857
  %v859 = vpop.f32.mrb[0].mxu0
  %v860 = vpop.f32.mrb[0].mxu0
  %v861 = vadd.f32 %v764, %v860
  %v862 = vpop.f32.mrb[0].mxu0
  %863 = vdwg.mxu0
  %864 = vst.msk [vmem:[%s2] sm:$0xff] %vm548, %v802
  %865 = vst.msk [vmem:[%s2 + $0x8] sm:$0xff] %vm548, %v805
  %866 = vst.msk [vmem:[%s2 + $0x10] sm:$0xff] %vm548, %v810
  %867 = vst.msk [vmem:[%s2 + $0x18] sm:$0xff] %vm548, %v813
  %868 = vst.msk [vmem:[%s2 + $0x20] sm:$0xff] %vm548, %v818
  %869 = vst.msk [vmem:[%s2 + $0x28] sm:$0xff] %vm548, %v821
  %870 = vst.msk [vmem:[%s2 + $0x30] sm:$0xff] %vm548, %v826
  %871 = vst.msk [vmem:[%s2 + $0x38] sm:$0xff] %vm548, %v829
  %872 = vst.msk [vmem:[%s2 + $0x40] sm:$0xff] %vm548, %v834
  %873 = vst.msk [vmem:[%s2 + $0x48] sm:$0xff] %vm548, %v837
  %874 = vst.msk [vmem:[%s2 + $0x50] sm:$0xff] %vm548, %v842
  %875 = vst.msk [vmem:[%s2 + $0x58] sm:$0xff] %vm548, %v845
  %876 = vst.msk [vmem:[%s2 + $0x60] sm:$0xff] %vm548, %v850
  %877 = vst.msk [vmem:[%s2 + $0x68] sm:$0xff] %vm548, %v853
  %878 = vst.msk [vmem:[%s2 + $0x70] sm:$0xff] %vm548, %v858
  %879 = vst.msk [vmem:[%s2 + $0x78] sm:$0xff] %vm548, %v861
  // Predicated region
  $region10: #{embedding_net_forward.63} parent=0 // pred_check
    _
  $region11: #{embedding_net_forward.63} parent=0 // pred_check_branch
    %881 = sbr.rel (0) target = $region13
  $region12: #{embedding_net_forward.63} parent=0 // pred_region
    _
  $region13: #{embedding_net_forward.63} parent=0 // pred_fallthru
    _
  // Predicated region
  $region14: #{embedding_net_forward.63} parent=0 // pred_check
    _
  $region15: #{embedding_net_forward.63} parent=0 // pred_check_branch
    %883 = sbr.rel (0) target = $region17
  $region16: #{embedding_net_forward.63} parent=0 // pred_region
    _
  $region17: #{embedding_net_forward.63} parent=0 // pred_fallthru
    _

// kernel: embedding_net_forward.68
$region0: #{embedding_net_forward.68}
  #allocation0 [shape = 'u32[]', space=smem, size = 0x4, offset = 0x4, fixed_abs, tag = 'smem constant byte address 0x4 - core index']
  #allocation1 [shape = 'u32[144,128]{1,0:T(1,128)}', space=vmem, size = 0x12000, scoped, tag = 'internal scratch']
  %s0 = inlined_call_operand.vmem [shape: f32[64,128], index: 0, kind: input, shape index: {}]
  %s1 = inlined_call_operand.vmem [shape: f32[1,128], index: 1, kind: input, shape index: {}]
  %s2 = inlined_call_operand.vmem [shape: f32[1,128], index: 2, kind: input, shape index: {}]
  %s3 = inlined_call_operand.vmem [shape: f32[64,128], index: 3, kind: input, shape index: {}]
  %s4 = inlined_call_operand.vmem [shape: f32[64,128], index: 4, kind: output, shape index: {}]
  %s5 = sld [smem:[#allocation0]]
  $region26: #{embedding_net_forward.68} parent=0
    _
  %s7 = ssub.s32 1, %s5
  %s8 = scalar_select 0, %s7, %s5
  // Predicated region
  $region2: #{embedding_net_forward.68} parent=0 // pred_check
    _
  $region3: #{embedding_net_forward.68} parent=0 // pred_check_branch
    %10 = sbr.rel (0) target = $region5
  $region4: #{embedding_net_forward.68} parent=0 // pred_region
    _
  $region5: #{embedding_net_forward.68} parent=0 // pred_fallthru
    _
  // Predicated region
  $region6: #{embedding_net_forward.68} parent=0 // pred_check
    _
  $region7: #{embedding_net_forward.68} parent=0 // pred_check_branch
    %12 = sbr.rel (0) target = $region9
  $region8: #{embedding_net_forward.68} parent=0 // pred_region
    _
  $region9: #{embedding_net_forward.68} parent=0 // pred_fallthru
    _
  // Predicated region
  $region10: #{embedding_net_forward.68} parent=0 // pred_check
    _
  $region11: #{embedding_net_forward.68} parent=0 // pred_check_branch
    %14 = sbr.rel (0) target = $region13
  $region12: #{embedding_net_forward.68} parent=0 // pred_region
    _
  $region13: #{embedding_net_forward.68} parent=0 // pred_fallthru
    _
  // Predicated region
  $region14: #{embedding_net_forward.68} parent=0 // pred_check
    _
  $region15: #{embedding_net_forward.68} parent=0 // pred_check_branch
    %16 = sbr.rel (0) target = $region17
  $region16: #{embedding_net_forward.68} parent=0 // pred_region
    _
  $region17: #{embedding_net_forward.68} parent=0 // pred_fallthru
    _
  %v17 = vld [vmem:[%s0] sm:$0xff]
  %v18 = vld [vmem:[%s0 + $0x8] sm:$0xff]
  %v19 = vld [vmem:[%s0 + $0x10] sm:$0xff]
  %v20 = vld [vmem:[%s0 + $0x18] sm:$0xff]
  %v21 = vld [vmem:[%s0 + $0x20] sm:$0xff]
  %v22 = vld [vmem:[%s0 + $0x28] sm:$0xff]
  %v23 = vld [vmem:[%s0 + $0x30] sm:$0xff]
  %v24 = vld [vmem:[%s0 + $0x38] sm:$0xff]
  %v25 = vld [vmem:[%s1] sm:$0x1]
  %v27 = vlaneseq
  %v28 = vshrl.u32 %v27, 7
  %v29 = vsub.s32 0, %v28
  %v30 = vrot.slane %v25, %v29
  %v32 = vmul.f32 %v17, %v30
  %v33 = vmul.f32 %v18, %v30
  %v34 = vmul.f32 %v19, %v30
  %v35 = vmul.f32 %v20, %v30
  %v36 = vmul.f32 %v21, %v30
  %v37 = vmul.f32 %v22, %v30
  %v38 = vmul.f32 %v23, %v30
  %v39 = vmul.f32 %v24, %v30
  %v40 = vld [vmem:[%s2] sm:$0x1]
  %v42 = vlaneseq
  %v43 = vshrl.u32 %v42, 7
  %v44 = vsub.s32 0, %v43
  %v45 = vrot.slane %v40, %v44
  %v47 = vadd.f32 %v32, %v45
  %v48 = vadd.f32 %v33, %v45
  %v49 = vadd.f32 %v34, %v45
  %v50 = vadd.f32 %v35, %v45
  %v51 = vadd.f32 %v36, %v45
  %v52 = vadd.f32 %v37, %v45
  %v53 = vadd.f32 %v38, %v45
  %v54 = vadd.f32 %v39, %v45
  %v55 = vld [vmem:[%s3] sm:$0xff]
  %v56 = vld [vmem:[%s3 + $0x8] sm:$0xff]
  %v57 = vld [vmem:[%s3 + $0x10] sm:$0xff]
  %v58 = vld [vmem:[%s3 + $0x18] sm:$0xff]
  %v59 = vld [vmem:[%s3 + $0x20] sm:$0xff]
  %v60 = vld [vmem:[%s3 + $0x28] sm:$0xff]
  %v61 = vld [vmem:[%s3 + $0x30] sm:$0xff]
  %v62 = vld [vmem:[%s3 + $0x38] sm:$0xff]
  %v63 = vadd.f32 %v47, %v55
  %v64 = vadd.f32 %v48, %v56
  %v65 = vadd.f32 %v49, %v57
  %v66 = vadd.f32 %v50, %v58
  %v67 = vadd.f32 %v51, %v59
  %v68 = vadd.f32 %v52, %v60
  %v69 = vadd.f32 %v53, %v61
  %v70 = vadd.f32 %v54, %v62
  %v71 = vmax.f32 %v63, 0.0
  %v72 = vmax.f32 %v64, 0.0
  %v73 = vmax.f32 %v65, 0.0
  %v74 = vmax.f32 %v66, 0.0
  %v75 = vmax.f32 %v67, 0.0
  %v76 = vmax.f32 %v68, 0.0
  %v77 = vmax.f32 %v69, 0.0
  %v78 = vmax.f32 %v70, 0.0
  %79 = vst [vmem:[%s4] sm:$0xff] %v71
  %80 = vst [vmem:[%s4 + $0x8] sm:$0xff] %v72
  %81 = vst [vmem:[%s4 + $0x10] sm:$0xff] %v73
  %82 = vst [vmem:[%s4 + $0x18] sm:$0xff] %v74
  %83 = vst [vmem:[%s4 + $0x20] sm:$0xff] %v75
  %84 = vst [vmem:[%s4 + $0x28] sm:$0xff] %v76
  %85 = vst [vmem:[%s4 + $0x30] sm:$0xff] %v77
  %86 = vst [vmem:[%s4 + $0x38] sm:$0xff] %v78
  // Predicated region
  $region18: #{embedding_net_forward.68} parent=0 // pred_check
    _
  $region19: #{embedding_net_forward.68} parent=0 // pred_check_branch
    %88 = sbr.rel (0) target = $region21
  $region20: #{embedding_net_forward.68} parent=0 // pred_region
    _
  $region21: #{embedding_net_forward.68} parent=0 // pred_fallthru
    _
  // Predicated region
  $region22: #{embedding_net_forward.68} parent=0 // pred_check
    _
  $region23: #{embedding_net_forward.68} parent=0 // pred_check_branch
    %90 = sbr.rel (0) target = $region25
  $region24: #{embedding_net_forward.68} parent=0 // pred_region
    _
  $region25: #{embedding_net_forward.68} parent=0 // pred_fallthru
    _

// kernel: embedding_net_forward.79
$region0: #{embedding_net_forward.79}
  #allocation0 [shape = 'u32[]', space=smem, size = 0x4, offset = 0x4, fixed_abs, tag = 'smem constant byte address 0x4 - core index']
  #allocation1 [shape = 'u32[144,128]{1,0:T(1,128)}', space=vmem, size = 0x12000, scoped, tag = 'internal scratch']
  %s0 = inlined_call_operand.vmem [shape: bf16[32,64], index: 0, kind: input, shape index: {}]
  %s1 = inlined_call_operand.vmem [shape: bf16[64,128], index: 1, kind: input, shape index: {}]
  %s2 = inlined_call_operand.vmem [shape: f32[32,128], index: 2, kind: output, shape index: {}]
  %s3 = sld [smem:[#allocation0]]
  $region18: #{embedding_net_forward.79} parent=0
    _
  %s5 = ssub.s32 1, %s3
  %s6 = scalar_select 0, %s5, %s3
  // Predicated region
  $region2: #{embedding_net_forward.79} parent=0 // pred_check
    _
  $region3: #{embedding_net_forward.79} parent=0 // pred_check_branch
    %8 = sbr.rel (0) target = $region5
  $region4: #{embedding_net_forward.79} parent=0 // pred_region
    _
  $region5: #{embedding_net_forward.79} parent=0 // pred_fallthru
    _
  // Predicated region
  $region6: #{embedding_net_forward.79} parent=0 // pred_check
    _
  $region7: #{embedding_net_forward.79} parent=0 // pred_check_branch
    %10 = sbr.rel (0) target = $region9
  $region8: #{embedding_net_forward.79} parent=0 // pred_region
    _
  $region9: #{embedding_net_forward.79} parent=0 // pred_fallthru
    _
  %v12 = vld [vmem:[%s0] sm:$0xf]
  %v13 = vld [vmem:[%s0 + $0x4] sm:$0xf]
  %v14 = vld [vmem:[%s0 + $0x8] sm:$0xf]
  %v15 = vld [vmem:[%s0 + $0xc] sm:$0xf]
  %v16 = vld [vmem:[%s1] sm:$0xf]
  %v17 = vld [vmem:[%s1 + $0x4] sm:$0xf]
  %v18 = vld [vmem:[%s1 + $0x8] sm:$0xf]
  %v19 = vld [vmem:[%s1 + $0xc] sm:$0xf]
  %v20 = vld [vmem:[%s1 + $0x10] sm:$0xf]
  %v21 = vld [vmem:[%s1 + $0x14] sm:$0xf]
  %v22 = vld [vmem:[%s1 + $0x18] sm:$0xf]
  %v23 = vld [vmem:[%s1 + $0x1c] sm:$0xf]
  %v28 = vunpack.c.l.b16 %v12
  %v29 = vunpack.c.l.b16 %v13
  %v30 = vunpack.c.l.b16 %v14
  %v31 = vunpack.c.l.b16 %v15
  %v32 = vpack.c.b16 %v29, %v28
  %v33 = vpack.c.b16 %v31, %v30
  %v42 = vunpack.c.l.b16 %v16
  %v43 = vunpack.c.l.b16 %v17
  %v44 = vunpack.c.l.b16 %v18
  %v45 = vunpack.c.l.b16 %v19
  %v46 = vunpack.c.l.b16 %v20
  %v47 = vunpack.c.l.b16 %v21
  %v48 = vunpack.c.l.b16 %v22
  %v49 = vunpack.c.l.b16 %v23
  %v50 = vpack.c.b16 %v43, %v42
  %v51 = vpack.c.b16 %v45, %v44
  %v52 = vpack.c.b16 %v47, %v46
  %v53 = vpack.c.b16 %v49, %v48
  %vm58 = vcmask 523264
  %v60 = vsel %vm58, %v32, 0
  %v63 = vsel %vm58, %v33, 0
  %65 = vmatprep.subr.bf16.mxu0 0
  %66 = vmatpush1.bf16.msra.mxu0 %v50
  %67 = vmatprep.subr.bf16.mxu0 0
  %68 = vmatpush1.bf16.msra.mxu0 %v51
  %69 = vmatprep.subr.bf16.mxu0 0
  %70 = vmatpush1.bf16.msra.mxu0 %v52
  %71 = vmatprep.subr.bf16.mxu0 0
  %72 = vmatpush1.bf16.msra.mxu0 %v53
  %73 = vmatprep.subr.bf16.mxu0 0
  %74 = vmatpush1.bf16.msra.mxu0 0
  %75 = vmatprep.subr.bf16.mxu0 0
  %76 = vmatpush1.bf16.msra.mxu0 0
  %77 = vmatprep.subr.bf16.mxu0 0
  %78 = vmatpush1.bf16.msra.mxu0 0
  %79 = vmatprep.subr.bf16.mxu0 0
  %80 = vmatpush1.bf16.msra.mxu0 0
  %81 = vmatprep.subr.bf16.mxu0 0
  %82 = vmatpush1.bf16.msra.mxu0 0
  %83 = vmatprep.subr.bf16.mxu0 0
  %84 = vmatpush1.bf16.msra.mxu0 0
  %85 = vmatprep.subr.bf16.mxu0 0
  %86 = vmatpush1.bf16.msra.mxu0 0
  %87 = vmatprep.subr.bf16.mxu0 0
  %88 = vmatpush1.bf16.msra.mxu0 0
  %89 = vmatprep.subr.bf16.mxu0 0
  %90 = vmatpush1.bf16.msra.mxu0 0
  %91 = vmatprep.subr.bf16.mxu0 0
  %92 = vmatpush1.bf16.msra.mxu0 0
  %93 = vmatprep.subr.bf16.mxu0 0
  %94 = vmatpush1.bf16.msra.mxu0 0
  %95 = vmatprep.subr.bf16.mxu0 0
  %96 = vmatpush1.bf16.msra.mxu0 0
  %97 = vmatprep.mubr.bf16.mxu0 0
  %98 = vmatmul.mubr.bf16.gmra.mrb[0].mxu0 %v60
  %v99 = vpop.f32.mrb[0].mxu0
  %v100 = vadd.f32 0.0, %v99
  %v101 = vpop.f32.mrb[0].mxu0
  %v102 = vpop.f32.mrb[0].mxu0
  %v103 = vadd.f32 0.0, %v102
  %v104 = vpop.f32.mrb[0].mxu0
  %105 = vmatprep.mubr.bf16.mxu0 0
  %106 = vmatmul.mubr.bf16.gmra.mrb[0].mxu0 %v63
  %v107 = vpop.f32.mrb[0].mxu0
  %v108 = vadd.f32 0.0, %v107
  %v109 = vpop.f32.mrb[0].mxu0
  %v110 = vpop.f32.mrb[0].mxu0
  %v111 = vadd.f32 0.0, %v110
  %v112 = vpop.f32.mrb[0].mxu0
  %113 = vdwg.mxu0
  %114 = vst [vmem:[%s2] sm:$0xff] %v100
  %115 = vst [vmem:[%s2 + $0x8] sm:$0xff] %v103
  %116 = vst [vmem:[%s2 + $0x10] sm:$0xff] %v108
  %117 = vst [vmem:[%s2 + $0x18] sm:$0xff] %v111
  // Predicated region
  $region10: #{embedding_net_forward.79} parent=0 // pred_check
    _
  $region11: #{embedding_net_forward.79} parent=0 // pred_check_branch
    %119 = sbr.rel (0) target = $region13
  $region12: #{embedding_net_forward.79} parent=0 // pred_region
    _
  $region13: #{embedding_net_forward.79} parent=0 // pred_fallthru
    _
  // Predicated region
  $region14: #{embedding_net_forward.79} parent=0 // pred_check
    _
  $region15: #{embedding_net_forward.79} parent=0 // pred_check_branch
    %121 = sbr.rel (0) target = $region17
  $region16: #{embedding_net_forward.79} parent=0 // pred_region
    _
  $region17: #{embedding_net_forward.79} parent=0 // pred_fallthru
    _

// kernel: embedding_net_forward.80
$region0: #{embedding_net_forward.80}
  #allocation0 [shape = 'u32[]', space=smem, size = 0x4, offset = 0x4, fixed_abs, tag = 'smem constant byte address 0x4 - core index']
  #allocation1 [shape = 'u32[144,128]{1,0:T(1,128)}', space=vmem, size = 0x12000, scoped, tag = 'internal scratch']
  %s0 = inlined_call_operand.vmem [shape: f32[32,128], index: 0, kind: input, shape index: {}]
  %s1 = inlined_call_operand.vmem [shape: f32[1,128], index: 1, kind: output, shape index: {0}]
  %s2 = inlined_call_operand.vmem [shape: f32[1,128], index: 2, kind: output, shape index: {1}]
  %3 = xla_tuple %s1, %s2
  %s4 = sld [smem:[#allocation0]]
  $region26: #{embedding_net_forward.80} parent=0
    _
  %s6 = ssub.s32 1, %s4
  %s7 = scalar_select 0, %s6, %s4
  // Predicated region
  $region2: #{embedding_net_forward.80} parent=0 // pred_check
    _
  $region3: #{embedding_net_forward.80} parent=0 // pred_check_branch
    %9 = sbr.rel (0) target = $region5
  $region4: #{embedding_net_forward.80} parent=0 // pred_region
    _
  $region5: #{embedding_net_forward.80} parent=0 // pred_fallthru
    _
  %p10 = scmp.eq.s32.totalorder 0, 0
  // Predicated region
  $region6: #{embedding_net_forward.80} parent=0 // pred_check
    %p11 = pneg %p10
  $region7: #{embedding_net_forward.80} parent=0 // pred_check_branch
    %13 = sbr.rel (%p11) target = $region9
  $region8: #{embedding_net_forward.80} parent=0 // pred_region
    %14 = vst [vmem:[%s1] sm:$0x1] 0.0
    %15 = vst [vmem:[%s2] sm:$0x1] 0.0
  $region9: #{embedding_net_forward.80} parent=0 // pred_fallthru
    _
  %v16 = vld [vmem:[%s0] sm:$0xff]
  %v17 = vld [vmem:[%s0 + $0x8] sm:$0xff]
  %v18 = vld [vmem:[%s0 + $0x10] sm:$0xff]
  %v19 = vld [vmem:[%s0 + $0x18] sm:$0xff]
  %v20 = vld [vmem:[%s1] sm:$0x1]
  %v21 = vadd.f32 %v16, %v17
  %v22 = vadd.f32 %v21, %v18
  %v23 = vadd.f32 %v22, %v19
  %v24 = vrot.slane %v23, 4
  %v25 = vadd.f32 %v23, %v24
  %v26 = vrot.slane %v25, 2
  %v27 = vadd.f32 %v25, %v26
  %v28 = vrot.slane %v27, 1
  %v29 = vadd.f32 %v27, %v28
  %v30 = vadd.f32 %v20, %v29
  %31 = vst [vmem:[%s1] sm:$0x1] %v30
  %v32 = vld [vmem:[%s2] sm:$0x1]
  %v33 = vmul.f32 %v16, %v16
  %v34 = vmul.f32 %v17, %v17
  %v35 = vmul.f32 %v18, %v18
  %v36 = vmul.f32 %v19, %v19
  %v37 = vadd.f32 %v33, %v34
  %v38 = vadd.f32 %v37, %v35
  %v39 = vadd.f32 %v38, %v36
  %v40 = vrot.slane %v39, 4
  %v41 = vadd.f32 %v39, %v40
  %v42 = vrot.slane %v41, 2
  %v43 = vadd.f32 %v41, %v42
  %v44 = vrot.slane %v43, 1
  %v45 = vadd.f32 %v43, %v44
  %v46 = vadd.f32 %v32, %v45
  %47 = vst [vmem:[%s2] sm:$0x1] %v46
  // Predicated region
  $region10: #{embedding_net_forward.80} parent=0 // pred_check
    _
  $region11: #{embedding_net_forward.80} parent=0 // pred_check_branch
    %49 = sbr.rel (0) target = $region13
  $region12: #{embedding_net_forward.80} parent=0 // pred_region
    _
  $region13: #{embedding_net_forward.80} parent=0 // pred_fallthru
    _
  // Predicated region
  $region14: #{embedding_net_forward.80} parent=0 // pred_check
    _
  $region15: #{embedding_net_forward.80} parent=0 // pred_check_branch
    %51 = sbr.rel (0) target = $region17
  $region16: #{embedding_net_forward.80} parent=0 // pred_region
    _
  $region17: #{embedding_net_forward.80} parent=0 // pred_fallthru
    _
  // Predicated region
  $region18: #{embedding_net_forward.80} parent=0 // pred_check
    _
  $region19: #{embedding_net_forward.80} parent=0 // pred_check_branch
    %53 = sbr.rel (0) target = $region21
  $region20: #{embedding_net_forward.80} parent=0 // pred_region
    _
  $region21: #{embedding_net_forward.80} parent=0 // pred_fallthru
    _
  // Predicated region
  $region22: #{embedding_net_forward.80} parent=0 // pred_check
    _
  $region23: #{embedding_net_forward.80} parent=0 // pred_check_branch
    %55 = sbr.rel (0) target = $region25
  $region24: #{embedding_net_forward.80} parent=0 // pred_region
    _
  $region25: #{embedding_net_forward.80} parent=0 // pred_fallthru
    _

// kernel: embedding_net_forward.81
$region0: #{embedding_net_forward.81}
  #allocation0 [shape = 'u32[]', space=smem, size = 0x4, offset = 0x4, fixed_abs, tag = 'smem constant byte address 0x4 - core index']
  #allocation1 [shape = 'u32[144,128]{1,0:T(1,128)}', space=vmem, size = 0x12000, scoped, tag = 'internal scratch']
  %s0 = inlined_call_operand.vmem [shape: f32[32,128], index: 0, kind: input, shape index: {}]
  %s1 = inlined_call_operand.vmem [shape: f32[1,128], index: 1, kind: input, shape index: {}]
  %s2 = inlined_call_operand.vmem [shape: f32[1,128], index: 2, kind: input, shape index: {}]
  %s3 = inlined_call_operand.vmem [shape: f32[32,128], index: 3, kind: output, shape index: {}]
  %s4 = sld [smem:[#allocation0]]
  $region22: #{embedding_net_forward.81} parent=0
    _
  %s6 = ssub.s32 1, %s4
  %s7 = scalar_select 0, %s6, %s4
  // Predicated region
  $region2: #{embedding_net_forward.81} parent=0 // pred_check
    _
  $region3: #{embedding_net_forward.81} parent=0 // pred_check_branch
    %9 = sbr.rel (0) target = $region5
  $region4: #{embedding_net_forward.81} parent=0 // pred_region
    _
  $region5: #{embedding_net_forward.81} parent=0 // pred_fallthru
    _
  // Predicated region
  $region6: #{embedding_net_forward.81} parent=0 // pred_check
    _
  $region7: #{embedding_net_forward.81} parent=0 // pred_check_branch
    %11 = sbr.rel (0) target = $region9
  $region8: #{embedding_net_forward.81} parent=0 // pred_region
    _
  $region9: #{embedding_net_forward.81} parent=0 // pred_fallthru
    _
  // Predicated region
  $region10: #{embedding_net_forward.81} parent=0 // pred_check
    _
  $region11: #{embedding_net_forward.81} parent=0 // pred_check_branch
    %13 = sbr.rel (0) target = $region13
  $region12: #{embedding_net_forward.81} parent=0 // pred_region
    _
  $region13: #{embedding_net_forward.81} parent=0 // pred_fallthru
    _
  %v14 = vld [vmem:[%s0] sm:$0xff]
  %v15 = vld [vmem:[%s0 + $0x8] sm:$0xff]
  %v16 = vld [vmem:[%s0 + $0x10] sm:$0xff]
  %v17 = vld [vmem:[%s0 + $0x18] sm:$0xff]
  %v18 = vld [vmem:[%s1] sm:$0x1]
  %v20 = vlaneseq
  %v21 = vshrl.u32 %v20, 7
  %v22 = vsub.s32 0, %v21
  %v23 = vrot.slane %v18, %v22
  %v25 = vmul.f32 %v14, %v23
  %v26 = vmul.f32 %v15, %v23
  %v27 = vmul.f32 %v16, %v23
  %v28 = vmul.f32 %v17, %v23
  %v29 = vld [vmem:[%s2] sm:$0x1]
  %v31 = vlaneseq
  %v32 = vshrl.u32 %v31, 7
  %v33 = vsub.s32 0, %v32
  %v34 = vrot.slane %v29, %v33
  %v36 = vadd.f32 %v25, %v34
  %v37 = vadd.f32 %v26, %v34
  %v38 = vadd.f32 %v27, %v34
  %v39 = vadd.f32 %v28, %v34
  %40 = vst [vmem:[%s3] sm:$0xff] %v36
  %41 = vst [vmem:[%s3 + $0x8] sm:$0xff] %v37
  %42 = vst [vmem:[%s3 + $0x10] sm:$0xff] %v38
  %43 = vst [vmem:[%s3 + $0x18] sm:$0xff] %v39
  // Predicated region
  $region14: #{embedding_net_forward.81} parent=0 // pred_check
    _
  $region15: #{embedding_net_forward.81} parent=0 // pred_check_branch
    %45 = sbr.rel (0) target = $region17
  $region16: #{embedding_net_forward.81} parent=0 // pred_region
    _
  $region17: #{embedding_net_forward.81} parent=0 // pred_fallthru
    _
  // Predicated region
  $region18: #{embedding_net_forward.81} parent=0 // pred_check
    _
  $region19: #{embedding_net_forward.81} parent=0 // pred_check_branch
    %47 = sbr.rel (0) target = $region21
  $region20: #{embedding_net_forward.81} parent=0 // pred_region
    _
  $region21: #{embedding_net_forward.81} parent=0 // pred_fallthru
    _

// kernel: embedding_net_forward.77
$region0: #{embedding_net_forward.77}
  #allocation0 [shape = 'u32[]', space=smem, size = 0x4, offset = 0x4, fixed_abs, tag = 'smem constant byte address 0x4 - core index']
  #allocation1 [shape = 'u32[144,128]{1,0:T(1,128)}', space=vmem, size = 0x12000, scoped, tag = 'internal scratch']
  %s0 = inlined_call_operand.vmem [shape: f32[32,128], index: 0, kind: input, shape index: {}]
  %s1 = inlined_call_operand.vmem [shape: f32[1,128], index: 1, kind: input, shape index: {}]
  %s2 = inlined_call_operand.vmem [shape: f32[1,128], index: 2, kind: input, shape index: {}]
  %s3 = inlined_call_operand.vmem [shape: f32[32,128], index: 3, kind: output, shape index: {}]
  %s4 = sld [smem:[#allocation0]]
  $region22: #{embedding_net_forward.77} parent=0
    _
  %s6 = ssub.s32 1, %s4
  %s7 = scalar_select 0, %s6, %s4
  // Predicated region
  $region2: #{embedding_net_forward.77} parent=0 // pred_check
    _
  $region3: #{embedding_net_forward.77} parent=0 // pred_check_branch
    %9 = sbr.rel (0) target = $region5
  $region4: #{embedding_net_forward.77} parent=0 // pred_region
    _
  $region5: #{embedding_net_forward.77} parent=0 // pred_fallthru
    _
  // Predicated region
  $region6: #{embedding_net_forward.77} parent=0 // pred_check
    _
  $region7: #{embedding_net_forward.77} parent=0 // pred_check_branch
    %11 = sbr.rel (0) target = $region9
  $region8: #{embedding_net_forward.77} parent=0 // pred_region
    _
  $region9: #{embedding_net_forward.77} parent=0 // pred_fallthru
    _
  // Predicated region
  $region10: #{embedding_net_forward.77} parent=0 // pred_check
    _
  $region11: #{embedding_net_forward.77} parent=0 // pred_check_branch
    %13 = sbr.rel (0) target = $region13
  $region12: #{embedding_net_forward.77} parent=0 // pred_region
    _
  $region13: #{embedding_net_forward.77} parent=0 // pred_fallthru
    _
  %v14 = vld [vmem:[%s0] sm:$0xff]
  %v15 = vld [vmem:[%s0 + $0x8] sm:$0xff]
  %v16 = vld [vmem:[%s0 + $0x10] sm:$0xff]
  %v17 = vld [vmem:[%s0 + $0x18] sm:$0xff]
  %v18 = vld [vmem:[%s1] sm:$0x1]
  %v20 = vlaneseq
  %v21 = vshrl.u32 %v20, 7
  %v22 = vsub.s32 0, %v21
  %v23 = vrot.slane %v18, %v22
  %v25 = vmul.f32 %v14, %v23
  %v26 = vmul.f32 %v15, %v23
  %v27 = vmul.f32 %v16, %v23
  %v28 = vmul.f32 %v17, %v23
  %v29 = vld [vmem:[%s2] sm:$0x1]
  %v31 = vlaneseq
  %v32 = vshrl.u32 %v31, 7
  %v33 = vsub.s32 0, %v32
  %v34 = vrot.slane %v29, %v33
  %v36 = vadd.f32 %v25, %v34
  %v37 = vadd.f32 %v26, %v34
  %v38 = vadd.f32 %v27, %v34
  %v39 = vadd.f32 %v28, %v34
  %v40 = vmax.f32 %v36, 0.0
  %v41 = vmax.f32 %v37, 0.0
  %v42 = vmax.f32 %v38, 0.0
  %v43 = vmax.f32 %v39, 0.0
  %44 = vst [vmem:[%s3] sm:$0xff] %v40
  %45 = vst [vmem:[%s3 + $0x8] sm:$0xff] %v41
  %46 = vst [vmem:[%s3 + $0x10] sm:$0xff] %v42
  %47 = vst [vmem:[%s3 + $0x18] sm:$0xff] %v43
  // Predicated region
  $region14: #{embedding_net_forward.77} parent=0 // pred_check
    _
  $region15: #{embedding_net_forward.77} parent=0 // pred_check_branch
    %49 = sbr.rel (0) target = $region17
  $region16: #{embedding_net_forward.77} parent=0 // pred_region
    _
  $region17: #{embedding_net_forward.77} parent=0 // pred_fallthru
    _
  // Predicated region
  $region18: #{embedding_net_forward.77} parent=0 // pred_check
    _
  $region19: #{embedding_net_forward.77} parent=0 // pred_check_branch
    %51 = sbr.rel (0) target = $region21
  $region20: #{embedding_net_forward.77} parent=0 // pred_region
    _
  $region21: #{embedding_net_forward.77} parent=0 // pred_fallthru
    _

// kernel: embedding_net_forward.75
$region0: #{embedding_net_forward.75}
  #allocation0 [shape = 'u32[]', space=smem, size = 0x4, offset = 0x4, fixed_abs, tag = 'smem constant byte address 0x4 - core index']
  #allocation1 [shape = 'u32[144,128]{1,0:T(1,128)}', space=vmem, size = 0x12000, scoped, tag = 'internal scratch']
  %s0 = inlined_call_operand.vmem [shape: bf16[32,576], index: 0, kind: input, shape index: {}]
  %s1 = inlined_call_operand.vmem [shape: bf16[576,128], index: 1, kind: input, shape index: {}]
  %s2 = inlined_call_operand.vmem [shape: f32[32,128], index: 2, kind: output, shape index: {}]
  %s3 = sld [smem:[#allocation0]]
  $region18: #{embedding_net_forward.75} parent=0
    _
  %s5 = ssub.s32 1, %s3
  %s6 = scalar_select 0, %s5, %s3
  // Predicated region
  $region2: #{embedding_net_forward.75} parent=0 // pred_check
    _
  $region3: #{embedding_net_forward.75} parent=0 // pred_check_branch
    %8 = sbr.rel (0) target = $region5
  $region4: #{embedding_net_forward.75} parent=0 // pred_region
    _
  $region5: #{embedding_net_forward.75} parent=0 // pred_fallthru
    _
  // Predicated region
  $region6: #{embedding_net_forward.75} parent=0 // pred_check
    _
  $region7: #{embedding_net_forward.75} parent=0 // pred_check_branch
    %10 = sbr.rel (0) target = $region9
  $region8: #{embedding_net_forward.75} parent=0 // pred_region
    _
  $region9: #{embedding_net_forward.75} parent=0 // pred_fallthru
    _
  %v12 = vld [vmem:[%s0] sm:$0xff]
  %v13 = vld [vmem:[%s0 + $0x8] sm:$0xff]
  %v14 = vld [vmem:[%s0 + $0x10] sm:$0xf]
  %v15 = vld [vmem:[%s0 + $0x14] sm:$0xff]
  %v16 = vld [vmem:[%s0 + $0x1c] sm:$0xff]
  %v17 = vld [vmem:[%s0 + $0x24] sm:$0xf]
  %v18 = vld [vmem:[%s0 + $0x28] sm:$0xff]
  %v19 = vld [vmem:[%s0 + $0x30] sm:$0xff]
  %v20 = vld [vmem:[%s0 + $0x38] sm:$0xf]
  %v21 = vld [vmem:[%s0 + $0x3c] sm:$0xff]
  %v22 = vld [vmem:[%s0 + $0x44] sm:$0xff]
  %v23 = vld [vmem:[%s0 + $0x4c] sm:$0xf]
  %v24 = vld [vmem:[%s1] sm:$0xf]
  %v25 = vld [vmem:[%s1 + $0x4] sm:$0xf]
  %v26 = vld [vmem:[%s1 + $0x8] sm:$0xf]
  %v27 = vld [vmem:[%s1 + $0xc] sm:$0xf]
  %v28 = vld [vmem:[%s1 + $0x10] sm:$0xf]
  %v29 = vld [vmem:[%s1 + $0x14] sm:$0xf]
  %v30 = vld [vmem:[%s1 + $0x18] sm:$0xf]
  %v31 = vld [vmem:[%s1 + $0x1c] sm:$0xf]
  %v32 = vld [vmem:[%s1 + $0x20] sm:$0xf]
  %v33 = vld [vmem:[%s1 + $0x24] sm:$0xf]
  %v34 = vld [vmem:[%s1 + $0x28] sm:$0xf]
  %v35 = vld [vmem:[%s1 + $0x2c] sm:$0xf]
  %v36 = vld [vmem:[%s1 + $0x30] sm:$0xf]
  %v37 = vld [vmem:[%s1 + $0x34] sm:$0xf]
  %v38 = vld [vmem:[%s1 + $0x38] sm:$0xf]
  %v39 = vld [vmem:[%s1 + $0x3c] sm:$0xf]
  %v40 = vld [vmem:[%s1 + $0x40] sm:$0xf]
  %v41 = vld [vmem:[%s1 + $0x44] sm:$0xf]
  %v42 = vld [vmem:[%s1 + $0x48] sm:$0xf]
  %v43 = vld [vmem:[%s1 + $0x4c] sm:$0xf]
  %v44 = vld [vmem:[%s1 + $0x50] sm:$0xf]
  %v45 = vld [vmem:[%s1 + $0x54] sm:$0xf]
  %v46 = vld [vmem:[%s1 + $0x58] sm:$0xf]
  %v47 = vld [vmem:[%s1 + $0x5c] sm:$0xf]
  %v48 = vld [vmem:[%s1 + $0x60] sm:$0xf]
  %v49 = vld [vmem:[%s1 + $0x64] sm:$0xf]
  %v50 = vld [vmem:[%s1 + $0x68] sm:$0xf]
  %v51 = vld [vmem:[%s1 + $0x6c] sm:$0xf]
  %v52 = vld [vmem:[%s1 + $0x70] sm:$0xf]
  %v53 = vld [vmem:[%s1 + $0x74] sm:$0xf]
  %v54 = vld [vmem:[%s1 + $0x78] sm:$0xf]
  %v55 = vld [vmem:[%s1 + $0x7c] sm:$0xf]
  %v56 = vld [vmem:[%s1 + $0x80] sm:$0xf]
  %v57 = vld [vmem:[%s1 + $0x84] sm:$0xf]
  %v58 = vld [vmem:[%s1 + $0x88] sm:$0xf]
  %v59 = vld [vmem:[%s1 + $0x8c] sm:$0xf]
  %v60 = vld [vmem:[%s1 + $0x90] sm:$0xf]
  %v61 = vld [vmem:[%s1 + $0x94] sm:$0xf]
  %v62 = vld [vmem:[%s1 + $0x98] sm:$0xf]
  %v63 = vld [vmem:[%s1 + $0x9c] sm:$0xf]
  %v64 = vld [vmem:[%s1 + $0xa0] sm:$0xf]
  %v65 = vld [vmem:[%s1 + $0xa4] sm:$0xf]
  %v66 = vld [vmem:[%s1 + $0xa8] sm:$0xf]
  %v67 = vld [vmem:[%s1 + $0xac] sm:$0xf]
  %v68 = vld [vmem:[%s1 + $0xb0] sm:$0xf]
  %v69 = vld [vmem:[%s1 + $0xb4] sm:$0xf]
  %v70 = vld [vmem:[%s1 + $0xb8] sm:$0xf]
  %v71 = vld [vmem:[%s1 + $0xbc] sm:$0xf]
  %v72 = vld [vmem:[%s1 + $0xc0] sm:$0xf]
  %v73 = vld [vmem:[%s1 + $0xc4] sm:$0xf]
  %v74 = vld [vmem:[%s1 + $0xc8] sm:$0xf]
  %v75 = vld [vmem:[%s1 + $0xcc] sm:$0xf]
  %v76 = vld [vmem:[%s1 + $0xd0] sm:$0xf]
  %v77 = vld [vmem:[%s1 + $0xd4] sm:$0xf]
  %v78 = vld [vmem:[%s1 + $0xd8] sm:$0xf]
  %v79 = vld [vmem:[%s1 + $0xdc] sm:$0xf]
  %v80 = vld [vmem:[%s1 + $0xe0] sm:$0xf]
  %v81 = vld [vmem:[%s1 + $0xe4] sm:$0xf]
  %v82 = vld [vmem:[%s1 + $0xe8] sm:$0xf]
  %v83 = vld [vmem:[%s1 + $0xec] sm:$0xf]
  %v84 = vld [vmem:[%s1 + $0xf0] sm:$0xf]
  %v85 = vld [vmem:[%s1 + $0xf4] sm:$0xf]
  %v86 = vld [vmem:[%s1 + $0xf8] sm:$0xf]
  %v87 = vld [vmem:[%s1 + $0xfc] sm:$0xf]
  %v88 = vld [vmem:[%s1 + $0x100] sm:$0xf]
  %v89 = vld [vmem:[%s1 + $0x104] sm:$0xf]
  %v90 = vld [vmem:[%s1 + $0x108] sm:$0xf]
  %v91 = vld [vmem:[%s1 + $0x10c] sm:$0xf]
  %v92 = vld [vmem:[%s1 + $0x110] sm:$0xf]
  %v93 = vld [vmem:[%s1 + $0x114] sm:$0xf]
  %v94 = vld [vmem:[%s1 + $0x118] sm:$0xf]
  %v95 = vld [vmem:[%s1 + $0x11c] sm:$0xf]
  %v108 = vunpack.c.l.b16 %v12
  %v109 = vunpack.c.h.b16 %v12
  %v110 = vunpack.c.l.b16 %v13
  %v111 = vunpack.c.h.b16 %v13
  %v112 = vunpack.c.l.b16 %v14
  %v113 = vunpack.c.l.b16 %v15
  %v114 = vunpack.c.h.b16 %v15
  %v115 = vunpack.c.l.b16 %v16
  %v116 = vunpack.c.h.b16 %v16
  %v117 = vunpack.c.l.b16 %v17
  %v118 = vunpack.c.l.b16 %v18
  %v119 = vunpack.c.h.b16 %v18
  %v120 = vunpack.c.l.b16 %v19
  %v121 = vunpack.c.h.b16 %v19
  %v122 = vunpack.c.l.b16 %v20
  %v123 = vunpack.c.l.b16 %v21
  %v124 = vunpack.c.h.b16 %v21
  %v125 = vunpack.c.l.b16 %v22
  %v126 = vunpack.c.h.b16 %v22
  %v127 = vunpack.c.l.b16 %v23
  %v128 = vpack.c.b16 %v113, %v108
  %v129 = vpack.c.b16 %v114, %v109
  %v130 = vpack.c.b16 %v115, %v110
  %v131 = vpack.c.b16 %v116, %v111
  %v132 = vpack.c.b16 %v117, %v112
  %v133 = vpack.c.b16 %v123, %v118
  %v134 = vpack.c.b16 %v124, %v119
  %v135 = vpack.c.b16 %v125, %v120
  %v136 = vpack.c.b16 %v126, %v121
  %v137 = vpack.c.b16 %v127, %v122
  %v218 = vunpack.c.l.b16 %v24
  %v219 = vunpack.c.l.b16 %v25
  %v220 = vunpack.c.l.b16 %v26
  %v221 = vunpack.c.l.b16 %v27
  %v222 = vunpack.c.l.b16 %v28
  %v223 = vunpack.c.l.b16 %v29
  %v224 = vunpack.c.l.b16 %v30
  %v225 = vunpack.c.l.b16 %v31
  %v226 = vunpack.c.l.b16 %v32
  %v227 = vunpack.c.l.b16 %v33
  %v228 = vunpack.c.l.b16 %v34
  %v229 = vunpack.c.l.b16 %v35
  %v230 = vunpack.c.l.b16 %v36
  %v231 = vunpack.c.l.b16 %v37
  %v232 = vunpack.c.l.b16 %v38
  %v233 = vunpack.c.l.b16 %v39
  %v234 = vunpack.c.l.b16 %v40
  %v235 = vunpack.c.l.b16 %v41
  %v236 = vunpack.c.l.b16 %v42
  %v237 = vunpack.c.l.b16 %v43
  %v238 = vunpack.c.l.b16 %v44
  %v239 = vunpack.c.l.b16 %v45
  %v240 = vunpack.c.l.b16 %v46
  %v241 = vunpack.c.l.b16 %v47
  %v242 = vunpack.c.l.b16 %v48
  %v243 = vunpack.c.l.b16 %v49
  %v244 = vunpack.c.l.b16 %v50
  %v245 = vunpack.c.l.b16 %v51
  %v246 = vunpack.c.l.b16 %v52
  %v247 = vunpack.c.l.b16 %v53
  %v248 = vunpack.c.l.b16 %v54
  %v249 = vunpack.c.l.b16 %v55
  %v250 = vunpack.c.l.b16 %v56
  %v251 = vunpack.c.l.b16 %v57
  %v252 = vunpack.c.l.b16 %v58
  %v253 = vunpack.c.l.b16 %v59
  %v254 = vunpack.c.l.b16 %v60
  %v255 = vunpack.c.l.b16 %v61
  %v256 = vunpack.c.l.b16 %v62
  %v257 = vunpack.c.l.b16 %v63
  %v258 = vunpack.c.l.b16 %v64
  %v259 = vunpack.c.l.b16 %v65
  %v260 = vunpack.c.l.b16 %v66
  %v261 = vunpack.c.l.b16 %v67
  %v262 = vunpack.c.l.b16 %v68
  %v263 = vunpack.c.l.b16 %v69
  %v264 = vunpack.c.l.b16 %v70
  %v265 = vunpack.c.l.b16 %v71
  %v266 = vunpack.c.l.b16 %v72
  %v267 = vunpack.c.l.b16 %v73
  %v268 = vunpack.c.l.b16 %v74
  %v269 = vunpack.c.l.b16 %v75
  %v270 = vunpack.c.l.b16 %v76
  %v271 = vunpack.c.l.b16 %v77
  %v272 = vunpack.c.l.b16 %v78
  %v273 = vunpack.c.l.b16 %v79
  %v274 = vunpack.c.l.b16 %v80
  %v275 = vunpack.c.l.b16 %v81
  %v276 = vunpack.c.l.b16 %v82
  %v277 = vunpack.c.l.b16 %v83
  %v278 = vunpack.c.l.b16 %v84
  %v279 = vunpack.c.l.b16 %v85
  %v280 = vunpack.c.l.b16 %v86
  %v281 = vunpack.c.l.b16 %v87
  %v282 = vunpack.c.l.b16 %v88
  %v283 = vunpack.c.l.b16 %v89
  %v284 = vunpack.c.l.b16 %v90
  %v285 = vunpack.c.l.b16 %v91
  %v286 = vunpack.c.l.b16 %v92
  %v287 = vunpack.c.l.b16 %v93
  %v288 = vunpack.c.l.b16 %v94
  %v289 = vunpack.c.l.b16 %v95
  %v290 = vpack.c.b16 %v219, %v218
  %v291 = vpack.c.b16 %v221, %v220
  %v292 = vpack.c.b16 %v223, %v222
  %v293 = vpack.c.b16 %v225, %v224
  %v294 = vpack.c.b16 %v227, %v226
  %v295 = vpack.c.b16 %v229, %v228
  %v296 = vpack.c.b16 %v231, %v230
  %v297 = vpack.c.b16 %v233, %v232
  %v298 = vpack.c.b16 %v235, %v234
  %v299 = vpack.c.b16 %v237, %v236
  %v300 = vpack.c.b16 %v239, %v238
  %v301 = vpack.c.b16 %v241, %v240
  %v302 = vpack.c.b16 %v243, %v242
  %v303 = vpack.c.b16 %v245, %v244
  %v304 = vpack.c.b16 %v247, %v246
  %v305 = vpack.c.b16 %v249, %v248
  %v306 = vpack.c.b16 %v251, %v250
  %v307 = vpack.c.b16 %v253, %v252
  %v308 = vpack.c.b16 %v255, %v254
  %v309 = vpack.c.b16 %v257, %v256
  %v310 = vpack.c.b16 %v259, %v258
  %v311 = vpack.c.b16 %v261, %v260
  %v312 = vpack.c.b16 %v263, %v262
  %v313 = vpack.c.b16 %v265, %v264
  %v314 = vpack.c.b16 %v267, %v266
  %v315 = vpack.c.b16 %v269, %v268
  %v316 = vpack.c.b16 %v271, %v270
  %v317 = vpack.c.b16 %v273, %v272
  %v318 = vpack.c.b16 %v275, %v274
  %v319 = vpack.c.b16 %v277, %v276
  %v320 = vpack.c.b16 %v279, %v278
  %v321 = vpack.c.b16 %v281, %v280
  %v322 = vpack.c.b16 %v283, %v282
  %v323 = vpack.c.b16 %v285, %v284
  %v324 = vpack.c.b16 %v287, %v286
  %v325 = vpack.c.b16 %v289, %v288
  %vm362 = vcmask 523264
  %v364 = vsel %vm362, %v132, 0
  %v367 = vsel %vm362, %v137, 0
  %369 = vmatprep.subr.bf16.mxu0 0
  %370 = vmatpush1.bf16.msra.mxu0 %v290
  %371 = vmatprep.subr.bf16.mxu0 0
  %372 = vmatpush1.bf16.msra.mxu0 %v291
  %373 = vmatprep.subr.bf16.mxu0 0
  %374 = vmatpush1.bf16.msra.mxu0 %v292
  %375 = vmatprep.subr.bf16.mxu0 0
  %376 = vmatpush1.bf16.msra.mxu0 %v293
  %377 = vmatprep.subr.bf16.mxu0 0
  %378 = vmatpush1.bf16.msra.mxu0 %v294
  %379 = vmatprep.subr.bf16.mxu0 0
  %380 = vmatpush1.bf16.msra.mxu0 %v295
  %381 = vmatprep.subr.bf16.mxu0 0
  %382 = vmatpush1.bf16.msra.mxu0 %v296
  %383 = vmatprep.subr.bf16.mxu0 0
  %384 = vmatpush1.bf16.msra.mxu0 %v297
  %385 = vmatprep.subr.bf16.mxu0 0
  %386 = vmatpush1.bf16.msra.mxu0 %v298
  %387 = vmatprep.subr.bf16.mxu0 0
  %388 = vmatpush1.bf16.msra.mxu0 %v299
  %389 = vmatprep.subr.bf16.mxu0 0
  %390 = vmatpush1.bf16.msra.mxu0 %v300
  %391 = vmatprep.subr.bf16.mxu0 0
  %392 = vmatpush1.bf16.msra.mxu0 %v301
  %393 = vmatprep.subr.bf16.mxu0 0
  %394 = vmatpush1.bf16.msra.mxu0 %v302
  %395 = vmatprep.subr.bf16.mxu0 0
  %396 = vmatpush1.bf16.msra.mxu0 %v303
  %397 = vmatprep.subr.bf16.mxu0 0
  %398 = vmatpush1.bf16.msra.mxu0 %v304
  %399 = vmatprep.subr.bf16.mxu0 0
  %400 = vmatpush1.bf16.msra.mxu0 %v305
  %401 = vmatprep.mubr.bf16.mxu0 %v129
  %402 = vmatmul.mubr.bf16.gmra.mrb[0].mxu0 %v128
  %v403 = vpop.f32.mrb[0].mxu0
  %v404 = vadd.f32 0.0, %v403
  %v405 = vpop.f32.mrb[0].mxu0
  %v406 = vpop.f32.mrb[0].mxu0
  %v407 = vadd.f32 0.0, %v406
  %v408 = vpop.f32.mrb[0].mxu0
  %409 = vmatprep.mubr.bf16.mxu0 %v134
  %410 = vmatmul.mubr.bf16.gmra.mrb[0].mxu0 %v133
  %v411 = vpop.f32.mrb[0].mxu0
  %v412 = vadd.f32 0.0, %v411
  %v413 = vpop.f32.mrb[0].mxu0
  %v414 = vpop.f32.mrb[0].mxu0
  %v415 = vadd.f32 0.0, %v414
  %v416 = vpop.f32.mrb[0].mxu0
  %417 = vdwg.mxu0
  %418 = vmatprep.subr.bf16.mxu0 0
  %419 = vmatpush1.bf16.msra.mxu0 %v306
  %420 = vmatprep.subr.bf16.mxu0 0
  %421 = vmatpush1.bf16.msra.mxu0 %v307
  %422 = vmatprep.subr.bf16.mxu0 0
  %423 = vmatpush1.bf16.msra.mxu0 %v308
  %424 = vmatprep.subr.bf16.mxu0 0
  %425 = vmatpush1.bf16.msra.mxu0 %v309
  %426 = vmatprep.subr.bf16.mxu0 0
  %427 = vmatpush1.bf16.msra.mxu0 %v310
  %428 = vmatprep.subr.bf16.mxu0 0
  %429 = vmatpush1.bf16.msra.mxu0 %v311
  %430 = vmatprep.subr.bf16.mxu0 0
  %431 = vmatpush1.bf16.msra.mxu0 %v312
  %432 = vmatprep.subr.bf16.mxu0 0
  %433 = vmatpush1.bf16.msra.mxu0 %v313
  %434 = vmatprep.subr.bf16.mxu0 0
  %435 = vmatpush1.bf16.msra.mxu0 %v314
  %436 = vmatprep.subr.bf16.mxu0 0
  %437 = vmatpush1.bf16.msra.mxu0 %v315
  %438 = vmatprep.subr.bf16.mxu0 0
  %439 = vmatpush1.bf16.msra.mxu0 %v316
  %440 = vmatprep.subr.bf16.mxu0 0
  %441 = vmatpush1.bf16.msra.mxu0 %v317
  %442 = vmatprep.subr.bf16.mxu0 0
  %443 = vmatpush1.bf16.msra.mxu0 %v318
  %444 = vmatprep.subr.bf16.mxu0 0
  %445 = vmatpush1.bf16.msra.mxu0 %v319
  %446 = vmatprep.subr.bf16.mxu0 0
  %447 = vmatpush1.bf16.msra.mxu0 %v320
  %448 = vmatprep.subr.bf16.mxu0 0
  %449 = vmatpush1.bf16.msra.mxu0 %v321
  %450 = vmatprep.mubr.bf16.mxu0 %v131
  %451 = vmatmul.mubr.bf16.gmra.mrb[0].mxu0 %v130
  %v452 = vpop.f32.mrb[0].mxu0
  %v453 = vadd.f32 %v404, %v452
  %v454 = vpop.f32.mrb[0].mxu0
  %v455 = vpop.f32.mrb[0].mxu0
  %v456 = vadd.f32 %v407, %v455
  %v457 = vpop.f32.mrb[0].mxu0
  %458 = vmatprep.mubr.bf16.mxu0 %v136
  %459 = vmatmul.mubr.bf16.gmra.mrb[0].mxu0 %v135
  %v460 = vpop.f32.mrb[0].mxu0
  %v461 = vadd.f32 %v412, %v460
  %v462 = vpop.f32.mrb[0].mxu0
  %v463 = vpop.f32.mrb[0].mxu0
  %v464 = vadd.f32 %v415, %v463
  %v465 = vpop.f32.mrb[0].mxu0
  %466 = vdwg.mxu0
  %467 = vmatprep.subr.bf16.mxu0 0
  %468 = vmatpush1.bf16.msra.mxu0 %v322
  %469 = vmatprep.subr.bf16.mxu0 0
  %470 = vmatpush1.bf16.msra.mxu0 %v323
  %471 = vmatprep.subr.bf16.mxu0 0
  %472 = vmatpush1.bf16.msra.mxu0 %v324
  %473 = vmatprep.subr.bf16.mxu0 0
  %474 = vmatpush1.bf16.msra.mxu0 %v325
  %475 = vmatprep.subr.bf16.mxu0 0
  %476 = vmatpush1.bf16.msra.mxu0 0
  %477 = vmatprep.subr.bf16.mxu0 0
  %478 = vmatpush1.bf16.msra.mxu0 0
  %479 = vmatprep.subr.bf16.mxu0 0
  %480 = vmatpush1.bf16.msra.mxu0 0
  %481 = vmatprep.subr.bf16.mxu0 0
  %482 = vmatpush1.bf16.msra.mxu0 0
  %483 = vmatprep.subr.bf16.mxu0 0
  %484 = vmatpush1.bf16.msra.mxu0 0
  %485 = vmatprep.subr.bf16.mxu0 0
  %486 = vmatpush1.bf16.msra.mxu0 0
  %487 = vmatprep.subr.bf16.mxu0 0
  %488 = vmatpush1.bf16.msra.mxu0 0
  %489 = vmatprep.subr.bf16.mxu0 0
  %490 = vmatpush1.bf16.msra.mxu0 0
  %491 = vmatprep.subr.bf16.mxu0 0
  %492 = vmatpush1.bf16.msra.mxu0 0
  %493 = vmatprep.subr.bf16.mxu0 0
  %494 = vmatpush1.bf16.msra.mxu0 0
  %495 = vmatprep.subr.bf16.mxu0 0
  %496 = vmatpush1.bf16.msra.mxu0 0
  %497 = vmatprep.subr.bf16.mxu0 0
  %498 = vmatpush1.bf16.msra.mxu0 0
  %499 = vmatprep.mubr.bf16.mxu0 0
  %500 = vmatmul.mubr.bf16.gmra.mrb[0].mxu0 %v364
  %v501 = vpop.f32.mrb[0].mxu0
  %v502 = vadd.f32 %v453, %v501
  %v503 = vpop.f32.mrb[0].mxu0
  %v504 = vpop.f32.mrb[0].mxu0
  %v505 = vadd.f32 %v456, %v504
  %v506 = vpop.f32.mrb[0].mxu0
  %507 = vmatprep.mubr.bf16.mxu0 0
  %508 = vmatmul.mubr.bf16.gmra.mrb[0].mxu0 %v367
  %v509 = vpop.f32.mrb[0].mxu0
  %v510 = vadd.f32 %v461, %v509
  %v511 = vpop.f32.mrb[0].mxu0
  %v512 = vpop.f32.mrb[0].mxu0
  %v513 = vadd.f32 %v464, %v512
  %v514 = vpop.f32.mrb[0].mxu0
  %515 = vdwg.mxu0
  %516 = vst [vmem:[%s2] sm:$0xff] %v502
  %517 = vst [vmem:[%s2 + $0x8] sm:$0xff] %v505
  %518 = vst [vmem:[%s2 + $0x10] sm:$0xff] %v510
  %519 = vst [vmem:[%s2 + $0x18] sm:$0xff] %v513
  // Predicated region
  $region10: #{embedding_net_forward.75} parent=0 // pred_check
    _
  $region11: #{embedding_net_forward.75} parent=0 // pred_check_branch
    %521 = sbr.rel (0) target = $region13
  $region12: #{embedding_net_forward.75} parent=0 // pred_region
    _
  $region13: #{embedding_net_forward.75} parent=0 // pred_fallthru
    _
  // Predicated region
  $region14: #{embedding_net_forward.75} parent=0 // pred_check
    _
  $region15: #{embedding_net_forward.75} parent=0 // pred_check_branch
    %523 = sbr.rel (0) target = $region17
  $region16: #{embedding_net_forward.75} parent=0 // pred_region
    _
  $region17: #{embedding_net_forward.75} parent=0 // pred_fallthru
    _

// kernel: embedding_net_forward.83
$region0: #{embedding_net_forward.83}
  #allocation0 [shape = 'u32[]', space=smem, size = 0x4, offset = 0x4, fixed_abs, tag = 'smem constant byte address 0x4 - core index']
  #allocation1 [shape = 'u32[144,128]{1,0:T(1,128)}', space=vmem, size = 0x12000, scoped, tag = 'internal scratch']
  %s0 = inlined_call_operand.vmem [shape: f32[32,128], index: 0, kind: input, shape index: {}]
  %s1 = inlined_call_operand.vmem [shape: f32[1,128], index: 1, kind: input, shape index: {}]
  %s2 = inlined_call_operand.vmem [shape: f32[1,128], index: 2, kind: input, shape index: {}]
  %s3 = inlined_call_operand.vmem [shape: f32[32,128], index: 3, kind: input, shape index: {}]
  %s4 = inlined_call_operand.vmem [shape: f32[32,128], index: 4, kind: output, shape index: {}]
  %s5 = sld [smem:[#allocation0]]
  $region26: #{embedding_net_forward.83} parent=0
    _
  %s7 = ssub.s32 1, %s5
  %s8 = scalar_select 0, %s7, %s5
  // Predicated region
  $region2: #{embedding_net_forward.83} parent=0 // pred_check
    _
  $region3: #{embedding_net_forward.83} parent=0 // pred_check_branch
    %10 = sbr.rel (0) target = $region5
  $region4: #{embedding_net_forward.83} parent=0 // pred_region
    _
  $region5: #{embedding_net_forward.83} parent=0 // pred_fallthru
    _
  // Predicated region
  $region6: #{embedding_net_forward.83} parent=0 // pred_check
    _
  $region7: #{embedding_net_forward.83} parent=0 // pred_check_branch
    %12 = sbr.rel (0) target = $region9
  $region8: #{embedding_net_forward.83} parent=0 // pred_region
    _
  $region9: #{embedding_net_forward.83} parent=0 // pred_fallthru
    _
  // Predicated region
  $region10: #{embedding_net_forward.83} parent=0 // pred_check
    _
  $region11: #{embedding_net_forward.83} parent=0 // pred_check_branch
    %14 = sbr.rel (0) target = $region13
  $region12: #{embedding_net_forward.83} parent=0 // pred_region
    _
  $region13: #{embedding_net_forward.83} parent=0 // pred_fallthru
    _
  // Predicated region
  $region14: #{embedding_net_forward.83} parent=0 // pred_check
    _
  $region15: #{embedding_net_forward.83} parent=0 // pred_check_branch
    %16 = sbr.rel (0) target = $region17
  $region16: #{embedding_net_forward.83} parent=0 // pred_region
    _
  $region17: #{embedding_net_forward.83} parent=0 // pred_fallthru
    _
  %v17 = vld [vmem:[%s0] sm:$0xff]
  %v18 = vld [vmem:[%s0 + $0x8] sm:$0xff]
  %v19 = vld [vmem:[%s0 + $0x10] sm:$0xff]
  %v20 = vld [vmem:[%s0 + $0x18] sm:$0xff]
  %v21 = vld [vmem:[%s1] sm:$0x1]
  %v23 = vlaneseq
  %v24 = vshrl.u32 %v23, 7
  %v25 = vsub.s32 0, %v24
  %v26 = vrot.slane %v21, %v25
  %v28 = vmul.f32 %v17, %v26
  %v29 = vmul.f32 %v18, %v26
  %v30 = vmul.f32 %v19, %v26
  %v31 = vmul.f32 %v20, %v26
  %v32 = vld [vmem:[%s2] sm:$0x1]
  %v34 = vlaneseq
  %v35 = vshrl.u32 %v34, 7
  %v36 = vsub.s32 0, %v35
  %v37 = vrot.slane %v32, %v36
  %v39 = vadd.f32 %v28, %v37
  %v40 = vadd.f32 %v29, %v37
  %v41 = vadd.f32 %v30, %v37
  %v42 = vadd.f32 %v31, %v37
  %v43 = vld [vmem:[%s3] sm:$0xff]
  %v44 = vld [vmem:[%s3 + $0x8] sm:$0xff]
  %v45 = vld [vmem:[%s3 + $0x10] sm:$0xff]
  %v46 = vld [vmem:[%s3 + $0x18] sm:$0xff]
  %v47 = vadd.f32 %v39, %v43
  %v48 = vadd.f32 %v40, %v44
  %v49 = vadd.f32 %v41, %v45
  %v50 = vadd.f32 %v42, %v46
  %v51 = vmax.f32 %v47, 0.0
  %v52 = vmax.f32 %v48, 0.0
  %v53 = vmax.f32 %v49, 0.0
  %v54 = vmax.f32 %v50, 0.0
  %55 = vst [vmem:[%s4] sm:$0xff] %v51
  %56 = vst [vmem:[%s4 + $0x8] sm:$0xff] %v52
  %57 = vst [vmem:[%s4 + $0x10] sm:$0xff] %v53
  %58 = vst [vmem:[%s4 + $0x18] sm:$0xff] %v54
  // Predicated region
  $region18: #{embedding_net_forward.83} parent=0 // pred_check
    _
  $region19: #{embedding_net_forward.83} parent=0 // pred_check_branch
    %60 = sbr.rel (0) target = $region21
  $region20: #{embedding_net_forward.83} parent=0 // pred_region
    _
  $region21: #{embedding_net_forward.83} parent=0 // pred_fallthru
    _
  // Predicated region
  $region22: #{embedding_net_forward.83} parent=0 // pred_check
    _
  $region23: #{embedding_net_forward.83} parent=0 // pred_check_branch
    %62 = sbr.rel (0) target = $region25
  $region24: #{embedding_net_forward.83} parent=0 // pred_region
    _
  $region25: #{embedding_net_forward.83} parent=0 // pred_fallthru
    _

// kernel: embedding_net_forward.78
$region0: #{embedding_net_forward.78}
  #allocation0 [shape = 'u32[]', space=smem, size = 0x4, offset = 0x4, fixed_abs, tag = 'smem constant byte address 0x4 - core index']
  #allocation1 [shape = 'u32[144,128]{1,0:T(1,128)}', space=vmem, size = 0x12000, scoped, tag = 'internal scratch']
  #allocation2 [shape = 'f32[32,128]{1,0:T(8,128)}', space=vmem, size = 0x4000, scoped, tag = 'scratch operand']
  %s0 = inlined_call_operand.vmem [shape: bf16[32,1152], index: 0, kind: input, shape index: {}]
  %s1 = inlined_call_operand.vmem [shape: bf16[1152,128], index: 1, kind: input, shape index: {}]
  %s2 = inlined_call_operand.vmem [shape: f32[32,128], index: 2, kind: output, shape index: {}]
  %s3 = sld [smem:[#allocation0]]
  $region75: #{embedding_net_forward.78} parent=0
    _
  %s5 = ssub.s32 1, %s3
  %s6 = scalar_select 0, %s5, %s3
  $region1: #{embedding_net_forward.78} parent=0
    #allocation3 [shape = 'u8[49152]{0}', space=vmem, size = 0xc000, scoped, tag = 'input window, operand 0']
    loop: start=0, step=1, limit=5
    $region2: #{embedding_net_forward.78} parent=1 // loop_pre_header
      _
    $region3: #{embedding_net_forward.78} parent=1 // loop_header
      %s8 = sphi 0, %s12
      %p9 = scmp.ge.s32.totalorder %s8, 5
      %s15 = sphi 0, %s34
      %s16 = sphi 0, %s30
      %s17 = sphi 0, %s26
      %s18 = sphi 0, %s15
      %s19 = sphi 0, %s16
      %s20 = sphi 0, %s17
      %s21 = sphi 0, %s18
      %s22 = sphi 0, %s19
      %s23 = sphi 0, %s20
      %s39 = sphi 0, %s41
      %s42 = sphi 0, %s39
      %s43 = sphi 0, %s42
      %s59 = sphi 0, %s43
      %s67 = sphi 0, %s69
      %s70 = sphi 0, %s67
      %s71 = sphi 0, %s70
      %s87 = sphi 0, %s71
      %s95 = sphi 0, %s97
      %s98 = sphi 0, %s95
      %s99 = sphi 0, %s98
      %s115 = sphi 0, %s99
    $region4: #{embedding_net_forward.78} parent=1 // loop_header_branch
      %11 = sbr.rel (%p9) target = $region8
    $region5: #{embedding_net_forward.78} parent=1 // loop_body
      %s13 = ssub.s32 %s8, 1
      %s14 = ssub.s32 %s8, 2
      %s24 = sadd.s32 1, %s17
      %p25 = scmp.ge.s32.totalorder %s24, 3
      %s26 = scalar_select %p25, 0, %s24
      %s27 = sadd.s32 1, %s16
      %s28 = scalar_select %p25, %s27, %s16
      %p29 = scmp.ge.s32.totalorder %s28, 1
      %s30 = scalar_select %p29, 0, %s28
      %s31 = sadd.s32 1, %s15
      %s32 = scalar_select %p29, %s31, %s15
      %p33 = scmp.ge.s32.totalorder %s32, 1
      %s34 = scalar_select %p33, 0, %s32
      %s35 = ssub.s32 %s15, %s34
      %s36 = ssub.s32 %s17, %s26
      %s37 = sor.u32 %s35, %s36
      %p38 = scmp.eq.s32.totalorder %s37, 0
      %s40 = sadd.s32 %s39, 1
      %s41 = scalar_select %p38, %s39, %s40
      %p44 = pneg %p38
      %p45 = scmp.eq.s32.totalorder %s8, 2
      %p46 = por %p44, %p45
      %p47 = scmp.ne.s32.totalorder %s39, %s42
      %p48 = scmp.eq.s32.totalorder %s8, 0
      %p49 = por %p47, %p48
      %p50 = scmp.ne.s32.totalorder %s39, %s42
      %p51 = scmp.eq.s32.totalorder %s13, 2
      %p52 = por %p50, %p51
      %p53 = scmp.ne.s32.totalorder %s42, %s43
      %p54 = scmp.eq.s32.totalorder %s13, 0
      %p55 = por %p53, %p54
      %p56 = scmp.ne.s32.totalorder %s42, %s43
      %p57 = scmp.eq.s32.totalorder %s14, 2
      %p58 = por %p56, %p57
      %p60 = scmp.ne.s32.totalorder %s43, %s59
      %p61 = scmp.eq.s32.totalorder %s14, 0
      %p62 = por %p60, %p61
      %s63 = ssub.s32 %s17, %s26
      %s64 = ssub.s32 %s16, %s30
      %s65 = sor.u32 %s63, %s64
      %p66 = scmp.eq.s32.totalorder %s65, 0
      %s68 = sadd.s32 %s67, 1
      %s69 = scalar_select %p66, %s67, %s68
      %p72 = pneg %p66
      %p73 = scmp.eq.s32.totalorder %s8, 2
      %p74 = por %p72, %p73
      %p75 = scmp.ne.s32.totalorder %s67, %s70
      %p76 = scmp.eq.s32.totalorder %s8, 0
      %p77 = por %p75, %p76
      %p78 = scmp.ne.s32.totalorder %s67, %s70
      %p79 = scmp.eq.s32.totalorder %s13, 2
      %p80 = por %p78, %p79
      %p81 = scmp.ne.s32.totalorder %s70, %s71
      %p82 = scmp.eq.s32.totalorder %s13, 0
      %p83 = por %p81, %p82
      %p84 = scmp.ne.s32.totalorder %s70, %s71
      %p85 = scmp.eq.s32.totalorder %s14, 2
      %p86 = por %p84, %p85
      %p88 = scmp.ne.s32.totalorder %s71, %s87
      %p89 = scmp.eq.s32.totalorder %s14, 0
      %p90 = por %p88, %p89
      %s91 = ssub.s32 %s15, %s34
      %s92 = ssub.s32 %s16, %s30
      %s93 = sor.u32 %s91, %s92
      %p94 = scmp.eq.s32.totalorder %s93, 0
      %s96 = sadd.s32 %s95, 1
      %s97 = scalar_select %p94, %s95, %s96
      %p100 = pneg %p94
      %p101 = scmp.eq.s32.totalorder %s8, 2
      %p102 = por %p100, %p101
      %p103 = scmp.ne.s32.totalorder %s95, %s98
      %p104 = scmp.eq.s32.totalorder %s8, 0
      %p105 = por %p103, %p104
      %p106 = scmp.ne.s32.totalorder %s95, %s98
      %p107 = scmp.eq.s32.totalorder %s13, 2
      %p108 = por %p106, %p107
      %p109 = scmp.ne.s32.totalorder %s98, %s99
      %p110 = scmp.eq.s32.totalorder %s13, 0
      %p111 = por %p109, %p110
      %p112 = scmp.ne.s32.totalorder %s98, %s99
      %p113 = scmp.eq.s32.totalorder %s14, 2
      %p114 = por %p112, %p113
      %p116 = scmp.ne.s32.totalorder %s99, %s115
      %p117 = scmp.eq.s32.totalorder %s14, 0
      %p118 = por %p116, %p117
      %p119 = scmp.le.s32.totalorder 1, %s8
      %p120 = scmp.lt.s32.totalorder %s8, 4
      %p121 = pnand %p119, %p120
      %p122 = pneg %p121
      // Predicated region
      $region9: #{embedding_net_forward.78} parent=5 // pred_check
        _
      $region10: #{embedding_net_forward.78} parent=5 // pred_check_branch
        %124 = sbr.rel (%p121) target = $region12
      $region11: #{embedding_net_forward.78} parent=5 // pred_region
        %s125 = ssub.s32 %s8, 1
      $region12: #{embedding_net_forward.78} parent=5 // pred_fallthru
        _
      %p126 = scmp.lt.s32.totalorder %s8, 3
      // Predicated region
      $region13: #{embedding_net_forward.78} parent=5 // pred_check
        %p127 = pneg %p126
      $region14: #{embedding_net_forward.78} parent=5 // pred_check_branch
        %129 = sbr.rel (%p127) target = $region16
      $region15: #{embedding_net_forward.78} parent=5 // pred_region
        // Predicated region
        $region17: #{embedding_net_forward.78} parent=15 // pred_check
          %p130 = pneg %p49
        $region18: #{embedding_net_forward.78} parent=15 // pred_check_branch
          %132 = sbr.rel (%p130) target = $region20
        $region19: #{embedding_net_forward.78} parent=15 // pred_region
          %s133 = sand.u32 %s39, 1
          %s134 = sand.u32 %s39, 1
          %s135 = smul.addr %s134, 48
          %s136 = scalar_lea.vmem [#allocation3], %s135
          %s137 = smul.u32 4, %s15
          %s138 = smul.u32 3, %s17
          %s139 = smul.addr %s137, 9
          %s140 = sadd.s32 %s138, %s139
          %s141 = smul.addr %s140, 4
          %s142 = scalar_lea.vmem %s0, %s141
          // Predicated region
          $region21: #{embedding_net_forward.78} parent=19 // pred_check
            _
          $region22: #{embedding_net_forward.78} parent=19 // pred_check_branch
            %144 = sbr.rel (0) target = $region24
          $region23: #{embedding_net_forward.78} parent=19 // pred_region
            // Predicated region
            $region25: #{embedding_net_forward.78} parent=23 // pred_check
              _
            $region26: #{embedding_net_forward.78} parent=23 // pred_check_branch
              %146 = sbr.rel (0) target = $region28
            $region27: #{embedding_net_forward.78} parent=23 // pred_region
              %s147 = scalar_lea.vmem %s142, 8
              %s148 = scalar_lea.vmem %s136, 8 [#allocation3]
              loop: start=0, step=1, limit=1
              $region29: #{embedding_net_forward.78} parent=27 // loop_pre_header
                _
              $region30: #{embedding_net_forward.78} parent=27 // loop_header
                %s150 = sphi 0, %s154
                %p151 = scmp.ge.s32.totalorder %s150, 1
                %s155 = sphi %s142, %s142
                %s156 = sphi %s136, %s136
              $region31: #{embedding_net_forward.78} parent=27 // loop_header_branch
                %153 = sbr.rel (%p151) target = $region35
              $region32: #{embedding_net_forward.78} parent=27 // loop_body
                %v157 = vld [vmem:[%s155] sm:$0xff]
                %158 = vst [vmem:[%s156] sm:$0xff] %v157
                %v159 = vld [vmem:[%s155 + $0x24] sm:$0xff]
                %160 = vst [vmem:[%s156 + $0xc] sm:$0xff] %v159
                %v161 = vld [vmem:[%s155 + $0x48] sm:$0xff]
                %162 = vst [vmem:[%s156 + $0x18] sm:$0xff] %v161
                %v163 = vld [vmem:[%s155 + $0x6c] sm:$0xff]
                %164 = vst [vmem:[%s156 + $0x24] sm:$0xff] %v163
              $region33: #{embedding_net_forward.78} parent=27 // loop_footer
                %s154 = sadd.s32 1, %s150
              $region34: #{embedding_net_forward.78} parent=27 // loop_footer_branch
                %149 = sbr.rel target = $region30
              $region35: #{embedding_net_forward.78} parent=27 // loop_exit
                _
              loop: start=0, step=1, limit=1
              $region36: #{embedding_net_forward.78} parent=27 // loop_pre_header
                _
              $region37: #{embedding_net_forward.78} parent=27 // loop_header
                %s167 = sphi 0, %s171
                %p168 = scmp.ge.s32.totalorder %s167, 1
                %s172 = sphi %s147, %s147
                %s173 = sphi %s148, %s148
              $region38: #{embedding_net_forward.78} parent=27 // loop_header_branch
                %170 = sbr.rel (%p168) target = $region42
              $region39: #{embedding_net_forward.78} parent=27 // loop_body
                %v174 = vld [vmem:[%s172] sm:$0xf]
                %175 = vst [vmem:[%s173] sm:$0xf] %v174
                %v176 = vld [vmem:[%s172 + $0x24] sm:$0xf]
                %177 = vst [vmem:[%s173 + $0xc] sm:$0xf] %v176
                %v178 = vld [vmem:[%s172 + $0x48] sm:$0xf]
                %179 = vst [vmem:[%s173 + $0x18] sm:$0xf] %v178
                %v180 = vld [vmem:[%s172 + $0x6c] sm:$0xf]
                %181 = vst [vmem:[%s173 + $0x24] sm:$0xf] %v180
              $region40: #{embedding_net_forward.78} parent=27 // loop_footer
                %s171 = sadd.s32 1, %s167
              $region41: #{embedding_net_forward.78} parent=27 // loop_footer_branch
                %166 = sbr.rel target = $region37
              $region42: #{embedding_net_forward.78} parent=27 // loop_exit
                _
            $region28: #{embedding_net_forward.78} parent=23 // pred_fallthru
              _
          $region24: #{embedding_net_forward.78} parent=19 // pred_fallthru
            _
          %182 = vnop
        $region20: #{embedding_net_forward.78} parent=15 // pred_fallthru
          _
        // Predicated region
        $region43: #{embedding_net_forward.78} parent=15 // pred_check
          %p183 = pneg %p77
        $region44: #{embedding_net_forward.78} parent=15 // pred_check_branch
          %185 = sbr.rel (%p183) target = $region46
        $region45: #{embedding_net_forward.78} parent=15 // pred_region
          %s186 = smul.u32 48, %s17
          %p187 = scmp.lt.s32.totalorder %s186, 143
          %s188 = scalar_select %p187, %s186, 143
          %p189 = scmp.lt.s32.totalorder %s16, 0
          %s190 = scalar_select %p189, %s16, 0
          %s191 = sadd.s32 %s190, %s188
          %s192 = smul.addr %s191, 4
          %s193 = scalar_lea.vmem %s1, %s192
          %s194 = smul.u32 48, %s17
        $region46: #{embedding_net_forward.78} parent=15 // pred_fallthru
          _
      $region16: #{embedding_net_forward.78} parent=5 // pred_fallthru
        _
      %p195 = scmp.le.s32.totalorder 1, %s8
      %p196 = scmp.lt.s32.totalorder %s8, 4
      %p197 = pnand %p195, %p196
      %p198 = pneg %p197
      // Predicated region
      $region47: #{embedding_net_forward.78} parent=5 // pred_check
        _
      $region48: #{embedding_net_forward.78} parent=5 // pred_check_branch
        %200 = sbr.rel (%p197) target = $region50
      $region49: #{embedding_net_forward.78} parent=5 // pred_region
        %s201 = ssub.s32 %s8, 1
        %s202 = sand.u32 %s42, 1
        %s203 = sand.u32 %s42, 1
        %s204 = smul.addr %s203, 48
        %s205 = scalar_lea.vmem [#allocation3], %s204
        // Predicated region
        $region51: #{embedding_net_forward.78} parent=49 // pred_check
          %p206 = pneg %p55
        $region52: #{embedding_net_forward.78} parent=49 // pred_check_branch
          %208 = sbr.rel (%p206) target = $region54
        $region53: #{embedding_net_forward.78} parent=49 // pred_region
          _
        $region54: #{embedding_net_forward.78} parent=49 // pred_fallthru
          _
        %s209 = sand.u32 %s42, 1
        %s210 = sand.u32 %s42, 1
        %s211 = smul.addr %s210, 48
        %s212 = scalar_lea.vmem [#allocation3], %s211
        %p213 = pneg %p55
        %p214 = pneg %p52
        %s215 = smul.u32 48, %s20
        %p216 = scmp.lt.s32.totalorder %s215, 143
        %s217 = scalar_select %p216, %s215, 143
        %p218 = scmp.lt.s32.totalorder %s19, 0
        %s219 = scalar_select %p218, %s19, 0
        %s220 = sadd.s32 %s219, %s217
        %s221 = smul.addr %s220, 4
        %s222 = scalar_lea.vmem %s1, %s221
        %p223 = pneg %p83
        %p224 = pneg %p80
        %p225 = pneg %p111
        %p226 = pneg %p108
        %s227 = smul.u32 4, %s18
        %p228 = scmp.lt.s32.totalorder %s227, 3
        %s229 = scalar_select %p228, %s227, 3
        %p230 = scmp.lt.s32.totalorder %s19, 0
        %s231 = scalar_select %p230, %s19, 0
        %s232 = sadd.s32 %s231, %s229
        %s233 = smul.addr %s232, 8
        %s234 = scalar_lea.vmem %s2, %s233
        %s235 = smul.u32 4, %s18
        %s236 = smul.u32 3, %s20
        %s237 = smul.u32 48, %s20
        %p238 = scmp.lt.s32.totalorder %s237, 143
        %s239 = scalar_select %p238, %s237, 143
        %p240 = scmp.lt.s32.totalorder %s19, 0
        %s241 = scalar_select %p240, %s19, 0
        %s242 = sadd.s32 %s241, %s239
        %s243 = smul.addr %s242, 4
        %s244 = scalar_lea.vmem %s1, %s243
        %s245 = smul.u32 48, %s20
        %s246 = smul.u32 4, %s18
        %p247 = scmp.lt.s32.totalorder %s246, 3
        %s248 = scalar_select %p247, %s246, 3
        %p249 = scmp.lt.s32.totalorder %s19, 0
        %s250 = scalar_select %p249, %s19, 0
        %s251 = sadd.s32 %s250, %s248
        %s252 = smul.addr %s251, 8
        %s253 = scalar_lea.vmem %s2, %s252
        %s254 = smul.u32 4, %s18
        %p256 = scmp.eq.s32.totalorder %s20, 0
        // Predicated region
        $region55: #{embedding_net_forward.78} parent=49 // pred_check
          %p257 = pneg %p256
        $region56: #{embedding_net_forward.78} parent=49 // pred_check_branch
          %259 = sbr.rel (%p257) target = $region58
        $region57: #{embedding_net_forward.78} parent=49 // pred_region
          %260 = vst [vmem:[#allocation2] sm:$0xff] 0.0
          %261 = vst [vmem:[#allocation2 + $0x8] sm:$0xff] 0.0
          %262 = vst [vmem:[#allocation2 + $0x10] sm:$0xff] 0.0
          %263 = vst [vmem:[#allocation2 + $0x18] sm:$0xff] 0.0
        $region58: #{embedding_net_forward.78} parent=49 // pred_fallthru
          _
        %v264 = vld [vmem:[#allocation2] sm:$0xff]
        %v265 = vld [vmem:[#allocation2 + $0x8] sm:$0xff]
        %v266 = vld [vmem:[#allocation2 + $0x10] sm:$0xff]
        %v267 = vld [vmem:[#allocation2 + $0x18] sm:$0xff]
        %v268 = vld [vmem:[%s205] sm:$0xff]
        %v269 = vld [vmem:[%s205 + $0x8] sm:$0xf]
        %v270 = vld [vmem:[%s205 + $0xc] sm:$0xff]
        %v271 = vld [vmem:[%s205 + $0x14] sm:$0xf]
        %v272 = vld [vmem:[%s205 + $0x18] sm:$0xff]
        %v273 = vld [vmem:[%s205 + $0x20] sm:$0xf]
        %v274 = vld [vmem:[%s205 + $0x24] sm:$0xff]
        %v275 = vld [vmem:[%s205 + $0x2c] sm:$0xf]
        %v276 = vld [vmem:[%s244] sm:$0xf]
        %v277 = vld [vmem:[%s244 + $0x4] sm:$0xf]
        %v278 = vld [vmem:[%s244 + $0x8] sm:$0xf]
        %v279 = vld [vmem:[%s244 + $0xc] sm:$0xf]
        %v280 = vld [vmem:[%s244 + $0x10] sm:$0xf]
        %v281 = vld [vmem:[%s244 + $0x14] sm:$0xf]
        %v282 = vld [vmem:[%s244 + $0x18] sm:$0xf]
        %v283 = vld [vmem:[%s244 + $0x1c] sm:$0xf]
        %v284 = vld [vmem:[%s244 + $0x20] sm:$0xf]
        %v285 = vld [vmem:[%s244 + $0x24] sm:$0xf]
        %v286 = vld [vmem:[%s244 + $0x28] sm:$0xf]
        %v287 = vld [vmem:[%s244 + $0x2c] sm:$0xf]
        %v288 = vld [vmem:[%s244 + $0x30] sm:$0xf]
        %v289 = vld [vmem:[%s244 + $0x34] sm:$0xf]
        %v290 = vld [vmem:[%s244 + $0x38] sm:$0xf]
        %v291 = vld [vmem:[%s244 + $0x3c] sm:$0xf]
        %v292 = vld [vmem:[%s244 + $0x40] sm:$0xf]
        %v293 = vld [vmem:[%s244 + $0x44] sm:$0xf]
        %v294 = vld [vmem:[%s244 + $0x48] sm:$0xf]
        %v295 = vld [vmem:[%s244 + $0x4c] sm:$0xf]
        %v296 = vld [vmem:[%s244 + $0x50] sm:$0xf]
        %v297 = vld [vmem:[%s244 + $0x54] sm:$0xf]
        %v298 = vld [vmem:[%s244 + $0x58] sm:$0xf]
        %v299 = vld [vmem:[%s244 + $0x5c] sm:$0xf]
        %v300 = vld [vmem:[%s244 + $0x60] sm:$0xf]
        %v301 = vld [vmem:[%s244 + $0x64] sm:$0xf]
        %v302 = vld [vmem:[%s244 + $0x68] sm:$0xf]
        %v303 = vld [vmem:[%s244 + $0x6c] sm:$0xf]
        %v304 = vld [vmem:[%s244 + $0x70] sm:$0xf]
        %v305 = vld [vmem:[%s244 + $0x74] sm:$0xf]
        %v306 = vld [vmem:[%s244 + $0x78] sm:$0xf]
        %v307 = vld [vmem:[%s244 + $0x7c] sm:$0xf]
        %v308 = vld [vmem:[%s244 + $0x80] sm:$0xf]
        %v309 = vld [vmem:[%s244 + $0x84] sm:$0xf]
        %v310 = vld [vmem:[%s244 + $0x88] sm:$0xf]
        %v311 = vld [vmem:[%s244 + $0x8c] sm:$0xf]
        %v312 = vld [vmem:[%s244 + $0x90] sm:$0xf]
        %v313 = vld [vmem:[%s244 + $0x94] sm:$0xf]
        %v314 = vld [vmem:[%s244 + $0x98] sm:$0xf]
        %v315 = vld [vmem:[%s244 + $0x9c] sm:$0xf]
        %v316 = vld [vmem:[%s244 + $0xa0] sm:$0xf]
        %v317 = vld [vmem:[%s244 + $0xa4] sm:$0xf]
        %v318 = vld [vmem:[%s244 + $0xa8] sm:$0xf]
        %v319 = vld [vmem:[%s244 + $0xac] sm:$0xf]
        %v320 = vld [vmem:[%s244 + $0xb0] sm:$0xf]
        %v321 = vld [vmem:[%s244 + $0xb4] sm:$0xf]
        %v322 = vld [vmem:[%s244 + $0xb8] sm:$0xf]
        %v323 = vld [vmem:[%s244 + $0xbc] sm:$0xf]
        %v332 = vunpack.c.l.b16 %v268
        %v333 = vunpack.c.h.b16 %v268
        %v334 = vunpack.c.l.b16 %v269
        %v335 = vunpack.c.l.b16 %v270
        %v336 = vunpack.c.h.b16 %v270
        %v337 = vunpack.c.l.b16 %v271
        %v338 = vunpack.c.l.b16 %v272
        %v339 = vunpack.c.h.b16 %v272
        %v340 = vunpack.c.l.b16 %v273
        %v341 = vunpack.c.l.b16 %v274
        %v342 = vunpack.c.h.b16 %v274
        %v343 = vunpack.c.l.b16 %v275
        %v344 = vpack.c.b16 %v335, %v332
        %v345 = vpack.c.b16 %v336, %v333
        %v346 = vpack.c.b16 %v337, %v334
        %v347 = vpack.c.b16 %v341, %v338
        %v348 = vpack.c.b16 %v342, %v339
        %v349 = vpack.c.b16 %v343, %v340
        %v404 = vunpack.c.l.b16 %v276
        %v405 = vunpack.c.l.b16 %v277
        %v406 = vunpack.c.l.b16 %v278
        %v407 = vunpack.c.l.b16 %v279
        %v408 = vunpack.c.l.b16 %v280
        %v409 = vunpack.c.l.b16 %v281
        %v410 = vunpack.c.l.b16 %v282
        %v411 = vunpack.c.l.b16 %v283
        %v412 = vunpack.c.l.b16 %v284
        %v413 = vunpack.c.l.b16 %v285
        %v414 = vunpack.c.l.b16 %v286
        %v415 = vunpack.c.l.b16 %v287
        %v416 = vunpack.c.l.b16 %v288
        %v417 = vunpack.c.l.b16 %v289
        %v418 = vunpack.c.l.b16 %v290
        %v419 = vunpack.c.l.b16 %v291
        %v420 = vunpack.c.l.b16 %v292
        %v421 = vunpack.c.l.b16 %v293
        %v422 = vunpack.c.l.b16 %v294
        %v423 = vunpack.c.l.b16 %v295
        %v424 = vunpack.c.l.b16 %v296
        %v425 = vunpack.c.l.b16 %v297
        %v426 = vunpack.c.l.b16 %v298
        %v427 = vunpack.c.l.b16 %v299
        %v428 = vunpack.c.l.b16 %v300
        %v429 = vunpack.c.l.b16 %v301
        %v430 = vunpack.c.l.b16 %v302
        %v431 = vunpack.c.l.b16 %v303
        %v432 = vunpack.c.l.b16 %v304
        %v433 = vunpack.c.l.b16 %v305
        %v434 = vunpack.c.l.b16 %v306
        %v435 = vunpack.c.l.b16 %v307
        %v436 = vunpack.c.l.b16 %v308
        %v437 = vunpack.c.l.b16 %v309
        %v438 = vunpack.c.l.b16 %v310
        %v439 = vunpack.c.l.b16 %v311
        %v440 = vunpack.c.l.b16 %v312
        %v441 = vunpack.c.l.b16 %v313
        %v442 = vunpack.c.l.b16 %v314
        %v443 = vunpack.c.l.b16 %v315
        %v444 = vunpack.c.l.b16 %v316
        %v445 = vunpack.c.l.b16 %v317
        %v446 = vunpack.c.l.b16 %v318
        %v447 = vunpack.c.l.b16 %v319
        %v448 = vunpack.c.l.b16 %v320
        %v449 = vunpack.c.l.b16 %v321
        %v450 = vunpack.c.l.b16 %v322
        %v451 = vunpack.c.l.b16 %v323
        %v452 = vpack.c.b16 %v405, %v404
        %v453 = vpack.c.b16 %v407, %v406
        %v454 = vpack.c.b16 %v409, %v408
        %v455 = vpack.c.b16 %v411, %v410
        %v456 = vpack.c.b16 %v413, %v412
        %v457 = vpack.c.b16 %v415, %v414
        %v458 = vpack.c.b16 %v417, %v416
        %v459 = vpack.c.b16 %v419, %v418
        %v460 = vpack.c.b16 %v421, %v420
        %v461 = vpack.c.b16 %v423, %v422
        %v462 = vpack.c.b16 %v425, %v424
        %v463 = vpack.c.b16 %v427, %v426
        %v464 = vpack.c.b16 %v429, %v428
        %v465 = vpack.c.b16 %v431, %v430
        %v466 = vpack.c.b16 %v433, %v432
        %v467 = vpack.c.b16 %v435, %v434
        %v468 = vpack.c.b16 %v437, %v436
        %v469 = vpack.c.b16 %v439, %v438
        %v470 = vpack.c.b16 %v441, %v440
        %v471 = vpack.c.b16 %v443, %v442
        %v472 = vpack.c.b16 %v445, %v444
        %v473 = vpack.c.b16 %v447, %v446
        %v474 = vpack.c.b16 %v449, %v448
        %v475 = vpack.c.b16 %v451, %v450
        %500 = vmatprep.subr.bf16.mxu0 0
        %501 = vmatpush1.bf16.msra.mxu0 %v452
        %502 = vmatprep.subr.bf16.mxu0 0
        %503 = vmatpush1.bf16.msra.mxu0 %v453
        %504 = vmatprep.subr.bf16.mxu0 0
        %505 = vmatpush1.bf16.msra.mxu0 %v454
        %506 = vmatprep.subr.bf16.mxu0 0
        %507 = vmatpush1.bf16.msra.mxu0 %v455
        %508 = vmatprep.subr.bf16.mxu0 0
        %509 = vmatpush1.bf16.msra.mxu0 %v456
        %510 = vmatprep.subr.bf16.mxu0 0
        %511 = vmatpush1.bf16.msra.mxu0 %v457
        %512 = vmatprep.subr.bf16.mxu0 0
        %513 = vmatpush1.bf16.msra.mxu0 %v458
        %514 = vmatprep.subr.bf16.mxu0 0
        %515 = vmatpush1.bf16.msra.mxu0 %v459
        %516 = vmatprep.subr.bf16.mxu0 0
        %517 = vmatpush1.bf16.msra.mxu0 %v460
        %518 = vmatprep.subr.bf16.mxu0 0
        %519 = vmatpush1.bf16.msra.mxu0 %v461
        %520 = vmatprep.subr.bf16.mxu0 0
        %521 = vmatpush1.bf16.msra.mxu0 %v462
        %522 = vmatprep.subr.bf16.mxu0 0
        %523 = vmatpush1.bf16.msra.mxu0 %v463
        %524 = vmatprep.subr.bf16.mxu0 0
        %525 = vmatpush1.bf16.msra.mxu0 %v464
        %526 = vmatprep.subr.bf16.mxu0 0
        %527 = vmatpush1.bf16.msra.mxu0 %v465
        %528 = vmatprep.subr.bf16.mxu0 0
        %529 = vmatpush1.bf16.msra.mxu0 %v466
        %530 = vmatprep.subr.bf16.mxu0 0
        %531 = vmatpush1.bf16.msra.mxu0 %v467
        %532 = vmatprep.mubr.bf16.mxu0 %v345
        %533 = vmatmul.mubr.bf16.gmra.mrb[0].mxu0 %v344
        %v534 = vpop.f32.mrb[0].mxu0
        %v535 = vadd.f32 0.0, %v534
        %v536 = vpop.f32.mrb[0].mxu0
        %v537 = vpop.f32.mrb[0].mxu0
        %v538 = vadd.f32 0.0, %v537
        %v539 = vpop.f32.mrb[0].mxu0
        %540 = vmatprep.mubr.bf16.mxu0 %v348
        %541 = vmatmul.mubr.bf16.gmra.mrb[0].mxu0 %v347
        %v542 = vpop.f32.mrb[0].mxu0
        %v543 = vadd.f32 0.0, %v542
        %v544 = vpop.f32.mrb[0].mxu0
        %v545 = vpop.f32.mrb[0].mxu0
        %v546 = vadd.f32 0.0, %v545
        %v547 = vpop.f32.mrb[0].mxu0
        %548 = vdwg.mxu0
        %549 = vmatprep.subr.bf16.mxu0 0
        %550 = vmatpush1.bf16.msra.mxu0 %v468
        %551 = vmatprep.subr.bf16.mxu0 0
        %552 = vmatpush1.bf16.msra.mxu0 %v469
        %553 = vmatprep.subr.bf16.mxu0 0
        %554 = vmatpush1.bf16.msra.mxu0 %v470
        %555 = vmatprep.subr.bf16.mxu0 0
        %556 = vmatpush1.bf16.msra.mxu0 %v471
        %557 = vmatprep.subr.bf16.mxu0 0
        %558 = vmatpush1.bf16.msra.mxu0 %v472
        %559 = vmatprep.subr.bf16.mxu0 0
        %560 = vmatpush1.bf16.msra.mxu0 %v473
        %561 = vmatprep.subr.bf16.mxu0 0
        %562 = vmatpush1.bf16.msra.mxu0 %v474
        %563 = vmatprep.subr.bf16.mxu0 0
        %564 = vmatpush1.bf16.msra.mxu0 %v475
        %565 = vmatprep.subr.bf16.mxu0 0
        %566 = vmatpush1.bf16.msra.mxu0 0
        %567 = vmatprep.subr.bf16.mxu0 0
        %568 = vmatpush1.bf16.msra.mxu0 0
        %569 = vmatprep.subr.bf16.mxu0 0
        %570 = vmatpush1.bf16.msra.mxu0 0
        %571 = vmatprep.subr.bf16.mxu0 0
        %572 = vmatpush1.bf16.msra.mxu0 0
        %573 = vmatprep.subr.bf16.mxu0 0
        %574 = vmatpush1.bf16.msra.mxu0 0
        %575 = vmatprep.subr.bf16.mxu0 0
        %576 = vmatpush1.bf16.msra.mxu0 0
        %577 = vmatprep.subr.bf16.mxu0 0
        %578 = vmatpush1.bf16.msra.mxu0 0
        %579 = vmatprep.subr.bf16.mxu0 0
        %580 = vmatpush1.bf16.msra.mxu0 0
        %581 = vmatprep.mubr.bf16.mxu0 0
        %582 = vmatmul.mubr.bf16.gmra.mrb[0].mxu0 %v346
        %v583 = vpop.f32.mrb[0].mxu0
        %v584 = vadd.f32 %v535, %v583
        %v585 = vpop.f32.mrb[0].mxu0
        %v586 = vpop.f32.mrb[0].mxu0
        %v587 = vadd.f32 %v538, %v586
        %v588 = vpop.f32.mrb[0].mxu0
        %589 = vmatprep.mubr.bf16.mxu0 0
        %590 = vmatmul.mubr.bf16.gmra.mrb[0].mxu0 %v349
        %v591 = vpop.f32.mrb[0].mxu0
        %v592 = vadd.f32 %v543, %v591
        %v593 = vpop.f32.mrb[0].mxu0
        %v594 = vpop.f32.mrb[0].mxu0
        %v595 = vadd.f32 %v546, %v594
        %v596 = vpop.f32.mrb[0].mxu0
        %597 = vdwg.mxu0
        %v598 = vadd.f32 %v264, %v584
        %v599 = vadd.f32 %v265, %v587
        %v600 = vadd.f32 %v266, %v592
        %v601 = vadd.f32 %v267, %v595
        %602 = vst [vmem:[#allocation2] sm:$0xff] %v598
        %603 = vst [vmem:[#allocation2 + $0x8] sm:$0xff] %v599
        %604 = vst [vmem:[#allocation2 + $0x10] sm:$0xff] %v600
        %605 = vst [vmem:[#allocation2 + $0x18] sm:$0xff] %v601
        %p606 = scmp.eq.s32.totalorder %s20, 2
        // Predicated region
        $region59: #{embedding_net_forward.78} parent=49 // pred_check
          %p607 = pneg %p606
        $region60: #{embedding_net_forward.78} parent=49 // pred_check_branch
          %609 = sbr.rel (%p607) target = $region62
        $region61: #{embedding_net_forward.78} parent=49 // pred_region
          %v610 = vld [vmem:[#allocation2] sm:$0xff]
          %v611 = vld [vmem:[#allocation2 + $0x8] sm:$0xff]
          %v612 = vld [vmem:[#allocation2 + $0x10] sm:$0xff]
          %v613 = vld [vmem:[#allocation2 + $0x18] sm:$0xff]
          %614 = vst [vmem:[%s253] sm:$0xff] %v610
          %615 = vst [vmem:[%s253 + $0x8] sm:$0xff] %v611
          %616 = vst [vmem:[%s253 + $0x10] sm:$0xff] %v612
          %617 = vst [vmem:[%s253 + $0x18] sm:$0xff] %v613
        $region62: #{embedding_net_forward.78} parent=49 // pred_fallthru
          _
        %s618 = smul.u32 4, %s18
        %p619 = scmp.lt.s32.totalorder %s618, 3
        %s620 = scalar_select %p619, %s618, 3
        %p621 = scmp.lt.s32.totalorder %s19, 0
        %s622 = scalar_select %p621, %s19, 0
        %s623 = sadd.s32 %s622, %s620
        %s624 = smul.addr %s623, 8
        %s625 = scalar_lea.vmem %s2, %s624
        // Predicated region
        $region63: #{embedding_net_forward.78} parent=49 // pred_check
          %p626 = pneg %p108
        $region64: #{embedding_net_forward.78} parent=49 // pred_check_branch
          %628 = sbr.rel (%p626) target = $region66
        $region65: #{embedding_net_forward.78} parent=49 // pred_region
          %s629 = smul.u32 4, %s18
        $region66: #{embedding_net_forward.78} parent=49 // pred_fallthru
          _
        // Predicated region
        $region67: #{embedding_net_forward.78} parent=49 // pred_check
          %p630 = pneg %p108
        $region68: #{embedding_net_forward.78} parent=49 // pred_check_branch
          %632 = sbr.rel (%p630) target = $region70
        $region69: #{embedding_net_forward.78} parent=49 // pred_region
          %s633 = smul.u32 4, %s18
          %p634 = scmp.lt.s32.totalorder %s633, 3
          %s635 = scalar_select %p634, %s633, 3
          %p636 = scmp.lt.s32.totalorder %s19, 0
          %s637 = scalar_select %p636, %s19, 0
          %s638 = sadd.s32 %s637, %s635
          %s639 = smul.addr %s638, 8
          %s640 = scalar_lea.vmem %s2, %s639
        $region70: #{embedding_net_forward.78} parent=49 // pred_fallthru
          _
      $region50: #{embedding_net_forward.78} parent=5 // pred_fallthru
        _
      %p641 = scmp.le.s32.totalorder 2, %s8
      // Predicated region
      $region71: #{embedding_net_forward.78} parent=5 // pred_check
        %p642 = pneg %p641
      $region72: #{embedding_net_forward.78} parent=5 // pred_check_branch
        %644 = sbr.rel (%p642) target = $region74
      $region73: #{embedding_net_forward.78} parent=5 // pred_region
        %s645 = ssub.s32 %s8, 2
      $region74: #{embedding_net_forward.78} parent=5 // pred_fallthru
        _
    $region6: #{embedding_net_forward.78} parent=1 // loop_footer
      %s12 = sadd.s32 1, %s8
    $region7: #{embedding_net_forward.78} parent=1 // loop_footer_branch
      %7 = sbr.rel target = $region3
    $region8: #{embedding_net_forward.78} parent=1 // loop_exit
      _

// kernel: embedding_net_forward.94
$region0: #{embedding_net_forward.94}
  #allocation0 [shape = 'u32[]', space=smem, size = 0x4, offset = 0x4, fixed_abs, tag = 'smem constant byte address 0x4 - core index']
  #allocation1 [shape = 'u32[144,128]{1,0:T(1,128)}', space=vmem, size = 0x12000, scoped, tag = 'internal scratch']
  %s0 = inlined_call_operand.vmem [shape: bf16[8,128], index: 0, kind: input, shape index: {}]
  %s1 = inlined_call_operand.vmem [shape: bf16[128,256], index: 1, kind: input, shape index: {}]
  %s2 = inlined_call_operand.vmem [shape: f32[8,256], index: 2, kind: output, shape index: {}]
  %s3 = sld [smem:[#allocation0]]
  $region18: #{embedding_net_forward.94} parent=0
    _
  %s5 = ssub.s32 1, %s3
  %s6 = scalar_select 0, %s5, %s3
  // Predicated region
  $region2: #{embedding_net_forward.94} parent=0 // pred_check
    _
  $region3: #{embedding_net_forward.94} parent=0 // pred_check_branch
    %8 = sbr.rel (0) target = $region5
  $region4: #{embedding_net_forward.94} parent=0 // pred_region
    _
  $region5: #{embedding_net_forward.94} parent=0 // pred_fallthru
    _
  // Predicated region
  $region6: #{embedding_net_forward.94} parent=0 // pred_check
    _
  $region7: #{embedding_net_forward.94} parent=0 // pred_check_branch
    %10 = sbr.rel (0) target = $region9
  $region8: #{embedding_net_forward.94} parent=0 // pred_region
    _
  $region9: #{embedding_net_forward.94} parent=0 // pred_fallthru
    _
  %v12 = vld [vmem:[%s0] sm:$0xf]
  %v13 = vld [vmem:[%s1] sm:$0xff]
  %v14 = vld [vmem:[%s1 + $0x8] sm:$0xff]
  %v15 = vld [vmem:[%s1 + $0x10] sm:$0xff]
  %v16 = vld [vmem:[%s1 + $0x18] sm:$0xff]
  %v17 = vld [vmem:[%s1 + $0x20] sm:$0xff]
  %v18 = vld [vmem:[%s1 + $0x28] sm:$0xff]
  %v19 = vld [vmem:[%s1 + $0x30] sm:$0xff]
  %v20 = vld [vmem:[%s1 + $0x38] sm:$0xff]
  %v21 = vld [vmem:[%s1 + $0x40] sm:$0xff]
  %v22 = vld [vmem:[%s1 + $0x48] sm:$0xff]
  %v23 = vld [vmem:[%s1 + $0x50] sm:$0xff]
  %v24 = vld [vmem:[%s1 + $0x58] sm:$0xff]
  %v25 = vld [vmem:[%s1 + $0x60] sm:$0xff]
  %v26 = vld [vmem:[%s1 + $0x68] sm:$0xff]
  %v27 = vld [vmem:[%s1 + $0x70] sm:$0xff]
  %v28 = vld [vmem:[%s1 + $0x78] sm:$0xff]
  %v45 = vunpack.c.l.b16 %v13
  %v46 = vunpack.c.h.b16 %v13
  %v47 = vunpack.c.l.b16 %v14
  %v48 = vunpack.c.h.b16 %v14
  %v49 = vunpack.c.l.b16 %v15
  %v50 = vunpack.c.h.b16 %v15
  %v51 = vunpack.c.l.b16 %v16
  %v52 = vunpack.c.h.b16 %v16
  %v53 = vunpack.c.l.b16 %v17
  %v54 = vunpack.c.h.b16 %v17
  %v55 = vunpack.c.l.b16 %v18
  %v56 = vunpack.c.h.b16 %v18
  %v57 = vunpack.c.l.b16 %v19
  %v58 = vunpack.c.h.b16 %v19
  %v59 = vunpack.c.l.b16 %v20
  %v60 = vunpack.c.h.b16 %v20
  %v61 = vunpack.c.l.b16 %v21
  %v62 = vunpack.c.h.b16 %v21
  %v63 = vunpack.c.l.b16 %v22
  %v64 = vunpack.c.h.b16 %v22
  %v65 = vunpack.c.l.b16 %v23
  %v66 = vunpack.c.h.b16 %v23
  %v67 = vunpack.c.l.b16 %v24
  %v68 = vunpack.c.h.b16 %v24
  %v69 = vunpack.c.l.b16 %v25
  %v70 = vunpack.c.h.b16 %v25
  %v71 = vunpack.c.l.b16 %v26
  %v72 = vunpack.c.h.b16 %v26
  %v73 = vunpack.c.l.b16 %v27
  %v74 = vunpack.c.h.b16 %v27
  %v75 = vunpack.c.l.b16 %v28
  %v76 = vunpack.c.h.b16 %v28
  %v77 = vpack.c.b16 %v47, %v45
  %v78 = vpack.c.b16 %v48, %v46
  %v79 = vpack.c.b16 %v51, %v49
  %v80 = vpack.c.b16 %v52, %v50
  %v81 = vpack.c.b16 %v55, %v53
  %v82 = vpack.c.b16 %v56, %v54
  %v83 = vpack.c.b16 %v59, %v57
  %v84 = vpack.c.b16 %v60, %v58
  %v85 = vpack.c.b16 %v63, %v61
  %v86 = vpack.c.b16 %v64, %v62
  %v87 = vpack.c.b16 %v67, %v65
  %v88 = vpack.c.b16 %v68, %v66
  %v89 = vpack.c.b16 %v71, %v69
  %v90 = vpack.c.b16 %v72, %v70
  %v91 = vpack.c.b16 %v75, %v73
  %v92 = vpack.c.b16 %v76, %v74
  %109 = vmatprep.subr.bf16.mxu0 %v78
  %110 = vmatpush1.bf16.msra.mxu0 %v77
  %111 = vmatprep.subr.bf16.mxu0 %v80
  %112 = vmatpush1.bf16.msra.mxu0 %v79
  %113 = vmatprep.subr.bf16.mxu0 %v82
  %114 = vmatpush1.bf16.msra.mxu0 %v81
  %115 = vmatprep.subr.bf16.mxu0 %v84
  %116 = vmatpush1.bf16.msra.mxu0 %v83
  %117 = vmatprep.subr.bf16.mxu0 %v86
  %118 = vmatpush1.bf16.msra.mxu0 %v85
  %119 = vmatprep.subr.bf16.mxu0 %v88
  %120 = vmatpush1.bf16.msra.mxu0 %v87
  %121 = vmatprep.subr.bf16.mxu0 %v90
  %122 = vmatpush1.bf16.msra.mxu0 %v89
  %123 = vmatprep.subr.bf16.mxu0 %v92
  %124 = vmatpush1.bf16.msra.mxu0 %v91
  %125 = vmatprep.subr.bf16.mxu0 0
  %126 = vmatpush1.bf16.msra.mxu0 0
  %127 = vmatprep.subr.bf16.mxu0 0
  %128 = vmatpush1.bf16.msra.mxu0 0
  %129 = vmatprep.subr.bf16.mxu0 0
  %130 = vmatpush1.bf16.msra.mxu0 0
  %131 = vmatprep.subr.bf16.mxu0 0
  %132 = vmatpush1.bf16.msra.mxu0 0
  %133 = vmatprep.subr.bf16.mxu0 0
  %134 = vmatpush1.bf16.msra.mxu0 0
  %135 = vmatprep.subr.bf16.mxu0 0
  %136 = vmatpush1.bf16.msra.mxu0 0
  %137 = vmatprep.subr.bf16.mxu0 0
  %138 = vmatpush1.bf16.msra.mxu0 0
  %139 = vmatprep.subr.bf16.mxu0 0
  %140 = vmatpush1.bf16.msra.mxu0 0
  %141 = vmatprep.mubr.bf16.mxu0 0
  %142 = vmatmul.mubr.bf16.gmra.mrb[0].mxu0 %v12
  %v143 = vpop.f32.mrb[0].mxu0
  %v144 = vadd.f32 0.0, %v143
  %v145 = vpop.f32.mrb[0].mxu0
  %v146 = vadd.f32 0.0, %v145
  %v147 = vpop.f32.mrb[0].mxu0
  %v148 = vpop.f32.mrb[0].mxu0
  %149 = vdwg.mxu0
  %150 = vst [vmem:[%s2] sm:$0xff] %v144
  %151 = vst [vmem:[%s2 + $0x8] sm:$0xff] %v146
  // Predicated region
  $region10: #{embedding_net_forward.94} parent=0 // pred_check
    _
  $region11: #{embedding_net_forward.94} parent=0 // pred_check_branch
    %153 = sbr.rel (0) target = $region13
  $region12: #{embedding_net_forward.94} parent=0 // pred_region
    _
  $region13: #{embedding_net_forward.94} parent=0 // pred_fallthru
    _
  // Predicated region
  $region14: #{embedding_net_forward.94} parent=0 // pred_check
    _
  $region15: #{embedding_net_forward.94} parent=0 // pred_check_branch
    %155 = sbr.rel (0) target = $region17
  $region16: #{embedding_net_forward.94} parent=0 // pred_region
    _
  $region17: #{embedding_net_forward.94} parent=0 // pred_fallthru
    _

// kernel: embedding_net_forward.95
$region0: #{embedding_net_forward.95}
  #allocation0 [shape = 'u32[]', space=smem, size = 0x4, offset = 0x4, fixed_abs, tag = 'smem constant byte address 0x4 - core index']
  #allocation1 [shape = 'u32[144,128]{1,0:T(1,128)}', space=vmem, size = 0x12000, scoped, tag = 'internal scratch']
  %s0 = inlined_call_operand.vmem [shape: f32[8,256], index: 0, kind: input, shape index: {}]
  %s1 = inlined_call_operand.vmem [shape: f32[1,256], index: 1, kind: output, shape index: {0}]
  %s2 = inlined_call_operand.vmem [shape: f32[1,256], index: 2, kind: output, shape index: {1}]
  %3 = xla_tuple %s1, %s2
  %s4 = sld [smem:[#allocation0]]
  $region26: #{embedding_net_forward.95} parent=0
    _
  %s6 = ssub.s32 1, %s4
  %s7 = scalar_select 0, %s6, %s4
  // Predicated region
  $region2: #{embedding_net_forward.95} parent=0 // pred_check
    _
  $region3: #{embedding_net_forward.95} parent=0 // pred_check_branch
    %9 = sbr.rel (0) target = $region5
  $region4: #{embedding_net_forward.95} parent=0 // pred_region
    _
  $region5: #{embedding_net_forward.95} parent=0 // pred_fallthru
    _
  %p10 = scmp.eq.s32.totalorder 0, 0
  // Predicated region
  $region6: #{embedding_net_forward.95} parent=0 // pred_check
    %p11 = pneg %p10
  $region7: #{embedding_net_forward.95} parent=0 // pred_check_branch
    %13 = sbr.rel (%p11) target = $region9
  $region8: #{embedding_net_forward.95} parent=0 // pred_region
    %v14 = vlaneseq
    %vm15 = vcmp.ge.s32.totalorder %v14, 0
    %vm16 = vcmp.lt.s32.totalorder %v14, 256
    %vm17 = vmand %vm15, %vm16
    %18 = vst.msk [vmem:[%s1] sm:$0x3] %vm17, 0.0
    %19 = vst.msk [vmem:[%s2] sm:$0x3] %vm17, 0.0
  $region9: #{embedding_net_forward.95} parent=0 // pred_fallthru
    _
  %v20 = vld [vmem:[%s0] sm:$0xff]
  %v21 = vld [vmem:[%s0 + $0x8] sm:$0xff]
  %v22 = vld [vmem:[%s1] sm:$0x3]
  %v23 = vrot.slane %v20, 4
  %v24 = vadd.f32 %v20, %v23
  %v25 = vrot.slane %v24, 2
  %v26 = vadd.f32 %v24, %v25
  %v27 = vrot.slane %v26, 1
  %v28 = vadd.f32 %v26, %v27
  %v29 = vrot.slane %v21, 4
  %v30 = vadd.f32 %v21, %v29
  %v31 = vrot.slane %v30, 2
  %v32 = vadd.f32 %v30, %v31
  %v33 = vrot.slane %v32, 1
  %v34 = vadd.f32 %v32, %v33
  %v37 = vcombine.low %v28, %v34
  %v39 = vunpack.c.l.s4 1966171168
  %v40 = vunpack.c.0.s8 %v39
  %v41 = vlaneseq
  %v42 = vshrl.u32 %v41, 7
  %v43 = vsub.s32 %v40, %v42
  %v44 = vrot.slane %v37, %v43
  %v46 = vunpack.c.l.s4 1966171168
  %v47 = vunpack.c.0.s8 %v46
  %v48 = vlaneseq
  %v49 = vshrl.u32 %v48, 7
  %v50 = vsub.s32 %v47, %v49
  %v51 = vrot.slane %v44, %v50
  %v53 = vadd.f32 %v22, %v51
  %v54 = vlaneseq
  %vm55 = vcmp.ge.s32.totalorder %v54, 0
  %vm56 = vcmp.lt.s32.totalorder %v54, 256
  %vm57 = vmand %vm55, %vm56
  %58 = vst.msk [vmem:[%s1] sm:$0x3] %vm57, %v53
  %v59 = vld [vmem:[%s2] sm:$0x3]
  %v60 = vmul.f32 %v20, %v20
  %v61 = vmul.f32 %v21, %v21
  %v62 = vrot.slane %v60, 4
  %v63 = vadd.f32 %v60, %v62
  %v64 = vrot.slane %v63, 2
  %v65 = vadd.f32 %v63, %v64
  %v66 = vrot.slane %v65, 1
  %v67 = vadd.f32 %v65, %v66
  %v68 = vrot.slane %v61, 4
  %v69 = vadd.f32 %v61, %v68
  %v70 = vrot.slane %v69, 2
  %v71 = vadd.f32 %v69, %v70
  %v72 = vrot.slane %v71, 1
  %v73 = vadd.f32 %v71, %v72
  %v76 = vcombine.low %v67, %v73
  %v78 = vunpack.c.l.s4 1966171168
  %v79 = vunpack.c.0.s8 %v78
  %v80 = vlaneseq
  %v81 = vshrl.u32 %v80, 7
  %v82 = vsub.s32 %v79, %v81
  %v83 = vrot.slane %v76, %v82
  %v85 = vunpack.c.l.s4 1966171168
  %v86 = vunpack.c.0.s8 %v85
  %v87 = vlaneseq
  %v88 = vshrl.u32 %v87, 7
  %v89 = vsub.s32 %v86, %v88
  %v90 = vrot.slane %v83, %v89
  %v92 = vadd.f32 %v59, %v90
  %93 = vst.msk [vmem:[%s2] sm:$0x3] %vm57, %v92
  // Predicated region
  $region10: #{embedding_net_forward.95} parent=0 // pred_check
    _
  $region11: #{embedding_net_forward.95} parent=0 // pred_check_branch
    %95 = sbr.rel (0) target = $region13
  $region12: #{embedding_net_forward.95} parent=0 // pred_region
    _
  $region13: #{embedding_net_forward.95} parent=0 // pred_fallthru
    _
  // Predicated region
  $region14: #{embedding_net_forward.95} parent=0 // pred_check
    _
  $region15: #{embedding_net_forward.95} parent=0 // pred_check_branch
    %97 = sbr.rel (0) target = $region17
  $region16: #{embedding_net_forward.95} parent=0 // pred_region
    _
  $region17: #{embedding_net_forward.95} parent=0 // pred_fallthru
    _
  // Predicated region
  $region18: #{embedding_net_forward.95} parent=0 // pred_check
    _
  $region19: #{embedding_net_forward.95} parent=0 // pred_check_branch
    %99 = sbr.rel (0) target = $region21
  $region20: #{embedding_net_forward.95} parent=0 // pred_region
    _
  $region21: #{embedding_net_forward.95} parent=0 // pred_fallthru
    _
  // Predicated region
  $region22: #{embedding_net_forward.95} parent=0 // pred_check
    _
  $region23: #{embedding_net_forward.95} parent=0 // pred_check_branch
    %101 = sbr.rel (0) target = $region25
  $region24: #{embedding_net_forward.95} parent=0 // pred_region
    _
  $region25: #{embedding_net_forward.95} parent=0 // pred_fallthru
    _

// kernel: embedding_net_forward.96
$region0: #{embedding_net_forward.96}
  #allocation0 [shape = 'u32[]', space=smem, size = 0x4, offset = 0x4, fixed_abs, tag = 'smem constant byte address 0x4 - core index']
  #allocation1 [shape = 'u32[144,128]{1,0:T(1,128)}', space=vmem, size = 0x12000, scoped, tag = 'internal scratch']
  %s0 = inlined_call_operand.vmem [shape: f32[8,256], index: 0, kind: input, shape index: {}]
  %s1 = inlined_call_operand.vmem [shape: f32[1,256], index: 1, kind: input, shape index: {}]
  %s2 = inlined_call_operand.vmem [shape: f32[1,256], index: 2, kind: input, shape index: {}]
  %s3 = inlined_call_operand.vmem [shape: f32[8,256], index: 3, kind: output, shape index: {}]
  %s4 = sld [smem:[#allocation0]]
  $region22: #{embedding_net_forward.96} parent=0
    _
  %s6 = ssub.s32 1, %s4
  %s7 = scalar_select 0, %s6, %s4
  // Predicated region
  $region2: #{embedding_net_forward.96} parent=0 // pred_check
    _
  $region3: #{embedding_net_forward.96} parent=0 // pred_check_branch
    %9 = sbr.rel (0) target = $region5
  $region4: #{embedding_net_forward.96} parent=0 // pred_region
    _
  $region5: #{embedding_net_forward.96} parent=0 // pred_fallthru
    _
  // Predicated region
  $region6: #{embedding_net_forward.96} parent=0 // pred_check
    _
  $region7: #{embedding_net_forward.96} parent=0 // pred_check_branch
    %11 = sbr.rel (0) target = $region9
  $region8: #{embedding_net_forward.96} parent=0 // pred_region
    _
  $region9: #{embedding_net_forward.96} parent=0 // pred_fallthru
    _
  // Predicated region
  $region10: #{embedding_net_forward.96} parent=0 // pred_check
    _
  $region11: #{embedding_net_forward.96} parent=0 // pred_check_branch
    %13 = sbr.rel (0) target = $region13
  $region12: #{embedding_net_forward.96} parent=0 // pred_region
    _
  $region13: #{embedding_net_forward.96} parent=0 // pred_fallthru
    _
  %v14 = vld [vmem:[%s0] sm:$0xff]
  %v15 = vld [vmem:[%s0 + $0x8] sm:$0xff]
  %v16 = vld [vmem:[%s1] sm:$0x3]
  %v18 = vlaneseq
  %v19 = vshrl.u32 %v18, 7
  %v20 = vsub.s32 0, %v19
  %v21 = vrot.slane %v16, %v20
  %v22 = vlaneseq
  %v23 = vshrl.u32 %v22, 7
  %v24 = vsub.s32 1, %v23
  %v25 = vrot.slane %v16, %v24
  %v28 = vmul.f32 %v14, %v21
  %v29 = vmul.f32 %v15, %v25
  %v30 = vld [vmem:[%s2] sm:$0x3]
  %v32 = vlaneseq
  %v33 = vshrl.u32 %v32, 7
  %v34 = vsub.s32 0, %v33
  %v35 = vrot.slane %v30, %v34
  %v36 = vlaneseq
  %v37 = vshrl.u32 %v36, 7
  %v38 = vsub.s32 1, %v37
  %v39 = vrot.slane %v30, %v38
  %v42 = vadd.f32 %v28, %v35
  %v43 = vadd.f32 %v29, %v39
  %44 = vst [vmem:[%s3] sm:$0xff] %v42
  %45 = vst [vmem:[%s3 + $0x8] sm:$0xff] %v43
  // Predicated region
  $region14: #{embedding_net_forward.96} parent=0 // pred_check
    _
  $region15: #{embedding_net_forward.96} parent=0 // pred_check_branch
    %47 = sbr.rel (0) target = $region17
  $region16: #{embedding_net_forward.96} parent=0 // pred_region
    _
  $region17: #{embedding_net_forward.96} parent=0 // pred_fallthru
    _
  // Predicated region
  $region18: #{embedding_net_forward.96} parent=0 // pred_check
    _
  $region19: #{embedding_net_forward.96} parent=0 // pred_check_branch
    %49 = sbr.rel (0) target = $region21
  $region20: #{embedding_net_forward.96} parent=0 // pred_region
    _
  $region21: #{embedding_net_forward.96} parent=0 // pred_fallthru
    _

// kernel: embedding_net_forward.92
$region0: #{embedding_net_forward.92}
  #allocation0 [shape = 'u32[]', space=smem, size = 0x4, offset = 0x4, fixed_abs, tag = 'smem constant byte address 0x4 - core index']
  #allocation1 [shape = 'u32[144,128]{1,0:T(1,128)}', space=vmem, size = 0x12000, scoped, tag = 'internal scratch']
  %s0 = inlined_call_operand.vmem [shape: f32[8,256], index: 0, kind: input, shape index: {}]
  %s1 = inlined_call_operand.vmem [shape: f32[1,256], index: 1, kind: input, shape index: {}]
  %s2 = inlined_call_operand.vmem [shape: f32[1,256], index: 2, kind: input, shape index: {}]
  %s3 = inlined_call_operand.vmem [shape: f32[8,256], index: 3, kind: output, shape index: {}]
  %s4 = sld [smem:[#allocation0]]
  $region22: #{embedding_net_forward.92} parent=0
    _
  %s6 = ssub.s32 1, %s4
  %s7 = scalar_select 0, %s6, %s4
  // Predicated region
  $region2: #{embedding_net_forward.92} parent=0 // pred_check
    _
  $region3: #{embedding_net_forward.92} parent=0 // pred_check_branch
    %9 = sbr.rel (0) target = $region5
  $region4: #{embedding_net_forward.92} parent=0 // pred_region
    _
  $region5: #{embedding_net_forward.92} parent=0 // pred_fallthru
    _
  // Predicated region
  $region6: #{embedding_net_forward.92} parent=0 // pred_check
    _
  $region7: #{embedding_net_forward.92} parent=0 // pred_check_branch
    %11 = sbr.rel (0) target = $region9
  $region8: #{embedding_net_forward.92} parent=0 // pred_region
    _
  $region9: #{embedding_net_forward.92} parent=0 // pred_fallthru
    _
  // Predicated region
  $region10: #{embedding_net_forward.92} parent=0 // pred_check
    _
  $region11: #{embedding_net_forward.92} parent=0 // pred_check_branch
    %13 = sbr.rel (0) target = $region13
  $region12: #{embedding_net_forward.92} parent=0 // pred_region
    _
  $region13: #{embedding_net_forward.92} parent=0 // pred_fallthru
    _
  %v14 = vld [vmem:[%s0] sm:$0xff]
  %v15 = vld [vmem:[%s0 + $0x8] sm:$0xff]
  %v16 = vld [vmem:[%s1] sm:$0x3]
  %v18 = vlaneseq
  %v19 = vshrl.u32 %v18, 7
  %v20 = vsub.s32 0, %v19
  %v21 = vrot.slane %v16, %v20
  %v22 = vlaneseq
  %v23 = vshrl.u32 %v22, 7
  %v24 = vsub.s32 1, %v23
  %v25 = vrot.slane %v16, %v24
  %v28 = vmul.f32 %v14, %v21
  %v29 = vmul.f32 %v15, %v25
  %v30 = vld [vmem:[%s2] sm:$0x3]
  %v32 = vlaneseq
  %v33 = vshrl.u32 %v32, 7
  %v34 = vsub.s32 0, %v33
  %v35 = vrot.slane %v30, %v34
  %v36 = vlaneseq
  %v37 = vshrl.u32 %v36, 7
  %v38 = vsub.s32 1, %v37
  %v39 = vrot.slane %v30, %v38
  %v42 = vadd.f32 %v28, %v35
  %v43 = vadd.f32 %v29, %v39
  %v44 = vmax.f32 %v42, 0.0
  %v45 = vmax.f32 %v43, 0.0
  %46 = vst [vmem:[%s3] sm:$0xff] %v44
  %47 = vst [vmem:[%s3 + $0x8] sm:$0xff] %v45
  // Predicated region
  $region14: #{embedding_net_forward.92} parent=0 // pred_check
    _
  $region15: #{embedding_net_forward.92} parent=0 // pred_check_branch
    %49 = sbr.rel (0) target = $region17
  $region16: #{embedding_net_forward.92} parent=0 // pred_region
    _
  $region17: #{embedding_net_forward.92} parent=0 // pred_fallthru
    _
  // Predicated region
  $region18: #{embedding_net_forward.92} parent=0 // pred_check
    _
  $region19: #{embedding_net_forward.92} parent=0 // pred_check_branch
    %51 = sbr.rel (0) target = $region21
  $region20: #{embedding_net_forward.92} parent=0 // pred_region
    _
  $region21: #{embedding_net_forward.92} parent=0 // pred_fallthru
    _

// kernel: embedding_net_forward.90
$region0: #{embedding_net_forward.90}
  #allocation0 [shape = 'u32[]', space=smem, size = 0x4, offset = 0x4, fixed_abs, tag = 'smem constant byte address 0x4 - core index']
  #allocation1 [shape = 'u32[144,128]{1,0:T(1,128)}', space=vmem, size = 0x12000, scoped, tag = 'internal scratch']
  #allocation2 [shape = 'f32[8,256]{1,0:T(8,128)}', space=vmem, size = 0x2000, scoped, tag = 'scratch operand']
  %s0 = inlined_call_operand.vmem [shape: bf16[8,1152], index: 0, kind: input, shape index: {}]
  %s1 = inlined_call_operand.vmem [shape: bf16[1152,256], index: 1, kind: input, shape index: {}]
  %s2 = inlined_call_operand.vmem [shape: f32[8,256], index: 2, kind: output, shape index: {}]
  %s3 = sld [smem:[#allocation0]]
  $region49: #{embedding_net_forward.90} parent=0
    _
  %s5 = ssub.s32 1, %s3
  %s6 = scalar_select 0, %s5, %s3
  loop: start=0, step=1, limit=5
  $region2: #{embedding_net_forward.90} parent=0 // loop_pre_header
    _
  $region3: #{embedding_net_forward.90} parent=0 // loop_header
    %s8 = sphi 0, %s12
    %p9 = scmp.ge.s32.totalorder %s8, 5
    %s15 = sphi 0, %s34
    %s16 = sphi 0, %s30
    %s17 = sphi 0, %s26
    %s18 = sphi 0, %s15
    %s19 = sphi 0, %s16
    %s20 = sphi 0, %s17
    %s21 = sphi 0, %s18
    %s22 = sphi 0, %s19
    %s23 = sphi 0, %s20
    %s39 = sphi 0, %s41
    %s42 = sphi 0, %s39
    %s43 = sphi 0, %s42
    %s59 = sphi 0, %s43
    %s67 = sphi 0, %s69
    %s70 = sphi 0, %s67
    %s71 = sphi 0, %s70
    %s87 = sphi 0, %s71
    %s95 = sphi 0, %s97
    %s98 = sphi 0, %s95
    %s99 = sphi 0, %s98
    %s115 = sphi 0, %s99
  $region4: #{embedding_net_forward.90} parent=0 // loop_header_branch
    %11 = sbr.rel (%p9) target = $region8
  $region5: #{embedding_net_forward.90} parent=0 // loop_body
    %s13 = ssub.s32 %s8, 1
    %s14 = ssub.s32 %s8, 2
    %s24 = sadd.s32 1, %s17
    %p25 = scmp.ge.s32.totalorder %s24, 3
    %s26 = scalar_select %p25, 0, %s24
    %s27 = sadd.s32 1, %s16
    %s28 = scalar_select %p25, %s27, %s16
    %p29 = scmp.ge.s32.totalorder %s28, 1
    %s30 = scalar_select %p29, 0, %s28
    %s31 = sadd.s32 1, %s15
    %s32 = scalar_select %p29, %s31, %s15
    %p33 = scmp.ge.s32.totalorder %s32, 1
    %s34 = scalar_select %p33, 0, %s32
    %s35 = ssub.s32 %s15, %s34
    %s36 = ssub.s32 %s17, %s26
    %s37 = sor.u32 %s35, %s36
    %p38 = scmp.eq.s32.totalorder %s37, 0
    %s40 = sadd.s32 %s39, 1
    %s41 = scalar_select %p38, %s39, %s40
    %p44 = pneg %p38
    %p45 = scmp.eq.s32.totalorder %s8, 2
    %p46 = por %p44, %p45
    %p47 = scmp.ne.s32.totalorder %s39, %s42
    %p48 = scmp.eq.s32.totalorder %s8, 0
    %p49 = por %p47, %p48
    %p50 = scmp.ne.s32.totalorder %s39, %s42
    %p51 = scmp.eq.s32.totalorder %s13, 2
    %p52 = por %p50, %p51
    %p53 = scmp.ne.s32.totalorder %s42, %s43
    %p54 = scmp.eq.s32.totalorder %s13, 0
    %p55 = por %p53, %p54
    %p56 = scmp.ne.s32.totalorder %s42, %s43
    %p57 = scmp.eq.s32.totalorder %s14, 2
    %p58 = por %p56, %p57
    %p60 = scmp.ne.s32.totalorder %s43, %s59
    %p61 = scmp.eq.s32.totalorder %s14, 0
    %p62 = por %p60, %p61
    %s63 = ssub.s32 %s17, %s26
    %s64 = ssub.s32 %s16, %s30
    %s65 = sor.u32 %s63, %s64
    %p66 = scmp.eq.s32.totalorder %s65, 0
    %s68 = sadd.s32 %s67, 1
    %s69 = scalar_select %p66, %s67, %s68
    %p72 = pneg %p66
    %p73 = scmp.eq.s32.totalorder %s8, 2
    %p74 = por %p72, %p73
    %p75 = scmp.ne.s32.totalorder %s67, %s70
    %p76 = scmp.eq.s32.totalorder %s8, 0
    %p77 = por %p75, %p76
    %p78 = scmp.ne.s32.totalorder %s67, %s70
    %p79 = scmp.eq.s32.totalorder %s13, 2
    %p80 = por %p78, %p79
    %p81 = scmp.ne.s32.totalorder %s70, %s71
    %p82 = scmp.eq.s32.totalorder %s13, 0
    %p83 = por %p81, %p82
    %p84 = scmp.ne.s32.totalorder %s70, %s71
    %p85 = scmp.eq.s32.totalorder %s14, 2
    %p86 = por %p84, %p85
    %p88 = scmp.ne.s32.totalorder %s71, %s87
    %p89 = scmp.eq.s32.totalorder %s14, 0
    %p90 = por %p88, %p89
    %s91 = ssub.s32 %s15, %s34
    %s92 = ssub.s32 %s16, %s30
    %s93 = sor.u32 %s91, %s92
    %p94 = scmp.eq.s32.totalorder %s93, 0
    %s96 = sadd.s32 %s95, 1
    %s97 = scalar_select %p94, %s95, %s96
    %p100 = pneg %p94
    %p101 = scmp.eq.s32.totalorder %s8, 2
    %p102 = por %p100, %p101
    %p103 = scmp.ne.s32.totalorder %s95, %s98
    %p104 = scmp.eq.s32.totalorder %s8, 0
    %p105 = por %p103, %p104
    %p106 = scmp.ne.s32.totalorder %s95, %s98
    %p107 = scmp.eq.s32.totalorder %s13, 2
    %p108 = por %p106, %p107
    %p109 = scmp.ne.s32.totalorder %s98, %s99
    %p110 = scmp.eq.s32.totalorder %s13, 0
    %p111 = por %p109, %p110
    %p112 = scmp.ne.s32.totalorder %s98, %s99
    %p113 = scmp.eq.s32.totalorder %s14, 2
    %p114 = por %p112, %p113
    %p116 = scmp.ne.s32.totalorder %s99, %s115
    %p117 = scmp.eq.s32.totalorder %s14, 0
    %p118 = por %p116, %p117
    %p119 = scmp.le.s32.totalorder 1, %s8
    %p120 = scmp.lt.s32.totalorder %s8, 4
    %p121 = pnand %p119, %p120
    %p122 = pneg %p121
    // Predicated region
    $region9: #{embedding_net_forward.90} parent=5 // pred_check
      _
    $region10: #{embedding_net_forward.90} parent=5 // pred_check_branch
      %124 = sbr.rel (%p121) target = $region12
    $region11: #{embedding_net_forward.90} parent=5 // pred_region
      %s125 = ssub.s32 %s8, 1
    $region12: #{embedding_net_forward.90} parent=5 // pred_fallthru
      _
    %p126 = scmp.lt.s32.totalorder %s8, 3
    // Predicated region
    $region13: #{embedding_net_forward.90} parent=5 // pred_check
      %p127 = pneg %p126
    $region14: #{embedding_net_forward.90} parent=5 // pred_check_branch
      %129 = sbr.rel (%p127) target = $region16
    $region15: #{embedding_net_forward.90} parent=5 // pred_region
      // Predicated region
      $region17: #{embedding_net_forward.90} parent=15 // pred_check
        %p130 = pneg %p49
      $region18: #{embedding_net_forward.90} parent=15 // pred_check_branch
        %132 = sbr.rel (%p130) target = $region20
      $region19: #{embedding_net_forward.90} parent=15 // pred_region
        %s133 = smul.u32 3, %s17
        %p134 = scmp.lt.s32.totalorder %s15, 0
        %s135 = scalar_select %p134, %s15, 0
        %p136 = scmp.lt.s32.totalorder %s133, 8
        %s137 = scalar_select %p136, %s133, 8
        %s138 = smul.addr %s135, 9
        %s139 = sadd.s32 %s137, %s138
        %s140 = smul.addr %s139, 4
        %s141 = scalar_lea.vmem %s0, %s140
        %s142 = smul.u32 3, %s17
      $region20: #{embedding_net_forward.90} parent=15 // pred_fallthru
        _
      // Predicated region
      $region21: #{embedding_net_forward.90} parent=15 // pred_check
        %p143 = pneg %p77
      $region22: #{embedding_net_forward.90} parent=15 // pred_check_branch
        %145 = sbr.rel (%p143) target = $region24
      $region23: #{embedding_net_forward.90} parent=15 // pred_region
        %s146 = smul.u32 48, %s17
        %s147 = smul.u32 2, %s16
        %p148 = scmp.lt.s32.totalorder %s146, 143
        %s149 = scalar_select %p148, %s146, 143
        %p150 = scmp.lt.s32.totalorder %s147, 1
        %s151 = scalar_select %p150, %s147, 1
        %s152 = smul.addr %s149, 2
        %s153 = sadd.s32 %s151, %s152
        %s154 = smul.addr %s153, 4
        %s155 = scalar_lea.vmem %s1, %s154
        %s156 = smul.u32 48, %s17
        %s157 = smul.u32 2, %s16
      $region24: #{embedding_net_forward.90} parent=15 // pred_fallthru
        _
    $region16: #{embedding_net_forward.90} parent=5 // pred_fallthru
      _
    %p158 = scmp.le.s32.totalorder 1, %s8
    %p159 = scmp.lt.s32.totalorder %s8, 4
    %p160 = pnand %p158, %p159
    %p161 = pneg %p160
    // Predicated region
    $region25: #{embedding_net_forward.90} parent=5 // pred_check
      _
    $region26: #{embedding_net_forward.90} parent=5 // pred_check_branch
      %163 = sbr.rel (%p160) target = $region28
    $region27: #{embedding_net_forward.90} parent=5 // pred_region
      %s164 = ssub.s32 %s8, 1
      %s165 = smul.u32 3, %s20
      %p166 = scmp.lt.s32.totalorder %s18, 0
      %s167 = scalar_select %p166, %s18, 0
      %p168 = scmp.lt.s32.totalorder %s165, 8
      %s169 = scalar_select %p168, %s165, 8
      %s170 = smul.addr %s167, 9
      %s171 = sadd.s32 %s169, %s170
      %s172 = smul.addr %s171, 4
      %s173 = scalar_lea.vmem %s0, %s172
      %p174 = pneg %p55
      %p175 = pneg %p52
      %s176 = smul.u32 48, %s20
      %s177 = smul.u32 2, %s19
      %p178 = scmp.lt.s32.totalorder %s176, 143
      %s179 = scalar_select %p178, %s176, 143
      %p180 = scmp.lt.s32.totalorder %s177, 1
      %s181 = scalar_select %p180, %s177, 1
      %s182 = smul.addr %s179, 2
      %s183 = sadd.s32 %s181, %s182
      %s184 = smul.addr %s183, 4
      %s185 = scalar_lea.vmem %s1, %s184
      %p186 = pneg %p83
      %p187 = pneg %p80
      %p188 = pneg %p111
      %p189 = pneg %p108
      %s190 = smul.u32 2, %s19
      %p191 = scmp.lt.s32.totalorder %s18, 0
      %s192 = scalar_select %p191, %s18, 0
      %p193 = scmp.lt.s32.totalorder %s190, 1
      %s194 = scalar_select %p193, %s190, 1
      %s195 = smul.addr %s192, 2
      %s196 = sadd.s32 %s194, %s195
      %s197 = smul.addr %s196, 8
      %s198 = scalar_lea.vmem %s2, %s197
      %s199 = smul.u32 3, %s20
      %p200 = scmp.lt.s32.totalorder %s18, 0
      %s201 = scalar_select %p200, %s18, 0
      %p202 = scmp.lt.s32.totalorder %s199, 8
      %s203 = scalar_select %p202, %s199, 8
      %s204 = smul.addr %s201, 9
      %s205 = sadd.s32 %s203, %s204
      %s206 = smul.addr %s205, 4
      %s207 = scalar_lea.vmem %s0, %s206
      %s208 = smul.u32 3, %s20
      %s209 = smul.u32 48, %s20
      %s210 = smul.u32 2, %s19
      %p211 = scmp.lt.s32.totalorder %s209, 143
      %s212 = scalar_select %p211, %s209, 143
      %p213 = scmp.lt.s32.totalorder %s210, 1
      %s214 = scalar_select %p213, %s210, 1
      %s215 = smul.addr %s212, 2
      %s216 = sadd.s32 %s214, %s215
      %s217 = smul.addr %s216, 4
      %s218 = scalar_lea.vmem %s1, %s217
      %s219 = smul.u32 48, %s20
      %s220 = smul.u32 2, %s19
      %s221 = smul.u32 2, %s19
      %p222 = scmp.lt.s32.totalorder %s18, 0
      %s223 = scalar_select %p222, %s18, 0
      %p224 = scmp.lt.s32.totalorder %s221, 1
      %s225 = scalar_select %p224, %s221, 1
      %s226 = smul.addr %s223, 2
      %s227 = sadd.s32 %s225, %s226
      %s228 = smul.addr %s227, 8
      %s229 = scalar_lea.vmem %s2, %s228
      %s230 = smul.u32 2, %s19
      %p232 = scmp.eq.s32.totalorder %s20, 0
      // Predicated region
      $region29: #{embedding_net_forward.90} parent=27 // pred_check
        %p233 = pneg %p232
      $region30: #{embedding_net_forward.90} parent=27 // pred_check_branch
        %235 = sbr.rel (%p233) target = $region32
      $region31: #{embedding_net_forward.90} parent=27 // pred_region
        %236 = vst [vmem:[#allocation2] sm:$0xff] 0.0
        %237 = vst [vmem:[#allocation2 + $0x8] sm:$0xff] 0.0
      $region32: #{embedding_net_forward.90} parent=27 // pred_fallthru
        _
      %v238 = vld [vmem:[#allocation2] sm:$0xff]
      %v239 = vld [vmem:[#allocation2 + $0x8] sm:$0xff]
      %v240 = vld [vmem:[%s207] sm:$0xff]
      %v241 = vld [vmem:[%s207 + $0x8] sm:$0xf]
      %v242 = vld [vmem:[%s218] sm:$0xff]
      %v243 = vld [vmem:[%s218 + $0x8] sm:$0xff]
      %v244 = vld [vmem:[%s218 + $0x10] sm:$0xff]
      %v245 = vld [vmem:[%s218 + $0x18] sm:$0xff]
      %v246 = vld [vmem:[%s218 + $0x20] sm:$0xff]
      %v247 = vld [vmem:[%s218 + $0x28] sm:$0xff]
      %v248 = vld [vmem:[%s218 + $0x30] sm:$0xff]
      %v249 = vld [vmem:[%s218 + $0x38] sm:$0xff]
      %v250 = vld [vmem:[%s218 + $0x40] sm:$0xff]
      %v251 = vld [vmem:[%s218 + $0x48] sm:$0xff]
      %v252 = vld [vmem:[%s218 + $0x50] sm:$0xff]
      %v253 = vld [vmem:[%s218 + $0x58] sm:$0xff]
      %v254 = vld [vmem:[%s218 + $0x60] sm:$0xff]
      %v255 = vld [vmem:[%s218 + $0x68] sm:$0xff]
      %v256 = vld [vmem:[%s218 + $0x70] sm:$0xff]
      %v257 = vld [vmem:[%s218 + $0x78] sm:$0xff]
      %v258 = vld [vmem:[%s218 + $0x80] sm:$0xff]
      %v259 = vld [vmem:[%s218 + $0x88] sm:$0xff]
      %v260 = vld [vmem:[%s218 + $0x90] sm:$0xff]
      %v261 = vld [vmem:[%s218 + $0x98] sm:$0xff]
      %v262 = vld [vmem:[%s218 + $0xa0] sm:$0xff]
      %v263 = vld [vmem:[%s218 + $0xa8] sm:$0xff]
      %v264 = vld [vmem:[%s218 + $0xb0] sm:$0xff]
      %v265 = vld [vmem:[%s218 + $0xb8] sm:$0xff]
      %v266 = vld [vmem:[%s218 + $0xc0] sm:$0xff]
      %v267 = vld [vmem:[%s218 + $0xc8] sm:$0xff]
      %v268 = vld [vmem:[%s218 + $0xd0] sm:$0xff]
      %v269 = vld [vmem:[%s218 + $0xd8] sm:$0xff]
      %v270 = vld [vmem:[%s218 + $0xe0] sm:$0xff]
      %v271 = vld [vmem:[%s218 + $0xe8] sm:$0xff]
      %v272 = vld [vmem:[%s218 + $0xf0] sm:$0xff]
      %v273 = vld [vmem:[%s218 + $0xf8] sm:$0xff]
      %v274 = vld [vmem:[%s218 + $0x100] sm:$0xff]
      %v275 = vld [vmem:[%s218 + $0x108] sm:$0xff]
      %v276 = vld [vmem:[%s218 + $0x110] sm:$0xff]
      %v277 = vld [vmem:[%s218 + $0x118] sm:$0xff]
      %v278 = vld [vmem:[%s218 + $0x120] sm:$0xff]
      %v279 = vld [vmem:[%s218 + $0x128] sm:$0xff]
      %v280 = vld [vmem:[%s218 + $0x130] sm:$0xff]
      %v281 = vld [vmem:[%s218 + $0x138] sm:$0xff]
      %v282 = vld [vmem:[%s218 + $0x140] sm:$0xff]
      %v283 = vld [vmem:[%s218 + $0x148] sm:$0xff]
      %v284 = vld [vmem:[%s218 + $0x150] sm:$0xff]
      %v285 = vld [vmem:[%s218 + $0x158] sm:$0xff]
      %v286 = vld [vmem:[%s218 + $0x160] sm:$0xff]
      %v287 = vld [vmem:[%s218 + $0x168] sm:$0xff]
      %v288 = vld [vmem:[%s218 + $0x170] sm:$0xff]
      %v289 = vld [vmem:[%s218 + $0x178] sm:$0xff]
      %v292 = vunpack.c.l.b16 %v240
      %v293 = vunpack.c.h.b16 %v240
      %v294 = vunpack.c.l.b16 %v241
      %v295 = vpack.c.b16 %v292, %v292
      %v296 = vpack.c.b16 %v293, %v293
      %v297 = vpack.c.b16 %v294, %v294
      %v349 = vunpack.c.l.b16 %v242
      %v350 = vunpack.c.h.b16 %v242
      %v351 = vunpack.c.l.b16 %v243
      %v352 = vunpack.c.h.b16 %v243
      %v353 = vunpack.c.l.b16 %v244
      %v354 = vunpack.c.h.b16 %v244
      %v355 = vunpack.c.l.b16 %v245
      %v356 = vunpack.c.h.b16 %v245
      %v357 = vunpack.c.l.b16 %v246
      %v358 = vunpack.c.h.b16 %v246
      %v359 = vunpack.c.l.b16 %v247
      %v360 = vunpack.c.h.b16 %v247
      %v361 = vunpack.c.l.b16 %v248
      %v362 = vunpack.c.h.b16 %v248
      %v363 = vunpack.c.l.b16 %v249
      %v364 = vunpack.c.h.b16 %v249
      %v365 = vunpack.c.l.b16 %v250
      %v366 = vunpack.c.h.b16 %v250
      %v367 = vunpack.c.l.b16 %v251
      %v368 = vunpack.c.h.b16 %v251
      %v369 = vunpack.c.l.b16 %v252
      %v370 = vunpack.c.h.b16 %v252
      %v371 = vunpack.c.l.b16 %v253
      %v372 = vunpack.c.h.b16 %v253
      %v373 = vunpack.c.l.b16 %v254
      %v374 = vunpack.c.h.b16 %v254
      %v375 = vunpack.c.l.b16 %v255
      %v376 = vunpack.c.h.b16 %v255
      %v377 = vunpack.c.l.b16 %v256
      %v378 = vunpack.c.h.b16 %v256
      %v379 = vunpack.c.l.b16 %v257
      %v380 = vunpack.c.h.b16 %v257
      %v381 = vunpack.c.l.b16 %v258
      %v382 = vunpack.c.h.b16 %v258
      %v383 = vunpack.c.l.b16 %v259
      %v384 = vunpack.c.h.b16 %v259
      %v385 = vunpack.c.l.b16 %v260
      %v386 = vunpack.c.h.b16 %v260
      %v387 = vunpack.c.l.b16 %v261
      %v388 = vunpack.c.h.b16 %v261
      %v389 = vunpack.c.l.b16 %v262
      %v390 = vunpack.c.h.b16 %v262
      %v391 = vunpack.c.l.b16 %v263
      %v392 = vunpack.c.h.b16 %v263
      %v393 = vunpack.c.l.b16 %v264
      %v394 = vunpack.c.h.b16 %v264
      %v395 = vunpack.c.l.b16 %v265
      %v396 = vunpack.c.h.b16 %v265
      %v397 = vunpack.c.l.b16 %v266
      %v398 = vunpack.c.h.b16 %v266
      %v399 = vunpack.c.l.b16 %v267
      %v400 = vunpack.c.h.b16 %v267
      %v401 = vunpack.c.l.b16 %v268
      %v402 = vunpack.c.h.b16 %v268
      %v403 = vunpack.c.l.b16 %v269
      %v404 = vunpack.c.h.b16 %v269
      %v405 = vunpack.c.l.b16 %v270
      %v406 = vunpack.c.h.b16 %v270
      %v407 = vunpack.c.l.b16 %v271
      %v408 = vunpack.c.h.b16 %v271
      %v409 = vunpack.c.l.b16 %v272
      %v410 = vunpack.c.h.b16 %v272
      %v411 = vunpack.c.l.b16 %v273
      %v412 = vunpack.c.h.b16 %v273
      %v413 = vunpack.c.l.b16 %v274
      %v414 = vunpack.c.h.b16 %v274
      %v415 = vunpack.c.l.b16 %v275
      %v416 = vunpack.c.h.b16 %v275
      %v417 = vunpack.c.l.b16 %v276
      %v418 = vunpack.c.h.b16 %v276
      %v419 = vunpack.c.l.b16 %v277
      %v420 = vunpack.c.h.b16 %v277
      %v421 = vunpack.c.l.b16 %v278
      %v422 = vunpack.c.h.b16 %v278
      %v423 = vunpack.c.l.b16 %v279
      %v424 = vunpack.c.h.b16 %v279
      %v425 = vunpack.c.l.b16 %v280
      %v426 = vunpack.c.h.b16 %v280
      %v427 = vunpack.c.l.b16 %v281
      %v428 = vunpack.c.h.b16 %v281
      %v429 = vunpack.c.l.b16 %v282
      %v430 = vunpack.c.h.b16 %v282
      %v431 = vunpack.c.l.b16 %v283
      %v432 = vunpack.c.h.b16 %v283
      %v433 = vunpack.c.l.b16 %v284
      %v434 = vunpack.c.h.b16 %v284
      %v435 = vunpack.c.l.b16 %v285
      %v436 = vunpack.c.h.b16 %v285
      %v437 = vunpack.c.l.b16 %v286
      %v438 = vunpack.c.h.b16 %v286
      %v439 = vunpack.c.l.b16 %v287
      %v440 = vunpack.c.h.b16 %v287
      %v441 = vunpack.c.l.b16 %v288
      %v442 = vunpack.c.h.b16 %v288
      %v443 = vunpack.c.l.b16 %v289
      %v444 = vunpack.c.h.b16 %v289
      %v445 = vpack.c.b16 %v351, %v349
      %v446 = vpack.c.b16 %v352, %v350
      %v447 = vpack.c.b16 %v355, %v353
      %v448 = vpack.c.b16 %v356, %v354
      %v449 = vpack.c.b16 %v359, %v357
      %v450 = vpack.c.b16 %v360, %v358
      %v451 = vpack.c.b16 %v363, %v361
      %v452 = vpack.c.b16 %v364, %v362
      %v453 = vpack.c.b16 %v367, %v365
      %v454 = vpack.c.b16 %v368, %v366
      %v455 = vpack.c.b16 %v371, %v369
      %v456 = vpack.c.b16 %v372, %v370
      %v457 = vpack.c.b16 %v375, %v373
      %v458 = vpack.c.b16 %v376, %v374
      %v459 = vpack.c.b16 %v379, %v377
      %v460 = vpack.c.b16 %v380, %v378
      %v461 = vpack.c.b16 %v383, %v381
      %v462 = vpack.c.b16 %v384, %v382
      %v463 = vpack.c.b16 %v387, %v385
      %v464 = vpack.c.b16 %v388, %v386
      %v465 = vpack.c.b16 %v391, %v389
      %v466 = vpack.c.b16 %v392, %v390
      %v467 = vpack.c.b16 %v395, %v393
      %v468 = vpack.c.b16 %v396, %v394
      %v469 = vpack.c.b16 %v399, %v397
      %v470 = vpack.c.b16 %v400, %v398
      %v471 = vpack.c.b16 %v403, %v401
      %v472 = vpack.c.b16 %v404, %v402
      %v473 = vpack.c.b16 %v407, %v405
      %v474 = vpack.c.b16 %v408, %v406
      %v475 = vpack.c.b16 %v411, %v409
      %v476 = vpack.c.b16 %v412, %v410
      %v477 = vpack.c.b16 %v415, %v413
      %v478 = vpack.c.b16 %v416, %v414
      %v479 = vpack.c.b16 %v419, %v417
      %v480 = vpack.c.b16 %v420, %v418
      %v481 = vpack.c.b16 %v423, %v421
      %v482 = vpack.c.b16 %v424, %v422
      %v483 = vpack.c.b16 %v427, %v425
      %v484 = vpack.c.b16 %v428, %v426
      %v485 = vpack.c.b16 %v431, %v429
      %v486 = vpack.c.b16 %v432, %v430
      %v487 = vpack.c.b16 %v435, %v433
      %v488 = vpack.c.b16 %v436, %v434
      %v489 = vpack.c.b16 %v439, %v437
      %v490 = vpack.c.b16 %v440, %v438
      %v491 = vpack.c.b16 %v443, %v441
      %v492 = vpack.c.b16 %v444, %v442
      %541 = vmatprep.subr.bf16.mxu0 %v446
      %542 = vmatpush1.bf16.msra.mxu0 %v445
      %543 = vmatprep.subr.bf16.mxu0 %v448
      %544 = vmatpush1.bf16.msra.mxu0 %v447
      %545 = vmatprep.subr.bf16.mxu0 %v450
      %546 = vmatpush1.bf16.msra.mxu0 %v449
      %547 = vmatprep.subr.bf16.mxu0 %v452
      %548 = vmatpush1.bf16.msra.mxu0 %v451
      %549 = vmatprep.subr.bf16.mxu0 %v454
      %550 = vmatpush1.bf16.msra.mxu0 %v453
      %551 = vmatprep.subr.bf16.mxu0 %v456
      %552 = vmatpush1.bf16.msra.mxu0 %v455
      %553 = vmatprep.subr.bf16.mxu0 %v458
      %554 = vmatpush1.bf16.msra.mxu0 %v457
      %555 = vmatprep.subr.bf16.mxu0 %v460
      %556 = vmatpush1.bf16.msra.mxu0 %v459
      %557 = vmatprep.subr.bf16.mxu0 %v462
      %558 = vmatpush1.bf16.msra.mxu0 %v461
      %559 = vmatprep.subr.bf16.mxu0 %v464
      %560 = vmatpush1.bf16.msra.mxu0 %v463
      %561 = vmatprep.subr.bf16.mxu0 %v466
      %562 = vmatpush1.bf16.msra.mxu0 %v465
      %563 = vmatprep.subr.bf16.mxu0 %v468
      %564 = vmatpush1.bf16.msra.mxu0 %v467
      %565 = vmatprep.subr.bf16.mxu0 %v470
      %566 = vmatpush1.bf16.msra.mxu0 %v469
      %567 = vmatprep.subr.bf16.mxu0 %v472
      %568 = vmatpush1.bf16.msra.mxu0 %v471
      %569 = vmatprep.subr.bf16.mxu0 %v474
      %570 = vmatpush1.bf16.msra.mxu0 %v473
      %571 = vmatprep.subr.bf16.mxu0 %v476
      %572 = vmatpush1.bf16.msra.mxu0 %v475
      %573 = vmatprep.mubr.bf16.mxu0 %v296
      %574 = vmatmul.mubr.bf16.gmra.mrb[0].mxu0 %v295
      %v575 = vpop.f32.mrb[0].mxu0
      %v576 = vadd.f32 0.0, %v575
      %v577 = vpop.f32.mrb[0].mxu0
      %v578 = vadd.f32 0.0, %v577
      %v579 = vpop.f32.mrb[0].mxu0
      %v580 = vpop.f32.mrb[0].mxu0
      %581 = vdwg.mxu0
      %582 = vmatprep.subr.bf16.mxu0 %v478
      %583 = vmatpush1.bf16.msra.mxu0 %v477
      %584 = vmatprep.subr.bf16.mxu0 %v480
      %585 = vmatpush1.bf16.msra.mxu0 %v479
      %586 = vmatprep.subr.bf16.mxu0 %v482
      %587 = vmatpush1.bf16.msra.mxu0 %v481
      %588 = vmatprep.subr.bf16.mxu0 %v484
      %589 = vmatpush1.bf16.msra.mxu0 %v483
      %590 = vmatprep.subr.bf16.mxu0 %v486
      %591 = vmatpush1.bf16.msra.mxu0 %v485
      %592 = vmatprep.subr.bf16.mxu0 %v488
      %593 = vmatpush1.bf16.msra.mxu0 %v487
      %594 = vmatprep.subr.bf16.mxu0 %v490
      %595 = vmatpush1.bf16.msra.mxu0 %v489
      %596 = vmatprep.subr.bf16.mxu0 %v492
      %597 = vmatpush1.bf16.msra.mxu0 %v491
      %598 = vmatprep.subr.bf16.mxu0 0
      %599 = vmatpush1.bf16.msra.mxu0 0
      %600 = vmatprep.subr.bf16.mxu0 0
      %601 = vmatpush1.bf16.msra.mxu0 0
      %602 = vmatprep.subr.bf16.mxu0 0
      %603 = vmatpush1.bf16.msra.mxu0 0
      %604 = vmatprep.subr.bf16.mxu0 0
      %605 = vmatpush1.bf16.msra.mxu0 0
      %606 = vmatprep.subr.bf16.mxu0 0
      %607 = vmatpush1.bf16.msra.mxu0 0
      %608 = vmatprep.subr.bf16.mxu0 0
      %609 = vmatpush1.bf16.msra.mxu0 0
      %610 = vmatprep.subr.bf16.mxu0 0
      %611 = vmatpush1.bf16.msra.mxu0 0
      %612 = vmatprep.subr.bf16.mxu0 0
      %613 = vmatpush1.bf16.msra.mxu0 0
      %614 = vmatprep.mubr.bf16.mxu0 0
      %615 = vmatmul.mubr.bf16.gmra.mrb[0].mxu0 %v297
      %v616 = vpop.f32.mrb[0].mxu0
      %v617 = vadd.f32 %v576, %v616
      %v618 = vpop.f32.mrb[0].mxu0
      %v619 = vadd.f32 %v578, %v618
      %v620 = vpop.f32.mrb[0].mxu0
      %v621 = vpop.f32.mrb[0].mxu0
      %622 = vdwg.mxu0
      %v623 = vadd.f32 %v238, %v617
      %v624 = vadd.f32 %v239, %v619
      %625 = vst [vmem:[#allocation2] sm:$0xff] %v623
      %626 = vst [vmem:[#allocation2 + $0x8] sm:$0xff] %v624
      %p627 = scmp.eq.s32.totalorder %s20, 2
      // Predicated region
      $region33: #{embedding_net_forward.90} parent=27 // pred_check
        %p628 = pneg %p627
      $region34: #{embedding_net_forward.90} parent=27 // pred_check_branch
        %630 = sbr.rel (%p628) target = $region36
      $region35: #{embedding_net_forward.90} parent=27 // pred_region
        %v631 = vld [vmem:[#allocation2] sm:$0xff]
        %v632 = vld [vmem:[#allocation2 + $0x8] sm:$0xff]
        %633 = vst [vmem:[%s229] sm:$0xff] %v631
        %634 = vst [vmem:[%s229 + $0x8] sm:$0xff] %v632
      $region36: #{embedding_net_forward.90} parent=27 // pred_fallthru
        _
      %s635 = smul.u32 2, %s19
      %p636 = scmp.lt.s32.totalorder %s18, 0
      %s637 = scalar_select %p636, %s18, 0
      %p638 = scmp.lt.s32.totalorder %s635, 1
      %s639 = scalar_select %p638, %s635, 1
      %s640 = smul.addr %s637, 2
      %s641 = sadd.s32 %s639, %s640
      %s642 = smul.addr %s641, 8
      %s643 = scalar_lea.vmem %s2, %s642
      // Predicated region
      $region37: #{embedding_net_forward.90} parent=27 // pred_check
        %p644 = pneg %p108
      $region38: #{embedding_net_forward.90} parent=27 // pred_check_branch
        %646 = sbr.rel (%p644) target = $region40
      $region39: #{embedding_net_forward.90} parent=27 // pred_region
        %s647 = smul.u32 2, %s19
      $region40: #{embedding_net_forward.90} parent=27 // pred_fallthru
        _
      // Predicated region
      $region41: #{embedding_net_forward.90} parent=27 // pred_check
        %p648 = pneg %p108
      $region42: #{embedding_net_forward.90} parent=27 // pred_check_branch
        %650 = sbr.rel (%p648) target = $region44
      $region43: #{embedding_net_forward.90} parent=27 // pred_region
        %s651 = smul.u32 2, %s19
        %p652 = scmp.lt.s32.totalorder %s18, 0
        %s653 = scalar_select %p652, %s18, 0
        %p654 = scmp.lt.s32.totalorder %s651, 1
        %s655 = scalar_select %p654, %s651, 1
        %s656 = smul.addr %s653, 2
        %s657 = sadd.s32 %s655, %s656
        %s658 = smul.addr %s657, 8
        %s659 = scalar_lea.vmem %s2, %s658
      $region44: #{embedding_net_forward.90} parent=27 // pred_fallthru
        _
    $region28: #{embedding_net_forward.90} parent=5 // pred_fallthru
      _
    %p660 = scmp.le.s32.totalorder 2, %s8
    // Predicated region
    $region45: #{embedding_net_forward.90} parent=5 // pred_check
      %p661 = pneg %p660
    $region46: #{embedding_net_forward.90} parent=5 // pred_check_branch
      %663 = sbr.rel (%p661) target = $region48
    $region47: #{embedding_net_forward.90} parent=5 // pred_region
      %s664 = ssub.s32 %s8, 2
    $region48: #{embedding_net_forward.90} parent=5 // pred_fallthru
      _
  $region6: #{embedding_net_forward.90} parent=0 // loop_footer
    %s12 = sadd.s32 1, %s8
  $region7: #{embedding_net_forward.90} parent=0 // loop_footer_branch
    %7 = sbr.rel target = $region3
  $region8: #{embedding_net_forward.90} parent=0 // loop_exit
    _

// kernel: embedding_net_forward.93
$region0: #{embedding_net_forward.93}
  #allocation0 [shape = 'u32[]', space=smem, size = 0x4, offset = 0x4, fixed_abs, tag = 'smem constant byte address 0x4 - core index']
  #allocation1 [shape = 'u32[144,128]{1,0:T(1,128)}', space=vmem, size = 0x12000, scoped, tag = 'internal scratch']
  #allocation2 [shape = 'f32[8,256]{1,0:T(8,128)}', space=vmem, size = 0x2000, scoped, tag = 'scratch operand']
  %s0 = inlined_call_operand.vmem [shape: bf16[8,2304], index: 0, kind: input, shape index: {}]
  %s1 = inlined_call_operand.vmem [shape: bf16[2304,256], index: 1, kind: input, shape index: {}]
  %s2 = inlined_call_operand.vmem [shape: f32[8,256], index: 2, kind: output, shape index: {}]
  %s3 = sld [smem:[#allocation0]]
  $region49: #{embedding_net_forward.93} parent=0
    _
  %s5 = ssub.s32 1, %s3
  %s6 = scalar_select 0, %s5, %s3
  loop: start=0, step=1, limit=8
  $region2: #{embedding_net_forward.93} parent=0 // loop_pre_header
    _
  $region3: #{embedding_net_forward.93} parent=0 // loop_header
    %s8 = sphi 0, %s12
    %p9 = scmp.ge.s32.totalorder %s8, 8
    %s15 = sphi 0, %s34
    %s16 = sphi 0, %s30
    %s17 = sphi 0, %s26
    %s18 = sphi 0, %s15
    %s19 = sphi 0, %s16
    %s20 = sphi 0, %s17
    %s21 = sphi 0, %s18
    %s22 = sphi 0, %s19
    %s23 = sphi 0, %s20
    %s39 = sphi 0, %s41
    %s42 = sphi 0, %s39
    %s43 = sphi 0, %s42
    %s59 = sphi 0, %s43
    %s67 = sphi 0, %s69
    %s70 = sphi 0, %s67
    %s71 = sphi 0, %s70
    %s87 = sphi 0, %s71
    %s95 = sphi 0, %s97
    %s98 = sphi 0, %s95
    %s99 = sphi 0, %s98
    %s115 = sphi 0, %s99
  $region4: #{embedding_net_forward.93} parent=0 // loop_header_branch
    %11 = sbr.rel (%p9) target = $region8
  $region5: #{embedding_net_forward.93} parent=0 // loop_body
    %s13 = ssub.s32 %s8, 1
    %s14 = ssub.s32 %s8, 2
    %s24 = sadd.s32 1, %s17
    %p25 = scmp.ge.s32.totalorder %s24, 6
    %s26 = scalar_select %p25, 0, %s24
    %s27 = sadd.s32 1, %s16
    %s28 = scalar_select %p25, %s27, %s16
    %p29 = scmp.ge.s32.totalorder %s28, 1
    %s30 = scalar_select %p29, 0, %s28
    %s31 = sadd.s32 1, %s15
    %s32 = scalar_select %p29, %s31, %s15
    %p33 = scmp.ge.s32.totalorder %s32, 1
    %s34 = scalar_select %p33, 0, %s32
    %s35 = ssub.s32 %s15, %s34
    %s36 = ssub.s32 %s17, %s26
    %s37 = sor.u32 %s35, %s36
    %p38 = scmp.eq.s32.totalorder %s37, 0
    %s40 = sadd.s32 %s39, 1
    %s41 = scalar_select %p38, %s39, %s40
    %p44 = pneg %p38
    %p45 = scmp.eq.s32.totalorder %s8, 5
    %p46 = por %p44, %p45
    %p47 = scmp.ne.s32.totalorder %s39, %s42
    %p48 = scmp.eq.s32.totalorder %s8, 0
    %p49 = por %p47, %p48
    %p50 = scmp.ne.s32.totalorder %s39, %s42
    %p51 = scmp.eq.s32.totalorder %s13, 5
    %p52 = por %p50, %p51
    %p53 = scmp.ne.s32.totalorder %s42, %s43
    %p54 = scmp.eq.s32.totalorder %s13, 0
    %p55 = por %p53, %p54
    %p56 = scmp.ne.s32.totalorder %s42, %s43
    %p57 = scmp.eq.s32.totalorder %s14, 5
    %p58 = por %p56, %p57
    %p60 = scmp.ne.s32.totalorder %s43, %s59
    %p61 = scmp.eq.s32.totalorder %s14, 0
    %p62 = por %p60, %p61
    %s63 = ssub.s32 %s17, %s26
    %s64 = ssub.s32 %s16, %s30
    %s65 = sor.u32 %s63, %s64
    %p66 = scmp.eq.s32.totalorder %s65, 0
    %s68 = sadd.s32 %s67, 1
    %s69 = scalar_select %p66, %s67, %s68
    %p72 = pneg %p66
    %p73 = scmp.eq.s32.totalorder %s8, 5
    %p74 = por %p72, %p73
    %p75 = scmp.ne.s32.totalorder %s67, %s70
    %p76 = scmp.eq.s32.totalorder %s8, 0
    %p77 = por %p75, %p76
    %p78 = scmp.ne.s32.totalorder %s67, %s70
    %p79 = scmp.eq.s32.totalorder %s13, 5
    %p80 = por %p78, %p79
    %p81 = scmp.ne.s32.totalorder %s70, %s71
    %p82 = scmp.eq.s32.totalorder %s13, 0
    %p83 = por %p81, %p82
    %p84 = scmp.ne.s32.totalorder %s70, %s71
    %p85 = scmp.eq.s32.totalorder %s14, 5
    %p86 = por %p84, %p85
    %p88 = scmp.ne.s32.totalorder %s71, %s87
    %p89 = scmp.eq.s32.totalorder %s14, 0
    %p90 = por %p88, %p89
    %s91 = ssub.s32 %s15, %s34
    %s92 = ssub.s32 %s16, %s30
    %s93 = sor.u32 %s91, %s92
    %p94 = scmp.eq.s32.totalorder %s93, 0
    %s96 = sadd.s32 %s95, 1
    %s97 = scalar_select %p94, %s95, %s96
    %p100 = pneg %p94
    %p101 = scmp.eq.s32.totalorder %s8, 5
    %p102 = por %p100, %p101
    %p103 = scmp.ne.s32.totalorder %s95, %s98
    %p104 = scmp.eq.s32.totalorder %s8, 0
    %p105 = por %p103, %p104
    %p106 = scmp.ne.s32.totalorder %s95, %s98
    %p107 = scmp.eq.s32.totalorder %s13, 5
    %p108 = por %p106, %p107
    %p109 = scmp.ne.s32.totalorder %s98, %s99
    %p110 = scmp.eq.s32.totalorder %s13, 0
    %p111 = por %p109, %p110
    %p112 = scmp.ne.s32.totalorder %s98, %s99
    %p113 = scmp.eq.s32.totalorder %s14, 5
    %p114 = por %p112, %p113
    %p116 = scmp.ne.s32.totalorder %s99, %s115
    %p117 = scmp.eq.s32.totalorder %s14, 0
    %p118 = por %p116, %p117
    %p119 = scmp.le.s32.totalorder 1, %s8
    %p120 = scmp.lt.s32.totalorder %s8, 7
    %p121 = pnand %p119, %p120
    %p122 = pneg %p121
    // Predicated region
    $region9: #{embedding_net_forward.93} parent=5 // pred_check
      _
    $region10: #{embedding_net_forward.93} parent=5 // pred_check_branch
      %124 = sbr.rel (%p121) target = $region12
    $region11: #{embedding_net_forward.93} parent=5 // pred_region
      %s125 = ssub.s32 %s8, 1
    $region12: #{embedding_net_forward.93} parent=5 // pred_fallthru
      _
    %p126 = scmp.lt.s32.totalorder %s8, 6
    // Predicated region
    $region13: #{embedding_net_forward.93} parent=5 // pred_check
      %p127 = pneg %p126
    $region14: #{embedding_net_forward.93} parent=5 // pred_check_branch
      %129 = sbr.rel (%p127) target = $region16
    $region15: #{embedding_net_forward.93} parent=5 // pred_region
      // Predicated region
      $region17: #{embedding_net_forward.93} parent=15 // pred_check
        %p130 = pneg %p49
      $region18: #{embedding_net_forward.93} parent=15 // pred_check_branch
        %132 = sbr.rel (%p130) target = $region20
      $region19: #{embedding_net_forward.93} parent=15 // pred_region
        %s133 = smul.u32 3, %s17
        %p134 = scmp.lt.s32.totalorder %s15, 0
        %s135 = scalar_select %p134, %s15, 0
        %p136 = scmp.lt.s32.totalorder %s133, 17
        %s137 = scalar_select %p136, %s133, 17
        %s138 = smul.addr %s135, 18
        %s139 = sadd.s32 %s137, %s138
        %s140 = smul.addr %s139, 4
        %s141 = scalar_lea.vmem %s0, %s140
        %s142 = smul.u32 3, %s17
      $region20: #{embedding_net_forward.93} parent=15 // pred_fallthru
        _
      // Predicated region
      $region21: #{embedding_net_forward.93} parent=15 // pred_check
        %p143 = pneg %p77
      $region22: #{embedding_net_forward.93} parent=15 // pred_check_branch
        %145 = sbr.rel (%p143) target = $region24
      $region23: #{embedding_net_forward.93} parent=15 // pred_region
        %s146 = smul.u32 48, %s17
        %s147 = smul.u32 2, %s16
        %p148 = scmp.lt.s32.totalorder %s146, 287
        %s149 = scalar_select %p148, %s146, 287
        %p150 = scmp.lt.s32.totalorder %s147, 1
        %s151 = scalar_select %p150, %s147, 1
        %s152 = smul.addr %s149, 2
        %s153 = sadd.s32 %s151, %s152
        %s154 = smul.addr %s153, 4
        %s155 = scalar_lea.vmem %s1, %s154
        %s156 = smul.u32 48, %s17
        %s157 = smul.u32 2, %s16
      $region24: #{embedding_net_forward.93} parent=15 // pred_fallthru
        _
    $region16: #{embedding_net_forward.93} parent=5 // pred_fallthru
      _
    %p158 = scmp.le.s32.totalorder 1, %s8
    %p159 = scmp.lt.s32.totalorder %s8, 7
    %p160 = pnand %p158, %p159
    %p161 = pneg %p160
    // Predicated region
    $region25: #{embedding_net_forward.93} parent=5 // pred_check
      _
    $region26: #{embedding_net_forward.93} parent=5 // pred_check_branch
      %163 = sbr.rel (%p160) target = $region28
    $region27: #{embedding_net_forward.93} parent=5 // pred_region
      %s164 = ssub.s32 %s8, 1
      %s165 = smul.u32 3, %s20
      %p166 = scmp.lt.s32.totalorder %s18, 0
      %s167 = scalar_select %p166, %s18, 0
      %p168 = scmp.lt.s32.totalorder %s165, 17
      %s169 = scalar_select %p168, %s165, 17
      %s170 = smul.addr %s167, 18
      %s171 = sadd.s32 %s169, %s170
      %s172 = smul.addr %s171, 4
      %s173 = scalar_lea.vmem %s0, %s172
      %p174 = pneg %p55
      %p175 = pneg %p52
      %s176 = smul.u32 48, %s20
      %s177 = smul.u32 2, %s19
      %p178 = scmp.lt.s32.totalorder %s176, 287
      %s179 = scalar_select %p178, %s176, 287
      %p180 = scmp.lt.s32.totalorder %s177, 1
      %s181 = scalar_select %p180, %s177, 1
      %s182 = smul.addr %s179, 2
      %s183 = sadd.s32 %s181, %s182
      %s184 = smul.addr %s183, 4
      %s185 = scalar_lea.vmem %s1, %s184
      %p186 = pneg %p83
      %p187 = pneg %p80
      %p188 = pneg %p111
      %p189 = pneg %p108
      %s190 = smul.u32 2, %s19
      %p191 = scmp.lt.s32.totalorder %s18, 0
      %s192 = scalar_select %p191, %s18, 0
      %p193 = scmp.lt.s32.totalorder %s190, 1
      %s194 = scalar_select %p193, %s190, 1
      %s195 = smul.addr %s192, 2
      %s196 = sadd.s32 %s194, %s195
      %s197 = smul.addr %s196, 8
      %s198 = scalar_lea.vmem %s2, %s197
      %s199 = smul.u32 3, %s20
      %p200 = scmp.lt.s32.totalorder %s18, 0
      %s201 = scalar_select %p200, %s18, 0
      %p202 = scmp.lt.s32.totalorder %s199, 17
      %s203 = scalar_select %p202, %s199, 17
      %s204 = smul.addr %s201, 18
      %s205 = sadd.s32 %s203, %s204
      %s206 = smul.addr %s205, 4
      %s207 = scalar_lea.vmem %s0, %s206
      %s208 = smul.u32 3, %s20
      %s209 = smul.u32 48, %s20
      %s210 = smul.u32 2, %s19
      %p211 = scmp.lt.s32.totalorder %s209, 287
      %s212 = scalar_select %p211, %s209, 287
      %p213 = scmp.lt.s32.totalorder %s210, 1
      %s214 = scalar_select %p213, %s210, 1
      %s215 = smul.addr %s212, 2
      %s216 = sadd.s32 %s214, %s215
      %s217 = smul.addr %s216, 4
      %s218 = scalar_lea.vmem %s1, %s217
      %s219 = smul.u32 48, %s20
      %s220 = smul.u32 2, %s19
      %s221 = smul.u32 2, %s19
      %p222 = scmp.lt.s32.totalorder %s18, 0
      %s223 = scalar_select %p222, %s18, 0
      %p224 = scmp.lt.s32.totalorder %s221, 1
      %s225 = scalar_select %p224, %s221, 1
      %s226 = smul.addr %s223, 2
      %s227 = sadd.s32 %s225, %s226
      %s228 = smul.addr %s227, 8
      %s229 = scalar_lea.vmem %s2, %s228
      %s230 = smul.u32 2, %s19
      %p232 = scmp.eq.s32.totalorder %s20, 0
      // Predicated region
      $region29: #{embedding_net_forward.93} parent=27 // pred_check
        %p233 = pneg %p232
      $region30: #{embedding_net_forward.93} parent=27 // pred_check_branch
        %235 = sbr.rel (%p233) target = $region32
      $region31: #{embedding_net_forward.93} parent=27 // pred_region
        %236 = vst [vmem:[#allocation2] sm:$0xff] 0.0
        %237 = vst [vmem:[#allocation2 + $0x8] sm:$0xff] 0.0
      $region32: #{embedding_net_forward.93} parent=27 // pred_fallthru
        _
      %v238 = vld [vmem:[#allocation2] sm:$0xff]
      %v239 = vld [vmem:[#allocation2 + $0x8] sm:$0xff]
      %v240 = vld [vmem:[%s207] sm:$0xff]
      %v241 = vld [vmem:[%s207 + $0x8] sm:$0xf]
      %v242 = vld [vmem:[%s218] sm:$0xff]
      %v243 = vld [vmem:[%s218 + $0x8] sm:$0xff]
      %v244 = vld [vmem:[%s218 + $0x10] sm:$0xff]
      %v245 = vld [vmem:[%s218 + $0x18] sm:$0xff]
      %v246 = vld [vmem:[%s218 + $0x20] sm:$0xff]
      %v247 = vld [vmem:[%s218 + $0x28] sm:$0xff]
      %v248 = vld [vmem:[%s218 + $0x30] sm:$0xff]
      %v249 = vld [vmem:[%s218 + $0x38] sm:$0xff]
      %v250 = vld [vmem:[%s218 + $0x40] sm:$0xff]
      %v251 = vld [vmem:[%s218 + $0x48] sm:$0xff]
      %v252 = vld [vmem:[%s218 + $0x50] sm:$0xff]
      %v253 = vld [vmem:[%s218 + $0x58] sm:$0xff]
      %v254 = vld [vmem:[%s218 + $0x60] sm:$0xff]
      %v255 = vld [vmem:[%s218 + $0x68] sm:$0xff]
      %v256 = vld [vmem:[%s218 + $0x70] sm:$0xff]
      %v257 = vld [vmem:[%s218 + $0x78] sm:$0xff]
      %v258 = vld [vmem:[%s218 + $0x80] sm:$0xff]
      %v259 = vld [vmem:[%s218 + $0x88] sm:$0xff]
      %v260 = vld [vmem:[%s218 + $0x90] sm:$0xff]
      %v261 = vld [vmem:[%s218 + $0x98] sm:$0xff]
      %v262 = vld [vmem:[%s218 + $0xa0] sm:$0xff]
      %v263 = vld [vmem:[%s218 + $0xa8] sm:$0xff]
      %v264 = vld [vmem:[%s218 + $0xb0] sm:$0xff]
      %v265 = vld [vmem:[%s218 + $0xb8] sm:$0xff]
      %v266 = vld [vmem:[%s218 + $0xc0] sm:$0xff]
      %v267 = vld [vmem:[%s218 + $0xc8] sm:$0xff]
      %v268 = vld [vmem:[%s218 + $0xd0] sm:$0xff]
      %v269 = vld [vmem:[%s218 + $0xd8] sm:$0xff]
      %v270 = vld [vmem:[%s218 + $0xe0] sm:$0xff]
      %v271 = vld [vmem:[%s218 + $0xe8] sm:$0xff]
      %v272 = vld [vmem:[%s218 + $0xf0] sm:$0xff]
      %v273 = vld [vmem:[%s218 + $0xf8] sm:$0xff]
      %v274 = vld [vmem:[%s218 + $0x100] sm:$0xff]
      %v275 = vld [vmem:[%s218 + $0x108] sm:$0xff]
      %v276 = vld [vmem:[%s218 + $0x110] sm:$0xff]
      %v277 = vld [vmem:[%s218 + $0x118] sm:$0xff]
      %v278 = vld [vmem:[%s218 + $0x120] sm:$0xff]
      %v279 = vld [vmem:[%s218 + $0x128] sm:$0xff]
      %v280 = vld [vmem:[%s218 + $0x130] sm:$0xff]
      %v281 = vld [vmem:[%s218 + $0x138] sm:$0xff]
      %v282 = vld [vmem:[%s218 + $0x140] sm:$0xff]
      %v283 = vld [vmem:[%s218 + $0x148] sm:$0xff]
      %v284 = vld [vmem:[%s218 + $0x150] sm:$0xff]
      %v285 = vld [vmem:[%s218 + $0x158] sm:$0xff]
      %v286 = vld [vmem:[%s218 + $0x160] sm:$0xff]
      %v287 = vld [vmem:[%s218 + $0x168] sm:$0xff]
      %v288 = vld [vmem:[%s218 + $0x170] sm:$0xff]
      %v289 = vld [vmem:[%s218 + $0x178] sm:$0xff]
      %v292 = vunpack.c.l.b16 %v240
      %v293 = vunpack.c.h.b16 %v240
      %v294 = vunpack.c.l.b16 %v241
      %v295 = vpack.c.b16 %v292, %v292
      %v296 = vpack.c.b16 %v293, %v293
      %v297 = vpack.c.b16 %v294, %v294
      %v349 = vunpack.c.l.b16 %v242
      %v350 = vunpack.c.h.b16 %v242
      %v351 = vunpack.c.l.b16 %v243
      %v352 = vunpack.c.h.b16 %v243
      %v353 = vunpack.c.l.b16 %v244
      %v354 = vunpack.c.h.b16 %v244
      %v355 = vunpack.c.l.b16 %v245
      %v356 = vunpack.c.h.b16 %v245
      %v357 = vunpack.c.l.b16 %v246
      %v358 = vunpack.c.h.b16 %v246
      %v359 = vunpack.c.l.b16 %v247
      %v360 = vunpack.c.h.b16 %v247
      %v361 = vunpack.c.l.b16 %v248
      %v362 = vunpack.c.h.b16 %v248
      %v363 = vunpack.c.l.b16 %v249
      %v364 = vunpack.c.h.b16 %v249
      %v365 = vunpack.c.l.b16 %v250
      %v366 = vunpack.c.h.b16 %v250
      %v367 = vunpack.c.l.b16 %v251
      %v368 = vunpack.c.h.b16 %v251
      %v369 = vunpack.c.l.b16 %v252
      %v370 = vunpack.c.h.b16 %v252
      %v371 = vunpack.c.l.b16 %v253
      %v372 = vunpack.c.h.b16 %v253
      %v373 = vunpack.c.l.b16 %v254
      %v374 = vunpack.c.h.b16 %v254
      %v375 = vunpack.c.l.b16 %v255
      %v376 = vunpack.c.h.b16 %v255
      %v377 = vunpack.c.l.b16 %v256
      %v378 = vunpack.c.h.b16 %v256
      %v379 = vunpack.c.l.b16 %v257
      %v380 = vunpack.c.h.b16 %v257
      %v381 = vunpack.c.l.b16 %v258
      %v382 = vunpack.c.h.b16 %v258
      %v383 = vunpack.c.l.b16 %v259
      %v384 = vunpack.c.h.b16 %v259
      %v385 = vunpack.c.l.b16 %v260
      %v386 = vunpack.c.h.b16 %v260
      %v387 = vunpack.c.l.b16 %v261
      %v388 = vunpack.c.h.b16 %v261
      %v389 = vunpack.c.l.b16 %v262
      %v390 = vunpack.c.h.b16 %v262
      %v391 = vunpack.c.l.b16 %v263
      %v392 = vunpack.c.h.b16 %v263
      %v393 = vunpack.c.l.b16 %v264
      %v394 = vunpack.c.h.b16 %v264
      %v395 = vunpack.c.l.b16 %v265
      %v396 = vunpack.c.h.b16 %v265
      %v397 = vunpack.c.l.b16 %v266
      %v398 = vunpack.c.h.b16 %v266
      %v399 = vunpack.c.l.b16 %v267
      %v400 = vunpack.c.h.b16 %v267
      %v401 = vunpack.c.l.b16 %v268
      %v402 = vunpack.c.h.b16 %v268
      %v403 = vunpack.c.l.b16 %v269
      %v404 = vunpack.c.h.b16 %v269
      %v405 = vunpack.c.l.b16 %v270
      %v406 = vunpack.c.h.b16 %v270
      %v407 = vunpack.c.l.b16 %v271
      %v408 = vunpack.c.h.b16 %v271
      %v409 = vunpack.c.l.b16 %v272
      %v410 = vunpack.c.h.b16 %v272
      %v411 = vunpack.c.l.b16 %v273
      %v412 = vunpack.c.h.b16 %v273
      %v413 = vunpack.c.l.b16 %v274
      %v414 = vunpack.c.h.b16 %v274
      %v415 = vunpack.c.l.b16 %v275
      %v416 = vunpack.c.h.b16 %v275
      %v417 = vunpack.c.l.b16 %v276
      %v418 = vunpack.c.h.b16 %v276
      %v419 = vunpack.c.l.b16 %v277
      %v420 = vunpack.c.h.b16 %v277
      %v421 = vunpack.c.l.b16 %v278
      %v422 = vunpack.c.h.b16 %v278
      %v423 = vunpack.c.l.b16 %v279
      %v424 = vunpack.c.h.b16 %v279
      %v425 = vunpack.c.l.b16 %v280
      %v426 = vunpack.c.h.b16 %v280
      %v427 = vunpack.c.l.b16 %v281
      %v428 = vunpack.c.h.b16 %v281
      %v429 = vunpack.c.l.b16 %v282
      %v430 = vunpack.c.h.b16 %v282
      %v431 = vunpack.c.l.b16 %v283
      %v432 = vunpack.c.h.b16 %v283
      %v433 = vunpack.c.l.b16 %v284
      %v434 = vunpack.c.h.b16 %v284
      %v435 = vunpack.c.l.b16 %v285
      %v436 = vunpack.c.h.b16 %v285
      %v437 = vunpack.c.l.b16 %v286
      %v438 = vunpack.c.h.b16 %v286
      %v439 = vunpack.c.l.b16 %v287
      %v440 = vunpack.c.h.b16 %v287
      %v441 = vunpack.c.l.b16 %v288
      %v442 = vunpack.c.h.b16 %v288
      %v443 = vunpack.c.l.b16 %v289
      %v444 = vunpack.c.h.b16 %v289
      %v445 = vpack.c.b16 %v351, %v349
      %v446 = vpack.c.b16 %v352, %v350
      %v447 = vpack.c.b16 %v355, %v353
      %v448 = vpack.c.b16 %v356, %v354
      %v449 = vpack.c.b16 %v359, %v357
      %v450 = vpack.c.b16 %v360, %v358
      %v451 = vpack.c.b16 %v363, %v361
      %v452 = vpack.c.b16 %v364, %v362
      %v453 = vpack.c.b16 %v367, %v365
      %v454 = vpack.c.b16 %v368, %v366
      %v455 = vpack.c.b16 %v371, %v369
      %v456 = vpack.c.b16 %v372, %v370
      %v457 = vpack.c.b16 %v375, %v373
      %v458 = vpack.c.b16 %v376, %v374
      %v459 = vpack.c.b16 %v379, %v377
      %v460 = vpack.c.b16 %v380, %v378
      %v461 = vpack.c.b16 %v383, %v381
      %v462 = vpack.c.b16 %v384, %v382
      %v463 = vpack.c.b16 %v387, %v385
      %v464 = vpack.c.b16 %v388, %v386
      %v465 = vpack.c.b16 %v391, %v389
      %v466 = vpack.c.b16 %v392, %v390
      %v467 = vpack.c.b16 %v395, %v393
      %v468 = vpack.c.b16 %v396, %v394
      %v469 = vpack.c.b16 %v399, %v397
      %v470 = vpack.c.b16 %v400, %v398
      %v471 = vpack.c.b16 %v403, %v401
      %v472 = vpack.c.b16 %v404, %v402
      %v473 = vpack.c.b16 %v407, %v405
      %v474 = vpack.c.b16 %v408, %v406
      %v475 = vpack.c.b16 %v411, %v409
      %v476 = vpack.c.b16 %v412, %v410
      %v477 = vpack.c.b16 %v415, %v413
      %v478 = vpack.c.b16 %v416, %v414
      %v479 = vpack.c.b16 %v419, %v417
      %v480 = vpack.c.b16 %v420, %v418
      %v481 = vpack.c.b16 %v423, %v421
      %v482 = vpack.c.b16 %v424, %v422
      %v483 = vpack.c.b16 %v427, %v425
      %v484 = vpack.c.b16 %v428, %v426
      %v485 = vpack.c.b16 %v431, %v429
      %v486 = vpack.c.b16 %v432, %v430
      %v487 = vpack.c.b16 %v435, %v433
      %v488 = vpack.c.b16 %v436, %v434
      %v489 = vpack.c.b16 %v439, %v437
      %v490 = vpack.c.b16 %v440, %v438
      %v491 = vpack.c.b16 %v443, %v441
      %v492 = vpack.c.b16 %v444, %v442
      %541 = vmatprep.subr.bf16.mxu0 %v446
      %542 = vmatpush1.bf16.msra.mxu0 %v445
      %543 = vmatprep.subr.bf16.mxu0 %v448
      %544 = vmatpush1.bf16.msra.mxu0 %v447
      %545 = vmatprep.subr.bf16.mxu0 %v450
      %546 = vmatpush1.bf16.msra.mxu0 %v449
      %547 = vmatprep.subr.bf16.mxu0 %v452
      %548 = vmatpush1.bf16.msra.mxu0 %v451
      %549 = vmatprep.subr.bf16.mxu0 %v454
      %550 = vmatpush1.bf16.msra.mxu0 %v453
      %551 = vmatprep.subr.bf16.mxu0 %v456
      %552 = vmatpush1.bf16.msra.mxu0 %v455
      %553 = vmatprep.subr.bf16.mxu0 %v458
      %554 = vmatpush1.bf16.msra.mxu0 %v457
      %555 = vmatprep.subr.bf16.mxu0 %v460
      %556 = vmatpush1.bf16.msra.mxu0 %v459
      %557 = vmatprep.subr.bf16.mxu0 %v462
      %558 = vmatpush1.bf16.msra.mxu0 %v461
      %559 = vmatprep.subr.bf16.mxu0 %v464
      %560 = vmatpush1.bf16.msra.mxu0 %v463
      %561 = vmatprep.subr.bf16.mxu0 %v466
      %562 = vmatpush1.bf16.msra.mxu0 %v465
      %563 = vmatprep.subr.bf16.mxu0 %v468
      %564 = vmatpush1.bf16.msra.mxu0 %v467
      %565 = vmatprep.subr.bf16.mxu0 %v470
      %566 = vmatpush1.bf16.msra.mxu0 %v469
      %567 = vmatprep.subr.bf16.mxu0 %v472
      %568 = vmatpush1.bf16.msra.mxu0 %v471
      %569 = vmatprep.subr.bf16.mxu0 %v474
      %570 = vmatpush1.bf16.msra.mxu0 %v473
      %571 = vmatprep.subr.bf16.mxu0 %v476
      %572 = vmatpush1.bf16.msra.mxu0 %v475
      %573 = vmatprep.mubr.bf16.mxu0 %v296
      %574 = vmatmul.mubr.bf16.gmra.mrb[0].mxu0 %v295
      %v575 = vpop.f32.mrb[0].mxu0
      %v576 = vadd.f32 0.0, %v575
      %v577 = vpop.f32.mrb[0].mxu0
      %v578 = vadd.f32 0.0, %v577
      %v579 = vpop.f32.mrb[0].mxu0
      %v580 = vpop.f32.mrb[0].mxu0
      %581 = vdwg.mxu0
      %582 = vmatprep.subr.bf16.mxu0 %v478
      %583 = vmatpush1.bf16.msra.mxu0 %v477
      %584 = vmatprep.subr.bf16.mxu0 %v480
      %585 = vmatpush1.bf16.msra.mxu0 %v479
      %586 = vmatprep.subr.bf16.mxu0 %v482
      %587 = vmatpush1.bf16.msra.mxu0 %v481
      %588 = vmatprep.subr.bf16.mxu0 %v484
      %589 = vmatpush1.bf16.msra.mxu0 %v483
      %590 = vmatprep.subr.bf16.mxu0 %v486
      %591 = vmatpush1.bf16.msra.mxu0 %v485
      %592 = vmatprep.subr.bf16.mxu0 %v488
      %593 = vmatpush1.bf16.msra.mxu0 %v487
      %594 = vmatprep.subr.bf16.mxu0 %v490
      %595 = vmatpush1.bf16.msra.mxu0 %v489
      %596 = vmatprep.subr.bf16.mxu0 %v492
      %597 = vmatpush1.bf16.msra.mxu0 %v491
      %598 = vmatprep.subr.bf16.mxu0 0
      %599 = vmatpush1.bf16.msra.mxu0 0
      %600 = vmatprep.subr.bf16.mxu0 0
      %601 = vmatpush1.bf16.msra.mxu0 0
      %602 = vmatprep.subr.bf16.mxu0 0
      %603 = vmatpush1.bf16.msra.mxu0 0
      %604 = vmatprep.subr.bf16.mxu0 0
      %605 = vmatpush1.bf16.msra.mxu0 0
      %606 = vmatprep.subr.bf16.mxu0 0
      %607 = vmatpush1.bf16.msra.mxu0 0
      %608 = vmatprep.subr.bf16.mxu0 0
      %609 = vmatpush1.bf16.msra.mxu0 0
      %610 = vmatprep.subr.bf16.mxu0 0
      %611 = vmatpush1.bf16.msra.mxu0 0
      %612 = vmatprep.subr.bf16.mxu0 0
      %613 = vmatpush1.bf16.msra.mxu0 0
      %614 = vmatprep.mubr.bf16.mxu0 0
      %615 = vmatmul.mubr.bf16.gmra.mrb[0].mxu0 %v297
      %v616 = vpop.f32.mrb[0].mxu0
      %v617 = vadd.f32 %v576, %v616
      %v618 = vpop.f32.mrb[0].mxu0
      %v619 = vadd.f32 %v578, %v618
      %v620 = vpop.f32.mrb[0].mxu0
      %v621 = vpop.f32.mrb[0].mxu0
      %622 = vdwg.mxu0
      %v623 = vadd.f32 %v238, %v617
      %v624 = vadd.f32 %v239, %v619
      %625 = vst [vmem:[#allocation2] sm:$0xff] %v623
      %626 = vst [vmem:[#allocation2 + $0x8] sm:$0xff] %v624
      %p627 = scmp.eq.s32.totalorder %s20, 5
      // Predicated region
      $region33: #{embedding_net_forward.93} parent=27 // pred_check
        %p628 = pneg %p627
      $region34: #{embedding_net_forward.93} parent=27 // pred_check_branch
        %630 = sbr.rel (%p628) target = $region36
      $region35: #{embedding_net_forward.93} parent=27 // pred_region
        %v631 = vld [vmem:[#allocation2] sm:$0xff]
        %v632 = vld [vmem:[#allocation2 + $0x8] sm:$0xff]
        %633 = vst [vmem:[%s229] sm:$0xff] %v631
        %634 = vst [vmem:[%s229 + $0x8] sm:$0xff] %v632
      $region36: #{embedding_net_forward.93} parent=27 // pred_fallthru
        _
      %s635 = smul.u32 2, %s19
      %p636 = scmp.lt.s32.totalorder %s18, 0
      %s637 = scalar_select %p636, %s18, 0
      %p638 = scmp.lt.s32.totalorder %s635, 1
      %s639 = scalar_select %p638, %s635, 1
      %s640 = smul.addr %s637, 2
      %s641 = sadd.s32 %s639, %s640
      %s642 = smul.addr %s641, 8
      %s643 = scalar_lea.vmem %s2, %s642
      // Predicated region
      $region37: #{embedding_net_forward.93} parent=27 // pred_check
        %p644 = pneg %p108
      $region38: #{embedding_net_forward.93} parent=27 // pred_check_branch
        %646 = sbr.rel (%p644) target = $region40
      $region39: #{embedding_net_forward.93} parent=27 // pred_region
        %s647 = smul.u32 2, %s19
      $region40: #{embedding_net_forward.93} parent=27 // pred_fallthru
        _
      // Predicated region
      $region41: #{embedding_net_forward.93} parent=27 // pred_check
        %p648 = pneg %p108
      $region42: #{embedding_net_forward.93} parent=27 // pred_check_branch
        %650 = sbr.rel (%p648) target = $region44
      $region43: #{embedding_net_forward.93} parent=27 // pred_region
        %s651 = smul.u32 2, %s19
        %p652 = scmp.lt.s32.totalorder %s18, 0
        %s653 = scalar_select %p652, %s18, 0
        %p654 = scmp.lt.s32.totalorder %s651, 1
        %s655 = scalar_select %p654, %s651, 1
        %s656 = smul.addr %s653, 2
        %s657 = sadd.s32 %s655, %s656
        %s658 = smul.addr %s657, 8
        %s659 = scalar_lea.vmem %s2, %s658
      $region44: #{embedding_net_forward.93} parent=27 // pred_fallthru
        _
    $region28: #{embedding_net_forward.93} parent=5 // pred_fallthru
      _
    %p660 = scmp.le.s32.totalorder 2, %s8
    // Predicated region
    $region45: #{embedding_net_forward.93} parent=5 // pred_check
      %p661 = pneg %p660
    $region46: #{embedding_net_forward.93} parent=5 // pred_check_branch
      %663 = sbr.rel (%p661) target = $region48
    $region47: #{embedding_net_forward.93} parent=5 // pred_region
      %s664 = ssub.s32 %s8, 2
    $region48: #{embedding_net_forward.93} parent=5 // pred_fallthru
      _
  $region6: #{embedding_net_forward.93} parent=0 // loop_footer
    %s12 = sadd.s32 1, %s8
  $region7: #{embedding_net_forward.93} parent=0 // loop_footer_branch
    %7 = sbr.rel target = $region3
  $region8: #{embedding_net_forward.93} parent=0 // loop_exit
    _

// kernel: embedding_net_forward.98
$region0: #{embedding_net_forward.98}
  #allocation0 [shape = 'u32[]', space=smem, size = 0x4, offset = 0x4, fixed_abs, tag = 'smem constant byte address 0x4 - core index']
  #allocation1 [shape = 'u32[144,128]{1,0:T(1,128)}', space=vmem, size = 0x12000, scoped, tag = 'internal scratch']
  %s0 = inlined_call_operand.vmem [shape: f32[8,256], index: 0, kind: input, shape index: {}]
  %s1 = inlined_call_operand.vmem [shape: f32[1,256], index: 1, kind: input, shape index: {}]
  %s2 = inlined_call_operand.vmem [shape: f32[1,256], index: 2, kind: input, shape index: {}]
  %s3 = inlined_call_operand.vmem [shape: f32[8,256], index: 3, kind: input, shape index: {}]
  %s4 = inlined_call_operand.vmem [shape: f32[8,256], index: 4, kind: output, shape index: {}]
  %s5 = sld [smem:[#allocation0]]
  $region26: #{embedding_net_forward.98} parent=0
    _
  %s7 = ssub.s32 1, %s5
  %s8 = scalar_select 0, %s7, %s5
  // Predicated region
  $region2: #{embedding_net_forward.98} parent=0 // pred_check
    _
  $region3: #{embedding_net_forward.98} parent=0 // pred_check_branch
    %10 = sbr.rel (0) target = $region5
  $region4: #{embedding_net_forward.98} parent=0 // pred_region
    _
  $region5: #{embedding_net_forward.98} parent=0 // pred_fallthru
    _
  // Predicated region
  $region6: #{embedding_net_forward.98} parent=0 // pred_check
    _
  $region7: #{embedding_net_forward.98} parent=0 // pred_check_branch
    %12 = sbr.rel (0) target = $region9
  $region8: #{embedding_net_forward.98} parent=0 // pred_region
    _
  $region9: #{embedding_net_forward.98} parent=0 // pred_fallthru
    _
  // Predicated region
  $region10: #{embedding_net_forward.98} parent=0 // pred_check
    _
  $region11: #{embedding_net_forward.98} parent=0 // pred_check_branch
    %14 = sbr.rel (0) target = $region13
  $region12: #{embedding_net_forward.98} parent=0 // pred_region
    _
  $region13: #{embedding_net_forward.98} parent=0 // pred_fallthru
    _
  // Predicated region
  $region14: #{embedding_net_forward.98} parent=0 // pred_check
    _
  $region15: #{embedding_net_forward.98} parent=0 // pred_check_branch
    %16 = sbr.rel (0) target = $region17
  $region16: #{embedding_net_forward.98} parent=0 // pred_region
    _
  $region17: #{embedding_net_forward.98} parent=0 // pred_fallthru
    _
  %v17 = vld [vmem:[%s0] sm:$0xff]
  %v18 = vld [vmem:[%s0 + $0x8] sm:$0xff]
  %v19 = vld [vmem:[%s1] sm:$0x3]
  %v21 = vlaneseq
  %v22 = vshrl.u32 %v21, 7
  %v23 = vsub.s32 0, %v22
  %v24 = vrot.slane %v19, %v23
  %v25 = vlaneseq
  %v26 = vshrl.u32 %v25, 7
  %v27 = vsub.s32 1, %v26
  %v28 = vrot.slane %v19, %v27
  %v31 = vmul.f32 %v17, %v24
  %v32 = vmul.f32 %v18, %v28
  %v33 = vld [vmem:[%s2] sm:$0x3]
  %v35 = vlaneseq
  %v36 = vshrl.u32 %v35, 7
  %v37 = vsub.s32 0, %v36
  %v38 = vrot.slane %v33, %v37
  %v39 = vlaneseq
  %v40 = vshrl.u32 %v39, 7
  %v41 = vsub.s32 1, %v40
  %v42 = vrot.slane %v33, %v41
  %v45 = vadd.f32 %v31, %v38
  %v46 = vadd.f32 %v32, %v42
  %v47 = vld [vmem:[%s3] sm:$0xff]
  %v48 = vld [vmem:[%s3 + $0x8] sm:$0xff]
  %v49 = vadd.f32 %v45, %v47
  %v50 = vadd.f32 %v46, %v48
  %v51 = vmax.f32 %v49, 0.0
  %v52 = vmax.f32 %v50, 0.0
  %53 = vst [vmem:[%s4] sm:$0xff] %v51
  %54 = vst [vmem:[%s4 + $0x8] sm:$0xff] %v52
  // Predicated region
  $region18: #{embedding_net_forward.98} parent=0 // pred_check
    _
  $region19: #{embedding_net_forward.98} parent=0 // pred_check_branch
    %56 = sbr.rel (0) target = $region21
  $region20: #{embedding_net_forward.98} parent=0 // pred_region
    _
  $region21: #{embedding_net_forward.98} parent=0 // pred_fallthru
    _
  // Predicated region
  $region22: #{embedding_net_forward.98} parent=0 // pred_check
    _
  $region23: #{embedding_net_forward.98} parent=0 // pred_check_branch
    %58 = sbr.rel (0) target = $region25
  $region24: #{embedding_net_forward.98} parent=0 // pred_region
    _
  $region25: #{embedding_net_forward.98} parent=0 // pred_fallthru
    _

// kernel: embedding_net_forward.109
$region0: #{embedding_net_forward.109}
  #allocation0 [shape = 'u32[]', space=smem, size = 0x4, offset = 0x4, fixed_abs, tag = 'smem constant byte address 0x4 - core index']
  #allocation1 [shape = 'u32[144,128]{1,0:T(1,128)}', space=vmem, size = 0x12000, scoped, tag = 'internal scratch']
  %s0 = inlined_call_operand.vmem [shape: bf16[2,256], index: 0, kind: input, shape index: {}]
  %s1 = inlined_call_operand.vmem [shape: bf16[256,512], index: 1, kind: input, shape index: {}]
  %s2 = inlined_call_operand.vmem [shape: f32[2,512], index: 2, kind: output, shape index: {}]
  %s3 = sld [smem:[#allocation0]]
  $region79: #{embedding_net_forward.109} parent=0
    _
  %s5 = ssub.s32 1, %s3
  %s6 = scalar_select 0, %s5, %s3
  $region1: #{embedding_net_forward.109} parent=0
    #allocation2 [shape = 'u8[262144]{0}', space=vmem, size = 0x40000, scoped, tag = 'input window, operand 1']
    loop: start=0, step=1, limit=4
    $region2: #{embedding_net_forward.109} parent=1 // loop_pre_header
      _
    $region3: #{embedding_net_forward.109} parent=1 // loop_header
      %s8 = sphi 0, %s12
      %p9 = scmp.ge.s32.totalorder %s8, 4
      %s15 = sphi 0, %s27
      %s16 = sphi 0, %s23
      %s17 = sphi 0, %s15
      %s18 = sphi 0, %s16
      %s19 = sphi 0, %s17
      %s20 = sphi 0, %s18
      %s30 = sphi 0, %s32
      %s33 = sphi 0, %s30
      %s34 = sphi 0, %s33
      %s50 = sphi 0, %s34
      %s56 = sphi 0, %s58
      %s59 = sphi 0, %s56
      %s60 = sphi 0, %s59
      %s76 = sphi 0, %s60
      %s84 = sphi 0, %s86
      %s87 = sphi 0, %s84
      %s88 = sphi 0, %s87
      %s104 = sphi 0, %s88
    $region4: #{embedding_net_forward.109} parent=1 // loop_header_branch
      %11 = sbr.rel (%p9) target = $region8
    $region5: #{embedding_net_forward.109} parent=1 // loop_body
      %s13 = ssub.s32 %s8, 1
      %s14 = ssub.s32 %s8, 2
      %s21 = sadd.s32 1, %s16
      %p22 = scmp.ge.s32.totalorder %s21, 2
      %s23 = scalar_select %p22, 0, %s21
      %s24 = sadd.s32 1, %s15
      %s25 = scalar_select %p22, %s24, %s15
      %p26 = scmp.ge.s32.totalorder %s25, 1
      %s27 = scalar_select %p26, 0, %s25
      %s28 = ssub.s32 %s15, %s27
      %p29 = scmp.eq.s32.totalorder %s28, 0
      %s31 = sadd.s32 %s30, 1
      %s32 = scalar_select %p29, %s30, %s31
      %p35 = pneg %p29
      %p36 = scmp.eq.s32.totalorder %s8, 1
      %p37 = por %p35, %p36
      %p38 = scmp.ne.s32.totalorder %s30, %s33
      %p39 = scmp.eq.s32.totalorder %s8, 0
      %p40 = por %p38, %p39
      %p41 = scmp.ne.s32.totalorder %s30, %s33
      %p42 = scmp.eq.s32.totalorder %s13, 1
      %p43 = por %p41, %p42
      %p44 = scmp.ne.s32.totalorder %s33, %s34
      %p45 = scmp.eq.s32.totalorder %s13, 0
      %p46 = por %p44, %p45
      %p47 = scmp.ne.s32.totalorder %s33, %s34
      %p48 = scmp.eq.s32.totalorder %s14, 1
      %p49 = por %p47, %p48
      %p51 = scmp.ne.s32.totalorder %s34, %s50
      %p52 = scmp.eq.s32.totalorder %s14, 0
      %p53 = por %p51, %p52
      %s54 = ssub.s32 %s16, %s23
      %p55 = scmp.eq.s32.totalorder %s54, 0
      %s57 = sadd.s32 %s56, 1
      %s58 = scalar_select %p55, %s56, %s57
      %p61 = pneg %p55
      %p62 = scmp.eq.s32.totalorder %s8, 1
      %p63 = por %p61, %p62
      %p64 = scmp.ne.s32.totalorder %s56, %s59
      %p65 = scmp.eq.s32.totalorder %s8, 0
      %p66 = por %p64, %p65
      %p67 = scmp.ne.s32.totalorder %s56, %s59
      %p68 = scmp.eq.s32.totalorder %s13, 1
      %p69 = por %p67, %p68
      %p70 = scmp.ne.s32.totalorder %s59, %s60
      %p71 = scmp.eq.s32.totalorder %s13, 0
      %p72 = por %p70, %p71
      %p73 = scmp.ne.s32.totalorder %s59, %s60
      %p74 = scmp.eq.s32.totalorder %s14, 1
      %p75 = por %p73, %p74
      %p77 = scmp.ne.s32.totalorder %s60, %s76
      %p78 = scmp.eq.s32.totalorder %s14, 0
      %p79 = por %p77, %p78
      %s80 = ssub.s32 %s15, %s27
      %s81 = ssub.s32 %s16, %s23
      %s82 = sor.u32 %s80, %s81
      %p83 = scmp.eq.s32.totalorder %s82, 0
      %s85 = sadd.s32 %s84, 1
      %s86 = scalar_select %p83, %s84, %s85
      %p89 = pneg %p83
      %p90 = scmp.eq.s32.totalorder %s8, 1
      %p91 = por %p89, %p90
      %p92 = scmp.ne.s32.totalorder %s84, %s87
      %p93 = scmp.eq.s32.totalorder %s8, 0
      %p94 = por %p92, %p93
      %p95 = scmp.ne.s32.totalorder %s84, %s87
      %p96 = scmp.eq.s32.totalorder %s13, 1
      %p97 = por %p95, %p96
      %p98 = scmp.ne.s32.totalorder %s87, %s88
      %p99 = scmp.eq.s32.totalorder %s13, 0
      %p100 = por %p98, %p99
      %p101 = scmp.ne.s32.totalorder %s87, %s88
      %p102 = scmp.eq.s32.totalorder %s14, 1
      %p103 = por %p101, %p102
      %p105 = scmp.ne.s32.totalorder %s88, %s104
      %p106 = scmp.eq.s32.totalorder %s14, 0
      %p107 = por %p105, %p106
      %p108 = scmp.le.s32.totalorder 1, %s8
      %p109 = scmp.lt.s32.totalorder %s8, 3
      %p110 = pnand %p108, %p109
      %p111 = pneg %p110
      // Predicated region
      $region9: #{embedding_net_forward.109} parent=5 // pred_check
        _
      $region10: #{embedding_net_forward.109} parent=5 // pred_check_branch
        %113 = sbr.rel (%p110) target = $region12
      $region11: #{embedding_net_forward.109} parent=5 // pred_region
        %s114 = ssub.s32 %s8, 1
        // Predicated region
        $region13: #{embedding_net_forward.109} parent=11 // pred_check
          %p115 = pneg %p46
        $region14: #{embedding_net_forward.109} parent=11 // pred_check_branch
          %117 = sbr.rel (%p115) target = $region16
        $region15: #{embedding_net_forward.109} parent=11 // pred_region
          %p118 = scmp.lt.s32.totalorder %s17, 0
          %s119 = scalar_select %p118, %s17, 0
          %s120 = smul.addr %s119, 2
          %s121 = scalar_lea.vmem %s0, %s120
        $region16: #{embedding_net_forward.109} parent=11 // pred_fallthru
          _
      $region12: #{embedding_net_forward.109} parent=5 // pred_fallthru
        _
      %p122 = scmp.lt.s32.totalorder %s8, 2
      // Predicated region
      $region17: #{embedding_net_forward.109} parent=5 // pred_check
        %p123 = pneg %p122
      $region18: #{embedding_net_forward.109} parent=5 // pred_check_branch
        %125 = sbr.rel (%p123) target = $region20
      $region19: #{embedding_net_forward.109} parent=5 // pred_region
        // Predicated region
        $region21: #{embedding_net_forward.109} parent=19 // pred_check
          %p126 = pneg %p66
        $region22: #{embedding_net_forward.109} parent=19 // pred_check_branch
          %128 = sbr.rel (%p126) target = $region24
        $region23: #{embedding_net_forward.109} parent=19 // pred_region
          %s129 = sand.u32 %s56, 1
          %s130 = sand.u32 %s56, 1
          %s131 = smul.addr %s130, 256
          %s132 = scalar_lea.vmem [#allocation2], %s131
          %s133 = smul.u32 2, %s16
          %s134 = smul.addr %s133, 4
          %s135 = scalar_lea.vmem %s1, %s134
          // Predicated region
          $region25: #{embedding_net_forward.109} parent=23 // pred_check
            _
          $region26: #{embedding_net_forward.109} parent=23 // pred_check_branch
            %137 = sbr.rel (0) target = $region28
          $region27: #{embedding_net_forward.109} parent=23 // pred_region
            // Predicated region
            $region29: #{embedding_net_forward.109} parent=27 // pred_check
              _
            $region30: #{embedding_net_forward.109} parent=27 // pred_check_branch
              %139 = sbr.rel (0) target = $region32
            $region31: #{embedding_net_forward.109} parent=27 // pred_region
              // Predicated region
              $region44: #{embedding_net_forward.109} parent=31 // pred_check
                _
              $region45: #{embedding_net_forward.109} parent=31 // pred_check_branch
                %216 = sbr.rel (0) target = $region47
              $region46: #{embedding_net_forward.109} parent=31 // pred_region
                loop: start=0, step=1, limit=1
                $region48: #{embedding_net_forward.109} parent=46 // loop_pre_header
                  _
                $region49: #{embedding_net_forward.109} parent=46 // loop_header
                  %s218 = sphi 0, %s222
                  %p219 = scmp.ge.s32.totalorder %s218, 1
                  %s223 = sphi %s135, %s135
                  %s224 = sphi %s132, %s132
                $region50: #{embedding_net_forward.109} parent=46 // loop_header_branch
                  %221 = sbr.rel (%p219) target = $region54
                $region51: #{embedding_net_forward.109} parent=46 // loop_body
                  %v225 = vld [vmem:[%s223] sm:$0xff]
                  %226 = vst [vmem:[%s224] sm:$0xff] %v225
                  %v227 = vld [vmem:[%s223 + $0x10] sm:$0xff]
                  %228 = vst [vmem:[%s224 + $0x8] sm:$0xff] %v227
                  %v229 = vld [vmem:[%s223 + $0x20] sm:$0xff]
                  %230 = vst [vmem:[%s224 + $0x10] sm:$0xff] %v229
                  %v231 = vld [vmem:[%s223 + $0x30] sm:$0xff]
                  %232 = vst [vmem:[%s224 + $0x18] sm:$0xff] %v231
                  %v233 = vld [vmem:[%s223 + $0x40] sm:$0xff]
                  %234 = vst [vmem:[%s224 + $0x20] sm:$0xff] %v233
                  %v235 = vld [vmem:[%s223 + $0x50] sm:$0xff]
                  %236 = vst [vmem:[%s224 + $0x28] sm:$0xff] %v235
                  %v237 = vld [vmem:[%s223 + $0x60] sm:$0xff]
                  %238 = vst [vmem:[%s224 + $0x30] sm:$0xff] %v237
                  %v239 = vld [vmem:[%s223 + $0x70] sm:$0xff]
                  %240 = vst [vmem:[%s224 + $0x38] sm:$0xff] %v239
                  %v241 = vld [vmem:[%s223 + $0x80] sm:$0xff]
                  %242 = vst [vmem:[%s224 + $0x40] sm:$0xff] %v241
                  %v243 = vld [vmem:[%s223 + $0x90] sm:$0xff]
                  %244 = vst [vmem:[%s224 + $0x48] sm:$0xff] %v243
                  %v245 = vld [vmem:[%s223 + $0xa0] sm:$0xff]
                  %246 = vst [vmem:[%s224 + $0x50] sm:$0xff] %v245
                  %v247 = vld [vmem:[%s223 + $0xb0] sm:$0xff]
                  %248 = vst [vmem:[%s224 + $0x58] sm:$0xff] %v247
                  %v249 = vld [vmem:[%s223 + $0xc0] sm:$0xff]
                  %250 = vst [vmem:[%s224 + $0x60] sm:$0xff] %v249
                  %v251 = vld [vmem:[%s223 + $0xd0] sm:$0xff]
                  %252 = vst [vmem:[%s224 + $0x68] sm:$0xff] %v251
                  %v253 = vld [vmem:[%s223 + $0xe0] sm:$0xff]
                  %254 = vst [vmem:[%s224 + $0x70] sm:$0xff] %v253
                  %v255 = vld [vmem:[%s223 + $0xf0] sm:$0xff]
                  %256 = vst [vmem:[%s224 + $0x78] sm:$0xff] %v255
                  %v257 = vld [vmem:[%s223 + $0x100] sm:$0xff]
                  %258 = vst [vmem:[%s224 + $0x80] sm:$0xff] %v257
                  %v259 = vld [vmem:[%s223 + $0x110] sm:$0xff]
                  %260 = vst [vmem:[%s224 + $0x88] sm:$0xff] %v259
                  %v261 = vld [vmem:[%s223 + $0x120] sm:$0xff]
                  %262 = vst [vmem:[%s224 + $0x90] sm:$0xff] %v261
                  %v263 = vld [vmem:[%s223 + $0x130] sm:$0xff]
                  %264 = vst [vmem:[%s224 + $0x98] sm:$0xff] %v263
                  %v265 = vld [vmem:[%s223 + $0x140] sm:$0xff]
                  %266 = vst [vmem:[%s224 + $0xa0] sm:$0xff] %v265
                  %v267 = vld [vmem:[%s223 + $0x150] sm:$0xff]
                  %268 = vst [vmem:[%s224 + $0xa8] sm:$0xff] %v267
                  %v269 = vld [vmem:[%s223 + $0x160] sm:$0xff]
                  %270 = vst [vmem:[%s224 + $0xb0] sm:$0xff] %v269
                  %v271 = vld [vmem:[%s223 + $0x170] sm:$0xff]
                  %272 = vst [vmem:[%s224 + $0xb8] sm:$0xff] %v271
                  %v273 = vld [vmem:[%s223 + $0x180] sm:$0xff]
                  %274 = vst [vmem:[%s224 + $0xc0] sm:$0xff] %v273
                  %v275 = vld [vmem:[%s223 + $0x190] sm:$0xff]
                  %276 = vst [vmem:[%s224 + $0xc8] sm:$0xff] %v275
                  %v277 = vld [vmem:[%s223 + $0x1a0] sm:$0xff]
                  %278 = vst [vmem:[%s224 + $0xd0] sm:$0xff] %v277
                  %v279 = vld [vmem:[%s223 + $0x1b0] sm:$0xff]
                  %280 = vst [vmem:[%s224 + $0xd8] sm:$0xff] %v279
                  %v281 = vld [vmem:[%s223 + $0x1c0] sm:$0xff]
                  %282 = vst [vmem:[%s224 + $0xe0] sm:$0xff] %v281
                  %v283 = vld [vmem:[%s223 + $0x1d0] sm:$0xff]
                  %284 = vst [vmem:[%s224 + $0xe8] sm:$0xff] %v283
                  %v285 = vld [vmem:[%s223 + $0x1e0] sm:$0xff]
                  %286 = vst [vmem:[%s224 + $0xf0] sm:$0xff] %v285
                  %v287 = vld [vmem:[%s223 + $0x1f0] sm:$0xff]
                  %288 = vst [vmem:[%s224 + $0xf8] sm:$0xff] %v287
                $region52: #{embedding_net_forward.109} parent=46 // loop_footer
                  %s222 = sadd.s32 1, %s218
                $region53: #{embedding_net_forward.109} parent=46 // loop_footer_branch
                  %217 = sbr.rel target = $region49
                $region54: #{embedding_net_forward.109} parent=46 // loop_exit
                  _
              $region47: #{embedding_net_forward.109} parent=31 // pred_fallthru
                _
              // Predicated region
              $region55: #{embedding_net_forward.109} parent=31 // pred_check
                _
              $region56: #{embedding_net_forward.109} parent=31 // pred_check_branch
                %290 = sbr.rel target = $region58
              $region57: #{embedding_net_forward.109} parent=31 // pred_region
                _
              $region58: #{embedding_net_forward.109} parent=31 // pred_fallthru
                _
            $region32: #{embedding_net_forward.109} parent=27 // pred_fallthru
              _
            // Predicated region
            $region33: #{embedding_net_forward.109} parent=27 // pred_check
              _
            $region34: #{embedding_net_forward.109} parent=27 // pred_check_branch
              %141 = sbr.rel target = $region36
            $region35: #{embedding_net_forward.109} parent=27 // pred_region
              loop: start=0, step=1, limit=1
              $region37: #{embedding_net_forward.109} parent=35 // loop_pre_header
                _
              $region38: #{embedding_net_forward.109} parent=35 // loop_header
                %s144 = sphi 0, %s148
                %p145 = scmp.ge.s32.totalorder %s144, 1
                %s149 = sphi %s135, %s135
                %s150 = sphi %s132, %s132
              $region39: #{embedding_net_forward.109} parent=35 // loop_header_branch
                %147 = sbr.rel (%p145) target = $region43
              $region40: #{embedding_net_forward.109} parent=35 // loop_body
                %v151 = vld [vmem:[%s149] sm:$0xff]
                %152 = vst [vmem:[%s150] sm:$0xff] %v151
                %v153 = vld [vmem:[%s149 + $0x10] sm:$0xff]
                %154 = vst [vmem:[%s150 + $0x8] sm:$0xff] %v153
                %v155 = vld [vmem:[%s149 + $0x20] sm:$0xff]
                %156 = vst [vmem:[%s150 + $0x10] sm:$0xff] %v155
                %v157 = vld [vmem:[%s149 + $0x30] sm:$0xff]
                %158 = vst [vmem:[%s150 + $0x18] sm:$0xff] %v157
                %v159 = vld [vmem:[%s149 + $0x40] sm:$0xff]
                %160 = vst [vmem:[%s150 + $0x20] sm:$0xff] %v159
                %v161 = vld [vmem:[%s149 + $0x50] sm:$0xff]
                %162 = vst [vmem:[%s150 + $0x28] sm:$0xff] %v161
                %v163 = vld [vmem:[%s149 + $0x60] sm:$0xff]
                %164 = vst [vmem:[%s150 + $0x30] sm:$0xff] %v163
                %v165 = vld [vmem:[%s149 + $0x70] sm:$0xff]
                %166 = vst [vmem:[%s150 + $0x38] sm:$0xff] %v165
                %v167 = vld [vmem:[%s149 + $0x80] sm:$0xff]
                %168 = vst [vmem:[%s150 + $0x40] sm:$0xff] %v167
                %v169 = vld [vmem:[%s149 + $0x90] sm:$0xff]
                %170 = vst [vmem:[%s150 + $0x48] sm:$0xff] %v169
                %v171 = vld [vmem:[%s149 + $0xa0] sm:$0xff]
                %172 = vst [vmem:[%s150 + $0x50] sm:$0xff] %v171
                %v173 = vld [vmem:[%s149 + $0xb0] sm:$0xff]
                %174 = vst [vmem:[%s150 + $0x58] sm:$0xff] %v173
                %v175 = vld [vmem:[%s149 + $0xc0] sm:$0xff]
                %176 = vst [vmem:[%s150 + $0x60] sm:$0xff] %v175
                %v177 = vld [vmem:[%s149 + $0xd0] sm:$0xff]
                %178 = vst [vmem:[%s150 + $0x68] sm:$0xff] %v177
                %v179 = vld [vmem:[%s149 + $0xe0] sm:$0xff]
                %180 = vst [vmem:[%s150 + $0x70] sm:$0xff] %v179
                %v181 = vld [vmem:[%s149 + $0xf0] sm:$0xff]
                %182 = vst [vmem:[%s150 + $0x78] sm:$0xff] %v181
                %v183 = vld [vmem:[%s149 + $0x100] sm:$0xff]
                %184 = vst [vmem:[%s150 + $0x80] sm:$0xff] %v183
                %v185 = vld [vmem:[%s149 + $0x110] sm:$0xff]
                %186 = vst [vmem:[%s150 + $0x88] sm:$0xff] %v185
                %v187 = vld [vmem:[%s149 + $0x120] sm:$0xff]
                %188 = vst [vmem:[%s150 + $0x90] sm:$0xff] %v187
                %v189 = vld [vmem:[%s149 + $0x130] sm:$0xff]
                %190 = vst [vmem:[%s150 + $0x98] sm:$0xff] %v189
                %v191 = vld [vmem:[%s149 + $0x140] sm:$0xff]
                %192 = vst [vmem:[%s150 + $0xa0] sm:$0xff] %v191
                %v193 = vld [vmem:[%s149 + $0x150] sm:$0xff]
                %194 = vst [vmem:[%s150 + $0xa8] sm:$0xff] %v193
                %v195 = vld [vmem:[%s149 + $0x160] sm:$0xff]
                %196 = vst [vmem:[%s150 + $0xb0] sm:$0xff] %v195
                %v197 = vld [vmem:[%s149 + $0x170] sm:$0xff]
                %198 = vst [vmem:[%s150 + $0xb8] sm:$0xff] %v197
                %v199 = vld [vmem:[%s149 + $0x180] sm:$0xff]
                %200 = vst [vmem:[%s150 + $0xc0] sm:$0xff] %v199
                %v201 = vld [vmem:[%s149 + $0x190] sm:$0xff]
                %202 = vst [vmem:[%s150 + $0xc8] sm:$0xff] %v201
                %v203 = vld [vmem:[%s149 + $0x1a0] sm:$0xff]
                %204 = vst [vmem:[%s150 + $0xd0] sm:$0xff] %v203
                %v205 = vld [vmem:[%s149 + $0x1b0] sm:$0xff]
                %206 = vst [vmem:[%s150 + $0xd8] sm:$0xff] %v205
                %v207 = vld [vmem:[%s149 + $0x1c0] sm:$0xff]
                %208 = vst [vmem:[%s150 + $0xe0] sm:$0xff] %v207
                %v209 = vld [vmem:[%s149 + $0x1d0] sm:$0xff]
                %210 = vst [vmem:[%s150 + $0xe8] sm:$0xff] %v209
                %v211 = vld [vmem:[%s149 + $0x1e0] sm:$0xff]
                %212 = vst [vmem:[%s150 + $0xf0] sm:$0xff] %v211
                %v213 = vld [vmem:[%s149 + $0x1f0] sm:$0xff]
                %214 = vst [vmem:[%s150 + $0xf8] sm:$0xff] %v213
              $region41: #{embedding_net_forward.109} parent=35 // loop_footer
                %s148 = sadd.s32 1, %s144
              $region42: #{embedding_net_forward.109} parent=35 // loop_footer_branch
                %143 = sbr.rel target = $region38
              $region43: #{embedding_net_forward.109} parent=35 // loop_exit
                _
            $region36: #{embedding_net_forward.109} parent=27 // pred_fallthru
              _
          $region28: #{embedding_net_forward.109} parent=23 // pred_fallthru
            _
          %291 = vnop
        $region24: #{embedding_net_forward.109} parent=19 // pred_fallthru
          _
      $region20: #{embedding_net_forward.109} parent=5 // pred_fallthru
        _
      %p292 = scmp.le.s32.totalorder 1, %s8
      %p293 = scmp.lt.s32.totalorder %s8, 3
      %p294 = pnand %p292, %p293
      %p295 = pneg %p294
      // Predicated region
      $region59: #{embedding_net_forward.109} parent=5 // pred_check
        _
      $region60: #{embedding_net_forward.109} parent=5 // pred_check_branch
        %297 = sbr.rel (%p294) target = $region62
      $region61: #{embedding_net_forward.109} parent=5 // pred_region
        %s298 = ssub.s32 %s8, 1
        %s299 = sand.u32 %s59, 1
        %s300 = sand.u32 %s59, 1
        %s301 = smul.addr %s300, 256
        %s302 = scalar_lea.vmem [#allocation2], %s301
        // Predicated region
        $region63: #{embedding_net_forward.109} parent=61 // pred_check
          %p303 = pneg %p72
        $region64: #{embedding_net_forward.109} parent=61 // pred_check_branch
          %305 = sbr.rel (%p303) target = $region66
        $region65: #{embedding_net_forward.109} parent=61 // pred_region
          _
        $region66: #{embedding_net_forward.109} parent=61 // pred_fallthru
          _
        %p306 = scmp.lt.s32.totalorder %s17, 0
        %s307 = scalar_select %p306, %s17, 0
        %s308 = smul.addr %s307, 2
        %s309 = scalar_lea.vmem %s0, %s308
        %p310 = pneg %p46
        %p311 = pneg %p43
        %s312 = sand.u32 %s59, 1
        %s313 = sand.u32 %s59, 1
        %s314 = smul.addr %s313, 256
        %s315 = scalar_lea.vmem [#allocation2], %s314
        %p316 = pneg %p72
        %p317 = pneg %p69
        %p318 = pneg %p100
        %p319 = pneg %p97
        %s320 = smul.u32 2, %s18
        %p321 = scmp.lt.s32.totalorder %s17, 0
        %s322 = scalar_select %p321, %s17, 0
        %p323 = scmp.lt.s32.totalorder %s320, 3
        %s324 = scalar_select %p323, %s320, 3
        %s325 = smul.addr %s322, 4
        %s326 = sadd.s32 %s324, %s325
        %s327 = smul.addr %s326, 2
        %s328 = scalar_lea.vmem %s2, %s327
        %p329 = scmp.lt.s32.totalorder %s17, 0
        %s330 = scalar_select %p329, %s17, 0
        %s331 = smul.addr %s330, 2
        %s332 = scalar_lea.vmem %s0, %s331
        %s333 = smul.u32 2, %s18
        %s334 = smul.u32 2, %s18
        %p335 = scmp.lt.s32.totalorder %s17, 0
        %s336 = scalar_select %p335, %s17, 0
        %p337 = scmp.lt.s32.totalorder %s334, 3
        %s338 = scalar_select %p337, %s334, 3
        %s339 = smul.addr %s336, 4
        %s340 = sadd.s32 %s338, %s339
        %s341 = smul.addr %s340, 2
        %s342 = scalar_lea.vmem %s2, %s341
        %s343 = smul.u32 2, %s18
        %v344 = vld [vmem:[%s332] sm:$0x3]
        %v345 = vld [vmem:[%s302] sm:$0xff]
        %v346 = vld [vmem:[%s302 + $0x8] sm:$0xff]
        %v347 = vld [vmem:[%s302 + $0x10] sm:$0xff]
        %v348 = vld [vmem:[%s302 + $0x18] sm:$0xff]
        %v349 = vld [vmem:[%s302 + $0x20] sm:$0xff]
        %v350 = vld [vmem:[%s302 + $0x28] sm:$0xff]
        %v351 = vld [vmem:[%s302 + $0x30] sm:$0xff]
        %v352 = vld [vmem:[%s302 + $0x38] sm:$0xff]
        %v353 = vld [vmem:[%s302 + $0x40] sm:$0xff]
        %v354 = vld [vmem:[%s302 + $0x48] sm:$0xff]
        %v355 = vld [vmem:[%s302 + $0x50] sm:$0xff]
        %v356 = vld [vmem:[%s302 + $0x58] sm:$0xff]
        %v357 = vld [vmem:[%s302 + $0x60] sm:$0xff]
        %v358 = vld [vmem:[%s302 + $0x68] sm:$0xff]
        %v359 = vld [vmem:[%s302 + $0x70] sm:$0xff]
        %v360 = vld [vmem:[%s302 + $0x78] sm:$0xff]
        %v361 = vld [vmem:[%s302 + $0x80] sm:$0xff]
        %v362 = vld [vmem:[%s302 + $0x88] sm:$0xff]
        %v363 = vld [vmem:[%s302 + $0x90] sm:$0xff]
        %v364 = vld [vmem:[%s302 + $0x98] sm:$0xff]
        %v365 = vld [vmem:[%s302 + $0xa0] sm:$0xff]
        %v366 = vld [vmem:[%s302 + $0xa8] sm:$0xff]
        %v367 = vld [vmem:[%s302 + $0xb0] sm:$0xff]
        %v368 = vld [vmem:[%s302 + $0xb8] sm:$0xff]
        %v369 = vld [vmem:[%s302 + $0xc0] sm:$0xff]
        %v370 = vld [vmem:[%s302 + $0xc8] sm:$0xff]
        %v371 = vld [vmem:[%s302 + $0xd0] sm:$0xff]
        %v372 = vld [vmem:[%s302 + $0xd8] sm:$0xff]
        %v373 = vld [vmem:[%s302 + $0xe0] sm:$0xff]
        %v374 = vld [vmem:[%s302 + $0xe8] sm:$0xff]
        %v375 = vld [vmem:[%s302 + $0xf0] sm:$0xff]
        %v376 = vld [vmem:[%s302 + $0xf8] sm:$0xff]
        %v379 = vunpack.c.l.s4 1966171168
        %v380 = vunpack.c.0.s8 %v379
        %v381 = vlaneseq
        %v382 = vshrl.u32 %v381, 7
        %v383 = vsub.s32 %v380, %v382
        %v384 = vrot.slane %v344, %v383
        %v385 = vcombine.high %v384, %v384
        %v387 = vunpack.c.l.s4 1966171168
        %v388 = vunpack.c.0.s8 %v387
        %v389 = vlaneseq
        %v390 = vshrl.u32 %v389, 7
        %v391 = vsub.s32 %v388, %v390
        %v392 = vrot.slane %v384, %v391
        %v394 = vunpack.c.l.s4 1966171168
        %v395 = vunpack.c.0.s8 %v394
        %v396 = vlaneseq
        %v397 = vshrl.u32 %v396, 7
        %v398 = vsub.s32 %v395, %v397
        %v399 = vrot.slane %v385, %v398
        %v434 = vunpack.c.l.b16 %v345
        %v435 = vunpack.c.h.b16 %v345
        %v436 = vunpack.c.l.b16 %v346
        %v437 = vunpack.c.h.b16 %v346
        %v438 = vunpack.c.l.b16 %v347
        %v439 = vunpack.c.h.b16 %v347
        %v440 = vunpack.c.l.b16 %v348
        %v441 = vunpack.c.h.b16 %v348
        %v442 = vunpack.c.l.b16 %v349
        %v443 = vunpack.c.h.b16 %v349
        %v444 = vunpack.c.l.b16 %v350
        %v445 = vunpack.c.h.b16 %v350
        %v446 = vunpack.c.l.b16 %v351
        %v447 = vunpack.c.h.b16 %v351
        %v448 = vunpack.c.l.b16 %v352
        %v449 = vunpack.c.h.b16 %v352
        %v450 = vunpack.c.l.b16 %v353
        %v451 = vunpack.c.h.b16 %v353
        %v452 = vunpack.c.l.b16 %v354
        %v453 = vunpack.c.h.b16 %v354
        %v454 = vunpack.c.l.b16 %v355
        %v455 = vunpack.c.h.b16 %v355
        %v456 = vunpack.c.l.b16 %v356
        %v457 = vunpack.c.h.b16 %v356
        %v458 = vunpack.c.l.b16 %v357
        %v459 = vunpack.c.h.b16 %v357
        %v460 = vunpack.c.l.b16 %v358
        %v461 = vunpack.c.h.b16 %v358
        %v462 = vunpack.c.l.b16 %v359
        %v463 = vunpack.c.h.b16 %v359
        %v464 = vunpack.c.l.b16 %v360
        %v465 = vunpack.c.h.b16 %v360
        %v466 = vunpack.c.l.b16 %v361
        %v467 = vunpack.c.h.b16 %v361
        %v468 = vunpack.c.l.b16 %v362
        %v469 = vunpack.c.h.b16 %v362
        %v470 = vunpack.c.l.b16 %v363
        %v471 = vunpack.c.h.b16 %v363
        %v472 = vunpack.c.l.b16 %v364
        %v473 = vunpack.c.h.b16 %v364
        %v474 = vunpack.c.l.b16 %v365
        %v475 = vunpack.c.h.b16 %v365
        %v476 = vunpack.c.l.b16 %v366
        %v477 = vunpack.c.h.b16 %v366
        %v478 = vunpack.c.l.b16 %v367
        %v479 = vunpack.c.h.b16 %v367
        %v480 = vunpack.c.l.b16 %v368
        %v481 = vunpack.c.h.b16 %v368
        %v482 = vunpack.c.l.b16 %v369
        %v483 = vunpack.c.h.b16 %v369
        %v484 = vunpack.c.l.b16 %v370
        %v485 = vunpack.c.h.b16 %v370
        %v486 = vunpack.c.l.b16 %v371
        %v487 = vunpack.c.h.b16 %v371
        %v488 = vunpack.c.l.b16 %v372
        %v489 = vunpack.c.h.b16 %v372
        %v490 = vunpack.c.l.b16 %v373
        %v491 = vunpack.c.h.b16 %v373
        %v492 = vunpack.c.l.b16 %v374
        %v493 = vunpack.c.h.b16 %v374
        %v494 = vunpack.c.l.b16 %v375
        %v495 = vunpack.c.h.b16 %v375
        %v496 = vunpack.c.l.b16 %v376
        %v497 = vunpack.c.h.b16 %v376
        %v498 = vpack.c.b16 %v436, %v434
        %v499 = vpack.c.b16 %v437, %v435
        %v500 = vpack.c.b16 %v440, %v438
        %v501 = vpack.c.b16 %v441, %v439
        %v502 = vpack.c.b16 %v444, %v442
        %v503 = vpack.c.b16 %v445, %v443
        %v504 = vpack.c.b16 %v448, %v446
        %v505 = vpack.c.b16 %v449, %v447
        %v506 = vpack.c.b16 %v452, %v450
        %v507 = vpack.c.b16 %v453, %v451
        %v508 = vpack.c.b16 %v456, %v454
        %v509 = vpack.c.b16 %v457, %v455
        %v510 = vpack.c.b16 %v460, %v458
        %v511 = vpack.c.b16 %v461, %v459
        %v512 = vpack.c.b16 %v464, %v462
        %v513 = vpack.c.b16 %v465, %v463
        %v514 = vpack.c.b16 %v468, %v466
        %v515 = vpack.c.b16 %v469, %v467
        %v516 = vpack.c.b16 %v472, %v470
        %v517 = vpack.c.b16 %v473, %v471
        %v518 = vpack.c.b16 %v476, %v474
        %v519 = vpack.c.b16 %v477, %v475
        %v520 = vpack.c.b16 %v480, %v478
        %v521 = vpack.c.b16 %v481, %v479
        %v522 = vpack.c.b16 %v484, %v482
        %v523 = vpack.c.b16 %v485, %v483
        %v524 = vpack.c.b16 %v488, %v486
        %v525 = vpack.c.b16 %v489, %v487
        %v526 = vpack.c.b16 %v492, %v490
        %v527 = vpack.c.b16 %v493, %v491
        %v528 = vpack.c.b16 %v496, %v494
        %v529 = vpack.c.b16 %v497, %v495
        %562 = vmatprep.subr.bf16.mxu0 %v499
        %563 = vmatpush1.bf16.msra.mxu0 %v498
        %564 = vmatprep.subr.bf16.mxu0 %v501
        %565 = vmatpush1.bf16.msra.mxu0 %v500
        %566 = vmatprep.subr.bf16.mxu0 %v503
        %567 = vmatpush1.bf16.msra.mxu0 %v502
        %568 = vmatprep.subr.bf16.mxu0 %v505
        %569 = vmatpush1.bf16.msra.mxu0 %v504
        %570 = vmatprep.subr.bf16.mxu0 %v507
        %571 = vmatpush1.bf16.msra.mxu0 %v506
        %572 = vmatprep.subr.bf16.mxu0 %v509
        %573 = vmatpush1.bf16.msra.mxu0 %v508
        %574 = vmatprep.subr.bf16.mxu0 %v511
        %575 = vmatpush1.bf16.msra.mxu0 %v510
        %576 = vmatprep.subr.bf16.mxu0 %v513
        %577 = vmatpush1.bf16.msra.mxu0 %v512
        %578 = vmatprep.subr.bf16.mxu0 %v515
        %579 = vmatpush1.bf16.msra.mxu0 %v514
        %580 = vmatprep.subr.bf16.mxu0 %v517
        %581 = vmatpush1.bf16.msra.mxu0 %v516
        %582 = vmatprep.subr.bf16.mxu0 %v519
        %583 = vmatpush1.bf16.msra.mxu0 %v518
        %584 = vmatprep.subr.bf16.mxu0 %v521
        %585 = vmatpush1.bf16.msra.mxu0 %v520
        %586 = vmatprep.subr.bf16.mxu0 %v523
        %587 = vmatpush1.bf16.msra.mxu0 %v522
        %588 = vmatprep.subr.bf16.mxu0 %v525
        %589 = vmatpush1.bf16.msra.mxu0 %v524
        %590 = vmatprep.subr.bf16.mxu0 %v527
        %591 = vmatpush1.bf16.msra.mxu0 %v526
        %592 = vmatprep.subr.bf16.mxu0 %v529
        %593 = vmatpush1.bf16.msra.mxu0 %v528
        %594 = vmatprep.mubr.bf16.mxu0 %v399
        %595 = vmatmul.mubr.bf16.gmra.mrb[0].mxu0 %v392
        %v596 = vpop.f32.mrb[0].mxu0
        %v597 = vadd.f32 0.0, %v596
        %v598 = vpop.f32.mrb[0].mxu0
        %v599 = vadd.f32 0.0, %v598
        %v600 = vpop.f32.mrb[0].mxu0
        %v601 = vpop.f32.mrb[0].mxu0
        %602 = vdwg.mxu0
        %v605 = vcombine.low %v597, %v599
        %v607 = vunpack.c.l.s4 1983009808
        %v608 = vunpack.c.0.s8 %v607
        %v609 = vlaneseq
        %v610 = vshrl.u32 %v609, 7
        %v611 = vsub.s32 %v608, %v610
        %v612 = vrot.slane %v605, %v611
        %614 = vst [vmem:[%s342] sm:$0xf] %v612
        %s615 = smul.u32 2, %s18
        %p616 = scmp.lt.s32.totalorder %s17, 0
        %s617 = scalar_select %p616, %s17, 0
        %p618 = scmp.lt.s32.totalorder %s615, 3
        %s619 = scalar_select %p618, %s615, 3
        %s620 = smul.addr %s617, 4
        %s621 = sadd.s32 %s619, %s620
        %s622 = smul.addr %s621, 2
        %s623 = scalar_lea.vmem %s2, %s622
        // Predicated region
        $region67: #{embedding_net_forward.109} parent=61 // pred_check
          %p624 = pneg %p97
        $region68: #{embedding_net_forward.109} parent=61 // pred_check_branch
          %626 = sbr.rel (%p624) target = $region70
        $region69: #{embedding_net_forward.109} parent=61 // pred_region
          %s627 = smul.u32 2, %s18
        $region70: #{embedding_net_forward.109} parent=61 // pred_fallthru
          _
      $region62: #{embedding_net_forward.109} parent=5 // pred_fallthru
        _
      %p628 = scmp.le.s32.totalorder 2, %s8
      // Predicated region
      $region71: #{embedding_net_forward.109} parent=5 // pred_check
        %p629 = pneg %p628
      $region72: #{embedding_net_forward.109} parent=5 // pred_check_branch
        %631 = sbr.rel (%p629) target = $region74
      $region73: #{embedding_net_forward.109} parent=5 // pred_region
        %s632 = ssub.s32 %s8, 2
        // Predicated region
        $region75: #{embedding_net_forward.109} parent=73 // pred_check
          %p633 = pneg %p103
        $region76: #{embedding_net_forward.109} parent=73 // pred_check_branch
          %635 = sbr.rel (%p633) target = $region78
        $region77: #{embedding_net_forward.109} parent=73 // pred_region
          %s636 = smul.u32 2, %s20
          %p637 = scmp.lt.s32.totalorder %s19, 0
          %s638 = scalar_select %p637, %s19, 0
          %p639 = scmp.lt.s32.totalorder %s636, 3
          %s640 = scalar_select %p639, %s636, 3
          %s641 = smul.addr %s638, 4
          %s642 = sadd.s32 %s640, %s641
          %s643 = smul.addr %s642, 2
          %s644 = scalar_lea.vmem %s2, %s643
        $region78: #{embedding_net_forward.109} parent=73 // pred_fallthru
          _
      $region74: #{embedding_net_forward.109} parent=5 // pred_fallthru
        _
    $region6: #{embedding_net_forward.109} parent=1 // loop_footer
      %s12 = sadd.s32 1, %s8
    $region7: #{embedding_net_forward.109} parent=1 // loop_footer_branch
      %7 = sbr.rel target = $region3
    $region8: #{embedding_net_forward.109} parent=1 // loop_exit
      _

// kernel: embedding_net_forward.110
$region0: #{embedding_net_forward.110}
  #allocation0 [shape = 'u32[]', space=smem, size = 0x4, offset = 0x4, fixed_abs, tag = 'smem constant byte address 0x4 - core index']
  #allocation1 [shape = 'u32[144,128]{1,0:T(1,128)}', space=vmem, size = 0x12000, scoped, tag = 'internal scratch']
  %s0 = inlined_call_operand.vmem [shape: f32[2,512], index: 0, kind: input, shape index: {}]
  %s1 = inlined_call_operand.vmem [shape: f32[1,512], index: 1, kind: output, shape index: {0}]
  %s2 = inlined_call_operand.vmem [shape: f32[1,512], index: 2, kind: output, shape index: {1}]
  %3 = xla_tuple %s1, %s2
  %s4 = sld [smem:[#allocation0]]
  $region26: #{embedding_net_forward.110} parent=0
    _
  %s6 = ssub.s32 1, %s4
  %s7 = scalar_select 0, %s6, %s4
  // Predicated region
  $region2: #{embedding_net_forward.110} parent=0 // pred_check
    _
  $region3: #{embedding_net_forward.110} parent=0 // pred_check_branch
    %9 = sbr.rel (0) target = $region5
  $region4: #{embedding_net_forward.110} parent=0 // pred_region
    _
  $region5: #{embedding_net_forward.110} parent=0 // pred_fallthru
    _
  %p10 = scmp.eq.s32.totalorder 0, 0
  // Predicated region
  $region6: #{embedding_net_forward.110} parent=0 // pred_check
    %p11 = pneg %p10
  $region7: #{embedding_net_forward.110} parent=0 // pred_check_branch
    %13 = sbr.rel (%p11) target = $region9
  $region8: #{embedding_net_forward.110} parent=0 // pred_region
    %v14 = vlaneseq
    %vm15 = vcmp.ge.s32.totalorder %v14, 0
    %vm16 = vcmp.lt.s32.totalorder %v14, 512
    %vm17 = vmand %vm15, %vm16
    %18 = vst.msk [vmem:[%s1] sm:$0xf] %vm17, 0.0
    %19 = vst.msk [vmem:[%s2] sm:$0xf] %vm17, 0.0
  $region9: #{embedding_net_forward.110} parent=0 // pred_fallthru
    _
  %v20 = vld [vmem:[%s0] sm:$0xff]
  %v21 = vld [vmem:[%s1] sm:$0xf]
  %v23 = vcombine.high %v20, %v20
  %v25 = vunpack.c.l.s4 1983009808
  %v26 = vunpack.c.0.s8 %v25
  %v27 = vlaneseq
  %v28 = vshrl.u32 %v27, 7
  %v29 = vsub.s32 %v26, %v28
  %v30 = vrot.slane %v20, %v29
  %v32 = vunpack.c.l.s4 1983009808
  %v33 = vunpack.c.0.s8 %v32
  %v34 = vlaneseq
  %v35 = vshrl.u32 %v34, 7
  %v36 = vsub.s32 %v33, %v35
  %v37 = vrot.slane %v23, %v36
  %v38 = vcombine.high %v30, %v30
  %v39 = vcombine.high %v37, %v37
  %vm44 = vcmask 1041408
  %v45 = vsel %vm44, %v30, 0.0
  %v46 = vrot.slane %v45, 4
  %v47 = vadd.f32 %v45, %v46
  %v48 = vrot.slane %v47, 2
  %v49 = vadd.f32 %v47, %v48
  %v50 = vrot.slane %v49, 1
  %v51 = vadd.f32 %v49, %v50
  %v52 = vsel %vm44, %v38, 0.0
  %v53 = vrot.slane %v52, 4
  %v54 = vadd.f32 %v52, %v53
  %v55 = vrot.slane %v54, 2
  %v56 = vadd.f32 %v54, %v55
  %v57 = vrot.slane %v56, 1
  %v58 = vadd.f32 %v56, %v57
  %v59 = vsel %vm44, %v37, 0.0
  %v60 = vrot.slane %v59, 4
  %v61 = vadd.f32 %v59, %v60
  %v62 = vrot.slane %v61, 2
  %v63 = vadd.f32 %v61, %v62
  %v64 = vrot.slane %v63, 1
  %v65 = vadd.f32 %v63, %v64
  %v66 = vsel %vm44, %v39, 0.0
  %v67 = vrot.slane %v66, 4
  %v68 = vadd.f32 %v66, %v67
  %v69 = vrot.slane %v68, 2
  %v70 = vadd.f32 %v68, %v69
  %v71 = vrot.slane %v70, 1
  %v72 = vadd.f32 %v70, %v71
  %v77 = vcombine.low %v51, %v58
  %v78 = vcombine.low %v65, %v72
  %v80 = vunpack.c.l.s4 1966171168
  %v81 = vunpack.c.0.s8 %v80
  %v82 = vlaneseq
  %v83 = vshrl.u32 %v82, 7
  %v84 = vsub.s32 %v81, %v83
  %v85 = vrot.slane %v77, %v84
  %v87 = vunpack.c.l.s4 1966171168
  %v88 = vunpack.c.0.s8 %v87
  %v89 = vlaneseq
  %v90 = vshrl.u32 %v89, 7
  %v91 = vsub.s32 %v88, %v90
  %v92 = vrot.slane %v78, %v91
  %v93 = vcombine.low %v85, %v92
  %v95 = vunpack.c.l.s4 1966171168
  %v96 = vunpack.c.0.s8 %v95
  %v97 = vlaneseq
  %v98 = vshrl.u32 %v97, 7
  %v99 = vsub.s32 %v96, %v98
  %v100 = vrot.slane %v93, %v99
  %v102 = vadd.f32 %v21, %v100
  %v103 = vlaneseq
  %vm104 = vcmp.ge.s32.totalorder %v103, 0
  %vm105 = vcmp.lt.s32.totalorder %v103, 512
  %vm106 = vmand %vm104, %vm105
  %107 = vst.msk [vmem:[%s1] sm:$0xf] %vm106, %v102
  %v108 = vld [vmem:[%s2] sm:$0xf]
  %v109 = vmul.f32 %v20, %v20
  %v111 = vcombine.high %v109, %v109
  %v113 = vunpack.c.l.s4 1983009808
  %v114 = vunpack.c.0.s8 %v113
  %v115 = vlaneseq
  %v116 = vshrl.u32 %v115, 7
  %v117 = vsub.s32 %v114, %v116
  %v118 = vrot.slane %v109, %v117
  %v120 = vunpack.c.l.s4 1983009808
  %v121 = vunpack.c.0.s8 %v120
  %v122 = vlaneseq
  %v123 = vshrl.u32 %v122, 7
  %v124 = vsub.s32 %v121, %v123
  %v125 = vrot.slane %v111, %v124
  %v126 = vcombine.high %v118, %v118
  %v127 = vcombine.high %v125, %v125
  %v132 = vsel %vm44, %v118, 0.0
  %v133 = vrot.slane %v132, 4
  %v134 = vadd.f32 %v132, %v133
  %v135 = vrot.slane %v134, 2
  %v136 = vadd.f32 %v134, %v135
  %v137 = vrot.slane %v136, 1
  %v138 = vadd.f32 %v136, %v137
  %v139 = vsel %vm44, %v126, 0.0
  %v140 = vrot.slane %v139, 4
  %v141 = vadd.f32 %v139, %v140
  %v142 = vrot.slane %v141, 2
  %v143 = vadd.f32 %v141, %v142
  %v144 = vrot.slane %v143, 1
  %v145 = vadd.f32 %v143, %v144
  %v146 = vsel %vm44, %v125, 0.0
  %v147 = vrot.slane %v146, 4
  %v148 = vadd.f32 %v146, %v147
  %v149 = vrot.slane %v148, 2
  %v150 = vadd.f32 %v148, %v149
  %v151 = vrot.slane %v150, 1
  %v152 = vadd.f32 %v150, %v151
  %v153 = vsel %vm44, %v127, 0.0
  %v154 = vrot.slane %v153, 4
  %v155 = vadd.f32 %v153, %v154
  %v156 = vrot.slane %v155, 2
  %v157 = vadd.f32 %v155, %v156
  %v158 = vrot.slane %v157, 1
  %v159 = vadd.f32 %v157, %v158
  %v164 = vcombine.low %v138, %v145
  %v165 = vcombine.low %v152, %v159
  %v167 = vunpack.c.l.s4 1966171168
  %v168 = vunpack.c.0.s8 %v167
  %v169 = vlaneseq
  %v170 = vshrl.u32 %v169, 7
  %v171 = vsub.s32 %v168, %v170
  %v172 = vrot.slane %v164, %v171
  %v174 = vunpack.c.l.s4 1966171168
  %v175 = vunpack.c.0.s8 %v174
  %v176 = vlaneseq
  %v177 = vshrl.u32 %v176, 7
  %v178 = vsub.s32 %v175, %v177
  %v179 = vrot.slane %v165, %v178
  %v180 = vcombine.low %v172, %v179
  %v182 = vunpack.c.l.s4 1966171168
  %v183 = vunpack.c.0.s8 %v182
  %v184 = vlaneseq
  %v185 = vshrl.u32 %v184, 7
  %v186 = vsub.s32 %v183, %v185
  %v187 = vrot.slane %v180, %v186
  %v189 = vadd.f32 %v108, %v187
  %190 = vst.msk [vmem:[%s2] sm:$0xf] %vm106, %v189
  // Predicated region
  $region10: #{embedding_net_forward.110} parent=0 // pred_check
    _
  $region11: #{embedding_net_forward.110} parent=0 // pred_check_branch
    %192 = sbr.rel (0) target = $region13
  $region12: #{embedding_net_forward.110} parent=0 // pred_region
    _
  $region13: #{embedding_net_forward.110} parent=0 // pred_fallthru
    _
  // Predicated region
  $region14: #{embedding_net_forward.110} parent=0 // pred_check
    _
  $region15: #{embedding_net_forward.110} parent=0 // pred_check_branch
    %194 = sbr.rel (0) target = $region17
  $region16: #{embedding_net_forward.110} parent=0 // pred_region
    _
  $region17: #{embedding_net_forward.110} parent=0 // pred_fallthru
    _
  // Predicated region
  $region18: #{embedding_net_forward.110} parent=0 // pred_check
    _
  $region19: #{embedding_net_forward.110} parent=0 // pred_check_branch
    %196 = sbr.rel (0) target = $region21
  $region20: #{embedding_net_forward.110} parent=0 // pred_region
    _
  $region21: #{embedding_net_forward.110} parent=0 // pred_fallthru
    _
  // Predicated region
  $region22: #{embedding_net_forward.110} parent=0 // pred_check
    _
  $region23: #{embedding_net_forward.110} parent=0 // pred_check_branch
    %198 = sbr.rel (0) target = $region25
  $region24: #{embedding_net_forward.110} parent=0 // pred_region
    _
  $region25: #{embedding_net_forward.110} parent=0 // pred_fallthru
    _

// kernel: embedding_net_forward.111
$region0: #{embedding_net_forward.111}
  #allocation0 [shape = 'u32[]', space=smem, size = 0x4, offset = 0x4, fixed_abs, tag = 'smem constant byte address 0x4 - core index']
  #allocation1 [shape = 'u32[144,128]{1,0:T(1,128)}', space=vmem, size = 0x12000, scoped, tag = 'internal scratch']
  %s0 = inlined_call_operand.vmem [shape: f32[2,512], index: 0, kind: input, shape index: {}]
  %s1 = inlined_call_operand.vmem [shape: f32[1,512], index: 1, kind: input, shape index: {}]
  %s2 = inlined_call_operand.vmem [shape: f32[1,512], index: 2, kind: input, shape index: {}]
  %s3 = inlined_call_operand.vmem [shape: f32[2,512], index: 3, kind: output, shape index: {}]
  %s4 = sld [smem:[#allocation0]]
  $region22: #{embedding_net_forward.111} parent=0
    _
  %s6 = ssub.s32 1, %s4
  %s7 = scalar_select 0, %s6, %s4
  // Predicated region
  $region2: #{embedding_net_forward.111} parent=0 // pred_check
    _
  $region3: #{embedding_net_forward.111} parent=0 // pred_check_branch
    %9 = sbr.rel (0) target = $region5
  $region4: #{embedding_net_forward.111} parent=0 // pred_region
    _
  $region5: #{embedding_net_forward.111} parent=0 // pred_fallthru
    _
  // Predicated region
  $region6: #{embedding_net_forward.111} parent=0 // pred_check
    _
  $region7: #{embedding_net_forward.111} parent=0 // pred_check_branch
    %11 = sbr.rel (0) target = $region9
  $region8: #{embedding_net_forward.111} parent=0 // pred_region
    _
  $region9: #{embedding_net_forward.111} parent=0 // pred_fallthru
    _
  // Predicated region
  $region10: #{embedding_net_forward.111} parent=0 // pred_check
    _
  $region11: #{embedding_net_forward.111} parent=0 // pred_check_branch
    %13 = sbr.rel (0) target = $region13
  $region12: #{embedding_net_forward.111} parent=0 // pred_region
    _
  $region13: #{embedding_net_forward.111} parent=0 // pred_fallthru
    _
  %v14 = vld [vmem:[%s0] sm:$0xff]
  %v15 = vld [vmem:[%s1] sm:$0xf]
  %v17 = vlaneseq
  %v18 = vshrl.u32 %v17, 7
  %v19 = vsub.s32 0, %v18
  %v20 = vrot.slane %v15, %v19
  %v21 = vlaneseq
  %v22 = vshrl.u32 %v21, 7
  %v23 = vsub.s32 1, %v22
  %v24 = vrot.slane %v15, %v23
  %v25 = vlaneseq
  %v26 = vshrl.u32 %v25, 7
  %v27 = vsub.s32 2, %v26
  %v28 = vrot.slane %v15, %v27
  %v29 = vlaneseq
  %v30 = vshrl.u32 %v29, 7
  %v31 = vsub.s32 3, %v30
  %v32 = vrot.slane %v15, %v31
  %v33 = vcombine.low %v20, %v24
  %v34 = vcombine.low %v28, %v32
  %v36 = vunpack.c.l.s4 1983009808
  %v37 = vunpack.c.0.s8 %v36
  %v38 = vlaneseq
  %v39 = vshrl.u32 %v38, 7
  %v40 = vsub.s32 %v37, %v39
  %v41 = vrot.slane %v33, %v40
  %v43 = vunpack.c.l.s4 1983009808
  %v44 = vunpack.c.0.s8 %v43
  %v45 = vlaneseq
  %v46 = vshrl.u32 %v45, 7
  %v47 = vsub.s32 %v44, %v46
  %v48 = vrot.slane %v34, %v47
  %v49 = vcombine.low %v41, %v48
  %v51 = vmul.f32 %v14, %v49
  %v52 = vld [vmem:[%s2] sm:$0xf]
  %v54 = vlaneseq
  %v55 = vshrl.u32 %v54, 7
  %v56 = vsub.s32 0, %v55
  %v57 = vrot.slane %v52, %v56
  %v58 = vlaneseq
  %v59 = vshrl.u32 %v58, 7
  %v60 = vsub.s32 1, %v59
  %v61 = vrot.slane %v52, %v60
  %v62 = vlaneseq
  %v63 = vshrl.u32 %v62, 7
  %v64 = vsub.s32 2, %v63
  %v65 = vrot.slane %v52, %v64
  %v66 = vlaneseq
  %v67 = vshrl.u32 %v66, 7
  %v68 = vsub.s32 3, %v67
  %v69 = vrot.slane %v52, %v68
  %v70 = vcombine.low %v57, %v61
  %v71 = vcombine.low %v65, %v69
  %v73 = vunpack.c.l.s4 1983009808
  %v74 = vunpack.c.0.s8 %v73
  %v75 = vlaneseq
  %v76 = vshrl.u32 %v75, 7
  %v77 = vsub.s32 %v74, %v76
  %v78 = vrot.slane %v70, %v77
  %v80 = vunpack.c.l.s4 1983009808
  %v81 = vunpack.c.0.s8 %v80
  %v82 = vlaneseq
  %v83 = vshrl.u32 %v82, 7
  %v84 = vsub.s32 %v81, %v83
  %v85 = vrot.slane %v71, %v84
  %v86 = vcombine.low %v78, %v85
  %v88 = vadd.f32 %v51, %v86
  %89 = vst [vmem:[%s3] sm:$0xff] %v88
  // Predicated region
  $region14: #{embedding_net_forward.111} parent=0 // pred_check
    _
  $region15: #{embedding_net_forward.111} parent=0 // pred_check_branch
    %91 = sbr.rel (0) target = $region17
  $region16: #{embedding_net_forward.111} parent=0 // pred_region
    _
  $region17: #{embedding_net_forward.111} parent=0 // pred_fallthru
    _
  // Predicated region
  $region18: #{embedding_net_forward.111} parent=0 // pred_check
    _
  $region19: #{embedding_net_forward.111} parent=0 // pred_check_branch
    %93 = sbr.rel (0) target = $region21
  $region20: #{embedding_net_forward.111} parent=0 // pred_region
    _
  $region21: #{embedding_net_forward.111} parent=0 // pred_fallthru
    _

// kernel: embedding_net_forward.105
$region0: #{embedding_net_forward.105}
  #allocation0 [shape = 'u32[]', space=smem, size = 0x4, offset = 0x4, fixed_abs, tag = 'smem constant byte address 0x4 - core index']
  #allocation1 [shape = 'u32[144,128]{1,0:T(1,128)}', space=vmem, size = 0x12000, scoped, tag = 'internal scratch']
  #allocation2 [shape = 'f32[2,256]{1,0:T(2,128)}', space=vmem, size = 0x800, scoped, tag = 'scratch operand']
  %s0 = inlined_call_operand.vmem [shape: bf16[2,2304], index: 0, kind: input, shape index: {}]
  %s1 = inlined_call_operand.vmem [shape: bf16[2304,512], index: 1, kind: input, shape index: {}]
  %s2 = inlined_call_operand.vmem [shape: f32[2,512], index: 2, kind: output, shape index: {}]
  %s3 = sld [smem:[#allocation0]]
  $region87: #{embedding_net_forward.105} parent=0
    _
  %s5 = ssub.s32 1, %s3
  %s6 = scalar_select 0, %s5, %s3
  $region1: #{embedding_net_forward.105} parent=0
    #allocation3 [shape = 'u8[393216]{0}', space=vmem, size = 0x60000, scoped, tag = 'input window, operand 1']
    loop: start=0, step=1, limit=14
    $region2: #{embedding_net_forward.105} parent=1 // loop_pre_header
      _
    $region3: #{embedding_net_forward.105} parent=1 // loop_header
      %s8 = sphi 0, %s12
      %p9 = scmp.ge.s32.totalorder %s8, 14
      %s15 = sphi 0, %s34
      %s16 = sphi 0, %s30
      %s17 = sphi 0, %s26
      %s18 = sphi 0, %s15
      %s19 = sphi 0, %s16
      %s20 = sphi 0, %s17
      %s21 = sphi 0, %s18
      %s22 = sphi 0, %s19
      %s23 = sphi 0, %s20
      %s39 = sphi 0, %s41
      %s42 = sphi 0, %s39
      %s43 = sphi 0, %s42
      %s59 = sphi 0, %s43
      %s67 = sphi 0, %s69
      %s70 = sphi 0, %s67
      %s71 = sphi 0, %s70
      %s87 = sphi 0, %s71
      %s95 = sphi 0, %s97
      %s98 = sphi 0, %s95
      %s99 = sphi 0, %s98
      %s115 = sphi 0, %s99
    $region4: #{embedding_net_forward.105} parent=1 // loop_header_branch
      %11 = sbr.rel (%p9) target = $region8
    $region5: #{embedding_net_forward.105} parent=1 // loop_body
      %s13 = ssub.s32 %s8, 1
      %s14 = ssub.s32 %s8, 2
      %s24 = sadd.s32 1, %s17
      %p25 = scmp.ge.s32.totalorder %s24, 6
      %s26 = scalar_select %p25, 0, %s24
      %s27 = sadd.s32 1, %s16
      %s28 = scalar_select %p25, %s27, %s16
      %p29 = scmp.ge.s32.totalorder %s28, 2
      %s30 = scalar_select %p29, 0, %s28
      %s31 = sadd.s32 1, %s15
      %s32 = scalar_select %p29, %s31, %s15
      %p33 = scmp.ge.s32.totalorder %s32, 1
      %s34 = scalar_select %p33, 0, %s32
      %s35 = ssub.s32 %s15, %s34
      %s36 = ssub.s32 %s17, %s26
      %s37 = sor.u32 %s35, %s36
      %p38 = scmp.eq.s32.totalorder %s37, 0
      %s40 = sadd.s32 %s39, 1
      %s41 = scalar_select %p38, %s39, %s40
      %p44 = pneg %p38
      %p45 = scmp.eq.s32.totalorder %s8, 11
      %p46 = por %p44, %p45
      %p47 = scmp.ne.s32.totalorder %s39, %s42
      %p48 = scmp.eq.s32.totalorder %s8, 0
      %p49 = por %p47, %p48
      %p50 = scmp.ne.s32.totalorder %s39, %s42
      %p51 = scmp.eq.s32.totalorder %s13, 11
      %p52 = por %p50, %p51
      %p53 = scmp.ne.s32.totalorder %s42, %s43
      %p54 = scmp.eq.s32.totalorder %s13, 0
      %p55 = por %p53, %p54
      %p56 = scmp.ne.s32.totalorder %s42, %s43
      %p57 = scmp.eq.s32.totalorder %s14, 11
      %p58 = por %p56, %p57
      %p60 = scmp.ne.s32.totalorder %s43, %s59
      %p61 = scmp.eq.s32.totalorder %s14, 0
      %p62 = por %p60, %p61
      %s63 = ssub.s32 %s17, %s26
      %s64 = ssub.s32 %s16, %s30
      %s65 = sor.u32 %s63, %s64
      %p66 = scmp.eq.s32.totalorder %s65, 0
      %s68 = sadd.s32 %s67, 1
      %s69 = scalar_select %p66, %s67, %s68
      %p72 = pneg %p66
      %p73 = scmp.eq.s32.totalorder %s8, 11
      %p74 = por %p72, %p73
      %p75 = scmp.ne.s32.totalorder %s67, %s70
      %p76 = scmp.eq.s32.totalorder %s8, 0
      %p77 = por %p75, %p76
      %p78 = scmp.ne.s32.totalorder %s67, %s70
      %p79 = scmp.eq.s32.totalorder %s13, 11
      %p80 = por %p78, %p79
      %p81 = scmp.ne.s32.totalorder %s70, %s71
      %p82 = scmp.eq.s32.totalorder %s13, 0
      %p83 = por %p81, %p82
      %p84 = scmp.ne.s32.totalorder %s70, %s71
      %p85 = scmp.eq.s32.totalorder %s14, 11
      %p86 = por %p84, %p85
      %p88 = scmp.ne.s32.totalorder %s71, %s87
      %p89 = scmp.eq.s32.totalorder %s14, 0
      %p90 = por %p88, %p89
      %s91 = ssub.s32 %s15, %s34
      %s92 = ssub.s32 %s16, %s30
      %s93 = sor.u32 %s91, %s92
      %p94 = scmp.eq.s32.totalorder %s93, 0
      %s96 = sadd.s32 %s95, 1
      %s97 = scalar_select %p94, %s95, %s96
      %p100 = pneg %p94
      %p101 = scmp.eq.s32.totalorder %s8, 11
      %p102 = por %p100, %p101
      %p103 = scmp.ne.s32.totalorder %s95, %s98
      %p104 = scmp.eq.s32.totalorder %s8, 0
      %p105 = por %p103, %p104
      %p106 = scmp.ne.s32.totalorder %s95, %s98
      %p107 = scmp.eq.s32.totalorder %s13, 11
      %p108 = por %p106, %p107
      %p109 = scmp.ne.s32.totalorder %s98, %s99
      %p110 = scmp.eq.s32.totalorder %s13, 0
      %p111 = por %p109, %p110
      %p112 = scmp.ne.s32.totalorder %s98, %s99
      %p113 = scmp.eq.s32.totalorder %s14, 11
      %p114 = por %p112, %p113
      %p116 = scmp.ne.s32.totalorder %s99, %s115
      %p117 = scmp.eq.s32.totalorder %s14, 0
      %p118 = por %p116, %p117
      %p119 = scmp.le.s32.totalorder 1, %s8
      %p120 = scmp.lt.s32.totalorder %s8, 13
      %p121 = pnand %p119, %p120
      %p122 = pneg %p121
      // Predicated region
      $region9: #{embedding_net_forward.105} parent=5 // pred_check
        _
      $region10: #{embedding_net_forward.105} parent=5 // pred_check_branch
        %124 = sbr.rel (%p121) target = $region12
      $region11: #{embedding_net_forward.105} parent=5 // pred_region
        %s125 = ssub.s32 %s8, 1
      $region12: #{embedding_net_forward.105} parent=5 // pred_fallthru
        _
      %p126 = scmp.lt.s32.totalorder %s8, 12
      // Predicated region
      $region13: #{embedding_net_forward.105} parent=5 // pred_check
        %p127 = pneg %p126
      $region14: #{embedding_net_forward.105} parent=5 // pred_check_branch
        %129 = sbr.rel (%p127) target = $region16
      $region15: #{embedding_net_forward.105} parent=5 // pred_region
        // Predicated region
        $region17: #{embedding_net_forward.105} parent=15 // pred_check
          %p130 = pneg %p49
        $region18: #{embedding_net_forward.105} parent=15 // pred_check_branch
          %132 = sbr.rel (%p130) target = $region20
        $region19: #{embedding_net_forward.105} parent=15 // pred_region
          %s133 = smul.u32 3, %s17
          %p134 = scmp.lt.s32.totalorder %s15, 0
          %s135 = scalar_select %p134, %s15, 0
          %p136 = scmp.lt.s32.totalorder %s133, 17
          %s137 = scalar_select %p136, %s133, 17
          %s138 = smul.addr %s135, 18
          %s139 = sadd.s32 %s137, %s138
          %s140 = scalar_lea.vmem %s0, %s139
          %s141 = smul.u32 3, %s17
        $region20: #{embedding_net_forward.105} parent=15 // pred_fallthru
          _
        // Predicated region
        $region21: #{embedding_net_forward.105} parent=15 // pred_check
          %p142 = pneg %p77
        $region22: #{embedding_net_forward.105} parent=15 // pred_check_branch
          %144 = sbr.rel (%p142) target = $region24
        $region23: #{embedding_net_forward.105} parent=15 // pred_region
          %s145 = sand.u32 %s67, 1
          %s146 = sand.u32 %s67, 1
          %s147 = smul.addr %s146, 384
          %s148 = scalar_lea.vmem [#allocation3], %s147
          %s149 = smul.u32 48, %s17
          %s150 = smul.u32 2, %s16
          %s151 = smul.addr %s149, 4
          %s152 = sadd.s32 %s150, %s151
          %s153 = smul.addr %s152, 4
          %s154 = scalar_lea.vmem %s1, %s153
          // Predicated region
          $region25: #{embedding_net_forward.105} parent=23 // pred_check
            _
          $region26: #{embedding_net_forward.105} parent=23 // pred_check_branch
            %156 = sbr.rel (0) target = $region28
          $region27: #{embedding_net_forward.105} parent=23 // pred_region
            // Predicated region
            $region29: #{embedding_net_forward.105} parent=27 // pred_check
              _
            $region30: #{embedding_net_forward.105} parent=27 // pred_check_branch
              %158 = sbr.rel (0) target = $region32
            $region31: #{embedding_net_forward.105} parent=27 // pred_region
              // Predicated region
              $region44: #{embedding_net_forward.105} parent=31 // pred_check
                _
              $region45: #{embedding_net_forward.105} parent=31 // pred_check_branch
                %267 = sbr.rel (0) target = $region47
              $region46: #{embedding_net_forward.105} parent=31 // pred_region
                loop: start=0, step=1, limit=1
                $region48: #{embedding_net_forward.105} parent=46 // loop_pre_header
                  _
                $region49: #{embedding_net_forward.105} parent=46 // loop_header
                  %s269 = sphi 0, %s273
                  %p270 = scmp.ge.s32.totalorder %s269, 1
                  %s274 = sphi %s154, %s154
                  %s275 = sphi %s148, %s148
                $region50: #{embedding_net_forward.105} parent=46 // loop_header_branch
                  %272 = sbr.rel (%p270) target = $region54
                $region51: #{embedding_net_forward.105} parent=46 // loop_body
                  %v276 = vld [vmem:[%s274] sm:$0xff]
                  %277 = vst [vmem:[%s275] sm:$0xff] %v276
                  %v278 = vld [vmem:[%s274 + $0x10] sm:$0xff]
                  %279 = vst [vmem:[%s275 + $0x8] sm:$0xff] %v278
                  %v280 = vld [vmem:[%s274 + $0x20] sm:$0xff]
                  %281 = vst [vmem:[%s275 + $0x10] sm:$0xff] %v280
                  %v282 = vld [vmem:[%s274 + $0x30] sm:$0xff]
                  %283 = vst [vmem:[%s275 + $0x18] sm:$0xff] %v282
                  %v284 = vld [vmem:[%s274 + $0x40] sm:$0xff]
                  %285 = vst [vmem:[%s275 + $0x20] sm:$0xff] %v284
                  %v286 = vld [vmem:[%s274 + $0x50] sm:$0xff]
                  %287 = vst [vmem:[%s275 + $0x28] sm:$0xff] %v286
                  %v288 = vld [vmem:[%s274 + $0x60] sm:$0xff]
                  %289 = vst [vmem:[%s275 + $0x30] sm:$0xff] %v288
                  %v290 = vld [vmem:[%s274 + $0x70] sm:$0xff]
                  %291 = vst [vmem:[%s275 + $0x38] sm:$0xff] %v290
                  %v292 = vld [vmem:[%s274 + $0x80] sm:$0xff]
                  %293 = vst [vmem:[%s275 + $0x40] sm:$0xff] %v292
                  %v294 = vld [vmem:[%s274 + $0x90] sm:$0xff]
                  %295 = vst [vmem:[%s275 + $0x48] sm:$0xff] %v294
                  %v296 = vld [vmem:[%s274 + $0xa0] sm:$0xff]
                  %297 = vst [vmem:[%s275 + $0x50] sm:$0xff] %v296
                  %v298 = vld [vmem:[%s274 + $0xb0] sm:$0xff]
                  %299 = vst [vmem:[%s275 + $0x58] sm:$0xff] %v298
                  %v300 = vld [vmem:[%s274 + $0xc0] sm:$0xff]
                  %301 = vst [vmem:[%s275 + $0x60] sm:$0xff] %v300
                  %v302 = vld [vmem:[%s274 + $0xd0] sm:$0xff]
                  %303 = vst [vmem:[%s275 + $0x68] sm:$0xff] %v302
                  %v304 = vld [vmem:[%s274 + $0xe0] sm:$0xff]
                  %305 = vst [vmem:[%s275 + $0x70] sm:$0xff] %v304
                  %v306 = vld [vmem:[%s274 + $0xf0] sm:$0xff]
                  %307 = vst [vmem:[%s275 + $0x78] sm:$0xff] %v306
                  %v308 = vld [vmem:[%s274 + $0x100] sm:$0xff]
                  %309 = vst [vmem:[%s275 + $0x80] sm:$0xff] %v308
                  %v310 = vld [vmem:[%s274 + $0x110] sm:$0xff]
                  %311 = vst [vmem:[%s275 + $0x88] sm:$0xff] %v310
                  %v312 = vld [vmem:[%s274 + $0x120] sm:$0xff]
                  %313 = vst [vmem:[%s275 + $0x90] sm:$0xff] %v312
                  %v314 = vld [vmem:[%s274 + $0x130] sm:$0xff]
                  %315 = vst [vmem:[%s275 + $0x98] sm:$0xff] %v314
                  %v316 = vld [vmem:[%s274 + $0x140] sm:$0xff]
                  %317 = vst [vmem:[%s275 + $0xa0] sm:$0xff] %v316
                  %v318 = vld [vmem:[%s274 + $0x150] sm:$0xff]
                  %319 = vst [vmem:[%s275 + $0xa8] sm:$0xff] %v318
                  %v320 = vld [vmem:[%s274 + $0x160] sm:$0xff]
                  %321 = vst [vmem:[%s275 + $0xb0] sm:$0xff] %v320
                  %v322 = vld [vmem:[%s274 + $0x170] sm:$0xff]
                  %323 = vst [vmem:[%s275 + $0xb8] sm:$0xff] %v322
                  %v324 = vld [vmem:[%s274 + $0x180] sm:$0xff]
                  %325 = vst [vmem:[%s275 + $0xc0] sm:$0xff] %v324
                  %v326 = vld [vmem:[%s274 + $0x190] sm:$0xff]
                  %327 = vst [vmem:[%s275 + $0xc8] sm:$0xff] %v326
                  %v328 = vld [vmem:[%s274 + $0x1a0] sm:$0xff]
                  %329 = vst [vmem:[%s275 + $0xd0] sm:$0xff] %v328
                  %v330 = vld [vmem:[%s274 + $0x1b0] sm:$0xff]
                  %331 = vst [vmem:[%s275 + $0xd8] sm:$0xff] %v330
                  %v332 = vld [vmem:[%s274 + $0x1c0] sm:$0xff]
                  %333 = vst [vmem:[%s275 + $0xe0] sm:$0xff] %v332
                  %v334 = vld [vmem:[%s274 + $0x1d0] sm:$0xff]
                  %335 = vst [vmem:[%s275 + $0xe8] sm:$0xff] %v334
                  %v336 = vld [vmem:[%s274 + $0x1e0] sm:$0xff]
                  %337 = vst [vmem:[%s275 + $0xf0] sm:$0xff] %v336
                  %v338 = vld [vmem:[%s274 + $0x1f0] sm:$0xff]
                  %339 = vst [vmem:[%s275 + $0xf8] sm:$0xff] %v338
                  %v340 = vld [vmem:[%s274 + $0x200] sm:$0xff]
                  %341 = vst [vmem:[%s275 + $0x100] sm:$0xff] %v340
                  %v342 = vld [vmem:[%s274 + $0x210] sm:$0xff]
                  %343 = vst [vmem:[%s275 + $0x108] sm:$0xff] %v342
                  %v344 = vld [vmem:[%s274 + $0x220] sm:$0xff]
                  %345 = vst [vmem:[%s275 + $0x110] sm:$0xff] %v344
                  %v346 = vld [vmem:[%s274 + $0x230] sm:$0xff]
                  %347 = vst [vmem:[%s275 + $0x118] sm:$0xff] %v346
                  %v348 = vld [vmem:[%s274 + $0x240] sm:$0xff]
                  %349 = vst [vmem:[%s275 + $0x120] sm:$0xff] %v348
                  %v350 = vld [vmem:[%s274 + $0x250] sm:$0xff]
                  %351 = vst [vmem:[%s275 + $0x128] sm:$0xff] %v350
                  %v352 = vld [vmem:[%s274 + $0x260] sm:$0xff]
                  %353 = vst [vmem:[%s275 + $0x130] sm:$0xff] %v352
                  %v354 = vld [vmem:[%s274 + $0x270] sm:$0xff]
                  %355 = vst [vmem:[%s275 + $0x138] sm:$0xff] %v354
                  %v356 = vld [vmem:[%s274 + $0x280] sm:$0xff]
                  %357 = vst [vmem:[%s275 + $0x140] sm:$0xff] %v356
                  %v358 = vld [vmem:[%s274 + $0x290] sm:$0xff]
                  %359 = vst [vmem:[%s275 + $0x148] sm:$0xff] %v358
                  %v360 = vld [vmem:[%s274 + $0x2a0] sm:$0xff]
                  %361 = vst [vmem:[%s275 + $0x150] sm:$0xff] %v360
                  %v362 = vld [vmem:[%s274 + $0x2b0] sm:$0xff]
                  %363 = vst [vmem:[%s275 + $0x158] sm:$0xff] %v362
                  %v364 = vld [vmem:[%s274 + $0x2c0] sm:$0xff]
                  %365 = vst [vmem:[%s275 + $0x160] sm:$0xff] %v364
                  %v366 = vld [vmem:[%s274 + $0x2d0] sm:$0xff]
                  %367 = vst [vmem:[%s275 + $0x168] sm:$0xff] %v366
                  %v368 = vld [vmem:[%s274 + $0x2e0] sm:$0xff]
                  %369 = vst [vmem:[%s275 + $0x170] sm:$0xff] %v368
                  %v370 = vld [vmem:[%s274 + $0x2f0] sm:$0xff]
                  %371 = vst [vmem:[%s275 + $0x178] sm:$0xff] %v370
                $region52: #{embedding_net_forward.105} parent=46 // loop_footer
                  %s273 = sadd.s32 1, %s269
                $region53: #{embedding_net_forward.105} parent=46 // loop_footer_branch
                  %268 = sbr.rel target = $region49
                $region54: #{embedding_net_forward.105} parent=46 // loop_exit
                  _
              $region47: #{embedding_net_forward.105} parent=31 // pred_fallthru
                _
              // Predicated region
              $region55: #{embedding_net_forward.105} parent=31 // pred_check
                _
              $region56: #{embedding_net_forward.105} parent=31 // pred_check_branch
                %373 = sbr.rel target = $region58
              $region57: #{embedding_net_forward.105} parent=31 // pred_region
                _
              $region58: #{embedding_net_forward.105} parent=31 // pred_fallthru
                _
            $region32: #{embedding_net_forward.105} parent=27 // pred_fallthru
              _
            // Predicated region
            $region33: #{embedding_net_forward.105} parent=27 // pred_check
              _
            $region34: #{embedding_net_forward.105} parent=27 // pred_check_branch
              %160 = sbr.rel target = $region36
            $region35: #{embedding_net_forward.105} parent=27 // pred_region
              loop: start=0, step=1, limit=1
              $region37: #{embedding_net_forward.105} parent=35 // loop_pre_header
                _
              $region38: #{embedding_net_forward.105} parent=35 // loop_header
                %s163 = sphi 0, %s167
                %p164 = scmp.ge.s32.totalorder %s163, 1
                %s168 = sphi %s154, %s154
                %s169 = sphi %s148, %s148
              $region39: #{embedding_net_forward.105} parent=35 // loop_header_branch
                %166 = sbr.rel (%p164) target = $region43
              $region40: #{embedding_net_forward.105} parent=35 // loop_body
                %v170 = vld [vmem:[%s168] sm:$0xff]
                %171 = vst [vmem:[%s169] sm:$0xff] %v170
                %v172 = vld [vmem:[%s168 + $0x10] sm:$0xff]
                %173 = vst [vmem:[%s169 + $0x8] sm:$0xff] %v172
                %v174 = vld [vmem:[%s168 + $0x20] sm:$0xff]
                %175 = vst [vmem:[%s169 + $0x10] sm:$0xff] %v174
                %v176 = vld [vmem:[%s168 + $0x30] sm:$0xff]
                %177 = vst [vmem:[%s169 + $0x18] sm:$0xff] %v176
                %v178 = vld [vmem:[%s168 + $0x40] sm:$0xff]
                %179 = vst [vmem:[%s169 + $0x20] sm:$0xff] %v178
                %v180 = vld [vmem:[%s168 + $0x50] sm:$0xff]
                %181 = vst [vmem:[%s169 + $0x28] sm:$0xff] %v180
                %v182 = vld [vmem:[%s168 + $0x60] sm:$0xff]
                %183 = vst [vmem:[%s169 + $0x30] sm:$0xff] %v182
                %v184 = vld [vmem:[%s168 + $0x70] sm:$0xff]
                %185 = vst [vmem:[%s169 + $0x38] sm:$0xff] %v184
                %v186 = vld [vmem:[%s168 + $0x80] sm:$0xff]
                %187 = vst [vmem:[%s169 + $0x40] sm:$0xff] %v186
                %v188 = vld [vmem:[%s168 + $0x90] sm:$0xff]
                %189 = vst [vmem:[%s169 + $0x48] sm:$0xff] %v188
                %v190 = vld [vmem:[%s168 + $0xa0] sm:$0xff]
                %191 = vst [vmem:[%s169 + $0x50] sm:$0xff] %v190
                %v192 = vld [vmem:[%s168 + $0xb0] sm:$0xff]
                %193 = vst [vmem:[%s169 + $0x58] sm:$0xff] %v192
                %v194 = vld [vmem:[%s168 + $0xc0] sm:$0xff]
                %195 = vst [vmem:[%s169 + $0x60] sm:$0xff] %v194
                %v196 = vld [vmem:[%s168 + $0xd0] sm:$0xff]
                %197 = vst [vmem:[%s169 + $0x68] sm:$0xff] %v196
                %v198 = vld [vmem:[%s168 + $0xe0] sm:$0xff]
                %199 = vst [vmem:[%s169 + $0x70] sm:$0xff] %v198
                %v200 = vld [vmem:[%s168 + $0xf0] sm:$0xff]
                %201 = vst [vmem:[%s169 + $0x78] sm:$0xff] %v200
                %v202 = vld [vmem:[%s168 + $0x100] sm:$0xff]
                %203 = vst [vmem:[%s169 + $0x80] sm:$0xff] %v202
                %v204 = vld [vmem:[%s168 + $0x110] sm:$0xff]
                %205 = vst [vmem:[%s169 + $0x88] sm:$0xff] %v204
                %v206 = vld [vmem:[%s168 + $0x120] sm:$0xff]
                %207 = vst [vmem:[%s169 + $0x90] sm:$0xff] %v206
                %v208 = vld [vmem:[%s168 + $0x130] sm:$0xff]
                %209 = vst [vmem:[%s169 + $0x98] sm:$0xff] %v208
                %v210 = vld [vmem:[%s168 + $0x140] sm:$0xff]
                %211 = vst [vmem:[%s169 + $0xa0] sm:$0xff] %v210
                %v212 = vld [vmem:[%s168 + $0x150] sm:$0xff]
                %213 = vst [vmem:[%s169 + $0xa8] sm:$0xff] %v212
                %v214 = vld [vmem:[%s168 + $0x160] sm:$0xff]
                %215 = vst [vmem:[%s169 + $0xb0] sm:$0xff] %v214
                %v216 = vld [vmem:[%s168 + $0x170] sm:$0xff]
                %217 = vst [vmem:[%s169 + $0xb8] sm:$0xff] %v216
                %v218 = vld [vmem:[%s168 + $0x180] sm:$0xff]
                %219 = vst [vmem:[%s169 + $0xc0] sm:$0xff] %v218
                %v220 = vld [vmem:[%s168 + $0x190] sm:$0xff]
                %221 = vst [vmem:[%s169 + $0xc8] sm:$0xff] %v220
                %v222 = vld [vmem:[%s168 + $0x1a0] sm:$0xff]
                %223 = vst [vmem:[%s169 + $0xd0] sm:$0xff] %v222
                %v224 = vld [vmem:[%s168 + $0x1b0] sm:$0xff]
                %225 = vst [vmem:[%s169 + $0xd8] sm:$0xff] %v224
                %v226 = vld [vmem:[%s168 + $0x1c0] sm:$0xff]
                %227 = vst [vmem:[%s169 + $0xe0] sm:$0xff] %v226
                %v228 = vld [vmem:[%s168 + $0x1d0] sm:$0xff]
                %229 = vst [vmem:[%s169 + $0xe8] sm:$0xff] %v228
                %v230 = vld [vmem:[%s168 + $0x1e0] sm:$0xff]
                %231 = vst [vmem:[%s169 + $0xf0] sm:$0xff] %v230
                %v232 = vld [vmem:[%s168 + $0x1f0] sm:$0xff]
                %233 = vst [vmem:[%s169 + $0xf8] sm:$0xff] %v232
                %v234 = vld [vmem:[%s168 + $0x200] sm:$0xff]
                %235 = vst [vmem:[%s169 + $0x100] sm:$0xff] %v234
                %v236 = vld [vmem:[%s168 + $0x210] sm:$0xff]
                %237 = vst [vmem:[%s169 + $0x108] sm:$0xff] %v236
                %v238 = vld [vmem:[%s168 + $0x220] sm:$0xff]
                %239 = vst [vmem:[%s169 + $0x110] sm:$0xff] %v238
                %v240 = vld [vmem:[%s168 + $0x230] sm:$0xff]
                %241 = vst [vmem:[%s169 + $0x118] sm:$0xff] %v240
                %v242 = vld [vmem:[%s168 + $0x240] sm:$0xff]
                %243 = vst [vmem:[%s169 + $0x120] sm:$0xff] %v242
                %v244 = vld [vmem:[%s168 + $0x250] sm:$0xff]
                %245 = vst [vmem:[%s169 + $0x128] sm:$0xff] %v244
                %v246 = vld [vmem:[%s168 + $0x260] sm:$0xff]
                %247 = vst [vmem:[%s169 + $0x130] sm:$0xff] %v246
                %v248 = vld [vmem:[%s168 + $0x270] sm:$0xff]
                %249 = vst [vmem:[%s169 + $0x138] sm:$0xff] %v248
                %v250 = vld [vmem:[%s168 + $0x280] sm:$0xff]
                %251 = vst [vmem:[%s169 + $0x140] sm:$0xff] %v250
                %v252 = vld [vmem:[%s168 + $0x290] sm:$0xff]
                %253 = vst [vmem:[%s169 + $0x148] sm:$0xff] %v252
                %v254 = vld [vmem:[%s168 + $0x2a0] sm:$0xff]
                %255 = vst [vmem:[%s169 + $0x150] sm:$0xff] %v254
                %v256 = vld [vmem:[%s168 + $0x2b0] sm:$0xff]
                %257 = vst [vmem:[%s169 + $0x158] sm:$0xff] %v256
                %v258 = vld [vmem:[%s168 + $0x2c0] sm:$0xff]
                %259 = vst [vmem:[%s169 + $0x160] sm:$0xff] %v258
                %v260 = vld [vmem:[%s168 + $0x2d0] sm:$0xff]
                %261 = vst [vmem:[%s169 + $0x168] sm:$0xff] %v260
                %v262 = vld [vmem:[%s168 + $0x2e0] sm:$0xff]
                %263 = vst [vmem:[%s169 + $0x170] sm:$0xff] %v262
                %v264 = vld [vmem:[%s168 + $0x2f0] sm:$0xff]
                %265 = vst [vmem:[%s169 + $0x178] sm:$0xff] %v264
              $region41: #{embedding_net_forward.105} parent=35 // loop_footer
                %s167 = sadd.s32 1, %s163
              $region42: #{embedding_net_forward.105} parent=35 // loop_footer_branch
                %162 = sbr.rel target = $region38
              $region43: #{embedding_net_forward.105} parent=35 // loop_exit
                _
            $region36: #{embedding_net_forward.105} parent=27 // pred_fallthru
              _
          $region28: #{embedding_net_forward.105} parent=23 // pred_fallthru
            _
          %374 = vnop
        $region24: #{embedding_net_forward.105} parent=15 // pred_fallthru
          _
      $region16: #{embedding_net_forward.105} parent=5 // pred_fallthru
        _
      %p375 = scmp.le.s32.totalorder 1, %s8
      %p376 = scmp.lt.s32.totalorder %s8, 13
      %p377 = pnand %p375, %p376
      %p378 = pneg %p377
      // Predicated region
      $region59: #{embedding_net_forward.105} parent=5 // pred_check
        _
      $region60: #{embedding_net_forward.105} parent=5 // pred_check_branch
        %380 = sbr.rel (%p377) target = $region62
      $region61: #{embedding_net_forward.105} parent=5 // pred_region
        %s381 = ssub.s32 %s8, 1
        %s382 = sand.u32 %s70, 1
        %s383 = sand.u32 %s70, 1
        %s384 = smul.addr %s383, 384
        %s385 = scalar_lea.vmem [#allocation3], %s384
        // Predicated region
        $region63: #{embedding_net_forward.105} parent=61 // pred_check
          %p386 = pneg %p83
        $region64: #{embedding_net_forward.105} parent=61 // pred_check_branch
          %388 = sbr.rel (%p386) target = $region66
        $region65: #{embedding_net_forward.105} parent=61 // pred_region
          _
        $region66: #{embedding_net_forward.105} parent=61 // pred_fallthru
          _
        %s389 = smul.u32 3, %s20
        %p390 = scmp.lt.s32.totalorder %s18, 0
        %s391 = scalar_select %p390, %s18, 0
        %p392 = scmp.lt.s32.totalorder %s389, 17
        %s393 = scalar_select %p392, %s389, 17
        %s394 = smul.addr %s391, 18
        %s395 = sadd.s32 %s393, %s394
        %s396 = scalar_lea.vmem %s0, %s395
        %p397 = pneg %p55
        %p398 = pneg %p52
        %s399 = sand.u32 %s70, 1
        %s400 = sand.u32 %s70, 1
        %s401 = smul.addr %s400, 384
        %s402 = scalar_lea.vmem [#allocation3], %s401
        %p403 = pneg %p83
        %p404 = pneg %p80
        %p405 = pneg %p111
        %p406 = pneg %p108
        %s407 = smul.u32 2, %s19
        %p408 = scmp.lt.s32.totalorder %s18, 0
        %s409 = scalar_select %p408, %s18, 0
        %p410 = scmp.lt.s32.totalorder %s407, 3
        %s411 = scalar_select %p410, %s407, 3
        %s412 = smul.addr %s409, 4
        %s413 = sadd.s32 %s411, %s412
        %s414 = smul.addr %s413, 2
        %s415 = scalar_lea.vmem %s2, %s414
        %s416 = smul.u32 3, %s20
        %p417 = scmp.lt.s32.totalorder %s18, 0
        %s418 = scalar_select %p417, %s18, 0
        %p419 = scmp.lt.s32.totalorder %s416, 17
        %s420 = scalar_select %p419, %s416, 17
        %s421 = smul.addr %s418, 18
        %s422 = sadd.s32 %s420, %s421
        %s423 = scalar_lea.vmem %s0, %s422
        %s424 = smul.u32 3, %s20
        %s425 = smul.u32 48, %s20
        %s426 = smul.u32 2, %s19
        %s427 = smul.u32 2, %s19
        %p428 = scmp.lt.s32.totalorder %s18, 0
        %s429 = scalar_select %p428, %s18, 0
        %p430 = scmp.lt.s32.totalorder %s427, 3
        %s431 = scalar_select %p430, %s427, 3
        %s432 = smul.addr %s429, 4
        %s433 = sadd.s32 %s431, %s432
        %s434 = smul.addr %s433, 2
        %s435 = scalar_lea.vmem %s2, %s434
        %s436 = smul.u32 2, %s19
        %p438 = scmp.eq.s32.totalorder %s20, 0
        // Predicated region
        $region67: #{embedding_net_forward.105} parent=61 // pred_check
          %p439 = pneg %p438
        $region68: #{embedding_net_forward.105} parent=61 // pred_check_branch
          %441 = sbr.rel (%p439) target = $region70
        $region69: #{embedding_net_forward.105} parent=61 // pred_region
          %442 = vst [vmem:[#allocation2] sm:$0xf] 0.0
        $region70: #{embedding_net_forward.105} parent=61 // pred_fallthru
          _
        %v443 = vld [vmem:[#allocation2] sm:$0xf]
        %v444 = vld [vmem:[%s423] sm:$0x7]
        %v445 = vld [vmem:[%s385] sm:$0xff]
        %v446 = vld [vmem:[%s385 + $0x8] sm:$0xff]
        %v447 = vld [vmem:[%s385 + $0x10] sm:$0xff]
        %v448 = vld [vmem:[%s385 + $0x18] sm:$0xff]
        %v449 = vld [vmem:[%s385 + $0x20] sm:$0xff]
        %v450 = vld [vmem:[%s385 + $0x28] sm:$0xff]
        %v451 = vld [vmem:[%s385 + $0x30] sm:$0xff]
        %v452 = vld [vmem:[%s385 + $0x38] sm:$0xff]
        %v453 = vld [vmem:[%s385 + $0x40] sm:$0xff]
        %v454 = vld [vmem:[%s385 + $0x48] sm:$0xff]
        %v455 = vld [vmem:[%s385 + $0x50] sm:$0xff]
        %v456 = vld [vmem:[%s385 + $0x58] sm:$0xff]
        %v457 = vld [vmem:[%s385 + $0x60] sm:$0xff]
        %v458 = vld [vmem:[%s385 + $0x68] sm:$0xff]
        %v459 = vld [vmem:[%s385 + $0x70] sm:$0xff]
        %v460 = vld [vmem:[%s385 + $0x78] sm:$0xff]
        %v461 = vld [vmem:[%s385 + $0x80] sm:$0xff]
        %v462 = vld [vmem:[%s385 + $0x88] sm:$0xff]
        %v463 = vld [vmem:[%s385 + $0x90] sm:$0xff]
        %v464 = vld [vmem:[%s385 + $0x98] sm:$0xff]
        %v465 = vld [vmem:[%s385 + $0xa0] sm:$0xff]
        %v466 = vld [vmem:[%s385 + $0xa8] sm:$0xff]
        %v467 = vld [vmem:[%s385 + $0xb0] sm:$0xff]
        %v468 = vld [vmem:[%s385 + $0xb8] sm:$0xff]
        %v469 = vld [vmem:[%s385 + $0xc0] sm:$0xff]
        %v470 = vld [vmem:[%s385 + $0xc8] sm:$0xff]
        %v471 = vld [vmem:[%s385 + $0xd0] sm:$0xff]
        %v472 = vld [vmem:[%s385 + $0xd8] sm:$0xff]
        %v473 = vld [vmem:[%s385 + $0xe0] sm:$0xff]
        %v474 = vld [vmem:[%s385 + $0xe8] sm:$0xff]
        %v475 = vld [vmem:[%s385 + $0xf0] sm:$0xff]
        %v476 = vld [vmem:[%s385 + $0xf8] sm:$0xff]
        %v477 = vld [vmem:[%s385 + $0x100] sm:$0xff]
        %v478 = vld [vmem:[%s385 + $0x108] sm:$0xff]
        %v479 = vld [vmem:[%s385 + $0x110] sm:$0xff]
        %v480 = vld [vmem:[%s385 + $0x118] sm:$0xff]
        %v481 = vld [vmem:[%s385 + $0x120] sm:$0xff]
        %v482 = vld [vmem:[%s385 + $0x128] sm:$0xff]
        %v483 = vld [vmem:[%s385 + $0x130] sm:$0xff]
        %v484 = vld [vmem:[%s385 + $0x138] sm:$0xff]
        %v485 = vld [vmem:[%s385 + $0x140] sm:$0xff]
        %v486 = vld [vmem:[%s385 + $0x148] sm:$0xff]
        %v487 = vld [vmem:[%s385 + $0x150] sm:$0xff]
        %v488 = vld [vmem:[%s385 + $0x158] sm:$0xff]
        %v489 = vld [vmem:[%s385 + $0x160] sm:$0xff]
        %v490 = vld [vmem:[%s385 + $0x168] sm:$0xff]
        %v491 = vld [vmem:[%s385 + $0x170] sm:$0xff]
        %v492 = vld [vmem:[%s385 + $0x178] sm:$0xff]
        %v495 = vunpack.c.l.s4 1966171168
        %v496 = vunpack.c.0.s8 %v495
        %v497 = vlaneseq
        %v498 = vshrl.u32 %v497, 7
        %v499 = vsub.s32 %v496, %v498
        %v500 = vrot.slane %v444, %v499
        %v501 = vcombine.high %v500, %v500
        %v503 = vunpack.c.l.s4 1966171168
        %v504 = vunpack.c.0.s8 %v503
        %v505 = vlaneseq
        %v506 = vshrl.u32 %v505, 7
        %v507 = vsub.s32 %v504, %v506
        %v508 = vrot.slane %v500, %v507
        %v510 = vunpack.c.l.s4 1966171168
        %v511 = vunpack.c.0.s8 %v510
        %v512 = vlaneseq
        %v513 = vshrl.u32 %v512, 7
        %v514 = vsub.s32 %v511, %v513
        %v515 = vrot.slane %v501, %v514
        %v516 = vcombine.high %v508, %v508
        %v568 = vunpack.c.l.b16 %v445
        %v569 = vunpack.c.h.b16 %v445
        %v570 = vunpack.c.l.b16 %v446
        %v571 = vunpack.c.h.b16 %v446
        %v572 = vunpack.c.l.b16 %v447
        %v573 = vunpack.c.h.b16 %v447
        %v574 = vunpack.c.l.b16 %v448
        %v575 = vunpack.c.h.b16 %v448
        %v576 = vunpack.c.l.b16 %v449
        %v577 = vunpack.c.h.b16 %v449
        %v578 = vunpack.c.l.b16 %v450
        %v579 = vunpack.c.h.b16 %v450
        %v580 = vunpack.c.l.b16 %v451
        %v581 = vunpack.c.h.b16 %v451
        %v582 = vunpack.c.l.b16 %v452
        %v583 = vunpack.c.h.b16 %v452
        %v584 = vunpack.c.l.b16 %v453
        %v585 = vunpack.c.h.b16 %v453
        %v586 = vunpack.c.l.b16 %v454
        %v587 = vunpack.c.h.b16 %v454
        %v588 = vunpack.c.l.b16 %v455
        %v589 = vunpack.c.h.b16 %v455
        %v590 = vunpack.c.l.b16 %v456
        %v591 = vunpack.c.h.b16 %v456
        %v592 = vunpack.c.l.b16 %v457
        %v593 = vunpack.c.h.b16 %v457
        %v594 = vunpack.c.l.b16 %v458
        %v595 = vunpack.c.h.b16 %v458
        %v596 = vunpack.c.l.b16 %v459
        %v597 = vunpack.c.h.b16 %v459
        %v598 = vunpack.c.l.b16 %v460
        %v599 = vunpack.c.h.b16 %v460
        %v600 = vunpack.c.l.b16 %v461
        %v601 = vunpack.c.h.b16 %v461
        %v602 = vunpack.c.l.b16 %v462
        %v603 = vunpack.c.h.b16 %v462
        %v604 = vunpack.c.l.b16 %v463
        %v605 = vunpack.c.h.b16 %v463
        %v606 = vunpack.c.l.b16 %v464
        %v607 = vunpack.c.h.b16 %v464
        %v608 = vunpack.c.l.b16 %v465
        %v609 = vunpack.c.h.b16 %v465
        %v610 = vunpack.c.l.b16 %v466
        %v611 = vunpack.c.h.b16 %v466
        %v612 = vunpack.c.l.b16 %v467
        %v613 = vunpack.c.h.b16 %v467
        %v614 = vunpack.c.l.b16 %v468
        %v615 = vunpack.c.h.b16 %v468
        %v616 = vunpack.c.l.b16 %v469
        %v617 = vunpack.c.h.b16 %v469
        %v618 = vunpack.c.l.b16 %v470
        %v619 = vunpack.c.h.b16 %v470
        %v620 = vunpack.c.l.b16 %v471
        %v621 = vunpack.c.h.b16 %v471
        %v622 = vunpack.c.l.b16 %v472
        %v623 = vunpack.c.h.b16 %v472
        %v624 = vunpack.c.l.b16 %v473
        %v625 = vunpack.c.h.b16 %v473
        %v626 = vunpack.c.l.b16 %v474
        %v627 = vunpack.c.h.b16 %v474
        %v628 = vunpack.c.l.b16 %v475
        %v629 = vunpack.c.h.b16 %v475
        %v630 = vunpack.c.l.b16 %v476
        %v631 = vunpack.c.h.b16 %v476
        %v632 = vunpack.c.l.b16 %v477
        %v633 = vunpack.c.h.b16 %v477
        %v634 = vunpack.c.l.b16 %v478
        %v635 = vunpack.c.h.b16 %v478
        %v636 = vunpack.c.l.b16 %v479
        %v637 = vunpack.c.h.b16 %v479
        %v638 = vunpack.c.l.b16 %v480
        %v639 = vunpack.c.h.b16 %v480
        %v640 = vunpack.c.l.b16 %v481
        %v641 = vunpack.c.h.b16 %v481
        %v642 = vunpack.c.l.b16 %v482
        %v643 = vunpack.c.h.b16 %v482
        %v644 = vunpack.c.l.b16 %v483
        %v645 = vunpack.c.h.b16 %v483
        %v646 = vunpack.c.l.b16 %v484
        %v647 = vunpack.c.h.b16 %v484
        %v648 = vunpack.c.l.b16 %v485
        %v649 = vunpack.c.h.b16 %v485
        %v650 = vunpack.c.l.b16 %v486
        %v651 = vunpack.c.h.b16 %v486
        %v652 = vunpack.c.l.b16 %v487
        %v653 = vunpack.c.h.b16 %v487
        %v654 = vunpack.c.l.b16 %v488
        %v655 = vunpack.c.h.b16 %v488
        %v656 = vunpack.c.l.b16 %v489
        %v657 = vunpack.c.h.b16 %v489
        %v658 = vunpack.c.l.b16 %v490
        %v659 = vunpack.c.h.b16 %v490
        %v660 = vunpack.c.l.b16 %v491
        %v661 = vunpack.c.h.b16 %v491
        %v662 = vunpack.c.l.b16 %v492
        %v663 = vunpack.c.h.b16 %v492
        %v664 = vpack.c.b16 %v570, %v568
        %v665 = vpack.c.b16 %v571, %v569
        %v666 = vpack.c.b16 %v574, %v572
        %v667 = vpack.c.b16 %v575, %v573
        %v668 = vpack.c.b16 %v578, %v576
        %v669 = vpack.c.b16 %v579, %v577
        %v670 = vpack.c.b16 %v582, %v580
        %v671 = vpack.c.b16 %v583, %v581
        %v672 = vpack.c.b16 %v586, %v584
        %v673 = vpack.c.b16 %v587, %v585
        %v674 = vpack.c.b16 %v590, %v588
        %v675 = vpack.c.b16 %v591, %v589
        %v676 = vpack.c.b16 %v594, %v592
        %v677 = vpack.c.b16 %v595, %v593
        %v678 = vpack.c.b16 %v598, %v596
        %v679 = vpack.c.b16 %v599, %v597
        %v680 = vpack.c.b16 %v602, %v600
        %v681 = vpack.c.b16 %v603, %v601
        %v682 = vpack.c.b16 %v606, %v604
        %v683 = vpack.c.b16 %v607, %v605
        %v684 = vpack.c.b16 %v610, %v608
        %v685 = vpack.c.b16 %v611, %v609
        %v686 = vpack.c.b16 %v614, %v612
        %v687 = vpack.c.b16 %v615, %v613
        %v688 = vpack.c.b16 %v618, %v616
        %v689 = vpack.c.b16 %v619, %v617
        %v690 = vpack.c.b16 %v622, %v620
        %v691 = vpack.c.b16 %v623, %v621
        %v692 = vpack.c.b16 %v626, %v624
        %v693 = vpack.c.b16 %v627, %v625
        %v694 = vpack.c.b16 %v630, %v628
        %v695 = vpack.c.b16 %v631, %v629
        %v696 = vpack.c.b16 %v634, %v632
        %v697 = vpack.c.b16 %v635, %v633
        %v698 = vpack.c.b16 %v638, %v636
        %v699 = vpack.c.b16 %v639, %v637
        %v700 = vpack.c.b16 %v642, %v640
        %v701 = vpack.c.b16 %v643, %v641
        %v702 = vpack.c.b16 %v646, %v644
        %v703 = vpack.c.b16 %v647, %v645
        %v704 = vpack.c.b16 %v650, %v648
        %v705 = vpack.c.b16 %v651, %v649
        %v706 = vpack.c.b16 %v654, %v652
        %v707 = vpack.c.b16 %v655, %v653
        %v708 = vpack.c.b16 %v658, %v656
        %v709 = vpack.c.b16 %v659, %v657
        %v710 = vpack.c.b16 %v662, %v660
        %v711 = vpack.c.b16 %v663, %v661
        %760 = vmatprep.subr.bf16.mxu0 %v665
        %761 = vmatpush1.bf16.msra.mxu0 %v664
        %762 = vmatprep.subr.bf16.mxu0 %v667
        %763 = vmatpush1.bf16.msra.mxu0 %v666
        %764 = vmatprep.subr.bf16.mxu0 %v669
        %765 = vmatpush1.bf16.msra.mxu0 %v668
        %766 = vmatprep.subr.bf16.mxu0 %v671
        %767 = vmatpush1.bf16.msra.mxu0 %v670
        %768 = vmatprep.subr.bf16.mxu0 %v673
        %769 = vmatpush1.bf16.msra.mxu0 %v672
        %770 = vmatprep.subr.bf16.mxu0 %v675
        %771 = vmatpush1.bf16.msra.mxu0 %v674
        %772 = vmatprep.subr.bf16.mxu0 %v677
        %773 = vmatpush1.bf16.msra.mxu0 %v676
        %774 = vmatprep.subr.bf16.mxu0 %v679
        %775 = vmatpush1.bf16.msra.mxu0 %v678
        %776 = vmatprep.subr.bf16.mxu0 %v681
        %777 = vmatpush1.bf16.msra.mxu0 %v680
        %778 = vmatprep.subr.bf16.mxu0 %v683
        %779 = vmatpush1.bf16.msra.mxu0 %v682
        %780 = vmatprep.subr.bf16.mxu0 %v685
        %781 = vmatpush1.bf16.msra.mxu0 %v684
        %782 = vmatprep.subr.bf16.mxu0 %v687
        %783 = vmatpush1.bf16.msra.mxu0 %v686
        %784 = vmatprep.subr.bf16.mxu0 %v689
        %785 = vmatpush1.bf16.msra.mxu0 %v688
        %786 = vmatprep.subr.bf16.mxu0 %v691
        %787 = vmatpush1.bf16.msra.mxu0 %v690
        %788 = vmatprep.subr.bf16.mxu0 %v693
        %789 = vmatpush1.bf16.msra.mxu0 %v692
        %790 = vmatprep.subr.bf16.mxu0 %v695
        %791 = vmatpush1.bf16.msra.mxu0 %v694
        %792 = vmatprep.mubr.bf16.mxu0 %v515
        %793 = vmatmul.mubr.bf16.gmra.mrb[0].mxu0 %v508
        %v794 = vpop.f32.mrb[0].mxu0
        %v795 = vadd.f32 0.0, %v794
        %v796 = vpop.f32.mrb[0].mxu0
        %v797 = vadd.f32 0.0, %v796
        %v798 = vpop.f32.mrb[0].mxu0
        %v799 = vpop.f32.mrb[0].mxu0
        %800 = vdwg.mxu0
        %801 = vmatprep.subr.bf16.mxu0 %v697
        %802 = vmatpush1.bf16.msra.mxu0 %v696
        %803 = vmatprep.subr.bf16.mxu0 %v699
        %804 = vmatpush1.bf16.msra.mxu0 %v698
        %805 = vmatprep.subr.bf16.mxu0 %v701
        %806 = vmatpush1.bf16.msra.mxu0 %v700
        %807 = vmatprep.subr.bf16.mxu0 %v703
        %808 = vmatpush1.bf16.msra.mxu0 %v702
        %809 = vmatprep.subr.bf16.mxu0 %v705
        %810 = vmatpush1.bf16.msra.mxu0 %v704
        %811 = vmatprep.subr.bf16.mxu0 %v707
        %812 = vmatpush1.bf16.msra.mxu0 %v706
        %813 = vmatprep.subr.bf16.mxu0 %v709
        %814 = vmatpush1.bf16.msra.mxu0 %v708
        %815 = vmatprep.subr.bf16.mxu0 %v711
        %816 = vmatpush1.bf16.msra.mxu0 %v710
        %817 = vmatprep.subr.bf16.mxu0 0
        %818 = vmatpush1.bf16.msra.mxu0 0
        %819 = vmatprep.subr.bf16.mxu0 0
        %820 = vmatpush1.bf16.msra.mxu0 0
        %821 = vmatprep.subr.bf16.mxu0 0
        %822 = vmatpush1.bf16.msra.mxu0 0
        %823 = vmatprep.subr.bf16.mxu0 0
        %824 = vmatpush1.bf16.msra.mxu0 0
        %825 = vmatprep.subr.bf16.mxu0 0
        %826 = vmatpush1.bf16.msra.mxu0 0
        %827 = vmatprep.subr.bf16.mxu0 0
        %828 = vmatpush1.bf16.msra.mxu0 0
        %829 = vmatprep.subr.bf16.mxu0 0
        %830 = vmatpush1.bf16.msra.mxu0 0
        %831 = vmatprep.subr.bf16.mxu0 0
        %832 = vmatpush1.bf16.msra.mxu0 0
        %833 = vmatprep.mubr.bf16.mxu0 0
        %834 = vmatmul.mubr.bf16.gmra.mrb[0].mxu0 %v516
        %v835 = vpop.f32.mrb[0].mxu0
        %v836 = vadd.f32 %v795, %v835
        %v837 = vpop.f32.mrb[0].mxu0
        %v838 = vadd.f32 %v797, %v837
        %v839 = vpop.f32.mrb[0].mxu0
        %v840 = vpop.f32.mrb[0].mxu0
        %841 = vdwg.mxu0
        %v844 = vcombine.low %v836, %v838
        %v846 = vunpack.c.l.s4 1983009808
        %v847 = vunpack.c.0.s8 %v846
        %v848 = vlaneseq
        %v849 = vshrl.u32 %v848, 7
        %v850 = vsub.s32 %v847, %v849
        %v851 = vrot.slane %v844, %v850
        %v853 = vadd.f32 %v443, %v851
        %854 = vst [vmem:[#allocation2] sm:$0xf] %v853
        %p855 = scmp.eq.s32.totalorder %s20, 5
        // Predicated region
        $region71: #{embedding_net_forward.105} parent=61 // pred_check
          %p856 = pneg %p855
        $region72: #{embedding_net_forward.105} parent=61 // pred_check_branch
          %858 = sbr.rel (%p856) target = $region74
        $region73: #{embedding_net_forward.105} parent=61 // pred_region
          %v859 = vld [vmem:[#allocation2] sm:$0xf]
          %860 = vst [vmem:[%s435] sm:$0xf] %v859
        $region74: #{embedding_net_forward.105} parent=61 // pred_fallthru
          _
        %s861 = smul.u32 2, %s19
        %p862 = scmp.lt.s32.totalorder %s18, 0
        %s863 = scalar_select %p862, %s18, 0
        %p864 = scmp.lt.s32.totalorder %s861, 3
        %s865 = scalar_select %p864, %s861, 3
        %s866 = smul.addr %s863, 4
        %s867 = sadd.s32 %s865, %s866
        %s868 = smul.addr %s867, 2
        %s869 = scalar_lea.vmem %s2, %s868
        // Predicated region
        $region75: #{embedding_net_forward.105} parent=61 // pred_check
          %p870 = pneg %p108
        $region76: #{embedding_net_forward.105} parent=61 // pred_check_branch
          %872 = sbr.rel (%p870) target = $region78
        $region77: #{embedding_net_forward.105} parent=61 // pred_region
          %s873 = smul.u32 2, %s19
        $region78: #{embedding_net_forward.105} parent=61 // pred_fallthru
          _
      $region62: #{embedding_net_forward.105} parent=5 // pred_fallthru
        _
      %p874 = scmp.le.s32.totalorder 2, %s8
      // Predicated region
      $region79: #{embedding_net_forward.105} parent=5 // pred_check
        %p875 = pneg %p874
      $region80: #{embedding_net_forward.105} parent=5 // pred_check_branch
        %877 = sbr.rel (%p875) target = $region82
      $region81: #{embedding_net_forward.105} parent=5 // pred_region
        %s878 = ssub.s32 %s8, 2
        // Predicated region
        $region83: #{embedding_net_forward.105} parent=81 // pred_check
          %p879 = pneg %p114
        $region84: #{embedding_net_forward.105} parent=81 // pred_check_branch
          %881 = sbr.rel (%p879) target = $region86
        $region85: #{embedding_net_forward.105} parent=81 // pred_region
          %s882 = smul.u32 2, %s22
          %p883 = scmp.lt.s32.totalorder %s21, 0
          %s884 = scalar_select %p883, %s21, 0
          %p885 = scmp.lt.s32.totalorder %s882, 3
          %s886 = scalar_select %p885, %s882, 3
          %s887 = smul.addr %s884, 4
          %s888 = sadd.s32 %s886, %s887
          %s889 = smul.addr %s888, 2
          %s890 = scalar_lea.vmem %s2, %s889
        $region86: #{embedding_net_forward.105} parent=81 // pred_fallthru
          _
      $region82: #{embedding_net_forward.105} parent=5 // pred_fallthru
        _
    $region6: #{embedding_net_forward.105} parent=1 // loop_footer
      %s12 = sadd.s32 1, %s8
    $region7: #{embedding_net_forward.105} parent=1 // loop_footer_branch
      %7 = sbr.rel target = $region3
    $region8: #{embedding_net_forward.105} parent=1 // loop_exit
      _

// kernel: embedding_net_forward.107
$region0: #{embedding_net_forward.107}
  #allocation0 [shape = 'u32[]', space=smem, size = 0x4, offset = 0x4, fixed_abs, tag = 'smem constant byte address 0x4 - core index']
  #allocation1 [shape = 'u32[144,128]{1,0:T(1,128)}', space=vmem, size = 0x12000, scoped, tag = 'internal scratch']
  %s0 = inlined_call_operand.vmem [shape: f32[2,512], index: 0, kind: input, shape index: {}]
  %s1 = inlined_call_operand.vmem [shape: f32[1,512], index: 1, kind: input, shape index: {}]
  %s2 = inlined_call_operand.vmem [shape: f32[1,512], index: 2, kind: input, shape index: {}]
  %s3 = inlined_call_operand.vmem [shape: f32[2,512], index: 3, kind: output, shape index: {}]
  %s4 = sld [smem:[#allocation0]]
  $region22: #{embedding_net_forward.107} parent=0
    _
  %s6 = ssub.s32 1, %s4
  %s7 = scalar_select 0, %s6, %s4
  // Predicated region
  $region2: #{embedding_net_forward.107} parent=0 // pred_check
    _
  $region3: #{embedding_net_forward.107} parent=0 // pred_check_branch
    %9 = sbr.rel (0) target = $region5
  $region4: #{embedding_net_forward.107} parent=0 // pred_region
    _
  $region5: #{embedding_net_forward.107} parent=0 // pred_fallthru
    _
  // Predicated region
  $region6: #{embedding_net_forward.107} parent=0 // pred_check
    _
  $region7: #{embedding_net_forward.107} parent=0 // pred_check_branch
    %11 = sbr.rel (0) target = $region9
  $region8: #{embedding_net_forward.107} parent=0 // pred_region
    _
  $region9: #{embedding_net_forward.107} parent=0 // pred_fallthru
    _
  // Predicated region
  $region10: #{embedding_net_forward.107} parent=0 // pred_check
    _
  $region11: #{embedding_net_forward.107} parent=0 // pred_check_branch
    %13 = sbr.rel (0) target = $region13
  $region12: #{embedding_net_forward.107} parent=0 // pred_region
    _
  $region13: #{embedding_net_forward.107} parent=0 // pred_fallthru
    _
  %v14 = vld [vmem:[%s0] sm:$0xff]
  %v15 = vld [vmem:[%s1] sm:$0xf]
  %v17 = vlaneseq
  %v18 = vshrl.u32 %v17, 7
  %v19 = vsub.s32 0, %v18
  %v20 = vrot.slane %v15, %v19
  %v21 = vlaneseq
  %v22 = vshrl.u32 %v21, 7
  %v23 = vsub.s32 1, %v22
  %v24 = vrot.slane %v15, %v23
  %v25 = vlaneseq
  %v26 = vshrl.u32 %v25, 7
  %v27 = vsub.s32 2, %v26
  %v28 = vrot.slane %v15, %v27
  %v29 = vlaneseq
  %v30 = vshrl.u32 %v29, 7
  %v31 = vsub.s32 3, %v30
  %v32 = vrot.slane %v15, %v31
  %v33 = vcombine.low %v20, %v24
  %v34 = vcombine.low %v28, %v32
  %v36 = vunpack.c.l.s4 1983009808
  %v37 = vunpack.c.0.s8 %v36
  %v38 = vlaneseq
  %v39 = vshrl.u32 %v38, 7
  %v40 = vsub.s32 %v37, %v39
  %v41 = vrot.slane %v33, %v40
  %v43 = vunpack.c.l.s4 1983009808
  %v44 = vunpack.c.0.s8 %v43
  %v45 = vlaneseq
  %v46 = vshrl.u32 %v45, 7
  %v47 = vsub.s32 %v44, %v46
  %v48 = vrot.slane %v34, %v47
  %v49 = vcombine.low %v41, %v48
  %v51 = vmul.f32 %v14, %v49
  %v52 = vld [vmem:[%s2] sm:$0xf]
  %v54 = vlaneseq
  %v55 = vshrl.u32 %v54, 7
  %v56 = vsub.s32 0, %v55
  %v57 = vrot.slane %v52, %v56
  %v58 = vlaneseq
  %v59 = vshrl.u32 %v58, 7
  %v60 = vsub.s32 1, %v59
  %v61 = vrot.slane %v52, %v60
  %v62 = vlaneseq
  %v63 = vshrl.u32 %v62, 7
  %v64 = vsub.s32 2, %v63
  %v65 = vrot.slane %v52, %v64
  %v66 = vlaneseq
  %v67 = vshrl.u32 %v66, 7
  %v68 = vsub.s32 3, %v67
  %v69 = vrot.slane %v52, %v68
  %v70 = vcombine.low %v57, %v61
  %v71 = vcombine.low %v65, %v69
  %v73 = vunpack.c.l.s4 1983009808
  %v74 = vunpack.c.0.s8 %v73
  %v75 = vlaneseq
  %v76 = vshrl.u32 %v75, 7
  %v77 = vsub.s32 %v74, %v76
  %v78 = vrot.slane %v70, %v77
  %v80 = vunpack.c.l.s4 1983009808
  %v81 = vunpack.c.0.s8 %v80
  %v82 = vlaneseq
  %v83 = vshrl.u32 %v82, 7
  %v84 = vsub.s32 %v81, %v83
  %v85 = vrot.slane %v71, %v84
  %v86 = vcombine.low %v78, %v85
  %v88 = vadd.f32 %v51, %v86
  %v89 = vmax.f32 %v88, 0.0
  %90 = vst [vmem:[%s3] sm:$0xff] %v89
  // Predicated region
  $region14: #{embedding_net_forward.107} parent=0 // pred_check
    _
  $region15: #{embedding_net_forward.107} parent=0 // pred_check_branch
    %92 = sbr.rel (0) target = $region17
  $region16: #{embedding_net_forward.107} parent=0 // pred_region
    _
  $region17: #{embedding_net_forward.107} parent=0 // pred_fallthru
    _
  // Predicated region
  $region18: #{embedding_net_forward.107} parent=0 // pred_check
    _
  $region19: #{embedding_net_forward.107} parent=0 // pred_check_branch
    %94 = sbr.rel (0) target = $region21
  $region20: #{embedding_net_forward.107} parent=0 // pred_region
    _
  $region21: #{embedding_net_forward.107} parent=0 // pred_fallthru
    _

// kernel: embedding_net_forward.113
$region0: #{embedding_net_forward.113}
  #allocation0 [shape = 'u32[]', space=smem, size = 0x4, offset = 0x4, fixed_abs, tag = 'smem constant byte address 0x4 - core index']
  #allocation1 [shape = 'u32[144,128]{1,0:T(1,128)}', space=vmem, size = 0x12000, scoped, tag = 'internal scratch']
  %s0 = inlined_call_operand.vmem [shape: f32[2,512], index: 0, kind: input, shape index: {}]
  %s1 = inlined_call_operand.vmem [shape: f32[1,512], index: 1, kind: input, shape index: {}]
  %s2 = inlined_call_operand.vmem [shape: f32[1,512], index: 2, kind: input, shape index: {}]
  %s3 = inlined_call_operand.vmem [shape: f32[2,512], index: 3, kind: input, shape index: {}]
  %s4 = inlined_call_operand.vmem [shape: f32[2,512], index: 4, kind: output, shape index: {}]
  %s5 = sld [smem:[#allocation0]]
  $region26: #{embedding_net_forward.113} parent=0
    _
  %s7 = ssub.s32 1, %s5
  %s8 = scalar_select 0, %s7, %s5
  // Predicated region
  $region2: #{embedding_net_forward.113} parent=0 // pred_check
    _
  $region3: #{embedding_net_forward.113} parent=0 // pred_check_branch
    %10 = sbr.rel (0) target = $region5
  $region4: #{embedding_net_forward.113} parent=0 // pred_region
    _
  $region5: #{embedding_net_forward.113} parent=0 // pred_fallthru
    _
  // Predicated region
  $region6: #{embedding_net_forward.113} parent=0 // pred_check
    _
  $region7: #{embedding_net_forward.113} parent=0 // pred_check_branch
    %12 = sbr.rel (0) target = $region9
  $region8: #{embedding_net_forward.113} parent=0 // pred_region
    _
  $region9: #{embedding_net_forward.113} parent=0 // pred_fallthru
    _
  // Predicated region
  $region10: #{embedding_net_forward.113} parent=0 // pred_check
    _
  $region11: #{embedding_net_forward.113} parent=0 // pred_check_branch
    %14 = sbr.rel (0) target = $region13
  $region12: #{embedding_net_forward.113} parent=0 // pred_region
    _
  $region13: #{embedding_net_forward.113} parent=0 // pred_fallthru
    _
  // Predicated region
  $region14: #{embedding_net_forward.113} parent=0 // pred_check
    _
  $region15: #{embedding_net_forward.113} parent=0 // pred_check_branch
    %16 = sbr.rel (0) target = $region17
  $region16: #{embedding_net_forward.113} parent=0 // pred_region
    _
  $region17: #{embedding_net_forward.113} parent=0 // pred_fallthru
    _
  %v17 = vld [vmem:[%s0] sm:$0xff]
  %v18 = vld [vmem:[%s1] sm:$0xf]
  %v20 = vlaneseq
  %v21 = vshrl.u32 %v20, 7
  %v22 = vsub.s32 0, %v21
  %v23 = vrot.slane %v18, %v22
  %v24 = vlaneseq
  %v25 = vshrl.u32 %v24, 7
  %v26 = vsub.s32 1, %v25
  %v27 = vrot.slane %v18, %v26
  %v28 = vlaneseq
  %v29 = vshrl.u32 %v28, 7
  %v30 = vsub.s32 2, %v29
  %v31 = vrot.slane %v18, %v30
  %v32 = vlaneseq
  %v33 = vshrl.u32 %v32, 7
  %v34 = vsub.s32 3, %v33
  %v35 = vrot.slane %v18, %v34
  %v36 = vcombine.low %v23, %v27
  %v37 = vcombine.low %v31, %v35
  %v39 = vunpack.c.l.s4 1983009808
  %v40 = vunpack.c.0.s8 %v39
  %v41 = vlaneseq
  %v42 = vshrl.u32 %v41, 7
  %v43 = vsub.s32 %v40, %v42
  %v44 = vrot.slane %v36, %v43
  %v46 = vunpack.c.l.s4 1983009808
  %v47 = vunpack.c.0.s8 %v46
  %v48 = vlaneseq
  %v49 = vshrl.u32 %v48, 7
  %v50 = vsub.s32 %v47, %v49
  %v51 = vrot.slane %v37, %v50
  %v52 = vcombine.low %v44, %v51
  %v54 = vmul.f32 %v17, %v52
  %v55 = vld [vmem:[%s2] sm:$0xf]
  %v57 = vlaneseq
  %v58 = vshrl.u32 %v57, 7
  %v59 = vsub.s32 0, %v58
  %v60 = vrot.slane %v55, %v59
  %v61 = vlaneseq
  %v62 = vshrl.u32 %v61, 7
  %v63 = vsub.s32 1, %v62
  %v64 = vrot.slane %v55, %v63
  %v65 = vlaneseq
  %v66 = vshrl.u32 %v65, 7
  %v67 = vsub.s32 2, %v66
  %v68 = vrot.slane %v55, %v67
  %v69 = vlaneseq
  %v70 = vshrl.u32 %v69, 7
  %v71 = vsub.s32 3, %v70
  %v72 = vrot.slane %v55, %v71
  %v73 = vcombine.low %v60, %v64
  %v74 = vcombine.low %v68, %v72
  %v76 = vunpack.c.l.s4 1983009808
  %v77 = vunpack.c.0.s8 %v76
  %v78 = vlaneseq
  %v79 = vshrl.u32 %v78, 7
  %v80 = vsub.s32 %v77, %v79
  %v81 = vrot.slane %v73, %v80
  %v83 = vunpack.c.l.s4 1983009808
  %v84 = vunpack.c.0.s8 %v83
  %v85 = vlaneseq
  %v86 = vshrl.u32 %v85, 7
  %v87 = vsub.s32 %v84, %v86
  %v88 = vrot.slane %v74, %v87
  %v89 = vcombine.low %v81, %v88
  %v91 = vadd.f32 %v54, %v89
  %v92 = vld [vmem:[%s3] sm:$0xff]
  %v93 = vadd.f32 %v91, %v92
  %v94 = vmax.f32 %v93, 0.0
  %95 = vst [vmem:[%s4] sm:$0xff] %v94
  // Predicated region
  $region18: #{embedding_net_forward.113} parent=0 // pred_check
    _
  $region19: #{embedding_net_forward.113} parent=0 // pred_check_branch
    %97 = sbr.rel (0) target = $region21
  $region20: #{embedding_net_forward.113} parent=0 // pred_region
    _
  $region21: #{embedding_net_forward.113} parent=0 // pred_fallthru
    _
  // Predicated region
  $region22: #{embedding_net_forward.113} parent=0 // pred_check
    _
  $region23: #{embedding_net_forward.113} parent=0 // pred_check_branch
    %99 = sbr.rel (0) target = $region25
  $region24: #{embedding_net_forward.113} parent=0 // pred_region
    _
  $region25: #{embedding_net_forward.113} parent=0 // pred_fallthru
    _

// kernel: embedding_net_forward.108
$region0: #{embedding_net_forward.108}
  #allocation0 [shape = 'u32[]', space=smem, size = 0x4, offset = 0x4, fixed_abs, tag = 'smem constant byte address 0x4 - core index']
  #allocation1 [shape = 'u32[144,128]{1,0:T(1,128)}', space=vmem, size = 0x12000, scoped, tag = 'internal scratch']
  #allocation2 [shape = 'f32[2,256]{1,0:T(2,128)}', space=vmem, size = 0x800, scoped, tag = 'scratch operand']
  %s0 = inlined_call_operand.vmem [shape: bf16[2,4608], index: 0, kind: input, shape index: {}]
  %s1 = inlined_call_operand.vmem [shape: bf16[4608,512], index: 1, kind: input, shape index: {}]
  %s2 = inlined_call_operand.vmem [shape: f32[2,512], index: 2, kind: output, shape index: {}]
  %s3 = sld [smem:[#allocation0]]
  $region87: #{embedding_net_forward.108} parent=0
    _
  %s5 = ssub.s32 1, %s3
  %s6 = scalar_select 0, %s5, %s3
  $region1: #{embedding_net_forward.108} parent=0
    #allocation3 [shape = 'u8[524288]{0}', space=vmem, size = 0x80000, scoped, tag = 'input window, operand 1']
    loop: start=0, step=1, limit=20
    $region2: #{embedding_net_forward.108} parent=1 // loop_pre_header
      _
    $region3: #{embedding_net_forward.108} parent=1 // loop_header
      %s8 = sphi 0, %s12
      %p9 = scmp.ge.s32.totalorder %s8, 20
      %s15 = sphi 0, %s34
      %s16 = sphi 0, %s30
      %s17 = sphi 0, %s26
      %s18 = sphi 0, %s15
      %s19 = sphi 0, %s16
      %s20 = sphi 0, %s17
      %s21 = sphi 0, %s18
      %s22 = sphi 0, %s19
      %s23 = sphi 0, %s20
      %s39 = sphi 0, %s41
      %s42 = sphi 0, %s39
      %s43 = sphi 0, %s42
      %s59 = sphi 0, %s43
      %s67 = sphi 0, %s69
      %s70 = sphi 0, %s67
      %s71 = sphi 0, %s70
      %s87 = sphi 0, %s71
      %s95 = sphi 0, %s97
      %s98 = sphi 0, %s95
      %s99 = sphi 0, %s98
      %s115 = sphi 0, %s99
    $region4: #{embedding_net_forward.108} parent=1 // loop_header_branch
      %11 = sbr.rel (%p9) target = $region8
    $region5: #{embedding_net_forward.108} parent=1 // loop_body
      %s13 = ssub.s32 %s8, 1
      %s14 = ssub.s32 %s8, 2
      %s24 = sadd.s32 1, %s17
      %p25 = scmp.ge.s32.totalorder %s24, 9
      %s26 = scalar_select %p25, 0, %s24
      %s27 = sadd.s32 1, %s16
      %s28 = scalar_select %p25, %s27, %s16
      %p29 = scmp.ge.s32.totalorder %s28, 2
      %s30 = scalar_select %p29, 0, %s28
      %s31 = sadd.s32 1, %s15
      %s32 = scalar_select %p29, %s31, %s15
      %p33 = scmp.ge.s32.totalorder %s32, 1
      %s34 = scalar_select %p33, 0, %s32
      %s35 = ssub.s32 %s15, %s34
      %s36 = ssub.s32 %s17, %s26
      %s37 = sor.u32 %s35, %s36
      %p38 = scmp.eq.s32.totalorder %s37, 0
      %s40 = sadd.s32 %s39, 1
      %s41 = scalar_select %p38, %s39, %s40
      %p44 = pneg %p38
      %p45 = scmp.eq.s32.totalorder %s8, 17
      %p46 = por %p44, %p45
      %p47 = scmp.ne.s32.totalorder %s39, %s42
      %p48 = scmp.eq.s32.totalorder %s8, 0
      %p49 = por %p47, %p48
      %p50 = scmp.ne.s32.totalorder %s39, %s42
      %p51 = scmp.eq.s32.totalorder %s13, 17
      %p52 = por %p50, %p51
      %p53 = scmp.ne.s32.totalorder %s42, %s43
      %p54 = scmp.eq.s32.totalorder %s13, 0
      %p55 = por %p53, %p54
      %p56 = scmp.ne.s32.totalorder %s42, %s43
      %p57 = scmp.eq.s32.totalorder %s14, 17
      %p58 = por %p56, %p57
      %p60 = scmp.ne.s32.totalorder %s43, %s59
      %p61 = scmp.eq.s32.totalorder %s14, 0
      %p62 = por %p60, %p61
      %s63 = ssub.s32 %s17, %s26
      %s64 = ssub.s32 %s16, %s30
      %s65 = sor.u32 %s63, %s64
      %p66 = scmp.eq.s32.totalorder %s65, 0
      %s68 = sadd.s32 %s67, 1
      %s69 = scalar_select %p66, %s67, %s68
      %p72 = pneg %p66
      %p73 = scmp.eq.s32.totalorder %s8, 17
      %p74 = por %p72, %p73
      %p75 = scmp.ne.s32.totalorder %s67, %s70
      %p76 = scmp.eq.s32.totalorder %s8, 0
      %p77 = por %p75, %p76
      %p78 = scmp.ne.s32.totalorder %s67, %s70
      %p79 = scmp.eq.s32.totalorder %s13, 17
      %p80 = por %p78, %p79
      %p81 = scmp.ne.s32.totalorder %s70, %s71
      %p82 = scmp.eq.s32.totalorder %s13, 0
      %p83 = por %p81, %p82
      %p84 = scmp.ne.s32.totalorder %s70, %s71
      %p85 = scmp.eq.s32.totalorder %s14, 17
      %p86 = por %p84, %p85
      %p88 = scmp.ne.s32.totalorder %s71, %s87
      %p89 = scmp.eq.s32.totalorder %s14, 0
      %p90 = por %p88, %p89
      %s91 = ssub.s32 %s15, %s34
      %s92 = ssub.s32 %s16, %s30
      %s93 = sor.u32 %s91, %s92
      %p94 = scmp.eq.s32.totalorder %s93, 0
      %s96 = sadd.s32 %s95, 1
      %s97 = scalar_select %p94, %s95, %s96
      %p100 = pneg %p94
      %p101 = scmp.eq.s32.totalorder %s8, 17
      %p102 = por %p100, %p101
      %p103 = scmp.ne.s32.totalorder %s95, %s98
      %p104 = scmp.eq.s32.totalorder %s8, 0
      %p105 = por %p103, %p104
      %p106 = scmp.ne.s32.totalorder %s95, %s98
      %p107 = scmp.eq.s32.totalorder %s13, 17
      %p108 = por %p106, %p107
      %p109 = scmp.ne.s32.totalorder %s98, %s99
      %p110 = scmp.eq.s32.totalorder %s13, 0
      %p111 = por %p109, %p110
      %p112 = scmp.ne.s32.totalorder %s98, %s99
      %p113 = scmp.eq.s32.totalorder %s14, 17
      %p114 = por %p112, %p113
      %p116 = scmp.ne.s32.totalorder %s99, %s115
      %p117 = scmp.eq.s32.totalorder %s14, 0
      %p118 = por %p116, %p117
      %p119 = scmp.le.s32.totalorder 1, %s8
      %p120 = scmp.lt.s32.totalorder %s8, 19
      %p121 = pnand %p119, %p120
      %p122 = pneg %p121
      // Predicated region
      $region9: #{embedding_net_forward.108} parent=5 // pred_check
        _
      $region10: #{embedding_net_forward.108} parent=5 // pred_check_branch
        %124 = sbr.rel (%p121) target = $region12
      $region11: #{embedding_net_forward.108} parent=5 // pred_region
        %s125 = ssub.s32 %s8, 1
      $region12: #{embedding_net_forward.108} parent=5 // pred_fallthru
        _
      %p126 = scmp.lt.s32.totalorder %s8, 18
      // Predicated region
      $region13: #{embedding_net_forward.108} parent=5 // pred_check
        %p127 = pneg %p126
      $region14: #{embedding_net_forward.108} parent=5 // pred_check_branch
        %129 = sbr.rel (%p127) target = $region16
      $region15: #{embedding_net_forward.108} parent=5 // pred_region
        // Predicated region
        $region17: #{embedding_net_forward.108} parent=15 // pred_check
          %p130 = pneg %p49
        $region18: #{embedding_net_forward.108} parent=15 // pred_check_branch
          %132 = sbr.rel (%p130) target = $region20
        $region19: #{embedding_net_forward.108} parent=15 // pred_region
          %s133 = smul.u32 4, %s17
          %p134 = scmp.lt.s32.totalorder %s15, 0
          %s135 = scalar_select %p134, %s15, 0
          %p136 = scmp.lt.s32.totalorder %s133, 35
          %s137 = scalar_select %p136, %s133, 35
          %s138 = smul.addr %s135, 36
          %s139 = sadd.s32 %s137, %s138
          %s140 = scalar_lea.vmem %s0, %s139
          %s141 = smul.u32 4, %s17
        $region20: #{embedding_net_forward.108} parent=15 // pred_fallthru
          _
        // Predicated region
        $region21: #{embedding_net_forward.108} parent=15 // pred_check
          %p142 = pneg %p77
        $region22: #{embedding_net_forward.108} parent=15 // pred_check_branch
          %144 = sbr.rel (%p142) target = $region24
        $region23: #{embedding_net_forward.108} parent=15 // pred_region
          %s145 = sand.u32 %s67, 1
          %s146 = sand.u32 %s67, 1
          %s147 = smul.addr %s146, 512
          %s148 = scalar_lea.vmem [#allocation3], %s147
          %s149 = smul.u32 64, %s17
          %s150 = smul.u32 2, %s16
          %s151 = smul.addr %s149, 4
          %s152 = sadd.s32 %s150, %s151
          %s153 = smul.addr %s152, 4
          %s154 = scalar_lea.vmem %s1, %s153
          // Predicated region
          $region25: #{embedding_net_forward.108} parent=23 // pred_check
            _
          $region26: #{embedding_net_forward.108} parent=23 // pred_check_branch
            %156 = sbr.rel (0) target = $region28
          $region27: #{embedding_net_forward.108} parent=23 // pred_region
            // Predicated region
            $region29: #{embedding_net_forward.108} parent=27 // pred_check
              _
            $region30: #{embedding_net_forward.108} parent=27 // pred_check_branch
              %158 = sbr.rel (0) target = $region32
            $region31: #{embedding_net_forward.108} parent=27 // pred_region
              // Predicated region
              $region44: #{embedding_net_forward.108} parent=31 // pred_check
                _
              $region45: #{embedding_net_forward.108} parent=31 // pred_check_branch
                %299 = sbr.rel (0) target = $region47
              $region46: #{embedding_net_forward.108} parent=31 // pred_region
                loop: start=0, step=1, limit=1
                $region48: #{embedding_net_forward.108} parent=46 // loop_pre_header
                  _
                $region49: #{embedding_net_forward.108} parent=46 // loop_header
                  %s301 = sphi 0, %s305
                  %p302 = scmp.ge.s32.totalorder %s301, 1
                  %s306 = sphi %s154, %s154
                  %s307 = sphi %s148, %s148
                $region50: #{embedding_net_forward.108} parent=46 // loop_header_branch
                  %304 = sbr.rel (%p302) target = $region54
                $region51: #{embedding_net_forward.108} parent=46 // loop_body
                  %v308 = vld [vmem:[%s306] sm:$0xff]
                  %309 = vst [vmem:[%s307] sm:$0xff] %v308
                  %v310 = vld [vmem:[%s306 + $0x10] sm:$0xff]
                  %311 = vst [vmem:[%s307 + $0x8] sm:$0xff] %v310
                  %v312 = vld [vmem:[%s306 + $0x20] sm:$0xff]
                  %313 = vst [vmem:[%s307 + $0x10] sm:$0xff] %v312
                  %v314 = vld [vmem:[%s306 + $0x30] sm:$0xff]
                  %315 = vst [vmem:[%s307 + $0x18] sm:$0xff] %v314
                  %v316 = vld [vmem:[%s306 + $0x40] sm:$0xff]
                  %317 = vst [vmem:[%s307 + $0x20] sm:$0xff] %v316
                  %v318 = vld [vmem:[%s306 + $0x50] sm:$0xff]
                  %319 = vst [vmem:[%s307 + $0x28] sm:$0xff] %v318
                  %v320 = vld [vmem:[%s306 + $0x60] sm:$0xff]
                  %321 = vst [vmem:[%s307 + $0x30] sm:$0xff] %v320
                  %v322 = vld [vmem:[%s306 + $0x70] sm:$0xff]
                  %323 = vst [vmem:[%s307 + $0x38] sm:$0xff] %v322
                  %v324 = vld [vmem:[%s306 + $0x80] sm:$0xff]
                  %325 = vst [vmem:[%s307 + $0x40] sm:$0xff] %v324
                  %v326 = vld [vmem:[%s306 + $0x90] sm:$0xff]
                  %327 = vst [vmem:[%s307 + $0x48] sm:$0xff] %v326
                  %v328 = vld [vmem:[%s306 + $0xa0] sm:$0xff]
                  %329 = vst [vmem:[%s307 + $0x50] sm:$0xff] %v328
                  %v330 = vld [vmem:[%s306 + $0xb0] sm:$0xff]
                  %331 = vst [vmem:[%s307 + $0x58] sm:$0xff] %v330
                  %v332 = vld [vmem:[%s306 + $0xc0] sm:$0xff]
                  %333 = vst [vmem:[%s307 + $0x60] sm:$0xff] %v332
                  %v334 = vld [vmem:[%s306 + $0xd0] sm:$0xff]
                  %335 = vst [vmem:[%s307 + $0x68] sm:$0xff] %v334
                  %v336 = vld [vmem:[%s306 + $0xe0] sm:$0xff]
                  %337 = vst [vmem:[%s307 + $0x70] sm:$0xff] %v336
                  %v338 = vld [vmem:[%s306 + $0xf0] sm:$0xff]
                  %339 = vst [vmem:[%s307 + $0x78] sm:$0xff] %v338
                  %v340 = vld [vmem:[%s306 + $0x100] sm:$0xff]
                  %341 = vst [vmem:[%s307 + $0x80] sm:$0xff] %v340
                  %v342 = vld [vmem:[%s306 + $0x110] sm:$0xff]
                  %343 = vst [vmem:[%s307 + $0x88] sm:$0xff] %v342
                  %v344 = vld [vmem:[%s306 + $0x120] sm:$0xff]
                  %345 = vst [vmem:[%s307 + $0x90] sm:$0xff] %v344
                  %v346 = vld [vmem:[%s306 + $0x130] sm:$0xff]
                  %347 = vst [vmem:[%s307 + $0x98] sm:$0xff] %v346
                  %v348 = vld [vmem:[%s306 + $0x140] sm:$0xff]
                  %349 = vst [vmem:[%s307 + $0xa0] sm:$0xff] %v348
                  %v350 = vld [vmem:[%s306 + $0x150] sm:$0xff]
                  %351 = vst [vmem:[%s307 + $0xa8] sm:$0xff] %v350
                  %v352 = vld [vmem:[%s306 + $0x160] sm:$0xff]
                  %353 = vst [vmem:[%s307 + $0xb0] sm:$0xff] %v352
                  %v354 = vld [vmem:[%s306 + $0x170] sm:$0xff]
                  %355 = vst [vmem:[%s307 + $0xb8] sm:$0xff] %v354
                  %v356 = vld [vmem:[%s306 + $0x180] sm:$0xff]
                  %357 = vst [vmem:[%s307 + $0xc0] sm:$0xff] %v356
                  %v358 = vld [vmem:[%s306 + $0x190] sm:$0xff]
                  %359 = vst [vmem:[%s307 + $0xc8] sm:$0xff] %v358
                  %v360 = vld [vmem:[%s306 + $0x1a0] sm:$0xff]
                  %361 = vst [vmem:[%s307 + $0xd0] sm:$0xff] %v360
                  %v362 = vld [vmem:[%s306 + $0x1b0] sm:$0xff]
                  %363 = vst [vmem:[%s307 + $0xd8] sm:$0xff] %v362
                  %v364 = vld [vmem:[%s306 + $0x1c0] sm:$0xff]
                  %365 = vst [vmem:[%s307 + $0xe0] sm:$0xff] %v364
                  %v366 = vld [vmem:[%s306 + $0x1d0] sm:$0xff]
                  %367 = vst [vmem:[%s307 + $0xe8] sm:$0xff] %v366
                  %v368 = vld [vmem:[%s306 + $0x1e0] sm:$0xff]
                  %369 = vst [vmem:[%s307 + $0xf0] sm:$0xff] %v368
                  %v370 = vld [vmem:[%s306 + $0x1f0] sm:$0xff]
                  %371 = vst [vmem:[%s307 + $0xf8] sm:$0xff] %v370
                  %v372 = vld [vmem:[%s306 + $0x200] sm:$0xff]
                  %373 = vst [vmem:[%s307 + $0x100] sm:$0xff] %v372
                  %v374 = vld [vmem:[%s306 + $0x210] sm:$0xff]
                  %375 = vst [vmem:[%s307 + $0x108] sm:$0xff] %v374
                  %v376 = vld [vmem:[%s306 + $0x220] sm:$0xff]
                  %377 = vst [vmem:[%s307 + $0x110] sm:$0xff] %v376
                  %v378 = vld [vmem:[%s306 + $0x230] sm:$0xff]
                  %379 = vst [vmem:[%s307 + $0x118] sm:$0xff] %v378
                  %v380 = vld [vmem:[%s306 + $0x240] sm:$0xff]
                  %381 = vst [vmem:[%s307 + $0x120] sm:$0xff] %v380
                  %v382 = vld [vmem:[%s306 + $0x250] sm:$0xff]
                  %383 = vst [vmem:[%s307 + $0x128] sm:$0xff] %v382
                  %v384 = vld [vmem:[%s306 + $0x260] sm:$0xff]
                  %385 = vst [vmem:[%s307 + $0x130] sm:$0xff] %v384
                  %v386 = vld [vmem:[%s306 + $0x270] sm:$0xff]
                  %387 = vst [vmem:[%s307 + $0x138] sm:$0xff] %v386
                  %v388 = vld [vmem:[%s306 + $0x280] sm:$0xff]
                  %389 = vst [vmem:[%s307 + $0x140] sm:$0xff] %v388
                  %v390 = vld [vmem:[%s306 + $0x290] sm:$0xff]
                  %391 = vst [vmem:[%s307 + $0x148] sm:$0xff] %v390
                  %v392 = vld [vmem:[%s306 + $0x2a0] sm:$0xff]
                  %393 = vst [vmem:[%s307 + $0x150] sm:$0xff] %v392
                  %v394 = vld [vmem:[%s306 + $0x2b0] sm:$0xff]
                  %395 = vst [vmem:[%s307 + $0x158] sm:$0xff] %v394
                  %v396 = vld [vmem:[%s306 + $0x2c0] sm:$0xff]
                  %397 = vst [vmem:[%s307 + $0x160] sm:$0xff] %v396
                  %v398 = vld [vmem:[%s306 + $0x2d0] sm:$0xff]
                  %399 = vst [vmem:[%s307 + $0x168] sm:$0xff] %v398
                  %v400 = vld [vmem:[%s306 + $0x2e0] sm:$0xff]
                  %401 = vst [vmem:[%s307 + $0x170] sm:$0xff] %v400
                  %v402 = vld [vmem:[%s306 + $0x2f0] sm:$0xff]
                  %403 = vst [vmem:[%s307 + $0x178] sm:$0xff] %v402
                  %v404 = vld [vmem:[%s306 + $0x300] sm:$0xff]
                  %405 = vst [vmem:[%s307 + $0x180] sm:$0xff] %v404
                  %v406 = vld [vmem:[%s306 + $0x310] sm:$0xff]
                  %407 = vst [vmem:[%s307 + $0x188] sm:$0xff] %v406
                  %v408 = vld [vmem:[%s306 + $0x320] sm:$0xff]
                  %409 = vst [vmem:[%s307 + $0x190] sm:$0xff] %v408
                  %v410 = vld [vmem:[%s306 + $0x330] sm:$0xff]
                  %411 = vst [vmem:[%s307 + $0x198] sm:$0xff] %v410
                  %v412 = vld [vmem:[%s306 + $0x340] sm:$0xff]
                  %413 = vst [vmem:[%s307 + $0x1a0] sm:$0xff] %v412
                  %v414 = vld [vmem:[%s306 + $0x350] sm:$0xff]
                  %415 = vst [vmem:[%s307 + $0x1a8] sm:$0xff] %v414
                  %v416 = vld [vmem:[%s306 + $0x360] sm:$0xff]
                  %417 = vst [vmem:[%s307 + $0x1b0] sm:$0xff] %v416
                  %v418 = vld [vmem:[%s306 + $0x370] sm:$0xff]
                  %419 = vst [vmem:[%s307 + $0x1b8] sm:$0xff] %v418
                  %v420 = vld [vmem:[%s306 + $0x380] sm:$0xff]
                  %421 = vst [vmem:[%s307 + $0x1c0] sm:$0xff] %v420
                  %v422 = vld [vmem:[%s306 + $0x390] sm:$0xff]
                  %423 = vst [vmem:[%s307 + $0x1c8] sm:$0xff] %v422
                  %v424 = vld [vmem:[%s306 + $0x3a0] sm:$0xff]
                  %425 = vst [vmem:[%s307 + $0x1d0] sm:$0xff] %v424
                  %v426 = vld [vmem:[%s306 + $0x3b0] sm:$0xff]
                  %427 = vst [vmem:[%s307 + $0x1d8] sm:$0xff] %v426
                  %v428 = vld [vmem:[%s306 + $0x3c0] sm:$0xff]
                  %429 = vst [vmem:[%s307 + $0x1e0] sm:$0xff] %v428
                  %v430 = vld [vmem:[%s306 + $0x3d0] sm:$0xff]
                  %431 = vst [vmem:[%s307 + $0x1e8] sm:$0xff] %v430
                  %v432 = vld [vmem:[%s306 + $0x3e0] sm:$0xff]
                  %433 = vst [vmem:[%s307 + $0x1f0] sm:$0xff] %v432
                  %v434 = vld [vmem:[%s306 + $0x3f0] sm:$0xff]
                  %435 = vst [vmem:[%s307 + $0x1f8] sm:$0xff] %v434
                $region52: #{embedding_net_forward.108} parent=46 // loop_footer
                  %s305 = sadd.s32 1, %s301
                $region53: #{embedding_net_forward.108} parent=46 // loop_footer_branch
                  %300 = sbr.rel target = $region49
                $region54: #{embedding_net_forward.108} parent=46 // loop_exit
                  _
              $region47: #{embedding_net_forward.108} parent=31 // pred_fallthru
                _
              // Predicated region
              $region55: #{embedding_net_forward.108} parent=31 // pred_check
                _
              $region56: #{embedding_net_forward.108} parent=31 // pred_check_branch
                %437 = sbr.rel target = $region58
              $region57: #{embedding_net_forward.108} parent=31 // pred_region
                _
              $region58: #{embedding_net_forward.108} parent=31 // pred_fallthru
                _
            $region32: #{embedding_net_forward.108} parent=27 // pred_fallthru
              _
            // Predicated region
            $region33: #{embedding_net_forward.108} parent=27 // pred_check
              _
            $region34: #{embedding_net_forward.108} parent=27 // pred_check_branch
              %160 = sbr.rel target = $region36
            $region35: #{embedding_net_forward.108} parent=27 // pred_region
              loop: start=0, step=1, limit=1
              $region37: #{embedding_net_forward.108} parent=35 // loop_pre_header
                _
              $region38: #{embedding_net_forward.108} parent=35 // loop_header
                %s163 = sphi 0, %s167
                %p164 = scmp.ge.s32.totalorder %s163, 1
                %s168 = sphi %s154, %s154
                %s169 = sphi %s148, %s148
              $region39: #{embedding_net_forward.108} parent=35 // loop_header_branch
                %166 = sbr.rel (%p164) target = $region43
              $region40: #{embedding_net_forward.108} parent=35 // loop_body
                %v170 = vld [vmem:[%s168] sm:$0xff]
                %171 = vst [vmem:[%s169] sm:$0xff] %v170
                %v172 = vld [vmem:[%s168 + $0x10] sm:$0xff]
                %173 = vst [vmem:[%s169 + $0x8] sm:$0xff] %v172
                %v174 = vld [vmem:[%s168 + $0x20] sm:$0xff]
                %175 = vst [vmem:[%s169 + $0x10] sm:$0xff] %v174
                %v176 = vld [vmem:[%s168 + $0x30] sm:$0xff]
                %177 = vst [vmem:[%s169 + $0x18] sm:$0xff] %v176
                %v178 = vld [vmem:[%s168 + $0x40] sm:$0xff]
                %179 = vst [vmem:[%s169 + $0x20] sm:$0xff] %v178
                %v180 = vld [vmem:[%s168 + $0x50] sm:$0xff]
                %181 = vst [vmem:[%s169 + $0x28] sm:$0xff] %v180
                %v182 = vld [vmem:[%s168 + $0x60] sm:$0xff]
                %183 = vst [vmem:[%s169 + $0x30] sm:$0xff] %v182
                %v184 = vld [vmem:[%s168 + $0x70] sm:$0xff]
                %185 = vst [vmem:[%s169 + $0x38] sm:$0xff] %v184
                %v186 = vld [vmem:[%s168 + $0x80] sm:$0xff]
                %187 = vst [vmem:[%s169 + $0x40] sm:$0xff] %v186
                %v188 = vld [vmem:[%s168 + $0x90] sm:$0xff]
                %189 = vst [vmem:[%s169 + $0x48] sm:$0xff] %v188
                %v190 = vld [vmem:[%s168 + $0xa0] sm:$0xff]
                %191 = vst [vmem:[%s169 + $0x50] sm:$0xff] %v190
                %v192 = vld [vmem:[%s168 + $0xb0] sm:$0xff]
                %193 = vst [vmem:[%s169 + $0x58] sm:$0xff] %v192
                %v194 = vld [vmem:[%s168 + $0xc0] sm:$0xff]
                %195 = vst [vmem:[%s169 + $0x60] sm:$0xff] %v194
                %v196 = vld [vmem:[%s168 + $0xd0] sm:$0xff]
                %197 = vst [vmem:[%s169 + $0x68] sm:$0xff] %v196
                %v198 = vld [vmem:[%s168 + $0xe0] sm:$0xff]
                %199 = vst [vmem:[%s169 + $0x70] sm:$0xff] %v198
                %v200 = vld [vmem:[%s168 + $0xf0] sm:$0xff]
                %201 = vst [vmem:[%s169 + $0x78] sm:$0xff] %v200
                %v202 = vld [vmem:[%s168 + $0x100] sm:$0xff]
                %203 = vst [vmem:[%s169 + $0x80] sm:$0xff] %v202
                %v204 = vld [vmem:[%s168 + $0x110] sm:$0xff]
                %205 = vst [vmem:[%s169 + $0x88] sm:$0xff] %v204
                %v206 = vld [vmem:[%s168 + $0x120] sm:$0xff]
                %207 = vst [vmem:[%s169 + $0x90] sm:$0xff] %v206
                %v208 = vld [vmem:[%s168 + $0x130] sm:$0xff]
                %209 = vst [vmem:[%s169 + $0x98] sm:$0xff] %v208
                %v210 = vld [vmem:[%s168 + $0x140] sm:$0xff]
                %211 = vst [vmem:[%s169 + $0xa0] sm:$0xff] %v210
                %v212 = vld [vmem:[%s168 + $0x150] sm:$0xff]
                %213 = vst [vmem:[%s169 + $0xa8] sm:$0xff] %v212
                %v214 = vld [vmem:[%s168 + $0x160] sm:$0xff]
                %215 = vst [vmem:[%s169 + $0xb0] sm:$0xff] %v214
                %v216 = vld [vmem:[%s168 + $0x170] sm:$0xff]
                %217 = vst [vmem:[%s169 + $0xb8] sm:$0xff] %v216
                %v218 = vld [vmem:[%s168 + $0x180] sm:$0xff]
                %219 = vst [vmem:[%s169 + $0xc0] sm:$0xff] %v218
                %v220 = vld [vmem:[%s168 + $0x190] sm:$0xff]
                %221 = vst [vmem:[%s169 + $0xc8] sm:$0xff] %v220
                %v222 = vld [vmem:[%s168 + $0x1a0] sm:$0xff]
                %223 = vst [vmem:[%s169 + $0xd0] sm:$0xff] %v222
                %v224 = vld [vmem:[%s168 + $0x1b0] sm:$0xff]
                %225 = vst [vmem:[%s169 + $0xd8] sm:$0xff] %v224
                %v226 = vld [vmem:[%s168 + $0x1c0] sm:$0xff]
                %227 = vst [vmem:[%s169 + $0xe0] sm:$0xff] %v226
                %v228 = vld [vmem:[%s168 + $0x1d0] sm:$0xff]
                %229 = vst [vmem:[%s169 + $0xe8] sm:$0xff] %v228
                %v230 = vld [vmem:[%s168 + $0x1e0] sm:$0xff]
                %231 = vst [vmem:[%s169 + $0xf0] sm:$0xff] %v230
                %v232 = vld [vmem:[%s168 + $0x1f0] sm:$0xff]
                %233 = vst [vmem:[%s169 + $0xf8] sm:$0xff] %v232
                %v234 = vld [vmem:[%s168 + $0x200] sm:$0xff]
                %235 = vst [vmem:[%s169 + $0x100] sm:$0xff] %v234
                %v236 = vld [vmem:[%s168 + $0x210] sm:$0xff]
                %237 = vst [vmem:[%s169 + $0x108] sm:$0xff] %v236
                %v238 = vld [vmem:[%s168 + $0x220] sm:$0xff]
                %239 = vst [vmem:[%s169 + $0x110] sm:$0xff] %v238
                %v240 = vld [vmem:[%s168 + $0x230] sm:$0xff]
                %241 = vst [vmem:[%s169 + $0x118] sm:$0xff] %v240
                %v242 = vld [vmem:[%s168 + $0x240] sm:$0xff]
                %243 = vst [vmem:[%s169 + $0x120] sm:$0xff] %v242
                %v244 = vld [vmem:[%s168 + $0x250] sm:$0xff]
                %245 = vst [vmem:[%s169 + $0x128] sm:$0xff] %v244
                %v246 = vld [vmem:[%s168 + $0x260] sm:$0xff]
                %247 = vst [vmem:[%s169 + $0x130] sm:$0xff] %v246
                %v248 = vld [vmem:[%s168 + $0x270] sm:$0xff]
                %249 = vst [vmem:[%s169 + $0x138] sm:$0xff] %v248
                %v250 = vld [vmem:[%s168 + $0x280] sm:$0xff]
                %251 = vst [vmem:[%s169 + $0x140] sm:$0xff] %v250
                %v252 = vld [vmem:[%s168 + $0x290] sm:$0xff]
                %253 = vst [vmem:[%s169 + $0x148] sm:$0xff] %v252
                %v254 = vld [vmem:[%s168 + $0x2a0] sm:$0xff]
                %255 = vst [vmem:[%s169 + $0x150] sm:$0xff] %v254
                %v256 = vld [vmem:[%s168 + $0x2b0] sm:$0xff]
                %257 = vst [vmem:[%s169 + $0x158] sm:$0xff] %v256
                %v258 = vld [vmem:[%s168 + $0x2c0] sm:$0xff]
                %259 = vst [vmem:[%s169 + $0x160] sm:$0xff] %v258
                %v260 = vld [vmem:[%s168 + $0x2d0] sm:$0xff]
                %261 = vst [vmem:[%s169 + $0x168] sm:$0xff] %v260
                %v262 = vld [vmem:[%s168 + $0x2e0] sm:$0xff]
                %263 = vst [vmem:[%s169 + $0x170] sm:$0xff] %v262
                %v264 = vld [vmem:[%s168 + $0x2f0] sm:$0xff]
                %265 = vst [vmem:[%s169 + $0x178] sm:$0xff] %v264
                %v266 = vld [vmem:[%s168 + $0x300] sm:$0xff]
                %267 = vst [vmem:[%s169 + $0x180] sm:$0xff] %v266
                %v268 = vld [vmem:[%s168 + $0x310] sm:$0xff]
                %269 = vst [vmem:[%s169 + $0x188] sm:$0xff] %v268
                %v270 = vld [vmem:[%s168 + $0x320] sm:$0xff]
                %271 = vst [vmem:[%s169 + $0x190] sm:$0xff] %v270
                %v272 = vld [vmem:[%s168 + $0x330] sm:$0xff]
                %273 = vst [vmem:[%s169 + $0x198] sm:$0xff] %v272
                %v274 = vld [vmem:[%s168 + $0x340] sm:$0xff]
                %275 = vst [vmem:[%s169 + $0x1a0] sm:$0xff] %v274
                %v276 = vld [vmem:[%s168 + $0x350] sm:$0xff]
                %277 = vst [vmem:[%s169 + $0x1a8] sm:$0xff] %v276
                %v278 = vld [vmem:[%s168 + $0x360] sm:$0xff]
                %279 = vst [vmem:[%s169 + $0x1b0] sm:$0xff] %v278
                %v280 = vld [vmem:[%s168 + $0x370] sm:$0xff]
                %281 = vst [vmem:[%s169 + $0x1b8] sm:$0xff] %v280
                %v282 = vld [vmem:[%s168 + $0x380] sm:$0xff]
                %283 = vst [vmem:[%s169 + $0x1c0] sm:$0xff] %v282
                %v284 = vld [vmem:[%s168 + $0x390] sm:$0xff]
                %285 = vst [vmem:[%s169 + $0x1c8] sm:$0xff] %v284
                %v286 = vld [vmem:[%s168 + $0x3a0] sm:$0xff]
                %287 = vst [vmem:[%s169 + $0x1d0] sm:$0xff] %v286
                %v288 = vld [vmem:[%s168 + $0x3b0] sm:$0xff]
                %289 = vst [vmem:[%s169 + $0x1d8] sm:$0xff] %v288
                %v290 = vld [vmem:[%s168 + $0x3c0] sm:$0xff]
                %291 = vst [vmem:[%s169 + $0x1e0] sm:$0xff] %v290
                %v292 = vld [vmem:[%s168 + $0x3d0] sm:$0xff]
                %293 = vst [vmem:[%s169 + $0x1e8] sm:$0xff] %v292
                %v294 = vld [vmem:[%s168 + $0x3e0] sm:$0xff]
                %295 = vst [vmem:[%s169 + $0x1f0] sm:$0xff] %v294
                %v296 = vld [vmem:[%s168 + $0x3f0] sm:$0xff]
                %297 = vst [vmem:[%s169 + $0x1f8] sm:$0xff] %v296
              $region41: #{embedding_net_forward.108} parent=35 // loop_footer
                %s167 = sadd.s32 1, %s163
              $region42: #{embedding_net_forward.108} parent=35 // loop_footer_branch
                %162 = sbr.rel target = $region38
              $region43: #{embedding_net_forward.108} parent=35 // loop_exit
                _
            $region36: #{embedding_net_forward.108} parent=27 // pred_fallthru
              _
          $region28: #{embedding_net_forward.108} parent=23 // pred_fallthru
            _
          %438 = vnop
        $region24: #{embedding_net_forward.108} parent=15 // pred_fallthru
          _
      $region16: #{embedding_net_forward.108} parent=5 // pred_fallthru
        _
      %p439 = scmp.le.s32.totalorder 1, %s8
      %p440 = scmp.lt.s32.totalorder %s8, 19
      %p441 = pnand %p439, %p440
      %p442 = pneg %p441
      // Predicated region
      $region59: #{embedding_net_forward.108} parent=5 // pred_check
        _
      $region60: #{embedding_net_forward.108} parent=5 // pred_check_branch
        %444 = sbr.rel (%p441) target = $region62
      $region61: #{embedding_net_forward.108} parent=5 // pred_region
        %s445 = ssub.s32 %s8, 1
        %s446 = sand.u32 %s70, 1
        %s447 = sand.u32 %s70, 1
        %s448 = smul.addr %s447, 512
        %s449 = scalar_lea.vmem [#allocation3], %s448
        // Predicated region
        $region63: #{embedding_net_forward.108} parent=61 // pred_check
          %p450 = pneg %p83
        $region64: #{embedding_net_forward.108} parent=61 // pred_check_branch
          %452 = sbr.rel (%p450) target = $region66
        $region65: #{embedding_net_forward.108} parent=61 // pred_region
          _
        $region66: #{embedding_net_forward.108} parent=61 // pred_fallthru
          _
        %s453 = smul.u32 4, %s20
        %p454 = scmp.lt.s32.totalorder %s18, 0
        %s455 = scalar_select %p454, %s18, 0
        %p456 = scmp.lt.s32.totalorder %s453, 35
        %s457 = scalar_select %p456, %s453, 35
        %s458 = smul.addr %s455, 36
        %s459 = sadd.s32 %s457, %s458
        %s460 = scalar_lea.vmem %s0, %s459
        %p461 = pneg %p55
        %p462 = pneg %p52
        %s463 = sand.u32 %s70, 1
        %s464 = sand.u32 %s70, 1
        %s465 = smul.addr %s464, 512
        %s466 = scalar_lea.vmem [#allocation3], %s465
        %p467 = pneg %p83
        %p468 = pneg %p80
        %p469 = pneg %p111
        %p470 = pneg %p108
        %s471 = smul.u32 2, %s19
        %p472 = scmp.lt.s32.totalorder %s18, 0
        %s473 = scalar_select %p472, %s18, 0
        %p474 = scmp.lt.s32.totalorder %s471, 3
        %s475 = scalar_select %p474, %s471, 3
        %s476 = smul.addr %s473, 4
        %s477 = sadd.s32 %s475, %s476
        %s478 = smul.addr %s477, 2
        %s479 = scalar_lea.vmem %s2, %s478
        %s480 = smul.u32 4, %s20
        %p481 = scmp.lt.s32.totalorder %s18, 0
        %s482 = scalar_select %p481, %s18, 0
        %p483 = scmp.lt.s32.totalorder %s480, 35
        %s484 = scalar_select %p483, %s480, 35
        %s485 = smul.addr %s482, 36
        %s486 = sadd.s32 %s484, %s485
        %s487 = scalar_lea.vmem %s0, %s486
        %s488 = smul.u32 4, %s20
        %s489 = smul.u32 64, %s20
        %s490 = smul.u32 2, %s19
        %s491 = smul.u32 2, %s19
        %p492 = scmp.lt.s32.totalorder %s18, 0
        %s493 = scalar_select %p492, %s18, 0
        %p494 = scmp.lt.s32.totalorder %s491, 3
        %s495 = scalar_select %p494, %s491, 3
        %s496 = smul.addr %s493, 4
        %s497 = sadd.s32 %s495, %s496
        %s498 = smul.addr %s497, 2
        %s499 = scalar_lea.vmem %s2, %s498
        %s500 = smul.u32 2, %s19
        %p501 = scmp.eq.s32.totalorder %s20, 0
        // Predicated region
        $region67: #{embedding_net_forward.108} parent=61 // pred_check
          %p502 = pneg %p501
        $region68: #{embedding_net_forward.108} parent=61 // pred_check_branch
          %504 = sbr.rel (%p502) target = $region70
        $region69: #{embedding_net_forward.108} parent=61 // pred_region
          %505 = vst [vmem:[#allocation2] sm:$0xf] 0.0
        $region70: #{embedding_net_forward.108} parent=61 // pred_fallthru
          _
        %v506 = vld [vmem:[#allocation2] sm:$0xf]
        %v507 = vld [vmem:[%s487] sm:$0xf]
        %v508 = vld [vmem:[%s449] sm:$0xff]
        %v509 = vld [vmem:[%s449 + $0x8] sm:$0xff]
        %v510 = vld [vmem:[%s449 + $0x10] sm:$0xff]
        %v511 = vld [vmem:[%s449 + $0x18] sm:$0xff]
        %v512 = vld [vmem:[%s449 + $0x20] sm:$0xff]
        %v513 = vld [vmem:[%s449 + $0x28] sm:$0xff]
        %v514 = vld [vmem:[%s449 + $0x30] sm:$0xff]
        %v515 = vld [vmem:[%s449 + $0x38] sm:$0xff]
        %v516 = vld [vmem:[%s449 + $0x40] sm:$0xff]
        %v517 = vld [vmem:[%s449 + $0x48] sm:$0xff]
        %v518 = vld [vmem:[%s449 + $0x50] sm:$0xff]
        %v519 = vld [vmem:[%s449 + $0x58] sm:$0xff]
        %v520 = vld [vmem:[%s449 + $0x60] sm:$0xff]
        %v521 = vld [vmem:[%s449 + $0x68] sm:$0xff]
        %v522 = vld [vmem:[%s449 + $0x70] sm:$0xff]
        %v523 = vld [vmem:[%s449 + $0x78] sm:$0xff]
        %v524 = vld [vmem:[%s449 + $0x80] sm:$0xff]
        %v525 = vld [vmem:[%s449 + $0x88] sm:$0xff]
        %v526 = vld [vmem:[%s449 + $0x90] sm:$0xff]
        %v527 = vld [vmem:[%s449 + $0x98] sm:$0xff]
        %v528 = vld [vmem:[%s449 + $0xa0] sm:$0xff]
        %v529 = vld [vmem:[%s449 + $0xa8] sm:$0xff]
        %v530 = vld [vmem:[%s449 + $0xb0] sm:$0xff]
        %v531 = vld [vmem:[%s449 + $0xb8] sm:$0xff]
        %v532 = vld [vmem:[%s449 + $0xc0] sm:$0xff]
        %v533 = vld [vmem:[%s449 + $0xc8] sm:$0xff]
        %v534 = vld [vmem:[%s449 + $0xd0] sm:$0xff]
        %v535 = vld [vmem:[%s449 + $0xd8] sm:$0xff]
        %v536 = vld [vmem:[%s449 + $0xe0] sm:$0xff]
        %v537 = vld [vmem:[%s449 + $0xe8] sm:$0xff]
        %v538 = vld [vmem:[%s449 + $0xf0] sm:$0xff]
        %v539 = vld [vmem:[%s449 + $0xf8] sm:$0xff]
        %v540 = vld [vmem:[%s449 + $0x100] sm:$0xff]
        %v541 = vld [vmem:[%s449 + $0x108] sm:$0xff]
        %v542 = vld [vmem:[%s449 + $0x110] sm:$0xff]
        %v543 = vld [vmem:[%s449 + $0x118] sm:$0xff]
        %v544 = vld [vmem:[%s449 + $0x120] sm:$0xff]
        %v545 = vld [vmem:[%s449 + $0x128] sm:$0xff]
        %v546 = vld [vmem:[%s449 + $0x130] sm:$0xff]
        %v547 = vld [vmem:[%s449 + $0x138] sm:$0xff]
        %v548 = vld [vmem:[%s449 + $0x140] sm:$0xff]
        %v549 = vld [vmem:[%s449 + $0x148] sm:$0xff]
        %v550 = vld [vmem:[%s449 + $0x150] sm:$0xff]
        %v551 = vld [vmem:[%s449 + $0x158] sm:$0xff]
        %v552 = vld [vmem:[%s449 + $0x160] sm:$0xff]
        %v553 = vld [vmem:[%s449 + $0x168] sm:$0xff]
        %v554 = vld [vmem:[%s449 + $0x170] sm:$0xff]
        %v555 = vld [vmem:[%s449 + $0x178] sm:$0xff]
        %v556 = vld [vmem:[%s449 + $0x180] sm:$0xff]
        %v557 = vld [vmem:[%s449 + $0x188] sm:$0xff]
        %v558 = vld [vmem:[%s449 + $0x190] sm:$0xff]
        %v559 = vld [vmem:[%s449 + $0x198] sm:$0xff]
        %v560 = vld [vmem:[%s449 + $0x1a0] sm:$0xff]
        %v561 = vld [vmem:[%s449 + $0x1a8] sm:$0xff]
        %v562 = vld [vmem:[%s449 + $0x1b0] sm:$0xff]
        %v563 = vld [vmem:[%s449 + $0x1b8] sm:$0xff]
        %v564 = vld [vmem:[%s449 + $0x1c0] sm:$0xff]
        %v565 = vld [vmem:[%s449 + $0x1c8] sm:$0xff]
        %v566 = vld [vmem:[%s449 + $0x1d0] sm:$0xff]
        %v567 = vld [vmem:[%s449 + $0x1d8] sm:$0xff]
        %v568 = vld [vmem:[%s449 + $0x1e0] sm:$0xff]
        %v569 = vld [vmem:[%s449 + $0x1e8] sm:$0xff]
        %v570 = vld [vmem:[%s449 + $0x1f0] sm:$0xff]
        %v571 = vld [vmem:[%s449 + $0x1f8] sm:$0xff]
        %v574 = vunpack.c.l.s4 1966171168
        %v575 = vunpack.c.0.s8 %v574
        %v576 = vlaneseq
        %v577 = vshrl.u32 %v576, 7
        %v578 = vsub.s32 %v575, %v577
        %v579 = vrot.slane %v507, %v578
        %v580 = vcombine.high %v579, %v579
        %v582 = vunpack.c.l.s4 1966171168
        %v583 = vunpack.c.0.s8 %v582
        %v584 = vlaneseq
        %v585 = vshrl.u32 %v584, 7
        %v586 = vsub.s32 %v583, %v585
        %v587 = vrot.slane %v579, %v586
        %v589 = vunpack.c.l.s4 1966171168
        %v590 = vunpack.c.0.s8 %v589
        %v591 = vlaneseq
        %v592 = vshrl.u32 %v591, 7
        %v593 = vsub.s32 %v590, %v592
        %v594 = vrot.slane %v580, %v593
        %v595 = vcombine.high %v587, %v587
        %v596 = vcombine.high %v594, %v594
        %v665 = vunpack.c.l.b16 %v508
        %v666 = vunpack.c.h.b16 %v508
        %v667 = vunpack.c.l.b16 %v509
        %v668 = vunpack.c.h.b16 %v509
        %v669 = vunpack.c.l.b16 %v510
        %v670 = vunpack.c.h.b16 %v510
        %v671 = vunpack.c.l.b16 %v511
        %v672 = vunpack.c.h.b16 %v511
        %v673 = vunpack.c.l.b16 %v512
        %v674 = vunpack.c.h.b16 %v512
        %v675 = vunpack.c.l.b16 %v513
        %v676 = vunpack.c.h.b16 %v513
        %v677 = vunpack.c.l.b16 %v514
        %v678 = vunpack.c.h.b16 %v514
        %v679 = vunpack.c.l.b16 %v515
        %v680 = vunpack.c.h.b16 %v515
        %v681 = vunpack.c.l.b16 %v516
        %v682 = vunpack.c.h.b16 %v516
        %v683 = vunpack.c.l.b16 %v517
        %v684 = vunpack.c.h.b16 %v517
        %v685 = vunpack.c.l.b16 %v518
        %v686 = vunpack.c.h.b16 %v518
        %v687 = vunpack.c.l.b16 %v519
        %v688 = vunpack.c.h.b16 %v519
        %v689 = vunpack.c.l.b16 %v520
        %v690 = vunpack.c.h.b16 %v520
        %v691 = vunpack.c.l.b16 %v521
        %v692 = vunpack.c.h.b16 %v521
        %v693 = vunpack.c.l.b16 %v522
        %v694 = vunpack.c.h.b16 %v522
        %v695 = vunpack.c.l.b16 %v523
        %v696 = vunpack.c.h.b16 %v523
        %v697 = vunpack.c.l.b16 %v524
        %v698 = vunpack.c.h.b16 %v524
        %v699 = vunpack.c.l.b16 %v525
        %v700 = vunpack.c.h.b16 %v525
        %v701 = vunpack.c.l.b16 %v526
        %v702 = vunpack.c.h.b16 %v526
        %v703 = vunpack.c.l.b16 %v527
        %v704 = vunpack.c.h.b16 %v527
        %v705 = vunpack.c.l.b16 %v528
        %v706 = vunpack.c.h.b16 %v528
        %v707 = vunpack.c.l.b16 %v529
        %v708 = vunpack.c.h.b16 %v529
        %v709 = vunpack.c.l.b16 %v530
        %v710 = vunpack.c.h.b16 %v530
        %v711 = vunpack.c.l.b16 %v531
        %v712 = vunpack.c.h.b16 %v531
        %v713 = vunpack.c.l.b16 %v532
        %v714 = vunpack.c.h.b16 %v532
        %v715 = vunpack.c.l.b16 %v533
        %v716 = vunpack.c.h.b16 %v533
        %v717 = vunpack.c.l.b16 %v534
        %v718 = vunpack.c.h.b16 %v534
        %v719 = vunpack.c.l.b16 %v535
        %v720 = vunpack.c.h.b16 %v535
        %v721 = vunpack.c.l.b16 %v536
        %v722 = vunpack.c.h.b16 %v536
        %v723 = vunpack.c.l.b16 %v537
        %v724 = vunpack.c.h.b16 %v537
        %v725 = vunpack.c.l.b16 %v538
        %v726 = vunpack.c.h.b16 %v538
        %v727 = vunpack.c.l.b16 %v539
        %v728 = vunpack.c.h.b16 %v539
        %v729 = vunpack.c.l.b16 %v540
        %v730 = vunpack.c.h.b16 %v540
        %v731 = vunpack.c.l.b16 %v541
        %v732 = vunpack.c.h.b16 %v541
        %v733 = vunpack.c.l.b16 %v542
        %v734 = vunpack.c.h.b16 %v542
        %v735 = vunpack.c.l.b16 %v543
        %v736 = vunpack.c.h.b16 %v543
        %v737 = vunpack.c.l.b16 %v544
        %v738 = vunpack.c.h.b16 %v544
        %v739 = vunpack.c.l.b16 %v545
        %v740 = vunpack.c.h.b16 %v545
        %v741 = vunpack.c.l.b16 %v546
        %v742 = vunpack.c.h.b16 %v546
        %v743 = vunpack.c.l.b16 %v547
        %v744 = vunpack.c.h.b16 %v547
        %v745 = vunpack.c.l.b16 %v548
        %v746 = vunpack.c.h.b16 %v548
        %v747 = vunpack.c.l.b16 %v549
        %v748 = vunpack.c.h.b16 %v549
        %v749 = vunpack.c.l.b16 %v550
        %v750 = vunpack.c.h.b16 %v550
        %v751 = vunpack.c.l.b16 %v551
        %v752 = vunpack.c.h.b16 %v551
        %v753 = vunpack.c.l.b16 %v552
        %v754 = vunpack.c.h.b16 %v552
        %v755 = vunpack.c.l.b16 %v553
        %v756 = vunpack.c.h.b16 %v553
        %v757 = vunpack.c.l.b16 %v554
        %v758 = vunpack.c.h.b16 %v554
        %v759 = vunpack.c.l.b16 %v555
        %v760 = vunpack.c.h.b16 %v555
        %v761 = vunpack.c.l.b16 %v556
        %v762 = vunpack.c.h.b16 %v556
        %v763 = vunpack.c.l.b16 %v557
        %v764 = vunpack.c.h.b16 %v557
        %v765 = vunpack.c.l.b16 %v558
        %v766 = vunpack.c.h.b16 %v558
        %v767 = vunpack.c.l.b16 %v559
        %v768 = vunpack.c.h.b16 %v559
        %v769 = vunpack.c.l.b16 %v560
        %v770 = vunpack.c.h.b16 %v560
        %v771 = vunpack.c.l.b16 %v561
        %v772 = vunpack.c.h.b16 %v561
        %v773 = vunpack.c.l.b16 %v562
        %v774 = vunpack.c.h.b16 %v562
        %v775 = vunpack.c.l.b16 %v563
        %v776 = vunpack.c.h.b16 %v563
        %v777 = vunpack.c.l.b16 %v564
        %v778 = vunpack.c.h.b16 %v564
        %v779 = vunpack.c.l.b16 %v565
        %v780 = vunpack.c.h.b16 %v565
        %v781 = vunpack.c.l.b16 %v566
        %v782 = vunpack.c.h.b16 %v566
        %v783 = vunpack.c.l.b16 %v567
        %v784 = vunpack.c.h.b16 %v567
        %v785 = vunpack.c.l.b16 %v568
        %v786 = vunpack.c.h.b16 %v568
        %v787 = vunpack.c.l.b16 %v569
        %v788 = vunpack.c.h.b16 %v569
        %v789 = vunpack.c.l.b16 %v570
        %v790 = vunpack.c.h.b16 %v570
        %v791 = vunpack.c.l.b16 %v571
        %v792 = vunpack.c.h.b16 %v571
        %v793 = vpack.c.b16 %v667, %v665
        %v794 = vpack.c.b16 %v668, %v666
        %v795 = vpack.c.b16 %v671, %v669
        %v796 = vpack.c.b16 %v672, %v670
        %v797 = vpack.c.b16 %v675, %v673
        %v798 = vpack.c.b16 %v676, %v674
        %v799 = vpack.c.b16 %v679, %v677
        %v800 = vpack.c.b16 %v680, %v678
        %v801 = vpack.c.b16 %v683, %v681
        %v802 = vpack.c.b16 %v684, %v682
        %v803 = vpack.c.b16 %v687, %v685
        %v804 = vpack.c.b16 %v688, %v686
        %v805 = vpack.c.b16 %v691, %v689
        %v806 = vpack.c.b16 %v692, %v690
        %v807 = vpack.c.b16 %v695, %v693
        %v808 = vpack.c.b16 %v696, %v694
        %v809 = vpack.c.b16 %v699, %v697
        %v810 = vpack.c.b16 %v700, %v698
        %v811 = vpack.c.b16 %v703, %v701
        %v812 = vpack.c.b16 %v704, %v702
        %v813 = vpack.c.b16 %v707, %v705
        %v814 = vpack.c.b16 %v708, %v706
        %v815 = vpack.c.b16 %v711, %v709
        %v816 = vpack.c.b16 %v712, %v710
        %v817 = vpack.c.b16 %v715, %v713
        %v818 = vpack.c.b16 %v716, %v714
        %v819 = vpack.c.b16 %v719, %v717
        %v820 = vpack.c.b16 %v720, %v718
        %v821 = vpack.c.b16 %v723, %v721
        %v822 = vpack.c.b16 %v724, %v722
        %v823 = vpack.c.b16 %v727, %v725
        %v824 = vpack.c.b16 %v728, %v726
        %v825 = vpack.c.b16 %v731, %v729
        %v826 = vpack.c.b16 %v732, %v730
        %v827 = vpack.c.b16 %v735, %v733
        %v828 = vpack.c.b16 %v736, %v734
        %v829 = vpack.c.b16 %v739, %v737
        %v830 = vpack.c.b16 %v740, %v738
        %v831 = vpack.c.b16 %v743, %v741
        %v832 = vpack.c.b16 %v744, %v742
        %v833 = vpack.c.b16 %v747, %v745
        %v834 = vpack.c.b16 %v748, %v746
        %v835 = vpack.c.b16 %v751, %v749
        %v836 = vpack.c.b16 %v752, %v750
        %v837 = vpack.c.b16 %v755, %v753
        %v838 = vpack.c.b16 %v756, %v754
        %v839 = vpack.c.b16 %v759, %v757
        %v840 = vpack.c.b16 %v760, %v758
        %v841 = vpack.c.b16 %v763, %v761
        %v842 = vpack.c.b16 %v764, %v762
        %v843 = vpack.c.b16 %v767, %v765
        %v844 = vpack.c.b16 %v768, %v766
        %v845 = vpack.c.b16 %v771, %v769
        %v846 = vpack.c.b16 %v772, %v770
        %v847 = vpack.c.b16 %v775, %v773
        %v848 = vpack.c.b16 %v776, %v774
        %v849 = vpack.c.b16 %v779, %v777
        %v850 = vpack.c.b16 %v780, %v778
        %v851 = vpack.c.b16 %v783, %v781
        %v852 = vpack.c.b16 %v784, %v782
        %v853 = vpack.c.b16 %v787, %v785
        %v854 = vpack.c.b16 %v788, %v786
        %v855 = vpack.c.b16 %v791, %v789
        %v856 = vpack.c.b16 %v792, %v790
        %921 = vmatprep.subr.bf16.mxu0 %v794
        %922 = vmatpush1.bf16.msra.mxu0 %v793
        %923 = vmatprep.subr.bf16.mxu0 %v796
        %924 = vmatpush1.bf16.msra.mxu0 %v795
        %925 = vmatprep.subr.bf16.mxu0 %v798
        %926 = vmatpush1.bf16.msra.mxu0 %v797
        %927 = vmatprep.subr.bf16.mxu0 %v800
        %928 = vmatpush1.bf16.msra.mxu0 %v799
        %929 = vmatprep.subr.bf16.mxu0 %v802
        %930 = vmatpush1.bf16.msra.mxu0 %v801
        %931 = vmatprep.subr.bf16.mxu0 %v804
        %932 = vmatpush1.bf16.msra.mxu0 %v803
        %933 = vmatprep.subr.bf16.mxu0 %v806
        %934 = vmatpush1.bf16.msra.mxu0 %v805
        %935 = vmatprep.subr.bf16.mxu0 %v808
        %936 = vmatpush1.bf16.msra.mxu0 %v807
        %937 = vmatprep.subr.bf16.mxu0 %v810
        %938 = vmatpush1.bf16.msra.mxu0 %v809
        %939 = vmatprep.subr.bf16.mxu0 %v812
        %940 = vmatpush1.bf16.msra.mxu0 %v811
        %941 = vmatprep.subr.bf16.mxu0 %v814
        %942 = vmatpush1.bf16.msra.mxu0 %v813
        %943 = vmatprep.subr.bf16.mxu0 %v816
        %944 = vmatpush1.bf16.msra.mxu0 %v815
        %945 = vmatprep.subr.bf16.mxu0 %v818
        %946 = vmatpush1.bf16.msra.mxu0 %v817
        %947 = vmatprep.subr.bf16.mxu0 %v820
        %948 = vmatpush1.bf16.msra.mxu0 %v819
        %949 = vmatprep.subr.bf16.mxu0 %v822
        %950 = vmatpush1.bf16.msra.mxu0 %v821
        %951 = vmatprep.subr.bf16.mxu0 %v824
        %952 = vmatpush1.bf16.msra.mxu0 %v823
        %953 = vmatprep.mubr.bf16.mxu0 %v594
        %954 = vmatmul.mubr.bf16.gmra.mrb[0].mxu0 %v587
        %v955 = vpop.f32.mrb[0].mxu0
        %v956 = vadd.f32 0.0, %v955
        %v957 = vpop.f32.mrb[0].mxu0
        %v958 = vadd.f32 0.0, %v957
        %v959 = vpop.f32.mrb[0].mxu0
        %v960 = vpop.f32.mrb[0].mxu0
        %961 = vdwg.mxu0
        %962 = vmatprep.subr.bf16.mxu0 %v826
        %963 = vmatpush1.bf16.msra.mxu0 %v825
        %964 = vmatprep.subr.bf16.mxu0 %v828
        %965 = vmatpush1.bf16.msra.mxu0 %v827
        %966 = vmatprep.subr.bf16.mxu0 %v830
        %967 = vmatpush1.bf16.msra.mxu0 %v829
        %968 = vmatprep.subr.bf16.mxu0 %v832
        %969 = vmatpush1.bf16.msra.mxu0 %v831
        %970 = vmatprep.subr.bf16.mxu0 %v834
        %971 = vmatpush1.bf16.msra.mxu0 %v833
        %972 = vmatprep.subr.bf16.mxu0 %v836
        %973 = vmatpush1.bf16.msra.mxu0 %v835
        %974 = vmatprep.subr.bf16.mxu0 %v838
        %975 = vmatpush1.bf16.msra.mxu0 %v837
        %976 = vmatprep.subr.bf16.mxu0 %v840
        %977 = vmatpush1.bf16.msra.mxu0 %v839
        %978 = vmatprep.subr.bf16.mxu0 %v842
        %979 = vmatpush1.bf16.msra.mxu0 %v841
        %980 = vmatprep.subr.bf16.mxu0 %v844
        %981 = vmatpush1.bf16.msra.mxu0 %v843
        %982 = vmatprep.subr.bf16.mxu0 %v846
        %983 = vmatpush1.bf16.msra.mxu0 %v845
        %984 = vmatprep.subr.bf16.mxu0 %v848
        %985 = vmatpush1.bf16.msra.mxu0 %v847
        %986 = vmatprep.subr.bf16.mxu0 %v850
        %987 = vmatpush1.bf16.msra.mxu0 %v849
        %988 = vmatprep.subr.bf16.mxu0 %v852
        %989 = vmatpush1.bf16.msra.mxu0 %v851
        %990 = vmatprep.subr.bf16.mxu0 %v854
        %991 = vmatpush1.bf16.msra.mxu0 %v853
        %992 = vmatprep.subr.bf16.mxu0 %v856
        %993 = vmatpush1.bf16.msra.mxu0 %v855
        %994 = vmatprep.mubr.bf16.mxu0 %v596
        %995 = vmatmul.mubr.bf16.gmra.mrb[0].mxu0 %v595
        %v996 = vpop.f32.mrb[0].mxu0
        %v997 = vadd.f32 %v956, %v996
        %v998 = vpop.f32.mrb[0].mxu0
        %v999 = vadd.f32 %v958, %v998
        %v1000 = vpop.f32.mrb[0].mxu0
        %v1001 = vpop.f32.mrb[0].mxu0
        %1002 = vdwg.mxu0
        %v1005 = vcombine.low %v997, %v999
        %v1007 = vunpack.c.l.s4 1983009808
        %v1008 = vunpack.c.0.s8 %v1007
        %v1009 = vlaneseq
        %v1010 = vshrl.u32 %v1009, 7
        %v1011 = vsub.s32 %v1008, %v1010
        %v1012 = vrot.slane %v1005, %v1011
        %v1014 = vadd.f32 %v506, %v1012
        %1015 = vst [vmem:[#allocation2] sm:$0xf] %v1014
        %p1016 = scmp.eq.s32.totalorder %s20, 8
        // Predicated region
        $region71: #{embedding_net_forward.108} parent=61 // pred_check
          %p1017 = pneg %p1016
        $region72: #{embedding_net_forward.108} parent=61 // pred_check_branch
          %1019 = sbr.rel (%p1017) target = $region74
        $region73: #{embedding_net_forward.108} parent=61 // pred_region
          %v1020 = vld [vmem:[#allocation2] sm:$0xf]
          %1021 = vst [vmem:[%s499] sm:$0xf] %v1020
        $region74: #{embedding_net_forward.108} parent=61 // pred_fallthru
          _
        %s1022 = smul.u32 2, %s19
        %p1023 = scmp.lt.s32.totalorder %s18, 0
        %s1024 = scalar_select %p1023, %s18, 0
        %p1025 = scmp.lt.s32.totalorder %s1022, 3
        %s1026 = scalar_select %p1025, %s1022, 3
        %s1027 = smul.addr %s1024, 4
        %s1028 = sadd.s32 %s1026, %s1027
        %s1029 = smul.addr %s1028, 2
        %s1030 = scalar_lea.vmem %s2, %s1029
        // Predicated region
        $region75: #{embedding_net_forward.108} parent=61 // pred_check
          %p1031 = pneg %p108
        $region76: #{embedding_net_forward.108} parent=61 // pred_check_branch
          %1033 = sbr.rel (%p1031) target = $region78
        $region77: #{embedding_net_forward.108} parent=61 // pred_region
          %s1034 = smul.u32 2, %s19
        $region78: #{embedding_net_forward.108} parent=61 // pred_fallthru
          _
      $region62: #{embedding_net_forward.108} parent=5 // pred_fallthru
        _
      %p1035 = scmp.le.s32.totalorder 2, %s8
      // Predicated region
      $region79: #{embedding_net_forward.108} parent=5 // pred_check
        %p1036 = pneg %p1035
      $region80: #{embedding_net_forward.108} parent=5 // pred_check_branch
        %1038 = sbr.rel (%p1036) target = $region82
      $region81: #{embedding_net_forward.108} parent=5 // pred_region
        %s1039 = ssub.s32 %s8, 2
        // Predicated region
        $region83: #{embedding_net_forward.108} parent=81 // pred_check
          %p1040 = pneg %p114
        $region84: #{embedding_net_forward.108} parent=81 // pred_check_branch
          %1042 = sbr.rel (%p1040) target = $region86
        $region85: #{embedding_net_forward.108} parent=81 // pred_region
          %s1043 = smul.u32 2, %s22
          %p1044 = scmp.lt.s32.totalorder %s21, 0
          %s1045 = scalar_select %p1044, %s21, 0
          %p1046 = scmp.lt.s32.totalorder %s1043, 3
          %s1047 = scalar_select %p1046, %s1043, 3
          %s1048 = smul.addr %s1045, 4
          %s1049 = sadd.s32 %s1047, %s1048
          %s1050 = smul.addr %s1049, 2
          %s1051 = scalar_lea.vmem %s2, %s1050
        $region86: #{embedding_net_forward.108} parent=81 // pred_fallthru
          _
      $region82: #{embedding_net_forward.108} parent=5 // pred_fallthru
        _
    $region6: #{embedding_net_forward.108} parent=1 // loop_footer
      %s12 = sadd.s32 1, %s8
    $region7: #{embedding_net_forward.108} parent=1 // loop_footer_branch
      %7 = sbr.rel target = $region3
    $region8: #{embedding_net_forward.108} parent=1 // loop_exit
      _

</llo_original>
